<compile_context>
chip_gen: v7x
topology: tpu7x:2x2x1
jax: 0.10.0
libtpu: 0.0.40
codegen_flags: <defaults>
</compile_context>

<pallas_src>
import math

import jax
import jax.numpy as jnp
from jax import lax
from jax.experimental import pallas as pl
from jax.experimental.pallas import tpu as pltpu  # noqa: F401  (TPU backend assumed)

F32 = jnp.float32
LN_EPS = 1e-5
NEG_INF = -1e30


# ---------------------------------------------------------------------------
# In-kernel helpers
# ---------------------------------------------------------------------------
def _relu_ln(y, g, beta):
    # ReLU -> LayerNorm(eps=1e-5) -> affine   (Dropout is identity in eval mode)
    y = jnp.maximum(y, 0.0)
    mean = jnp.mean(y, axis=-1, keepdims=True)
    var = jnp.mean(jnp.square(y - mean), axis=-1, keepdims=True)
    return (y - mean) * lax.rsqrt(var + LN_EPS) * g + beta


def _masked_softmax(s, mask):
    # rows with an all-zero mask produce all-zero weights (matches PyG aggregation)
    s = jnp.where(mask > 0.0, s, NEG_INF)
    s = s - jnp.max(s, axis=-1, keepdims=True)
    p = jnp.exp(s) * mask
    denom = jnp.sum(p, axis=-1, keepdims=True)
    inv = pl.reciprocal(jnp.where(denom > 0.0, denom, 1.0), approx=True)
    return p * inv


# ---------------------------------------------------------------------------
# Fused forward kernel (single pallas_call, no grid: everything VMEM-resident)
# ---------------------------------------------------------------------------
def _make_fused_kernel(*, E, H, A, num_layers):
    gnn_scale = 1.0 / math.sqrt(H)   # TransformerConv scale (heads=1 -> head_dim=H)
    mha_scale = 1.0 / math.sqrt(E)   # nn.MultiheadAttention, 1 head -> head_dim=E

    def kernel(*refs):
        logits_ref, values_ref = refs[-2], refs[-1]
        it = iter(refs[:-2])
        ld = lambda: next(it)[...]          # noqa: E731

        feat6 = ld()      # (n, 6)  [coords(2) | mask | speed | dist | timetogo]
        tfeat = ld()      # (n, 3)  [timetogo | 0 | 0]
        adj = ld()        # (n, n)  adj[i, j] = 1 iff edge j -> i
        mmask = ld()      # (n, n)  1 iff same mission column (MHA over UAV axis)

        # ---- outer time encoder: Linear(3, E) -> ReLU -> LayerNorm
        w, b, g, beta = ld(), ld(), ld(), ld()
        time_encoded = _relu_ln(
            jnp.dot(tfeat, w, preferred_element_type=F32) + b, g, beta)        # (n, E)

        # ---- GNN time encoder (weight zero-padded to (E, H): selects last 3 cols
        #      of the combined features == last 3 cols of time_encoded)
        w, b, g, beta = ld(), ld(), ld(), ld()
        gnn_time = _relu_ln(
            jnp.dot(time_encoded, w, preferred_element_type=F32) + b, g, beta)  # (n, H)
        # NOTE: GNN spatial encoder is computed-and-discarded in the reference -> skipped.

        # ---- GNN TransformerConv stack (heads=1), fused q|k|v|skip projection
        def tconv(all4, residual):
            q = all4[:, :H]
            k = all4[:, H:2 * H]
            v = all4[:, 2 * H:3 * H]
            skip = all4[:, 3 * H:]
            s = lax.dot_general(q, k, (((1,), (1,)), ((), ())),
                                preferred_element_type=F32) * gnn_scale
            attn = _masked_softmax(s, adj)
            agg = jnp.dot(attn, v, preferred_element_type=F32)
            # conv -> ReLU -> Dropout(id) -> + residual
            return jnp.maximum(agg + skip, 0.0) + residual

        # layer 0: input is cat([feat6, time_encoded]) realized as split dots
        w_qf, w_qt, b_q = ld(), ld(), ld()      # (6,4H), (E,4H), (1,4H)
        w_rf, w_rt, b_r = ld(), ld(), ld()      # (6,H),  (E,H),  (1,H)
        all4 = (jnp.dot(feat6, w_qf, preferred_element_type=F32)
                + jnp.dot(time_encoded, w_qt, preferred_element_type=F32) + b_q)
        residual = (jnp.dot(feat6, w_rf, preferred_element_type=F32)
                    + jnp.dot(time_encoded, w_rt, preferred_element_type=F32) + b_r)
        cur = tconv(all4, residual)

        for _ in range(num_layers - 1):
            w_q, b_q = ld(), ld()               # (H, 4H), (1, 4H)
            all4 = jnp.dot(cur, w_q, preferred_element_type=F32) + b_q
            cur = tconv(all4, cur)              # residual projection = Identity

        # ---- GNN feature fusion Linear(2H, H) -> ReLU -> LN (split dot), then out Linear(H, E)
        w_c, w_t, b, g, beta = ld(), ld(), ld(), ld(), ld()
        fused_g = _relu_ln(
            jnp.dot(cur, w_c, preferred_element_type=F32)
            + jnp.dot(gnn_time, w_t, preferred_element_type=F32) + b, g, beta)   # (n, H)
        w, b = ld(), ld()
        gnn_out = jnp.dot(fused_g, w, preferred_element_type=F32) + b            # (n, E)

        # ---- actor attention: nn.MultiheadAttention (1 head), attention over the UAV axis
        w_qkv, b_qkv, w_o, b_o = ld(), ld(), ld(), ld()
        qkv = jnp.dot(time_encoded, w_qkv, preferred_element_type=F32) + b_qkv   # (n, 3E)
        q = qkv[:, :E]
        k = qkv[:, E:2 * E]
        v = qkv[:, 2 * E:]
        s = lax.dot_general(q, k, (((1,), (1,)), ((), ())),
                            preferred_element_type=F32) * mha_scale
        attn = _masked_softmax(s, mmask)
        ctx = jnp.dot(attn, v, preferred_element_type=F32)
        time_context = jnp.dot(ctx, w_o, preferred_element_type=F32) + b_o       # (n, E)

        # ---- outer feature fusion Linear(3E, E) -> ReLU -> LN (split dot)
        w_g, w_t, w_x, b, g, beta = ld(), ld(), ld(), ld(), ld(), ld()
        fused = _relu_ln(
            jnp.dot(gnn_out, w_g, preferred_element_type=F32)
            + jnp.dot(time_encoded, w_t, preferred_element_type=F32)
            + jnp.dot(time_context, w_x, preferred_element_type=F32) + b, g, beta)  # (n, E)

        # ---- fused actor_shared + critic head-1: one (E, A+C) lane-dense matmul
        w_ac, b_ac, g_a, beta_a, g_c, beta_c = ld(), ld(), ld(), ld(), ld(), ld()
        y = jnp.dot(fused, w_ac, preferred_element_type=F32) + b_ac              # (n, A+C)
        actor_feat = _relu_ln(y[:, :A], g_a, beta_a)
        critic_feat = _relu_ln(y[:, A:], g_c, beta_c)

        # ---- output heads
        w, b = ld(), ld()
        logits_ref[...] = jnp.dot(actor_feat, w, preferred_element_type=F32) + b
        w, b = ld(), ld()
        values_ref[...] = jnp.dot(critic_feat, w, preferred_element_type=F32) + b

    return kernel


# ---------------------------------------------------------------------------
# Parameters (deterministic synthetic init, stored in the fused/split layouts)
# ---------------------------------------------------------------------------
def init_params(key, cfg):
    E, H = cfg['embedding_dim'], cfg['gnn_hidden_dim']
    L, A, C = cfg['num_layers'], cfg['actor_hidden_dim'], cfg['critic_hidden_dim']
    nm = cfg['num_missions']
    gnn_in = 6 + E                      # reference hardcodes 8; actual concat width is 6+E

    keys = iter(jax.random.split(key, 64 + 8 * L))

    def dense(din, dout):
        kw, kb = jax.random.split(next(keys))
        s = 1.0 / math.sqrt(din)
        return ((jax.random.normal(kw, (din, dout)) * s).astype(F32),
                (jax.random.normal(kb, (1, dout)) * 0.01).astype(F32))

    def ln(d):
        return jnp.ones((1, d), F32), jnp.zeros((1, d), F32)

    p = {}

    w, b = dense(3, E)
    g, beta = ln(E)
    p['te'] = dict(w=w, b=b, g=g, beta=beta)

    # GNN time encoder: native (3, H) weight zero-padded to (E, H) so it picks the
    # last 3 columns of time_encoded (== cols -3: of the combined features).
    w3, b = dense(3, H)
    g, beta = ln(H)
    p['gnn_te'] = dict(w=jnp.zeros((E, H), F32).at[E - 3:, :].set(w3), b=b, g=g, beta=beta)

    layers = []
    for layer in range(L):
        din = gnn_in if layer == 0 else H
        wq, bq = dense(din, H)
        wk, bk = dense(din, H)
        wv, bv = dense(din, H)
        ws, bs = dense(din, H)
        w_qkvs = jnp.concatenate([wq, wk, wv, ws], axis=1)
        b_qkvs = jnp.concatenate([bq, bk, bv, bs], axis=1)
        if layer == 0:
            wr, br = dense(din, H)          # residual projection (in != hidden)
            layers.append(dict(w_qkvs_feat=w_qkvs[:6], w_qkvs_time=w_qkvs[6:],
                               b_qkvs=b_qkvs,
                               w_res_feat=wr[:6], w_res_time=wr[6:], b_res=br))
        else:
            layers.append(dict(w_qkvs=w_qkvs, b_qkvs=b_qkvs))
    p['gnn_layers'] = layers

    wf, bf = dense(2 * H, H)
    g, beta = ln(H)
    p['gnn_fusion'] = dict(w_cur=wf[:H], w_time=wf[H:], b=bf, g=g, beta=beta)

    w, b = dense(H, E)
    p['gnn_out'] = dict(w=w, b=b)

    wq, bq = dense(E, E)
    wk, bk = dense(E, E)
    wv, bv = dense(E, E)
    wo, bo = dense(E, E)
    p['attn'] = dict(w_qkv=jnp.concatenate([wq, wk, wv], axis=1),
                     b_qkv=jnp.concatenate([bq, bk, bv], axis=1),
                     w_o=wo, b_o=bo)

    wf, bf = dense(3 * E, E)
    g, beta = ln(E)
    p['fusion'] = dict(w_gnn=wf[:E], w_time=wf[E:2 * E], w_ctx=wf[2 * E:],
                       b=bf, g=g, beta=beta)

    # actor_shared + critic first layer fused (reference declares 2E inputs; actual is E)
    wa, ba = dense(E, A)
    wc, bc = dense(E, C)
    g_a, beta_a = ln(A)
    g_c, beta_c = ln(C)
    p['ac1'] = dict(w=jnp.concatenate([wa, wc], axis=1),
                    b=jnp.concatenate([ba, bc], axis=1),
                    g_a=g_a, beta_a=beta_a, g_c=g_c, beta_c=beta_c)

    w, b = dense(A, nm)
    p['actor_out'] = dict(w=w, b=b)
    w, b = dense(C, 1)
    p['critic2'] = dict(w=w, b=b)
    return p


def _flatten_params(p):
    flat = [p['te']['w'], p['te']['b'], p['te']['g'], p['te']['beta'],
            p['gnn_te']['w'], p['gnn_te']['b'], p['gnn_te']['g'], p['gnn_te']['beta']]
    l0 = p['gnn_layers'][0]
    flat += [l0['w_qkvs_feat'], l0['w_qkvs_time'], l0['b_qkvs'],
             l0['w_res_feat'], l0['w_res_time'], l0['b_res']]
    for layer in p['gnn_layers'][1:]:
        flat += [layer['w_qkvs'], layer['b_qkvs']]
    gf = p['gnn_fusion']
    flat += [gf['w_cur'], gf['w_time'], gf['b'], gf['g'], gf['beta']]
    flat += [p['gnn_out']['w'], p['gnn_out']['b']]
    at = p['attn']
    flat += [at['w_qkv'], at['b_qkv'], at['w_o'], at['b_o']]
    fu = p['fusion']
    flat += [fu['w_gnn'], fu['w_time'], fu['w_ctx'], fu['b'], fu['g'], fu['beta']]
    ac = p['ac1']
    flat += [ac['w'], ac['b'], ac['g_a'], ac['beta_a'], ac['g_c'], ac['beta_c']]
    flat += [p['actor_out']['w'], p['actor_out']['b'],
             p['critic2']['w'], p['critic2']['b']]
    return flat


# ---------------------------------------------------------------------------
# Forward pass (single fused pallas_call)
# ---------------------------------------------------------------------------
def _edge_index_to_adj(edge_index, n):
    # TODO(synk): duplicate (src, dst) edges collapse to a single 1.0; PyG's edge softmax
    # would weight repeated edges separately.
    src, dst = edge_index[0], edge_index[1]
    return jnp.zeros((n, n), F32).at[dst, src].set(1.0)


def forward(params, mission_coords, edge_index, batch, uavs_info,
            action_mask, speeds, dist_matrix, timetogo_matrix):
    del batch, uavs_info                      # unused by the reference forward as well
    U, M = timetogo_matrix.shape              # U == M == N (forced by the reference cat)
    n = U * M
    E = params['te']['w'].shape[1]
    H = params['gnn_out']['w'].shape[0]
    A = params['actor_out']['w'].shape[0]
    nm = params['actor_out']['w'].shape[1]
    num_layers = len(params['gnn_layers'])

    tt = timetogo_matrix.astype(F32)[..., None]
    tfeat = jnp.concatenate([tt, jnp.zeros_like(tt), jnp.zeros_like(tt)],
                            axis=-1).reshape(n, 3)
    feat6 = jnp.concatenate(
        [mission_coords.astype(F32),
         action_mask.astype(F32)[..., None],
         jnp.broadcast_to(speeds.astype(F32)[:, None, None], (U, M, 1)),
         dist_matrix.astype(F32)[..., None],
         tt], axis=-1).reshape(n, 6)

    adj = _edge_index_to_adj(edge_index, n)
    # MHA runs over the UAV (seq) axis separately per mission column m = idx % M.
    col = jnp.arange(n, dtype=jnp.int32) % M
    mha_mask = (col[:, None] == col[None, :]).astype(F32)

    kernel = _make_fused_kernel(E=E, H=H, A=A, num_layers=num_layers)
    logits, values = pl.pallas_call(
        kernel,
        out_shape=(jax.ShapeDtypeStruct((n, nm), F32),
                   jax.ShapeDtypeStruct((n, 1), F32)),
    )(feat6, tfeat, adj, mha_mask, *_flatten_params(params))

    return logits.reshape(U, M, nm), values.reshape(U, M)


# ---------------------------------------------------------------------------
if __name__ == "__main__":
    N = 8   # num_missions == num_uavs (required by the reference concat/repeat ops)
    cfg = dict(num_missions=N, num_uavs=N, embedding_dim=32, gnn_hidden_dim=16,
               actor_hidden_dim=64, critic_hidden_dim=64, num_layers=4, heads=1)

    key = jax.random.PRNGKey(0)
    kp, kd = jax.random.split(key)
    params = init_params(kp, cfg)

    ks = jax.random.split(kd, 6)
    mission_coords = jax.random.uniform(ks[0], (N, N, 2), F32)
    action_mask = (jax.random.uniform(ks[1], (N, N)) > 0.3).astype(jnp.int32)
    speeds = jax.random.uniform(ks[2], (N,), F32, minval=1.0, maxval=5.0)
    dist_matrix = jax.random.uniform(ks[3], (N, N), F32)
    timetogo_matrix = dist_matrix / speeds[:, None]
    uavs_info = jax.random.uniform(ks[4], (N, 2), F32)     # unused by forward (as in reference)

    n_nodes = N * N
    idx = jnp.arange(n_nodes, dtype=jnp.int32)
    src = jnp.concatenate([idx, idx])                       # self-loops + directed ring
    dst = jnp.concatenate([idx, (idx + 1) % n_nodes])
    edge_index = jnp.stack([src, dst], axis=0)
    batch = jnp.zeros((n_nodes,), jnp.int32)                # unused by forward (as in reference)

    fwd = jax.jit(forward)
    logits, values = fwd(params, mission_coords, edge_index, batch, uavs_info,
                         action_mask, speeds, dist_matrix, timetogo_matrix)
    jax.block_until_ready((logits, values))

    assert logits.shape == (N, N, N), logits.shape
    assert values.shape == (N, N), values.shape
    assert bool(jnp.all(jnp.isfinite(logits))) and bool(jnp.all(jnp.isfinite(values)))
    print("KERNEL_OK")
</pallas_src>

<mosaic_0001>
module attributes {stable_mosaic.version = 11 : i64} {
  func.func @kernel(%arg0: memref<64x6xf32, #tpu.memory_space<vmem>>, %arg1: memref<64x3xf32, #tpu.memory_space<vmem>>, %arg2: memref<64x64xf32, #tpu.memory_space<vmem>>, %arg3: memref<64x64xf32, #tpu.memory_space<vmem>>, %arg4: memref<3x32xf32, #tpu.memory_space<vmem>>, %arg5: memref<1x32xf32, #tpu.memory_space<vmem>>, %arg6: memref<1x32xf32, #tpu.memory_space<vmem>>, %arg7: memref<1x32xf32, #tpu.memory_space<vmem>>, %arg8: memref<32x16xf32, #tpu.memory_space<vmem>>, %arg9: memref<1x16xf32, #tpu.memory_space<vmem>>, %arg10: memref<1x16xf32, #tpu.memory_space<vmem>>, %arg11: memref<1x16xf32, #tpu.memory_space<vmem>>, %arg12: memref<6x64xf32, #tpu.memory_space<vmem>>, %arg13: memref<32x64xf32, #tpu.memory_space<vmem>>, %arg14: memref<1x64xf32, #tpu.memory_space<vmem>>, %arg15: memref<6x16xf32, #tpu.memory_space<vmem>>, %arg16: memref<32x16xf32, #tpu.memory_space<vmem>>, %arg17: memref<1x16xf32, #tpu.memory_space<vmem>>, %arg18: memref<16x64xf32, #tpu.memory_space<vmem>>, %arg19: memref<1x64xf32, #tpu.memory_space<vmem>>, %arg20: memref<16x64xf32, #tpu.memory_space<vmem>>, %arg21: memref<1x64xf32, #tpu.memory_space<vmem>>, %arg22: memref<16x64xf32, #tpu.memory_space<vmem>>, %arg23: memref<1x64xf32, #tpu.memory_space<vmem>>, %arg24: memref<16x16xf32, #tpu.memory_space<vmem>>, %arg25: memref<16x16xf32, #tpu.memory_space<vmem>>, %arg26: memref<1x16xf32, #tpu.memory_space<vmem>>, %arg27: memref<1x16xf32, #tpu.memory_space<vmem>>, %arg28: memref<1x16xf32, #tpu.memory_space<vmem>>, %arg29: memref<16x32xf32, #tpu.memory_space<vmem>>, %arg30: memref<1x32xf32, #tpu.memory_space<vmem>>, %arg31: memref<32x96xf32, #tpu.memory_space<vmem>>, %arg32: memref<1x96xf32, #tpu.memory_space<vmem>>, %arg33: memref<32x32xf32, #tpu.memory_space<vmem>>, %arg34: memref<1x32xf32, #tpu.memory_space<vmem>>, %arg35: memref<32x32xf32, #tpu.memory_space<vmem>>, %arg36: memref<32x32xf32, #tpu.memory_space<vmem>>, %arg37: memref<32x32xf32, #tpu.memory_space<vmem>>, %arg38: memref<1x32xf32, #tpu.memory_space<vmem>>, %arg39: memref<1x32xf32, #tpu.memory_space<vmem>>, %arg40: memref<1x32xf32, #tpu.memory_space<vmem>>, %arg41: memref<32x128xf32, #tpu.memory_space<vmem>>, %arg42: memref<1x128xf32, #tpu.memory_space<vmem>>, %arg43: memref<1x64xf32, #tpu.memory_space<vmem>>, %arg44: memref<1x64xf32, #tpu.memory_space<vmem>>, %arg45: memref<1x64xf32, #tpu.memory_space<vmem>>, %arg46: memref<1x64xf32, #tpu.memory_space<vmem>>, %arg47: memref<64x8xf32, #tpu.memory_space<vmem>>, %arg48: memref<1x8xf32, #tpu.memory_space<vmem>>, %arg49: memref<64x1xf32, #tpu.memory_space<vmem>>, %arg50: memref<1x1xf32, #tpu.memory_space<vmem>>, %arg51: memref<64x8xf32, #tpu.memory_space<vmem>>, %arg52: memref<64x1xf32, #tpu.memory_space<vmem>>) attributes {dimension_semantics = [], scalar_prefetch = 0 : i64, scratch_operands = 0 : i64, tpu.core_type = #tpu.core_type<tc>} {
    %c0 = arith.constant 0 : index
    %c0_0 = arith.constant 0 : index
    %0 = vector.load %arg0[%c0, %c0_0] : memref<64x6xf32, #tpu.memory_space<vmem>>, vector<64x6xf32>
    %c0_1 = arith.constant 0 : index
    %c0_2 = arith.constant 0 : index
    %1 = vector.load %arg1[%c0_1, %c0_2] : memref<64x3xf32, #tpu.memory_space<vmem>>, vector<64x3xf32>
    %c0_3 = arith.constant 0 : index
    %c0_4 = arith.constant 0 : index
    %2 = vector.load %arg2[%c0_3, %c0_4] : memref<64x64xf32, #tpu.memory_space<vmem>>, vector<64x64xf32>
    %c0_5 = arith.constant 0 : index
    %c0_6 = arith.constant 0 : index
    %3 = vector.load %arg3[%c0_5, %c0_6] : memref<64x64xf32, #tpu.memory_space<vmem>>, vector<64x64xf32>
    %c0_7 = arith.constant 0 : index
    %c0_8 = arith.constant 0 : index
    %4 = vector.load %arg4[%c0_7, %c0_8] : memref<3x32xf32, #tpu.memory_space<vmem>>, vector<3x32xf32>
    %c0_9 = arith.constant 0 : index
    %c0_10 = arith.constant 0 : index
    %5 = vector.load %arg5[%c0_9, %c0_10] : memref<1x32xf32, #tpu.memory_space<vmem>>, vector<1x32xf32>
    %c0_11 = arith.constant 0 : index
    %c0_12 = arith.constant 0 : index
    %6 = vector.load %arg6[%c0_11, %c0_12] : memref<1x32xf32, #tpu.memory_space<vmem>>, vector<1x32xf32>
    %c0_13 = arith.constant 0 : index
    %c0_14 = arith.constant 0 : index
    %7 = vector.load %arg7[%c0_13, %c0_14] : memref<1x32xf32, #tpu.memory_space<vmem>>, vector<1x32xf32>
    %cst = arith.constant dense<0.000000e+00> : vector<64x32xf32>
    %8 = tpu.matmul %1, %4, %cst {dimension_numbers = #tpu.dot_dimension_numbers<[1], [0], [0], [1], [0, 0, 1, 1], [], []>} : vector<64x3xf32>, vector<3x32xf32>, vector<64x32xf32> -> vector<64x32xf32>
    %9 = vector.broadcast %5 : vector<1x32xf32> to vector<64x32xf32>
    %10 = arith.addf %8, %9 : vector<64x32xf32>
    %cst_15 = arith.constant 0.000000e+00 : f32
    %11 = vector.broadcast %cst_15 : f32 to vector<64x32xf32>
    %12 = arith.maximumf %10, %11 : vector<64x32xf32>
    %cst_16 = arith.constant dense<0.000000e+00> : vector<64xf32>
    %13 = vector.multi_reduction <add>, %12, %cst_16 [1] : vector<64x32xf32> to vector<64xf32>
    %14 = vector.shape_cast %13 : vector<64xf32> to vector<64x1xf32>
    %cst_17 = arith.constant 3.200000e+01 : f32
    %15 = vector.broadcast %cst_17 : f32 to vector<64x1xf32>
    %16 = arith.divf %14, %15 : vector<64x1xf32>
    %17 = vector.broadcast %16 : vector<64x1xf32> to vector<64x32xf32>
    %18 = arith.subf %12, %17 : vector<64x32xf32>
    %19 = arith.mulf %18, %18 : vector<64x32xf32>
    %cst_18 = arith.constant dense<0.000000e+00> : vector<64xf32>
    %20 = vector.multi_reduction <add>, %19, %cst_18 [1] : vector<64x32xf32> to vector<64xf32>
    %21 = vector.shape_cast %20 : vector<64xf32> to vector<64x1xf32>
    %cst_19 = arith.constant 3.200000e+01 : f32
    %22 = vector.broadcast %cst_19 : f32 to vector<64x1xf32>
    %23 = arith.divf %21, %22 : vector<64x1xf32>
    %24 = vector.broadcast %16 : vector<64x1xf32> to vector<64x32xf32>
    %25 = arith.subf %12, %24 : vector<64x32xf32>
    %cst_20 = arith.constant 9.99999974E-6 : f32
    %26 = vector.broadcast %cst_20 : f32 to vector<64x1xf32>
    %27 = arith.addf %23, %26 : vector<64x1xf32>
    %28 = math.rsqrt %27 : vector<64x1xf32>
    %29 = vector.broadcast %28 : vector<64x1xf32> to vector<64x32xf32>
    %30 = arith.mulf %25, %29 : vector<64x32xf32>
    %31 = vector.broadcast %6 : vector<1x32xf32> to vector<64x32xf32>
    %32 = arith.mulf %30, %31 : vector<64x32xf32>
    %33 = vector.broadcast %7 : vector<1x32xf32> to vector<64x32xf32>
    %34 = arith.addf %32, %33 : vector<64x32xf32>
    %c0_21 = arith.constant 0 : index
    %c0_22 = arith.constant 0 : index
    %35 = vector.load %arg8[%c0_21, %c0_22] : memref<32x16xf32, #tpu.memory_space<vmem>>, vector<32x16xf32>
    %c0_23 = arith.constant 0 : index
    %c0_24 = arith.constant 0 : index
    %36 = vector.load %arg9[%c0_23, %c0_24] : memref<1x16xf32, #tpu.memory_space<vmem>>, vector<1x16xf32>
    %c0_25 = arith.constant 0 : index
    %c0_26 = arith.constant 0 : index
    %37 = vector.load %arg10[%c0_25, %c0_26] : memref<1x16xf32, #tpu.memory_space<vmem>>, vector<1x16xf32>
    %c0_27 = arith.constant 0 : index
    %c0_28 = arith.constant 0 : index
    %38 = vector.load %arg11[%c0_27, %c0_28] : memref<1x16xf32, #tpu.memory_space<vmem>>, vector<1x16xf32>
    %cst_29 = arith.constant dense<0.000000e+00> : vector<64x16xf32>
    %39 = tpu.matmul %34, %35, %cst_29 {dimension_numbers = #tpu.dot_dimension_numbers<[1], [0], [0], [1], [0, 0, 1, 1], [], []>} : vector<64x32xf32>, vector<32x16xf32>, vector<64x16xf32> -> vector<64x16xf32>
    %40 = vector.broadcast %36 : vector<1x16xf32> to vector<64x16xf32>
    %41 = arith.addf %39, %40 : vector<64x16xf32>
    %cst_30 = arith.constant 0.000000e+00 : f32
    %42 = vector.broadcast %cst_30 : f32 to vector<64x16xf32>
    %43 = arith.maximumf %41, %42 : vector<64x16xf32>
    %cst_31 = arith.constant dense<0.000000e+00> : vector<64xf32>
    %44 = vector.multi_reduction <add>, %43, %cst_31 [1] : vector<64x16xf32> to vector<64xf32>
    %45 = vector.shape_cast %44 : vector<64xf32> to vector<64x1xf32>
    %cst_32 = arith.constant 1.600000e+01 : f32
    %46 = vector.broadcast %cst_32 : f32 to vector<64x1xf32>
    %47 = arith.divf %45, %46 : vector<64x1xf32>
    %48 = vector.broadcast %47 : vector<64x1xf32> to vector<64x16xf32>
    %49 = arith.subf %43, %48 : vector<64x16xf32>
    %50 = arith.mulf %49, %49 : vector<64x16xf32>
    %cst_33 = arith.constant dense<0.000000e+00> : vector<64xf32>
    %51 = vector.multi_reduction <add>, %50, %cst_33 [1] : vector<64x16xf32> to vector<64xf32>
    %52 = vector.shape_cast %51 : vector<64xf32> to vector<64x1xf32>
    %cst_34 = arith.constant 1.600000e+01 : f32
    %53 = vector.broadcast %cst_34 : f32 to vector<64x1xf32>
    %54 = arith.divf %52, %53 : vector<64x1xf32>
    %55 = vector.broadcast %47 : vector<64x1xf32> to vector<64x16xf32>
    %56 = arith.subf %43, %55 : vector<64x16xf32>
    %cst_35 = arith.constant 9.99999974E-6 : f32
    %57 = vector.broadcast %cst_35 : f32 to vector<64x1xf32>
    %58 = arith.addf %54, %57 : vector<64x1xf32>
    %59 = math.rsqrt %58 : vector<64x1xf32>
    %60 = vector.broadcast %59 : vector<64x1xf32> to vector<64x16xf32>
    %61 = arith.mulf %56, %60 : vector<64x16xf32>
    %62 = vector.broadcast %37 : vector<1x16xf32> to vector<64x16xf32>
    %63 = arith.mulf %61, %62 : vector<64x16xf32>
    %64 = vector.broadcast %38 : vector<1x16xf32> to vector<64x16xf32>
    %65 = arith.addf %63, %64 : vector<64x16xf32>
    %c0_36 = arith.constant 0 : index
    %c0_37 = arith.constant 0 : index
    %66 = vector.load %arg12[%c0_36, %c0_37] : memref<6x64xf32, #tpu.memory_space<vmem>>, vector<6x64xf32>
    %c0_38 = arith.constant 0 : index
    %c0_39 = arith.constant 0 : index
    %67 = vector.load %arg13[%c0_38, %c0_39] : memref<32x64xf32, #tpu.memory_space<vmem>>, vector<32x64xf32>
    %c0_40 = arith.constant 0 : index
    %c0_41 = arith.constant 0 : index
    %68 = vector.load %arg14[%c0_40, %c0_41] : memref<1x64xf32, #tpu.memory_space<vmem>>, vector<1x64xf32>
    %c0_42 = arith.constant 0 : index
    %c0_43 = arith.constant 0 : index
    %69 = vector.load %arg15[%c0_42, %c0_43] : memref<6x16xf32, #tpu.memory_space<vmem>>, vector<6x16xf32>
    %c0_44 = arith.constant 0 : index
    %c0_45 = arith.constant 0 : index
    %70 = vector.load %arg16[%c0_44, %c0_45] : memref<32x16xf32, #tpu.memory_space<vmem>>, vector<32x16xf32>
    %c0_46 = arith.constant 0 : index
    %c0_47 = arith.constant 0 : index
    %71 = vector.load %arg17[%c0_46, %c0_47] : memref<1x16xf32, #tpu.memory_space<vmem>>, vector<1x16xf32>
    %cst_48 = arith.constant dense<0.000000e+00> : vector<64x64xf32>
    %72 = tpu.matmul %0, %66, %cst_48 {dimension_numbers = #tpu.dot_dimension_numbers<[1], [0], [0], [1], [0, 0, 1, 1], [], []>} : vector<64x6xf32>, vector<6x64xf32>, vector<64x64xf32> -> vector<64x64xf32>
    %cst_49 = arith.constant dense<0.000000e+00> : vector<64x64xf32>
    %73 = tpu.matmul %34, %67, %cst_49 {dimension_numbers = #tpu.dot_dimension_numbers<[1], [0], [0], [1], [0, 0, 1, 1], [], []>} : vector<64x32xf32>, vector<32x64xf32>, vector<64x64xf32> -> vector<64x64xf32>
    %74 = arith.addf %72, %73 : vector<64x64xf32>
    %75 = vector.broadcast %68 : vector<1x64xf32> to vector<64x64xf32>
    %76 = arith.addf %74, %75 : vector<64x64xf32>
    %cst_50 = arith.constant dense<0.000000e+00> : vector<64x16xf32>
    %77 = tpu.matmul %0, %69, %cst_50 {dimension_numbers = #tpu.dot_dimension_numbers<[1], [0], [0], [1], [0, 0, 1, 1], [], []>} : vector<64x6xf32>, vector<6x16xf32>, vector<64x16xf32> -> vector<64x16xf32>
    %cst_51 = arith.constant dense<0.000000e+00> : vector<64x16xf32>
    %78 = tpu.matmul %34, %70, %cst_51 {dimension_numbers = #tpu.dot_dimension_numbers<[1], [0], [0], [1], [0, 0, 1, 1], [], []>} : vector<64x32xf32>, vector<32x16xf32>, vector<64x16xf32> -> vector<64x16xf32>
    %79 = arith.addf %77, %78 : vector<64x16xf32>
    %80 = vector.broadcast %71 : vector<1x16xf32> to vector<64x16xf32>
    %81 = arith.addf %79, %80 : vector<64x16xf32>
    %82 = vector.extract_strided_slice %76 {offsets = [0, 0], sizes = [64, 16], strides = [1, 1]} : vector<64x64xf32> to vector<64x16xf32>
    %83 = vector.extract_strided_slice %76 {offsets = [0, 16], sizes = [64, 16], strides = [1, 1]} : vector<64x64xf32> to vector<64x16xf32>
    %84 = vector.extract_strided_slice %76 {offsets = [0, 32], sizes = [64, 16], strides = [1, 1]} : vector<64x64xf32> to vector<64x16xf32>
    %85 = vector.extract_strided_slice %76 {offsets = [0, 48], sizes = [64, 16], strides = [1, 1]} : vector<64x64xf32> to vector<64x16xf32>
    %cst_52 = arith.constant dense<0.000000e+00> : vector<64x64xf32>
    %86 = tpu.matmul %82, %83, %cst_52 {dimension_numbers = #tpu.dot_dimension_numbers<[1], [1], [0], [0], [0, 0, 1, 0], [], []>} : vector<64x16xf32>, vector<64x16xf32>, vector<64x64xf32> -> vector<64x64xf32>
    %cst_53 = arith.constant 2.500000e-01 : f32
    %87 = vector.broadcast %cst_53 : f32 to vector<64x64xf32>
    %88 = arith.mulf %86, %87 : vector<64x64xf32>
    %cst_54 = arith.constant 0.000000e+00 : f32
    %89 = vector.broadcast %cst_54 : f32 to vector<64x64xf32>
    %90 = arith.cmpf ogt, %2, %89 : vector<64x64xf32>
    %cst_55 = arith.constant -1.000000e+30 : f32
    %91 = vector.broadcast %cst_55 : f32 to vector<64x64xf32>
    %92 = arith.select %90, %88, %91 : vector<64x64xi1>, vector<64x64xf32>
    %cst_56 = arith.constant dense<0xFF800000> : vector<64xf32>
    %93 = vector.multi_reduction <maximumf>, %92, %cst_56 [1] : vector<64x64xf32> to vector<64xf32>
    %94 = vector.shape_cast %93 : vector<64xf32> to vector<64x1xf32>
    %95 = vector.broadcast %94 : vector<64x1xf32> to vector<64x64xf32>
    %96 = arith.subf %92, %95 : vector<64x64xf32>
    %97 = math.exp %96 : vector<64x64xf32>
    %98 = arith.mulf %97, %2 : vector<64x64xf32>
    %cst_57 = arith.constant dense<0.000000e+00> : vector<64xf32>
    %99 = vector.multi_reduction <add>, %98, %cst_57 [1] : vector<64x64xf32> to vector<64xf32>
    %100 = vector.shape_cast %99 : vector<64xf32> to vector<64x1xf32>
    %cst_58 = arith.constant 0.000000e+00 : f32
    %101 = vector.broadcast %cst_58 : f32 to vector<64x1xf32>
    %102 = arith.cmpf ogt, %100, %101 : vector<64x1xf32>
    %cst_59 = arith.constant 1.000000e+00 : f32
    %103 = vector.broadcast %cst_59 : f32 to vector<64x1xf32>
    %104 = arith.select %102, %100, %103 : vector<64x1xi1>, vector<64x1xf32>
    %105 = tpu.reciprocal %104 {approx = true} : vector<64x1xf32> -> vector<64x1xf32>
    %106 = vector.broadcast %105 : vector<64x1xf32> to vector<64x64xf32>
    %107 = arith.mulf %98, %106 : vector<64x64xf32>
    %cst_60 = arith.constant dense<0.000000e+00> : vector<64x16xf32>
    %108 = tpu.matmul %107, %84, %cst_60 {dimension_numbers = #tpu.dot_dimension_numbers<[1], [0], [0], [1], [0, 0, 1, 1], [], []>} : vector<64x64xf32>, vector<64x16xf32>, vector<64x16xf32> -> vector<64x16xf32>
    %109 = arith.addf %108, %85 : vector<64x16xf32>
    %cst_61 = arith.constant 0.000000e+00 : f32
    %110 = vector.broadcast %cst_61 : f32 to vector<64x16xf32>
    %111 = arith.maximumf %109, %110 : vector<64x16xf32>
    %112 = arith.addf %111, %81 : vector<64x16xf32>
    %c0_62 = arith.constant 0 : index
    %c0_63 = arith.constant 0 : index
    %113 = vector.load %arg18[%c0_62, %c0_63] : memref<16x64xf32, #tpu.memory_space<vmem>>, vector<16x64xf32>
    %c0_64 = arith.constant 0 : index
    %c0_65 = arith.constant 0 : index
    %114 = vector.load %arg19[%c0_64, %c0_65] : memref<1x64xf32, #tpu.memory_space<vmem>>, vector<1x64xf32>
    %cst_66 = arith.constant dense<0.000000e+00> : vector<64x64xf32>
    %115 = tpu.matmul %112, %113, %cst_66 {dimension_numbers = #tpu.dot_dimension_numbers<[1], [0], [0], [1], [0, 0, 1, 1], [], []>} : vector<64x16xf32>, vector<16x64xf32>, vector<64x64xf32> -> vector<64x64xf32>
    %116 = vector.broadcast %114 : vector<1x64xf32> to vector<64x64xf32>
    %117 = arith.addf %115, %116 : vector<64x64xf32>
    %118 = vector.extract_strided_slice %117 {offsets = [0, 0], sizes = [64, 16], strides = [1, 1]} : vector<64x64xf32> to vector<64x16xf32>
    %119 = vector.extract_strided_slice %117 {offsets = [0, 16], sizes = [64, 16], strides = [1, 1]} : vector<64x64xf32> to vector<64x16xf32>
    %120 = vector.extract_strided_slice %117 {offsets = [0, 32], sizes = [64, 16], strides = [1, 1]} : vector<64x64xf32> to vector<64x16xf32>
    %121 = vector.extract_strided_slice %117 {offsets = [0, 48], sizes = [64, 16], strides = [1, 1]} : vector<64x64xf32> to vector<64x16xf32>
    %cst_67 = arith.constant dense<0.000000e+00> : vector<64x64xf32>
    %122 = tpu.matmul %118, %119, %cst_67 {dimension_numbers = #tpu.dot_dimension_numbers<[1], [1], [0], [0], [0, 0, 1, 0], [], []>} : vector<64x16xf32>, vector<64x16xf32>, vector<64x64xf32> -> vector<64x64xf32>
    %cst_68 = arith.constant 2.500000e-01 : f32
    %123 = vector.broadcast %cst_68 : f32 to vector<64x64xf32>
    %124 = arith.mulf %122, %123 : vector<64x64xf32>
    %cst_69 = arith.constant 0.000000e+00 : f32
    %125 = vector.broadcast %cst_69 : f32 to vector<64x64xf32>
    %126 = arith.cmpf ogt, %2, %125 : vector<64x64xf32>
    %cst_70 = arith.constant -1.000000e+30 : f32
    %127 = vector.broadcast %cst_70 : f32 to vector<64x64xf32>
    %128 = arith.select %126, %124, %127 : vector<64x64xi1>, vector<64x64xf32>
    %cst_71 = arith.constant dense<0xFF800000> : vector<64xf32>
    %129 = vector.multi_reduction <maximumf>, %128, %cst_71 [1] : vector<64x64xf32> to vector<64xf32>
    %130 = vector.shape_cast %129 : vector<64xf32> to vector<64x1xf32>
    %131 = vector.broadcast %130 : vector<64x1xf32> to vector<64x64xf32>
    %132 = arith.subf %128, %131 : vector<64x64xf32>
    %133 = math.exp %132 : vector<64x64xf32>
    %134 = arith.mulf %133, %2 : vector<64x64xf32>
    %cst_72 = arith.constant dense<0.000000e+00> : vector<64xf32>
    %135 = vector.multi_reduction <add>, %134, %cst_72 [1] : vector<64x64xf32> to vector<64xf32>
    %136 = vector.shape_cast %135 : vector<64xf32> to vector<64x1xf32>
    %cst_73 = arith.constant 0.000000e+00 : f32
    %137 = vector.broadcast %cst_73 : f32 to vector<64x1xf32>
    %138 = arith.cmpf ogt, %136, %137 : vector<64x1xf32>
    %cst_74 = arith.constant 1.000000e+00 : f32
    %139 = vector.broadcast %cst_74 : f32 to vector<64x1xf32>
    %140 = arith.select %138, %136, %139 : vector<64x1xi1>, vector<64x1xf32>
    %141 = tpu.reciprocal %140 {approx = true} : vector<64x1xf32> -> vector<64x1xf32>
    %142 = vector.broadcast %141 : vector<64x1xf32> to vector<64x64xf32>
    %143 = arith.mulf %134, %142 : vector<64x64xf32>
    %cst_75 = arith.constant dense<0.000000e+00> : vector<64x16xf32>
    %144 = tpu.matmul %143, %120, %cst_75 {dimension_numbers = #tpu.dot_dimension_numbers<[1], [0], [0], [1], [0, 0, 1, 1], [], []>} : vector<64x64xf32>, vector<64x16xf32>, vector<64x16xf32> -> vector<64x16xf32>
    %145 = arith.addf %144, %121 : vector<64x16xf32>
    %cst_76 = arith.constant 0.000000e+00 : f32
    %146 = vector.broadcast %cst_76 : f32 to vector<64x16xf32>
    %147 = arith.maximumf %145, %146 : vector<64x16xf32>
    %148 = arith.addf %147, %112 : vector<64x16xf32>
    %c0_77 = arith.constant 0 : index
    %c0_78 = arith.constant 0 : index
    %149 = vector.load %arg20[%c0_77, %c0_78] : memref<16x64xf32, #tpu.memory_space<vmem>>, vector<16x64xf32>
    %c0_79 = arith.constant 0 : index
    %c0_80 = arith.constant 0 : index
    %150 = vector.load %arg21[%c0_79, %c0_80] : memref<1x64xf32, #tpu.memory_space<vmem>>, vector<1x64xf32>
    %cst_81 = arith.constant dense<0.000000e+00> : vector<64x64xf32>
    %151 = tpu.matmul %148, %149, %cst_81 {dimension_numbers = #tpu.dot_dimension_numbers<[1], [0], [0], [1], [0, 0, 1, 1], [], []>} : vector<64x16xf32>, vector<16x64xf32>, vector<64x64xf32> -> vector<64x64xf32>
    %152 = vector.broadcast %150 : vector<1x64xf32> to vector<64x64xf32>
    %153 = arith.addf %151, %152 : vector<64x64xf32>
    %154 = vector.extract_strided_slice %153 {offsets = [0, 0], sizes = [64, 16], strides = [1, 1]} : vector<64x64xf32> to vector<64x16xf32>
    %155 = vector.extract_strided_slice %153 {offsets = [0, 16], sizes = [64, 16], strides = [1, 1]} : vector<64x64xf32> to vector<64x16xf32>
    %156 = vector.extract_strided_slice %153 {offsets = [0, 32], sizes = [64, 16], strides = [1, 1]} : vector<64x64xf32> to vector<64x16xf32>
    %157 = vector.extract_strided_slice %153 {offsets = [0, 48], sizes = [64, 16], strides = [1, 1]} : vector<64x64xf32> to vector<64x16xf32>
    %cst_82 = arith.constant dense<0.000000e+00> : vector<64x64xf32>
    %158 = tpu.matmul %154, %155, %cst_82 {dimension_numbers = #tpu.dot_dimension_numbers<[1], [1], [0], [0], [0, 0, 1, 0], [], []>} : vector<64x16xf32>, vector<64x16xf32>, vector<64x64xf32> -> vector<64x64xf32>
    %cst_83 = arith.constant 2.500000e-01 : f32
    %159 = vector.broadcast %cst_83 : f32 to vector<64x64xf32>
    %160 = arith.mulf %158, %159 : vector<64x64xf32>
    %cst_84 = arith.constant 0.000000e+00 : f32
    %161 = vector.broadcast %cst_84 : f32 to vector<64x64xf32>
    %162 = arith.cmpf ogt, %2, %161 : vector<64x64xf32>
    %cst_85 = arith.constant -1.000000e+30 : f32
    %163 = vector.broadcast %cst_85 : f32 to vector<64x64xf32>
    %164 = arith.select %162, %160, %163 : vector<64x64xi1>, vector<64x64xf32>
    %cst_86 = arith.constant dense<0xFF800000> : vector<64xf32>
    %165 = vector.multi_reduction <maximumf>, %164, %cst_86 [1] : vector<64x64xf32> to vector<64xf32>
    %166 = vector.shape_cast %165 : vector<64xf32> to vector<64x1xf32>
    %167 = vector.broadcast %166 : vector<64x1xf32> to vector<64x64xf32>
    %168 = arith.subf %164, %167 : vector<64x64xf32>
    %169 = math.exp %168 : vector<64x64xf32>
    %170 = arith.mulf %169, %2 : vector<64x64xf32>
    %cst_87 = arith.constant dense<0.000000e+00> : vector<64xf32>
    %171 = vector.multi_reduction <add>, %170, %cst_87 [1] : vector<64x64xf32> to vector<64xf32>
    %172 = vector.shape_cast %171 : vector<64xf32> to vector<64x1xf32>
    %cst_88 = arith.constant 0.000000e+00 : f32
    %173 = vector.broadcast %cst_88 : f32 to vector<64x1xf32>
    %174 = arith.cmpf ogt, %172, %173 : vector<64x1xf32>
    %cst_89 = arith.constant 1.000000e+00 : f32
    %175 = vector.broadcast %cst_89 : f32 to vector<64x1xf32>
    %176 = arith.select %174, %172, %175 : vector<64x1xi1>, vector<64x1xf32>
    %177 = tpu.reciprocal %176 {approx = true} : vector<64x1xf32> -> vector<64x1xf32>
    %178 = vector.broadcast %177 : vector<64x1xf32> to vector<64x64xf32>
    %179 = arith.mulf %170, %178 : vector<64x64xf32>
    %cst_90 = arith.constant dense<0.000000e+00> : vector<64x16xf32>
    %180 = tpu.matmul %179, %156, %cst_90 {dimension_numbers = #tpu.dot_dimension_numbers<[1], [0], [0], [1], [0, 0, 1, 1], [], []>} : vector<64x64xf32>, vector<64x16xf32>, vector<64x16xf32> -> vector<64x16xf32>
    %181 = arith.addf %180, %157 : vector<64x16xf32>
    %cst_91 = arith.constant 0.000000e+00 : f32
    %182 = vector.broadcast %cst_91 : f32 to vector<64x16xf32>
    %183 = arith.maximumf %181, %182 : vector<64x16xf32>
    %184 = arith.addf %183, %148 : vector<64x16xf32>
    %c0_92 = arith.constant 0 : index
    %c0_93 = arith.constant 0 : index
    %185 = vector.load %arg22[%c0_92, %c0_93] : memref<16x64xf32, #tpu.memory_space<vmem>>, vector<16x64xf32>
    %c0_94 = arith.constant 0 : index
    %c0_95 = arith.constant 0 : index
    %186 = vector.load %arg23[%c0_94, %c0_95] : memref<1x64xf32, #tpu.memory_space<vmem>>, vector<1x64xf32>
    %cst_96 = arith.constant dense<0.000000e+00> : vector<64x64xf32>
    %187 = tpu.matmul %184, %185, %cst_96 {dimension_numbers = #tpu.dot_dimension_numbers<[1], [0], [0], [1], [0, 0, 1, 1], [], []>} : vector<64x16xf32>, vector<16x64xf32>, vector<64x64xf32> -> vector<64x64xf32>
    %188 = vector.broadcast %186 : vector<1x64xf32> to vector<64x64xf32>
    %189 = arith.addf %187, %188 : vector<64x64xf32>
    %190 = vector.extract_strided_slice %189 {offsets = [0, 0], sizes = [64, 16], strides = [1, 1]} : vector<64x64xf32> to vector<64x16xf32>
    %191 = vector.extract_strided_slice %189 {offsets = [0, 16], sizes = [64, 16], strides = [1, 1]} : vector<64x64xf32> to vector<64x16xf32>
    %192 = vector.extract_strided_slice %189 {offsets = [0, 32], sizes = [64, 16], strides = [1, 1]} : vector<64x64xf32> to vector<64x16xf32>
    %193 = vector.extract_strided_slice %189 {offsets = [0, 48], sizes = [64, 16], strides = [1, 1]} : vector<64x64xf32> to vector<64x16xf32>
    %cst_97 = arith.constant dense<0.000000e+00> : vector<64x64xf32>
    %194 = tpu.matmul %190, %191, %cst_97 {dimension_numbers = #tpu.dot_dimension_numbers<[1], [1], [0], [0], [0, 0, 1, 0], [], []>} : vector<64x16xf32>, vector<64x16xf32>, vector<64x64xf32> -> vector<64x64xf32>
    %cst_98 = arith.constant 2.500000e-01 : f32
    %195 = vector.broadcast %cst_98 : f32 to vector<64x64xf32>
    %196 = arith.mulf %194, %195 : vector<64x64xf32>
    %cst_99 = arith.constant 0.000000e+00 : f32
    %197 = vector.broadcast %cst_99 : f32 to vector<64x64xf32>
    %198 = arith.cmpf ogt, %2, %197 : vector<64x64xf32>
    %cst_100 = arith.constant -1.000000e+30 : f32
    %199 = vector.broadcast %cst_100 : f32 to vector<64x64xf32>
    %200 = arith.select %198, %196, %199 : vector<64x64xi1>, vector<64x64xf32>
    %cst_101 = arith.constant dense<0xFF800000> : vector<64xf32>
    %201 = vector.multi_reduction <maximumf>, %200, %cst_101 [1] : vector<64x64xf32> to vector<64xf32>
    %202 = vector.shape_cast %201 : vector<64xf32> to vector<64x1xf32>
    %203 = vector.broadcast %202 : vector<64x1xf32> to vector<64x64xf32>
    %204 = arith.subf %200, %203 : vector<64x64xf32>
    %205 = math.exp %204 : vector<64x64xf32>
    %206 = arith.mulf %205, %2 : vector<64x64xf32>
    %cst_102 = arith.constant dense<0.000000e+00> : vector<64xf32>
    %207 = vector.multi_reduction <add>, %206, %cst_102 [1] : vector<64x64xf32> to vector<64xf32>
    %208 = vector.shape_cast %207 : vector<64xf32> to vector<64x1xf32>
    %cst_103 = arith.constant 0.000000e+00 : f32
    %209 = vector.broadcast %cst_103 : f32 to vector<64x1xf32>
    %210 = arith.cmpf ogt, %208, %209 : vector<64x1xf32>
    %cst_104 = arith.constant 1.000000e+00 : f32
    %211 = vector.broadcast %cst_104 : f32 to vector<64x1xf32>
    %212 = arith.select %210, %208, %211 : vector<64x1xi1>, vector<64x1xf32>
    %213 = tpu.reciprocal %212 {approx = true} : vector<64x1xf32> -> vector<64x1xf32>
    %214 = vector.broadcast %213 : vector<64x1xf32> to vector<64x64xf32>
    %215 = arith.mulf %206, %214 : vector<64x64xf32>
    %cst_105 = arith.constant dense<0.000000e+00> : vector<64x16xf32>
    %216 = tpu.matmul %215, %192, %cst_105 {dimension_numbers = #tpu.dot_dimension_numbers<[1], [0], [0], [1], [0, 0, 1, 1], [], []>} : vector<64x64xf32>, vector<64x16xf32>, vector<64x16xf32> -> vector<64x16xf32>
    %217 = arith.addf %216, %193 : vector<64x16xf32>
    %cst_106 = arith.constant 0.000000e+00 : f32
    %218 = vector.broadcast %cst_106 : f32 to vector<64x16xf32>
    %219 = arith.maximumf %217, %218 : vector<64x16xf32>
    %220 = arith.addf %219, %184 : vector<64x16xf32>
    %c0_107 = arith.constant 0 : index
    %c0_108 = arith.constant 0 : index
    %221 = vector.load %arg24[%c0_107, %c0_108] : memref<16x16xf32, #tpu.memory_space<vmem>>, vector<16x16xf32>
    %c0_109 = arith.constant 0 : index
    %c0_110 = arith.constant 0 : index
    %222 = vector.load %arg25[%c0_109, %c0_110] : memref<16x16xf32, #tpu.memory_space<vmem>>, vector<16x16xf32>
    %c0_111 = arith.constant 0 : index
    %c0_112 = arith.constant 0 : index
    %223 = vector.load %arg26[%c0_111, %c0_112] : memref<1x16xf32, #tpu.memory_space<vmem>>, vector<1x16xf32>
    %c0_113 = arith.constant 0 : index
    %c0_114 = arith.constant 0 : index
    %224 = vector.load %arg27[%c0_113, %c0_114] : memref<1x16xf32, #tpu.memory_space<vmem>>, vector<1x16xf32>
    %c0_115 = arith.constant 0 : index
    %c0_116 = arith.constant 0 : index
    %225 = vector.load %arg28[%c0_115, %c0_116] : memref<1x16xf32, #tpu.memory_space<vmem>>, vector<1x16xf32>
    %cst_117 = arith.constant dense<0.000000e+00> : vector<64x16xf32>
    %226 = tpu.matmul %220, %221, %cst_117 {dimension_numbers = #tpu.dot_dimension_numbers<[1], [0], [0], [1], [0, 0, 1, 1], [], []>} : vector<64x16xf32>, vector<16x16xf32>, vector<64x16xf32> -> vector<64x16xf32>
    %cst_118 = arith.constant dense<0.000000e+00> : vector<64x16xf32>
    %227 = tpu.matmul %65, %222, %cst_118 {dimension_numbers = #tpu.dot_dimension_numbers<[1], [0], [0], [1], [0, 0, 1, 1], [], []>} : vector<64x16xf32>, vector<16x16xf32>, vector<64x16xf32> -> vector<64x16xf32>
    %228 = arith.addf %226, %227 : vector<64x16xf32>
    %229 = vector.broadcast %223 : vector<1x16xf32> to vector<64x16xf32>
    %230 = arith.addf %228, %229 : vector<64x16xf32>
    %cst_119 = arith.constant 0.000000e+00 : f32
    %231 = vector.broadcast %cst_119 : f32 to vector<64x16xf32>
    %232 = arith.maximumf %230, %231 : vector<64x16xf32>
    %cst_120 = arith.constant dense<0.000000e+00> : vector<64xf32>
    %233 = vector.multi_reduction <add>, %232, %cst_120 [1] : vector<64x16xf32> to vector<64xf32>
    %234 = vector.shape_cast %233 : vector<64xf32> to vector<64x1xf32>
    %cst_121 = arith.constant 1.600000e+01 : f32
    %235 = vector.broadcast %cst_121 : f32 to vector<64x1xf32>
    %236 = arith.divf %234, %235 : vector<64x1xf32>
    %237 = vector.broadcast %236 : vector<64x1xf32> to vector<64x16xf32>
    %238 = arith.subf %232, %237 : vector<64x16xf32>
    %239 = arith.mulf %238, %238 : vector<64x16xf32>
    %cst_122 = arith.constant dense<0.000000e+00> : vector<64xf32>
    %240 = vector.multi_reduction <add>, %239, %cst_122 [1] : vector<64x16xf32> to vector<64xf32>
    %241 = vector.shape_cast %240 : vector<64xf32> to vector<64x1xf32>
    %cst_123 = arith.constant 1.600000e+01 : f32
    %242 = vector.broadcast %cst_123 : f32 to vector<64x1xf32>
    %243 = arith.divf %241, %242 : vector<64x1xf32>
    %244 = vector.broadcast %236 : vector<64x1xf32> to vector<64x16xf32>
    %245 = arith.subf %232, %244 : vector<64x16xf32>
    %cst_124 = arith.constant 9.99999974E-6 : f32
    %246 = vector.broadcast %cst_124 : f32 to vector<64x1xf32>
    %247 = arith.addf %243, %246 : vector<64x1xf32>
    %248 = math.rsqrt %247 : vector<64x1xf32>
    %249 = vector.broadcast %248 : vector<64x1xf32> to vector<64x16xf32>
    %250 = arith.mulf %245, %249 : vector<64x16xf32>
    %251 = vector.broadcast %224 : vector<1x16xf32> to vector<64x16xf32>
    %252 = arith.mulf %250, %251 : vector<64x16xf32>
    %253 = vector.broadcast %225 : vector<1x16xf32> to vector<64x16xf32>
    %254 = arith.addf %252, %253 : vector<64x16xf32>
    %c0_125 = arith.constant 0 : index
    %c0_126 = arith.constant 0 : index
    %255 = vector.load %arg29[%c0_125, %c0_126] : memref<16x32xf32, #tpu.memory_space<vmem>>, vector<16x32xf32>
    %c0_127 = arith.constant 0 : index
    %c0_128 = arith.constant 0 : index
    %256 = vector.load %arg30[%c0_127, %c0_128] : memref<1x32xf32, #tpu.memory_space<vmem>>, vector<1x32xf32>
    %cst_129 = arith.constant dense<0.000000e+00> : vector<64x32xf32>
    %257 = tpu.matmul %254, %255, %cst_129 {dimension_numbers = #tpu.dot_dimension_numbers<[1], [0], [0], [1], [0, 0, 1, 1], [], []>} : vector<64x16xf32>, vector<16x32xf32>, vector<64x32xf32> -> vector<64x32xf32>
    %258 = vector.broadcast %256 : vector<1x32xf32> to vector<64x32xf32>
    %259 = arith.addf %257, %258 : vector<64x32xf32>
    %c0_130 = arith.constant 0 : index
    %c0_131 = arith.constant 0 : index
    %260 = vector.load %arg31[%c0_130, %c0_131] : memref<32x96xf32, #tpu.memory_space<vmem>>, vector<32x96xf32>
    %c0_132 = arith.constant 0 : index
    %c0_133 = arith.constant 0 : index
    %261 = vector.load %arg32[%c0_132, %c0_133] : memref<1x96xf32, #tpu.memory_space<vmem>>, vector<1x96xf32>
    %c0_134 = arith.constant 0 : index
    %c0_135 = arith.constant 0 : index
    %262 = vector.load %arg33[%c0_134, %c0_135] : memref<32x32xf32, #tpu.memory_space<vmem>>, vector<32x32xf32>
    %c0_136 = arith.constant 0 : index
    %c0_137 = arith.constant 0 : index
    %263 = vector.load %arg34[%c0_136, %c0_137] : memref<1x32xf32, #tpu.memory_space<vmem>>, vector<1x32xf32>
    %cst_138 = arith.constant dense<0.000000e+00> : vector<64x96xf32>
    %264 = tpu.matmul %34, %260, %cst_138 {dimension_numbers = #tpu.dot_dimension_numbers<[1], [0], [0], [1], [0, 0, 1, 1], [], []>} : vector<64x32xf32>, vector<32x96xf32>, vector<64x96xf32> -> vector<64x96xf32>
    %265 = vector.broadcast %261 : vector<1x96xf32> to vector<64x96xf32>
    %266 = arith.addf %264, %265 : vector<64x96xf32>
    %267 = vector.extract_strided_slice %266 {offsets = [0, 0], sizes = [64, 32], strides = [1, 1]} : vector<64x96xf32> to vector<64x32xf32>
    %268 = vector.extract_strided_slice %266 {offsets = [0, 32], sizes = [64, 32], strides = [1, 1]} : vector<64x96xf32> to vector<64x32xf32>
    %269 = vector.extract_strided_slice %266 {offsets = [0, 64], sizes = [64, 32], strides = [1, 1]} : vector<64x96xf32> to vector<64x32xf32>
    %cst_139 = arith.constant dense<0.000000e+00> : vector<64x64xf32>
    %270 = tpu.matmul %267, %268, %cst_139 {dimension_numbers = #tpu.dot_dimension_numbers<[1], [1], [0], [0], [0, 0, 1, 0], [], []>} : vector<64x32xf32>, vector<64x32xf32>, vector<64x64xf32> -> vector<64x64xf32>
    %cst_140 = arith.constant 0.176776692 : f32
    %271 = vector.broadcast %cst_140 : f32 to vector<64x64xf32>
    %272 = arith.mulf %270, %271 : vector<64x64xf32>
    %cst_141 = arith.constant 0.000000e+00 : f32
    %273 = vector.broadcast %cst_141 : f32 to vector<64x64xf32>
    %274 = arith.cmpf ogt, %3, %273 : vector<64x64xf32>
    %cst_142 = arith.constant -1.000000e+30 : f32
    %275 = vector.broadcast %cst_142 : f32 to vector<64x64xf32>
    %276 = arith.select %274, %272, %275 : vector<64x64xi1>, vector<64x64xf32>
    %cst_143 = arith.constant dense<0xFF800000> : vector<64xf32>
    %277 = vector.multi_reduction <maximumf>, %276, %cst_143 [1] : vector<64x64xf32> to vector<64xf32>
    %278 = vector.shape_cast %277 : vector<64xf32> to vector<64x1xf32>
    %279 = vector.broadcast %278 : vector<64x1xf32> to vector<64x64xf32>
    %280 = arith.subf %276, %279 : vector<64x64xf32>
    %281 = math.exp %280 : vector<64x64xf32>
    %282 = arith.mulf %281, %3 : vector<64x64xf32>
    %cst_144 = arith.constant dense<0.000000e+00> : vector<64xf32>
    %283 = vector.multi_reduction <add>, %282, %cst_144 [1] : vector<64x64xf32> to vector<64xf32>
    %284 = vector.shape_cast %283 : vector<64xf32> to vector<64x1xf32>
    %cst_145 = arith.constant 0.000000e+00 : f32
    %285 = vector.broadcast %cst_145 : f32 to vector<64x1xf32>
    %286 = arith.cmpf ogt, %284, %285 : vector<64x1xf32>
    %cst_146 = arith.constant 1.000000e+00 : f32
    %287 = vector.broadcast %cst_146 : f32 to vector<64x1xf32>
    %288 = arith.select %286, %284, %287 : vector<64x1xi1>, vector<64x1xf32>
    %289 = tpu.reciprocal %288 {approx = true} : vector<64x1xf32> -> vector<64x1xf32>
    %290 = vector.broadcast %289 : vector<64x1xf32> to vector<64x64xf32>
    %291 = arith.mulf %282, %290 : vector<64x64xf32>
    %cst_147 = arith.constant dense<0.000000e+00> : vector<64x32xf32>
    %292 = tpu.matmul %291, %269, %cst_147 {dimension_numbers = #tpu.dot_dimension_numbers<[1], [0], [0], [1], [0, 0, 1, 1], [], []>} : vector<64x64xf32>, vector<64x32xf32>, vector<64x32xf32> -> vector<64x32xf32>
    %cst_148 = arith.constant dense<0.000000e+00> : vector<64x32xf32>
    %293 = tpu.matmul %292, %262, %cst_148 {dimension_numbers = #tpu.dot_dimension_numbers<[1], [0], [0], [1], [0, 0, 1, 1], [], []>} : vector<64x32xf32>, vector<32x32xf32>, vector<64x32xf32> -> vector<64x32xf32>
    %294 = vector.broadcast %263 : vector<1x32xf32> to vector<64x32xf32>
    %295 = arith.addf %293, %294 : vector<64x32xf32>
    %c0_149 = arith.constant 0 : index
    %c0_150 = arith.constant 0 : index
    %296 = vector.load %arg35[%c0_149, %c0_150] : memref<32x32xf32, #tpu.memory_space<vmem>>, vector<32x32xf32>
    %c0_151 = arith.constant 0 : index
    %c0_152 = arith.constant 0 : index
    %297 = vector.load %arg36[%c0_151, %c0_152] : memref<32x32xf32, #tpu.memory_space<vmem>>, vector<32x32xf32>
    %c0_153 = arith.constant 0 : index
    %c0_154 = arith.constant 0 : index
    %298 = vector.load %arg37[%c0_153, %c0_154] : memref<32x32xf32, #tpu.memory_space<vmem>>, vector<32x32xf32>
    %c0_155 = arith.constant 0 : index
    %c0_156 = arith.constant 0 : index
    %299 = vector.load %arg38[%c0_155, %c0_156] : memref<1x32xf32, #tpu.memory_space<vmem>>, vector<1x32xf32>
    %c0_157 = arith.constant 0 : index
    %c0_158 = arith.constant 0 : index
    %300 = vector.load %arg39[%c0_157, %c0_158] : memref<1x32xf32, #tpu.memory_space<vmem>>, vector<1x32xf32>
    %c0_159 = arith.constant 0 : index
    %c0_160 = arith.constant 0 : index
    %301 = vector.load %arg40[%c0_159, %c0_160] : memref<1x32xf32, #tpu.memory_space<vmem>>, vector<1x32xf32>
    %cst_161 = arith.constant dense<0.000000e+00> : vector<64x32xf32>
    %302 = tpu.matmul %259, %296, %cst_161 {dimension_numbers = #tpu.dot_dimension_numbers<[1], [0], [0], [1], [0, 0, 1, 1], [], []>} : vector<64x32xf32>, vector<32x32xf32>, vector<64x32xf32> -> vector<64x32xf32>
    %cst_162 = arith.constant dense<0.000000e+00> : vector<64x32xf32>
    %303 = tpu.matmul %34, %297, %cst_162 {dimension_numbers = #tpu.dot_dimension_numbers<[1], [0], [0], [1], [0, 0, 1, 1], [], []>} : vector<64x32xf32>, vector<32x32xf32>, vector<64x32xf32> -> vector<64x32xf32>
    %304 = arith.addf %302, %303 : vector<64x32xf32>
    %cst_163 = arith.constant dense<0.000000e+00> : vector<64x32xf32>
    %305 = tpu.matmul %295, %298, %cst_163 {dimension_numbers = #tpu.dot_dimension_numbers<[1], [0], [0], [1], [0, 0, 1, 1], [], []>} : vector<64x32xf32>, vector<32x32xf32>, vector<64x32xf32> -> vector<64x32xf32>
    %306 = arith.addf %304, %305 : vector<64x32xf32>
    %307 = vector.broadcast %299 : vector<1x32xf32> to vector<64x32xf32>
    %308 = arith.addf %306, %307 : vector<64x32xf32>
    %cst_164 = arith.constant 0.000000e+00 : f32
    %309 = vector.broadcast %cst_164 : f32 to vector<64x32xf32>
    %310 = arith.maximumf %308, %309 : vector<64x32xf32>
    %cst_165 = arith.constant dense<0.000000e+00> : vector<64xf32>
    %311 = vector.multi_reduction <add>, %310, %cst_165 [1] : vector<64x32xf32> to vector<64xf32>
    %312 = vector.shape_cast %311 : vector<64xf32> to vector<64x1xf32>
    %cst_166 = arith.constant 3.200000e+01 : f32
    %313 = vector.broadcast %cst_166 : f32 to vector<64x1xf32>
    %314 = arith.divf %312, %313 : vector<64x1xf32>
    %315 = vector.broadcast %314 : vector<64x1xf32> to vector<64x32xf32>
    %316 = arith.subf %310, %315 : vector<64x32xf32>
    %317 = arith.mulf %316, %316 : vector<64x32xf32>
    %cst_167 = arith.constant dense<0.000000e+00> : vector<64xf32>
    %318 = vector.multi_reduction <add>, %317, %cst_167 [1] : vector<64x32xf32> to vector<64xf32>
    %319 = vector.shape_cast %318 : vector<64xf32> to vector<64x1xf32>
    %cst_168 = arith.constant 3.200000e+01 : f32
    %320 = vector.broadcast %cst_168 : f32 to vector<64x1xf32>
    %321 = arith.divf %319, %320 : vector<64x1xf32>
    %322 = vector.broadcast %314 : vector<64x1xf32> to vector<64x32xf32>
    %323 = arith.subf %310, %322 : vector<64x32xf32>
    %cst_169 = arith.constant 9.99999974E-6 : f32
    %324 = vector.broadcast %cst_169 : f32 to vector<64x1xf32>
    %325 = arith.addf %321, %324 : vector<64x1xf32>
    %326 = math.rsqrt %325 : vector<64x1xf32>
    %327 = vector.broadcast %326 : vector<64x1xf32> to vector<64x32xf32>
    %328 = arith.mulf %323, %327 : vector<64x32xf32>
    %329 = vector.broadcast %300 : vector<1x32xf32> to vector<64x32xf32>
    %330 = arith.mulf %328, %329 : vector<64x32xf32>
    %331 = vector.broadcast %301 : vector<1x32xf32> to vector<64x32xf32>
    %332 = arith.addf %330, %331 : vector<64x32xf32>
    %c0_170 = arith.constant 0 : index
    %c0_171 = arith.constant 0 : index
    %333 = vector.load %arg41[%c0_170, %c0_171] : memref<32x128xf32, #tpu.memory_space<vmem>>, vector<32x128xf32>
    %c0_172 = arith.constant 0 : index
    %c0_173 = arith.constant 0 : index
    %334 = vector.load %arg42[%c0_172, %c0_173] : memref<1x128xf32, #tpu.memory_space<vmem>>, vector<1x128xf32>
    %c0_174 = arith.constant 0 : index
    %c0_175 = arith.constant 0 : index
    %335 = vector.load %arg43[%c0_174, %c0_175] : memref<1x64xf32, #tpu.memory_space<vmem>>, vector<1x64xf32>
    %c0_176 = arith.constant 0 : index
    %c0_177 = arith.constant 0 : index
    %336 = vector.load %arg44[%c0_176, %c0_177] : memref<1x64xf32, #tpu.memory_space<vmem>>, vector<1x64xf32>
    %c0_178 = arith.constant 0 : index
    %c0_179 = arith.constant 0 : index
    %337 = vector.load %arg45[%c0_178, %c0_179] : memref<1x64xf32, #tpu.memory_space<vmem>>, vector<1x64xf32>
    %c0_180 = arith.constant 0 : index
    %c0_181 = arith.constant 0 : index
    %338 = vector.load %arg46[%c0_180, %c0_181] : memref<1x64xf32, #tpu.memory_space<vmem>>, vector<1x64xf32>
    %cst_182 = arith.constant dense<0.000000e+00> : vector<64x128xf32>
    %339 = tpu.matmul %332, %333, %cst_182 {dimension_numbers = #tpu.dot_dimension_numbers<[1], [0], [0], [1], [0, 0, 1, 1], [], []>} : vector<64x32xf32>, vector<32x128xf32>, vector<64x128xf32> -> vector<64x128xf32>
    %340 = vector.broadcast %334 : vector<1x128xf32> to vector<64x128xf32>
    %341 = arith.addf %339, %340 : vector<64x128xf32>
    %342 = vector.extract_strided_slice %341 {offsets = [0, 0], sizes = [64, 64], strides = [1, 1]} : vector<64x128xf32> to vector<64x64xf32>
    %cst_183 = arith.constant 0.000000e+00 : f32
    %343 = vector.broadcast %cst_183 : f32 to vector<64x64xf32>
    %344 = arith.maximumf %342, %343 : vector<64x64xf32>
    %cst_184 = arith.constant dense<0.000000e+00> : vector<64xf32>
    %345 = vector.multi_reduction <add>, %344, %cst_184 [1] : vector<64x64xf32> to vector<64xf32>
    %346 = vector.shape_cast %345 : vector<64xf32> to vector<64x1xf32>
    %cst_185 = arith.constant 6.400000e+01 : f32
    %347 = vector.broadcast %cst_185 : f32 to vector<64x1xf32>
    %348 = arith.divf %346, %347 : vector<64x1xf32>
    %349 = vector.broadcast %348 : vector<64x1xf32> to vector<64x64xf32>
    %350 = arith.subf %344, %349 : vector<64x64xf32>
    %351 = arith.mulf %350, %350 : vector<64x64xf32>
    %cst_186 = arith.constant dense<0.000000e+00> : vector<64xf32>
    %352 = vector.multi_reduction <add>, %351, %cst_186 [1] : vector<64x64xf32> to vector<64xf32>
    %353 = vector.shape_cast %352 : vector<64xf32> to vector<64x1xf32>
    %cst_187 = arith.constant 6.400000e+01 : f32
    %354 = vector.broadcast %cst_187 : f32 to vector<64x1xf32>
    %355 = arith.divf %353, %354 : vector<64x1xf32>
    %356 = vector.broadcast %348 : vector<64x1xf32> to vector<64x64xf32>
    %357 = arith.subf %344, %356 : vector<64x64xf32>
    %cst_188 = arith.constant 9.99999974E-6 : f32
    %358 = vector.broadcast %cst_188 : f32 to vector<64x1xf32>
    %359 = arith.addf %355, %358 : vector<64x1xf32>
    %360 = math.rsqrt %359 : vector<64x1xf32>
    %361 = vector.broadcast %360 : vector<64x1xf32> to vector<64x64xf32>
    %362 = arith.mulf %357, %361 : vector<64x64xf32>
    %363 = vector.broadcast %335 : vector<1x64xf32> to vector<64x64xf32>
    %364 = arith.mulf %362, %363 : vector<64x64xf32>
    %365 = vector.broadcast %336 : vector<1x64xf32> to vector<64x64xf32>
    %366 = arith.addf %364, %365 : vector<64x64xf32>
    %367 = vector.extract_strided_slice %341 {offsets = [0, 64], sizes = [64, 64], strides = [1, 1]} : vector<64x128xf32> to vector<64x64xf32>
    %cst_189 = arith.constant 0.000000e+00 : f32
    %368 = vector.broadcast %cst_189 : f32 to vector<64x64xf32>
    %369 = arith.maximumf %367, %368 : vector<64x64xf32>
    %cst_190 = arith.constant dense<0.000000e+00> : vector<64xf32>
    %370 = vector.multi_reduction <add>, %369, %cst_190 [1] : vector<64x64xf32> to vector<64xf32>
    %371 = vector.shape_cast %370 : vector<64xf32> to vector<64x1xf32>
    %cst_191 = arith.constant 6.400000e+01 : f32
    %372 = vector.broadcast %cst_191 : f32 to vector<64x1xf32>
    %373 = arith.divf %371, %372 : vector<64x1xf32>
    %374 = vector.broadcast %373 : vector<64x1xf32> to vector<64x64xf32>
    %375 = arith.subf %369, %374 : vector<64x64xf32>
    %376 = arith.mulf %375, %375 : vector<64x64xf32>
    %cst_192 = arith.constant dense<0.000000e+00> : vector<64xf32>
    %377 = vector.multi_reduction <add>, %376, %cst_192 [1] : vector<64x64xf32> to vector<64xf32>
    %378 = vector.shape_cast %377 : vector<64xf32> to vector<64x1xf32>
    %cst_193 = arith.constant 6.400000e+01 : f32
    %379 = vector.broadcast %cst_193 : f32 to vector<64x1xf32>
    %380 = arith.divf %378, %379 : vector<64x1xf32>
    %381 = vector.broadcast %373 : vector<64x1xf32> to vector<64x64xf32>
    %382 = arith.subf %369, %381 : vector<64x64xf32>
    %cst_194 = arith.constant 9.99999974E-6 : f32
    %383 = vector.broadcast %cst_194 : f32 to vector<64x1xf32>
    %384 = arith.addf %380, %383 : vector<64x1xf32>
    %385 = math.rsqrt %384 : vector<64x1xf32>
    %386 = vector.broadcast %385 : vector<64x1xf32> to vector<64x64xf32>
    %387 = arith.mulf %382, %386 : vector<64x64xf32>
    %388 = vector.broadcast %337 : vector<1x64xf32> to vector<64x64xf32>
    %389 = arith.mulf %387, %388 : vector<64x64xf32>
    %390 = vector.broadcast %338 : vector<1x64xf32> to vector<64x64xf32>
    %391 = arith.addf %389, %390 : vector<64x64xf32>
    %c0_195 = arith.constant 0 : index
    %c0_196 = arith.constant 0 : index
    %392 = vector.load %arg47[%c0_195, %c0_196] : memref<64x8xf32, #tpu.memory_space<vmem>>, vector<64x8xf32>
    %c0_197 = arith.constant 0 : index
    %c0_198 = arith.constant 0 : index
    %393 = vector.load %arg48[%c0_197, %c0_198] : memref<1x8xf32, #tpu.memory_space<vmem>>, vector<1x8xf32>
    %cst_199 = arith.constant dense<0.000000e+00> : vector<64x8xf32>
    %394 = tpu.matmul %366, %392, %cst_199 {dimension_numbers = #tpu.dot_dimension_numbers<[1], [0], [0], [1], [0, 0, 1, 1], [], []>} : vector<64x64xf32>, vector<64x8xf32>, vector<64x8xf32> -> vector<64x8xf32>
    %395 = vector.broadcast %393 : vector<1x8xf32> to vector<64x8xf32>
    %396 = arith.addf %394, %395 : vector<64x8xf32>
    %c0_200 = arith.constant 0 : index
    %c0_201 = arith.constant 0 : index
    %397 = vector.load %arg51[%c0_200, %c0_201] : memref<64x8xf32, #tpu.memory_space<vmem>>, vector<64x8xf32>
    tpu.vector_store %arg51[%c0_200, %c0_201], %396 {strides = array<i32>} : memref<64x8xf32, #tpu.memory_space<vmem>>, vector<64x8xf32>,
    %c0_202 = arith.constant 0 : index
    %c0_203 = arith.constant 0 : index
    %398 = vector.load %arg49[%c0_202, %c0_203] : memref<64x1xf32, #tpu.memory_space<vmem>>, vector<64x1xf32>
    %c0_204 = arith.constant 0 : index
    %c0_205 = arith.constant 0 : index
    %399 = vector.load %arg50[%c0_204, %c0_205] : memref<1x1xf32, #tpu.memory_space<vmem>>, vector<1x1xf32>
    %cst_206 = arith.constant dense<0.000000e+00> : vector<64x1xf32>
    %400 = tpu.matmul %391, %398, %cst_206 {dimension_numbers = #tpu.dot_dimension_numbers<[1], [0], [0], [1], [0, 0, 1, 1], [], []>} : vector<64x64xf32>, vector<64x1xf32>, vector<64x1xf32> -> vector<64x1xf32>
    %401 = vector.broadcast %399 : vector<1x1xf32> to vector<64x1xf32>
    %402 = arith.addf %400, %401 : vector<64x1xf32>
    %c0_207 = arith.constant 0 : index
    %c0_208 = arith.constant 0 : index
    %403 = vector.load %arg52[%c0_207, %c0_208] : memref<64x1xf32, #tpu.memory_space<vmem>>, vector<64x1xf32>
    tpu.vector_store %arg52[%c0_207, %c0_208], %402 {strides = array<i32>} : memref<64x1xf32, #tpu.memory_space<vmem>>, vector<64x1xf32>,
    return
  }
}

</mosaic_0001>

<llo_original>
// kernel: forward.1
$region0: #{forward.1}
  #allocation0 [shape = 'u32[]', space=smem, size = 0x4, offset = 0x4, fixed_abs, tag = 'smem constant byte address 0x4 - core index']
  #allocation1 [shape = 'u32[144,128]{1,0:T(1,128)}', space=vmem, size = 0x12000, scoped, tag = 'internal scratch']
  #allocation2 [shape = 'f32[1,1]{1,0:T(1,128)S(1)}', space=vmem, size = 0x200, scoped, tag = 'scoped memory for forward.1']
  %s0 = inlined_call_operand.smem [shape: u32[53], index: -1, kind: input, shape index: {}]
  %s1 = sld [smem:[%s0]]
  %s2 = scalar_lea.smem %s0, 1
  %s3 = sld [smem:[%s2]]
  %s4 = scalar_lea.smem %s0, 2
  %s5 = sld [smem:[%s4]]
  %s6 = scalar_lea.smem %s0, 3
  %s7 = sld [smem:[%s6]]
  %s8 = scalar_lea.smem %s0, 4
  %s9 = sld [smem:[%s8]]
  %s10 = scalar_lea.smem %s0, 5
  %s11 = sld [smem:[%s10]]
  %s12 = scalar_lea.smem %s0, 6
  %s13 = sld [smem:[%s12]]
  %s14 = scalar_lea.smem %s0, 7
  %s15 = sld [smem:[%s14]]
  %s16 = scalar_lea.smem %s0, 8
  %s17 = sld [smem:[%s16]]
  %s18 = scalar_lea.smem %s0, 9
  %s19 = sld [smem:[%s18]]
  %s20 = scalar_lea.smem %s0, 10
  %s21 = sld [smem:[%s20]]
  %s22 = scalar_lea.smem %s0, 11
  %s23 = sld [smem:[%s22]]
  %s24 = scalar_lea.smem %s0, 12
  %s25 = sld [smem:[%s24]]
  %s26 = scalar_lea.smem %s0, 13
  %s27 = sld [smem:[%s26]]
  %s28 = scalar_lea.smem %s0, 14
  %s29 = sld [smem:[%s28]]
  %s30 = scalar_lea.smem %s0, 15
  %s31 = sld [smem:[%s30]]
  %s32 = scalar_lea.smem %s0, 16
  %s33 = sld [smem:[%s32]]
  %s34 = scalar_lea.smem %s0, 17
  %s35 = sld [smem:[%s34]]
  %s36 = scalar_lea.smem %s0, 18
  %s37 = sld [smem:[%s36]]
  %s38 = scalar_lea.smem %s0, 19
  %s39 = sld [smem:[%s38]]
  %s40 = scalar_lea.smem %s0, 20
  %s41 = sld [smem:[%s40]]
  %s42 = scalar_lea.smem %s0, 21
  %s43 = sld [smem:[%s42]]
  %s44 = scalar_lea.smem %s0, 22
  %s45 = sld [smem:[%s44]]
  %s46 = scalar_lea.smem %s0, 23
  %s47 = sld [smem:[%s46]]
  %s48 = scalar_lea.smem %s0, 24
  %s49 = sld [smem:[%s48]]
  %s50 = scalar_lea.smem %s0, 25
  %s51 = sld [smem:[%s50]]
  %s52 = scalar_lea.smem %s0, 26
  %s53 = sld [smem:[%s52]]
  %s54 = scalar_lea.smem %s0, 27
  %s55 = sld [smem:[%s54]]
  %s56 = scalar_lea.smem %s0, 28
  %s57 = sld [smem:[%s56]]
  %s58 = scalar_lea.smem %s0, 29
  %s59 = sld [smem:[%s58]]
  %s60 = scalar_lea.smem %s0, 30
  %s61 = sld [smem:[%s60]]
  %s62 = scalar_lea.smem %s0, 31
  %s63 = sld [smem:[%s62]]
  %s64 = scalar_lea.smem %s0, 32
  %s65 = sld [smem:[%s64]]
  %s66 = scalar_lea.smem %s0, 33
  %s67 = sld [smem:[%s66]]
  %s68 = scalar_lea.smem %s0, 34
  %s69 = sld [smem:[%s68]]
  %s70 = scalar_lea.smem %s0, 35
  %s71 = sld [smem:[%s70]]
  %s72 = scalar_lea.smem %s0, 36
  %s73 = sld [smem:[%s72]]
  %s74 = scalar_lea.smem %s0, 37
  %s75 = sld [smem:[%s74]]
  %s76 = scalar_lea.smem %s0, 38
  %s77 = sld [smem:[%s76]]
  %s78 = scalar_lea.smem %s0, 39
  %s79 = sld [smem:[%s78]]
  %s80 = scalar_lea.smem %s0, 40
  %s81 = sld [smem:[%s80]]
  %s82 = scalar_lea.smem %s0, 41
  %s83 = sld [smem:[%s82]]
  %s84 = scalar_lea.smem %s0, 42
  %s85 = sld [smem:[%s84]]
  %s86 = scalar_lea.smem %s0, 43
  %s87 = sld [smem:[%s86]]
  %s88 = scalar_lea.smem %s0, 44
  %s89 = sld [smem:[%s88]]
  %s90 = scalar_lea.smem %s0, 45
  %s91 = sld [smem:[%s90]]
  %s92 = scalar_lea.smem %s0, 46
  %s93 = sld [smem:[%s92]]
  %s94 = scalar_lea.smem %s0, 47
  %s95 = sld [smem:[%s94]]
  %s96 = scalar_lea.smem %s0, 48
  %s97 = sld [smem:[%s96]]
  %s98 = scalar_lea.smem %s0, 49
  %s99 = sld [smem:[%s98]]
  %s100 = scalar_lea.smem %s0, 50
  %s101 = sld [smem:[%s100]]
  %s102 = scalar_lea.smem %s0, 51
  %s103 = sld [smem:[%s102]]
  %s104 = scalar_lea.smem %s0, 52
  %s105 = sld [smem:[%s104]]
  %106 = xla_tuple %s103, %s105
  %s107 = sld [smem:[#allocation0]]
  $region230: #{forward.1} parent=0
    _
  %s109 = ssub.s32 1, %s107
  %s110 = scalar_select 0, %s109, %s107
  %v111 = vstv %s101
  %112 = vst [vmem:[#allocation2] sm:$0x1] %v111
  $region1: #{forward.1} parent=0
    #allocation3 [shape = 'u8[512]{0}', space=vmem, size = 0x400, scoped, tag = 'input window, operand 46, single buffered']
    #allocation4 [shape = 's32[1]{0}', space=sflag, size = 0x4, scoped, tag = 'scoped memory for forward.1']
    #allocation5 [shape = 's32[1]{0}', space=sflag, size = 0x4, scoped, tag = 'scoped memory for forward.1']
    #allocation6 [shape = 'u8[512]{0}', space=vmem, size = 0x400, scoped, tag = 'input window, operand 48, single buffered']
    #allocation7 [shape = 's32[1]{0}', space=sflag, size = 0x4, scoped, tag = 'scoped memory for forward.1']
    #allocation8 [shape = 'u8[32768]{0}', space=vmem, size = 0x8000, scoped, tag = 'output window, operand 0, single buffered']
    %113 = vsyncpa [#allocation4], 0
    %114 = vsyncpa [#allocation7], 0
    %115 = vsyncpa [#allocation5], 0
    // Predicated region
    $region2: #{forward.1} parent=1 // pred_check
      _
    $region3: #{forward.1} parent=1 // pred_check_branch
      %117 = sbr.rel (0) target = $region5
    $region4: #{forward.1} parent=1 // pred_region
      _
    $region5: #{forward.1} parent=1 // pred_fallthru
      _
    // Predicated region
    $region6: #{forward.1} parent=1 // pred_check
      _
    $region7: #{forward.1} parent=1 // pred_check_branch
      %119 = sbr.rel (0) target = $region9
    $region8: #{forward.1} parent=1 // pred_region
      _
    $region9: #{forward.1} parent=1 // pred_fallthru
      _
    // Predicated region
    $region10: #{forward.1} parent=1 // pred_check
      _
    $region11: #{forward.1} parent=1 // pred_check_branch
      %121 = sbr.rel (0) target = $region13
    $region12: #{forward.1} parent=1 // pred_region
      _
    $region13: #{forward.1} parent=1 // pred_fallthru
      _
    // Predicated region
    $region14: #{forward.1} parent=1 // pred_check
      _
    $region15: #{forward.1} parent=1 // pred_check_branch
      %123 = sbr.rel (0) target = $region17
    $region16: #{forward.1} parent=1 // pred_region
      _
    $region17: #{forward.1} parent=1 // pred_fallthru
      _
    // Predicated region
    $region18: #{forward.1} parent=1 // pred_check
      _
    $region19: #{forward.1} parent=1 // pred_check_branch
      %125 = sbr.rel (0) target = $region21
    $region20: #{forward.1} parent=1 // pred_region
      _
    $region21: #{forward.1} parent=1 // pred_fallthru
      _
    // Predicated region
    $region22: #{forward.1} parent=1 // pred_check
      _
    $region23: #{forward.1} parent=1 // pred_check_branch
      %127 = sbr.rel (0) target = $region25
    $region24: #{forward.1} parent=1 // pred_region
      _
    $region25: #{forward.1} parent=1 // pred_fallthru
      _
    // Predicated region
    $region26: #{forward.1} parent=1 // pred_check
      _
    $region27: #{forward.1} parent=1 // pred_check_branch
      %129 = sbr.rel (0) target = $region29
    $region28: #{forward.1} parent=1 // pred_region
      _
    $region29: #{forward.1} parent=1 // pred_fallthru
      _
    // Predicated region
    $region30: #{forward.1} parent=1 // pred_check
      _
    $region31: #{forward.1} parent=1 // pred_check_branch
      %131 = sbr.rel (0) target = $region33
    $region32: #{forward.1} parent=1 // pred_region
      _
    $region33: #{forward.1} parent=1 // pred_fallthru
      _
    // Predicated region
    $region34: #{forward.1} parent=1 // pred_check
      _
    $region35: #{forward.1} parent=1 // pred_check_branch
      %133 = sbr.rel (0) target = $region37
    $region36: #{forward.1} parent=1 // pred_region
      _
    $region37: #{forward.1} parent=1 // pred_fallthru
      _
    // Predicated region
    $region38: #{forward.1} parent=1 // pred_check
      _
    $region39: #{forward.1} parent=1 // pred_check_branch
      %135 = sbr.rel (0) target = $region41
    $region40: #{forward.1} parent=1 // pred_region
      _
    $region41: #{forward.1} parent=1 // pred_fallthru
      _
    // Predicated region
    $region42: #{forward.1} parent=1 // pred_check
      _
    $region43: #{forward.1} parent=1 // pred_check_branch
      %137 = sbr.rel (0) target = $region45
    $region44: #{forward.1} parent=1 // pred_region
      _
    $region45: #{forward.1} parent=1 // pred_fallthru
      _
    // Predicated region
    $region46: #{forward.1} parent=1 // pred_check
      _
    $region47: #{forward.1} parent=1 // pred_check_branch
      %139 = sbr.rel (0) target = $region49
    $region48: #{forward.1} parent=1 // pred_region
      _
    $region49: #{forward.1} parent=1 // pred_fallthru
      _
    // Predicated region
    $region50: #{forward.1} parent=1 // pred_check
      _
    $region51: #{forward.1} parent=1 // pred_check_branch
      %141 = sbr.rel (0) target = $region53
    $region52: #{forward.1} parent=1 // pred_region
      _
    $region53: #{forward.1} parent=1 // pred_fallthru
      _
    // Predicated region
    $region54: #{forward.1} parent=1 // pred_check
      _
    $region55: #{forward.1} parent=1 // pred_check_branch
      %143 = sbr.rel (0) target = $region57
    $region56: #{forward.1} parent=1 // pred_region
      _
    $region57: #{forward.1} parent=1 // pred_fallthru
      _
    // Predicated region
    $region58: #{forward.1} parent=1 // pred_check
      _
    $region59: #{forward.1} parent=1 // pred_check_branch
      %145 = sbr.rel (0) target = $region61
    $region60: #{forward.1} parent=1 // pred_region
      _
    $region61: #{forward.1} parent=1 // pred_fallthru
      _
    // Predicated region
    $region62: #{forward.1} parent=1 // pred_check
      _
    $region63: #{forward.1} parent=1 // pred_check_branch
      %147 = sbr.rel (0) target = $region65
    $region64: #{forward.1} parent=1 // pred_region
      _
    $region65: #{forward.1} parent=1 // pred_fallthru
      _
    // Predicated region
    $region66: #{forward.1} parent=1 // pred_check
      _
    $region67: #{forward.1} parent=1 // pred_check_branch
      %149 = sbr.rel (0) target = $region69
    $region68: #{forward.1} parent=1 // pred_region
      _
    $region69: #{forward.1} parent=1 // pred_fallthru
      _
    // Predicated region
    $region70: #{forward.1} parent=1 // pred_check
      _
    $region71: #{forward.1} parent=1 // pred_check_branch
      %151 = sbr.rel (0) target = $region73
    $region72: #{forward.1} parent=1 // pred_region
      _
    $region73: #{forward.1} parent=1 // pred_fallthru
      _
    // Predicated region
    $region74: #{forward.1} parent=1 // pred_check
      _
    $region75: #{forward.1} parent=1 // pred_check_branch
      %153 = sbr.rel (0) target = $region77
    $region76: #{forward.1} parent=1 // pred_region
      _
    $region77: #{forward.1} parent=1 // pred_fallthru
      _
    // Predicated region
    $region78: #{forward.1} parent=1 // pred_check
      _
    $region79: #{forward.1} parent=1 // pred_check_branch
      %155 = sbr.rel (0) target = $region81
    $region80: #{forward.1} parent=1 // pred_region
      _
    $region81: #{forward.1} parent=1 // pred_fallthru
      _
    // Predicated region
    $region82: #{forward.1} parent=1 // pred_check
      _
    $region83: #{forward.1} parent=1 // pred_check_branch
      %157 = sbr.rel (0) target = $region85
    $region84: #{forward.1} parent=1 // pred_region
      _
    $region85: #{forward.1} parent=1 // pred_fallthru
      _
    // Predicated region
    $region86: #{forward.1} parent=1 // pred_check
      _
    $region87: #{forward.1} parent=1 // pred_check_branch
      %159 = sbr.rel (0) target = $region89
    $region88: #{forward.1} parent=1 // pred_region
      _
    $region89: #{forward.1} parent=1 // pred_fallthru
      _
    // Predicated region
    $region90: #{forward.1} parent=1 // pred_check
      _
    $region91: #{forward.1} parent=1 // pred_check_branch
      %161 = sbr.rel (0) target = $region93
    $region92: #{forward.1} parent=1 // pred_region
      _
    $region93: #{forward.1} parent=1 // pred_fallthru
      _
    // Predicated region
    $region94: #{forward.1} parent=1 // pred_check
      _
    $region95: #{forward.1} parent=1 // pred_check_branch
      %163 = sbr.rel (0) target = $region97
    $region96: #{forward.1} parent=1 // pred_region
      _
    $region97: #{forward.1} parent=1 // pred_fallthru
      _
    // Predicated region
    $region98: #{forward.1} parent=1 // pred_check
      _
    $region99: #{forward.1} parent=1 // pred_check_branch
      %165 = sbr.rel (0) target = $region101
    $region100: #{forward.1} parent=1 // pred_region
      _
    $region101: #{forward.1} parent=1 // pred_fallthru
      _
    // Predicated region
    $region102: #{forward.1} parent=1 // pred_check
      _
    $region103: #{forward.1} parent=1 // pred_check_branch
      %167 = sbr.rel (0) target = $region105
    $region104: #{forward.1} parent=1 // pred_region
      _
    $region105: #{forward.1} parent=1 // pred_fallthru
      _
    // Predicated region
    $region106: #{forward.1} parent=1 // pred_check
      _
    $region107: #{forward.1} parent=1 // pred_check_branch
      %169 = sbr.rel (0) target = $region109
    $region108: #{forward.1} parent=1 // pred_region
      _
    $region109: #{forward.1} parent=1 // pred_fallthru
      _
    // Predicated region
    $region110: #{forward.1} parent=1 // pred_check
      _
    $region111: #{forward.1} parent=1 // pred_check_branch
      %171 = sbr.rel (0) target = $region113
    $region112: #{forward.1} parent=1 // pred_region
      _
    $region113: #{forward.1} parent=1 // pred_fallthru
      _
    // Predicated region
    $region114: #{forward.1} parent=1 // pred_check
      _
    $region115: #{forward.1} parent=1 // pred_check_branch
      %173 = sbr.rel (0) target = $region117
    $region116: #{forward.1} parent=1 // pred_region
      _
    $region117: #{forward.1} parent=1 // pred_fallthru
      _
    // Predicated region
    $region118: #{forward.1} parent=1 // pred_check
      _
    $region119: #{forward.1} parent=1 // pred_check_branch
      %175 = sbr.rel (0) target = $region121
    $region120: #{forward.1} parent=1 // pred_region
      _
    $region121: #{forward.1} parent=1 // pred_fallthru
      _
    // Predicated region
    $region122: #{forward.1} parent=1 // pred_check
      _
    $region123: #{forward.1} parent=1 // pred_check_branch
      %177 = sbr.rel (0) target = $region125
    $region124: #{forward.1} parent=1 // pred_region
      _
    $region125: #{forward.1} parent=1 // pred_fallthru
      _
    // Predicated region
    $region126: #{forward.1} parent=1 // pred_check
      _
    $region127: #{forward.1} parent=1 // pred_check_branch
      %179 = sbr.rel (0) target = $region129
    $region128: #{forward.1} parent=1 // pred_region
      _
    $region129: #{forward.1} parent=1 // pred_fallthru
      _
    // Predicated region
    $region130: #{forward.1} parent=1 // pred_check
      _
    $region131: #{forward.1} parent=1 // pred_check_branch
      %181 = sbr.rel (0) target = $region133
    $region132: #{forward.1} parent=1 // pred_region
      _
    $region133: #{forward.1} parent=1 // pred_fallthru
      _
    // Predicated region
    $region134: #{forward.1} parent=1 // pred_check
      _
    $region135: #{forward.1} parent=1 // pred_check_branch
      %183 = sbr.rel (0) target = $region137
    $region136: #{forward.1} parent=1 // pred_region
      _
    $region137: #{forward.1} parent=1 // pred_fallthru
      _
    // Predicated region
    $region138: #{forward.1} parent=1 // pred_check
      _
    $region139: #{forward.1} parent=1 // pred_check_branch
      %185 = sbr.rel (0) target = $region141
    $region140: #{forward.1} parent=1 // pred_region
      _
    $region141: #{forward.1} parent=1 // pred_fallthru
      _
    // Predicated region
    $region142: #{forward.1} parent=1 // pred_check
      _
    $region143: #{forward.1} parent=1 // pred_check_branch
      %187 = sbr.rel (0) target = $region145
    $region144: #{forward.1} parent=1 // pred_region
      _
    $region145: #{forward.1} parent=1 // pred_fallthru
      _
    // Predicated region
    $region146: #{forward.1} parent=1 // pred_check
      _
    $region147: #{forward.1} parent=1 // pred_check_branch
      %189 = sbr.rel (0) target = $region149
    $region148: #{forward.1} parent=1 // pred_region
      _
    $region149: #{forward.1} parent=1 // pred_fallthru
      _
    // Predicated region
    $region150: #{forward.1} parent=1 // pred_check
      _
    $region151: #{forward.1} parent=1 // pred_check_branch
      %191 = sbr.rel (0) target = $region153
    $region152: #{forward.1} parent=1 // pred_region
      _
    $region153: #{forward.1} parent=1 // pred_fallthru
      _
    // Predicated region
    $region154: #{forward.1} parent=1 // pred_check
      _
    $region155: #{forward.1} parent=1 // pred_check_branch
      %193 = sbr.rel (0) target = $region157
    $region156: #{forward.1} parent=1 // pred_region
      _
    $region157: #{forward.1} parent=1 // pred_fallthru
      _
    // Predicated region
    $region158: #{forward.1} parent=1 // pred_check
      _
    $region159: #{forward.1} parent=1 // pred_check_branch
      %195 = sbr.rel (0) target = $region161
    $region160: #{forward.1} parent=1 // pred_region
      _
    $region161: #{forward.1} parent=1 // pred_fallthru
      _
    // Predicated region
    $region162: #{forward.1} parent=1 // pred_check
      _
    $region163: #{forward.1} parent=1 // pred_check_branch
      %197 = sbr.rel (0) target = $region165
    $region164: #{forward.1} parent=1 // pred_region
      _
    $region165: #{forward.1} parent=1 // pred_fallthru
      _
    // Predicated region
    $region166: #{forward.1} parent=1 // pred_check
      _
    $region167: #{forward.1} parent=1 // pred_check_branch
      %199 = sbr.rel (0) target = $region169
    $region168: #{forward.1} parent=1 // pred_region
      _
    $region169: #{forward.1} parent=1 // pred_fallthru
      _
    // Predicated region
    $region170: #{forward.1} parent=1 // pred_check
      _
    $region171: #{forward.1} parent=1 // pred_check_branch
      %201 = sbr.rel (0) target = $region173
    $region172: #{forward.1} parent=1 // pred_region
      _
    $region173: #{forward.1} parent=1 // pred_fallthru
      _
    // Predicated region
    $region174: #{forward.1} parent=1 // pred_check
      _
    $region175: #{forward.1} parent=1 // pred_check_branch
      %203 = sbr.rel (0) target = $region177
    $region176: #{forward.1} parent=1 // pred_region
      _
    $region177: #{forward.1} parent=1 // pred_fallthru
      _
    // Predicated region
    $region178: #{forward.1} parent=1 // pred_check
      _
    $region179: #{forward.1} parent=1 // pred_check_branch
      %205 = sbr.rel (0) target = $region181
    $region180: #{forward.1} parent=1 // pred_region
      _
    $region181: #{forward.1} parent=1 // pred_fallthru
      _
    // Predicated region
    $region182: #{forward.1} parent=1 // pred_check
      _
    $region183: #{forward.1} parent=1 // pred_check_branch
      %207 = sbr.rel (0) target = $region185
    $region184: #{forward.1} parent=1 // pred_region
      _
    $region185: #{forward.1} parent=1 // pred_fallthru
      _
    // Predicated region
    $region186: #{forward.1} parent=1 // pred_check
      _
    $region187: #{forward.1} parent=1 // pred_check_branch
      %209 = sbr.rel (0) target = $region189
    $region188: #{forward.1} parent=1 // pred_region
      %s211 = ssub.s32 16, 16
      %212 = vsyncadd [#allocation4], %s211
      %s214 = sshll.u32 [#allocation3], 4
      %s215 = int_to_ptr.vmem [resolvable:$true] %s214
      %217 = dma.hbm_to_vmem [thread:$0]  %s93, 16, %s215, [#allocation4]
    $region189: #{forward.1} parent=1 // pred_fallthru
      _
    // Predicated region
    $region190: #{forward.1} parent=1 // pred_check
      _
    $region191: #{forward.1} parent=1 // pred_check_branch
      %219 = sbr.rel (0) target = $region193
    $region192: #{forward.1} parent=1 // pred_region
      _
    $region193: #{forward.1} parent=1 // pred_fallthru
      _
    // Predicated region
    $region194: #{forward.1} parent=1 // pred_check
      _
    $region195: #{forward.1} parent=1 // pred_check_branch
      %221 = sbr.rel (0) target = $region197
    $region196: #{forward.1} parent=1 // pred_region
      %s223 = ssub.s32 16, 16
      %224 = vsyncadd [#allocation7], %s223
      %s226 = sshll.u32 [#allocation6], 4
      %s227 = int_to_ptr.vmem [resolvable:$true] %s226
      %229 = dma.hbm_to_vmem [thread:$0]  %s97, 16, %s227, [#allocation7]
    $region197: #{forward.1} parent=1 // pred_fallthru
      _
    // Predicated region
    $region198: #{forward.1} parent=1 // pred_check
      _
    $region199: #{forward.1} parent=1 // pred_check_branch
      %231 = sbr.rel (0) target = $region201
    $region200: #{forward.1} parent=1 // pred_region
      _
    $region201: #{forward.1} parent=1 // pred_fallthru
      _
    // Predicated region
    $region202: #{forward.1} parent=1 // pred_check
      _
    $region203: #{forward.1} parent=1 // pred_check_branch
      %233 = sbr.rel (0) target = $region205
    $region204: #{forward.1} parent=1 // pred_region
      _
    $region205: #{forward.1} parent=1 // pred_fallthru
      _
    // Predicated region
    $region206: #{forward.1} parent=1 // pred_check
      _
    $region207: #{forward.1} parent=1 // pred_check_branch
      %235 = sbr.rel (0) target = $region209
    $region208: #{forward.1} parent=1 // pred_region
      %236 = dma.done [#allocation4], 16
    $region209: #{forward.1} parent=1 // pred_fallthru
      _
    // Predicated region
    $region210: #{forward.1} parent=1 // pred_check
      _
    $region211: #{forward.1} parent=1 // pred_check_branch
      %238 = sbr.rel (0) target = $region213
    $region212: #{forward.1} parent=1 // pred_region
      %239 = dma.done [#allocation7], 16
    $region213: #{forward.1} parent=1 // pred_fallthru
      _
    %v240 = vld [vmem:[%s1] sm:$0xff]
    %v241 = vld [vmem:[%s1 + $0x8] sm:$0xff]
    %v242 = vld [vmem:[%s1 + $0x10] sm:$0xff]
    %v243 = vld [vmem:[%s1 + $0x18] sm:$0xff]
    %v244 = vld [vmem:[%s1 + $0x20] sm:$0xff]
    %v245 = vld [vmem:[%s1 + $0x28] sm:$0xff]
    %v246 = vld [vmem:[%s1 + $0x30] sm:$0xff]
    %v247 = vld [vmem:[%s1 + $0x38] sm:$0xff]
    %v248 = vld [vmem:[%s3] sm:$0xff]
    %v249 = vld [vmem:[%s3 + $0x8] sm:$0xff]
    %v250 = vld [vmem:[%s3 + $0x10] sm:$0xff]
    %v251 = vld [vmem:[%s3 + $0x18] sm:$0xff]
    %v252 = vld [vmem:[%s3 + $0x20] sm:$0xff]
    %v253 = vld [vmem:[%s3 + $0x28] sm:$0xff]
    %v254 = vld [vmem:[%s3 + $0x30] sm:$0xff]
    %v255 = vld [vmem:[%s3 + $0x38] sm:$0xff]
    %v256 = vld [vmem:[%s5] sm:$0xff]
    %v257 = vld [vmem:[%s5 + $0x8] sm:$0xff]
    %v258 = vld [vmem:[%s5 + $0x10] sm:$0xff]
    %v259 = vld [vmem:[%s5 + $0x18] sm:$0xff]
    %v260 = vld [vmem:[%s5 + $0x20] sm:$0xff]
    %v261 = vld [vmem:[%s5 + $0x28] sm:$0xff]
    %v262 = vld [vmem:[%s5 + $0x30] sm:$0xff]
    %v263 = vld [vmem:[%s5 + $0x38] sm:$0xff]
    %v264 = vld [vmem:[%s7] sm:$0xff]
    %v265 = vld [vmem:[%s7 + $0x8] sm:$0xff]
    %v266 = vld [vmem:[%s7 + $0x10] sm:$0xff]
    %v267 = vld [vmem:[%s7 + $0x18] sm:$0xff]
    %v268 = vld [vmem:[%s7 + $0x20] sm:$0xff]
    %v269 = vld [vmem:[%s7 + $0x28] sm:$0xff]
    %v270 = vld [vmem:[%s7 + $0x30] sm:$0xff]
    %v271 = vld [vmem:[%s7 + $0x38] sm:$0xff]
    %v272 = vld [vmem:[%s9] sm:$0x7]
    %v273 = vld [vmem:[%s11] sm:$0x1]
    %v274 = vld [vmem:[%s13] sm:$0x1]
    %v275 = vld [vmem:[%s15] sm:$0x1]
    %v277 = vlaneseq
    %v278 = vshrl.u32 %v277, 7
    %v279 = vsub.s32 0, %v278
    %v280 = vrot.slane %v273, %v279
    %vm282 = vcmask 23552
    %v284 = vsel %vm282, %v248, 0
    %v287 = vsel %vm282, %v249, 0
    %v290 = vsel %vm282, %v250, 0
    %v293 = vsel %vm282, %v251, 0
    %v296 = vsel %vm282, %v252, 0
    %v299 = vsel %vm282, %v253, 0
    %v302 = vsel %vm282, %v254, 0
    %v305 = vsel %vm282, %v255, 0
    %vm307 = vcmask 1042432
    %v309 = vsel %vm307, %v272, 0
    %311 = vmatprep.subr.mxu0 0.0
    %312 = vmatpush1.msra.mxu0 %v309
    %313 = vmatprep.subr.mxu0 0.0
    %314 = vmatpush1.msra.mxu0 0.0
    %315 = vmatprep.subr.mxu0 0.0
    %316 = vmatpush1.msra.mxu0 0.0
    %317 = vmatprep.subr.mxu0 0.0
    %318 = vmatpush1.msra.mxu0 0.0
    %319 = vmatprep.subr.mxu0 0.0
    %320 = vmatpush1.msra.mxu0 0.0
    %321 = vmatprep.subr.mxu0 0.0
    %322 = vmatpush1.msra.mxu0 0.0
    %323 = vmatprep.subr.mxu0 0.0
    %324 = vmatpush1.msra.mxu0 0.0
    %325 = vmatprep.subr.mxu0 0.0
    %326 = vmatpush1.msra.mxu0 0.0
    %327 = vmatprep.subr.mxu0 0.0
    %328 = vmatpush1.msra.mxu0 0.0
    %329 = vmatprep.subr.mxu0 0.0
    %330 = vmatpush1.msra.mxu0 0.0
    %331 = vmatprep.subr.mxu0 0.0
    %332 = vmatpush1.msra.mxu0 0.0
    %333 = vmatprep.subr.mxu0 0.0
    %334 = vmatpush1.msra.mxu0 0.0
    %335 = vmatprep.subr.mxu0 0.0
    %336 = vmatpush1.msra.mxu0 0.0
    %337 = vmatprep.subr.mxu0 0.0
    %338 = vmatpush1.msra.mxu0 0.0
    %339 = vmatprep.subr.mxu0 0.0
    %340 = vmatpush1.msra.mxu0 0.0
    %341 = vmatprep.subr.mxu0 0.0
    %342 = vmatpush1.msra.mxu0 0.0
    %343 = vmatprep.subr.mxu0 0.0
    %344 = vmatpush1.msra.mxu0 0.0
    %345 = vmatprep.subr.mxu0 0.0
    %346 = vmatpush1.msra.mxu0 0.0
    %347 = vmatprep.subr.mxu0 0.0
    %348 = vmatpush1.msra.mxu0 0.0
    %349 = vmatprep.subr.mxu0 0.0
    %350 = vmatpush1.msra.mxu0 0.0
    %351 = vmatprep.subr.mxu0 0.0
    %352 = vmatpush1.msra.mxu0 0.0
    %353 = vmatprep.subr.mxu0 0.0
    %354 = vmatpush1.msra.mxu0 0.0
    %355 = vmatprep.subr.mxu0 0.0
    %356 = vmatpush1.msra.mxu0 0.0
    %357 = vmatprep.subr.mxu0 0.0
    %358 = vmatpush1.msra.mxu0 0.0
    %359 = vmatprep.subr.mxu0 0.0
    %360 = vmatpush1.msra.mxu0 0.0
    %361 = vmatprep.subr.mxu0 0.0
    %362 = vmatpush1.msra.mxu0 0.0
    %363 = vmatprep.subr.mxu0 0.0
    %364 = vmatpush1.msra.mxu0 0.0
    %365 = vmatprep.subr.mxu0 0.0
    %366 = vmatpush1.msra.mxu0 0.0
    %367 = vmatprep.subr.mxu0 0.0
    %368 = vmatpush1.msra.mxu0 0.0
    %369 = vmatprep.subr.mxu0 0.0
    %370 = vmatpush1.msra.mxu0 0.0
    %371 = vmatprep.subr.mxu0 0.0
    %372 = vmatpush1.msra.mxu0 0.0
    %373 = vmatprep.subr.mxu0 0.0
    %374 = vmatpush1.msra.mxu0 0.0
    %375 = vmatprep.mubr.f32.mxu0 0.0
    %376 = vmatmul.mubr.f32.gmra.mrb[0].mxu0 %v284
    %v377 = vpop.f32.mrb[0].mxu0
    %v378 = vadd.f32 %v280, %v377
    %v379 = vpop.f32.mrb[0].mxu0
    %380 = vmatprep.mubr.f32.mxu0 0.0
    %381 = vmatmul.mubr.f32.gmra.mrb[0].mxu0 %v287
    %v382 = vpop.f32.mrb[0].mxu0
    %v383 = vadd.f32 %v280, %v382
    %v384 = vpop.f32.mrb[0].mxu0
    %385 = vmatprep.mubr.f32.mxu0 0.0
    %386 = vmatmul.mubr.f32.gmra.mrb[0].mxu0 %v290
    %v387 = vpop.f32.mrb[0].mxu0
    %v388 = vadd.f32 %v280, %v387
    %v389 = vpop.f32.mrb[0].mxu0
    %390 = vmatprep.mubr.f32.mxu0 0.0
    %391 = vmatmul.mubr.f32.gmra.mrb[0].mxu0 %v293
    %v392 = vpop.f32.mrb[0].mxu0
    %v393 = vadd.f32 %v280, %v392
    %v394 = vpop.f32.mrb[0].mxu0
    %395 = vmatprep.mubr.f32.mxu0 0.0
    %396 = vmatmul.mubr.f32.gmra.mrb[0].mxu0 %v296
    %v397 = vpop.f32.mrb[0].mxu0
    %v398 = vadd.f32 %v280, %v397
    %v399 = vpop.f32.mrb[0].mxu0
    %400 = vmatprep.mubr.f32.mxu0 0.0
    %401 = vmatmul.mubr.f32.gmra.mrb[0].mxu0 %v299
    %v402 = vpop.f32.mrb[0].mxu0
    %v403 = vadd.f32 %v280, %v402
    %v404 = vpop.f32.mrb[0].mxu0
    %405 = vmatprep.mubr.f32.mxu0 0.0
    %406 = vmatmul.mubr.f32.gmra.mrb[0].mxu0 %v302
    %v407 = vpop.f32.mrb[0].mxu0
    %v408 = vadd.f32 %v280, %v407
    %v409 = vpop.f32.mrb[0].mxu0
    %410 = vmatprep.mubr.f32.mxu0 0.0
    %411 = vmatmul.mubr.f32.gmra.mrb[0].mxu0 %v305
    %v412 = vpop.f32.mrb[0].mxu0
    %v413 = vadd.f32 %v280, %v412
    %v414 = vpop.f32.mrb[0].mxu0
    %415 = vdwg.mxu0
    %v416 = vmax.f32 %v378, 0.0
    %v417 = vmax.f32 %v383, 0.0
    %v418 = vmax.f32 %v388, 0.0
    %v419 = vmax.f32 %v393, 0.0
    %v420 = vmax.f32 %v398, 0.0
    %v421 = vmax.f32 %v403, 0.0
    %v422 = vmax.f32 %v408, 0.0
    %v423 = vmax.f32 %v413, 0.0
    %vm424 = vcmask 261120
    %v425 = vsel %vm424, %v416, 0.0
    %426 = vadd.xlane.f32.xlu0 %v425
    %v427 = vpop.xlane.xlu0 %426
    %v428 = vsel %vm424, %v417, 0.0
    %429 = vadd.xlane.f32.xlu0 %v428
    %v430 = vpop.xlane.xlu0 %429
    %v431 = vsel %vm424, %v418, 0.0
    %432 = vadd.xlane.f32.xlu0 %v431
    %v433 = vpop.xlane.xlu0 %432
    %v434 = vsel %vm424, %v419, 0.0
    %435 = vadd.xlane.f32.xlu0 %v434
    %v436 = vpop.xlane.xlu0 %435
    %v437 = vsel %vm424, %v420, 0.0
    %438 = vadd.xlane.f32.xlu0 %v437
    %v439 = vpop.xlane.xlu0 %438
    %v440 = vsel %vm424, %v421, 0.0
    %441 = vadd.xlane.f32.xlu0 %v440
    %v442 = vpop.xlane.xlu0 %441
    %v443 = vsel %vm424, %v422, 0.0
    %444 = vadd.xlane.f32.xlu0 %v443
    %v445 = vpop.xlane.xlu0 %444
    %v446 = vsel %vm424, %v423, 0.0
    %447 = vadd.xlane.f32.xlu0 %v446
    %v448 = vpop.xlane.xlu0 %447
    %v449 = vrcp.pop 32.0
    %v450 = vmul.f32 %v427, %v449
    %v451 = vmul.f32 %v430, %v449
    %v452 = vmul.f32 %v433, %v449
    %v453 = vmul.f32 %v436, %v449
    %v454 = vmul.f32 %v439, %v449
    %v455 = vmul.f32 %v442, %v449
    %v456 = vmul.f32 %v445, %v449
    %v457 = vmul.f32 %v448, %v449
    %v458 = vsub.f32 %v416, %v450
    %v459 = vsub.f32 %v417, %v451
    %v460 = vsub.f32 %v418, %v452
    %v461 = vsub.f32 %v419, %v453
    %v462 = vsub.f32 %v420, %v454
    %v463 = vsub.f32 %v421, %v455
    %v464 = vsub.f32 %v422, %v456
    %v465 = vsub.f32 %v423, %v457
    %v466 = vmul.f32 %v458, %v458
    %v467 = vmul.f32 %v459, %v459
    %v468 = vmul.f32 %v460, %v460
    %v469 = vmul.f32 %v461, %v461
    %v470 = vmul.f32 %v462, %v462
    %v471 = vmul.f32 %v463, %v463
    %v472 = vmul.f32 %v464, %v464
    %v473 = vmul.f32 %v465, %v465
    %v474 = vsel %vm424, %v466, 0.0
    %475 = vadd.xlane.f32.xlu0 %v474
    %v476 = vpop.xlane.xlu0 %475
    %v477 = vsel %vm424, %v467, 0.0
    %478 = vadd.xlane.f32.xlu0 %v477
    %v479 = vpop.xlane.xlu0 %478
    %v480 = vsel %vm424, %v468, 0.0
    %481 = vadd.xlane.f32.xlu0 %v480
    %v482 = vpop.xlane.xlu0 %481
    %v483 = vsel %vm424, %v469, 0.0
    %484 = vadd.xlane.f32.xlu0 %v483
    %v485 = vpop.xlane.xlu0 %484
    %v486 = vsel %vm424, %v470, 0.0
    %487 = vadd.xlane.f32.xlu0 %v486
    %v488 = vpop.xlane.xlu0 %487
    %v489 = vsel %vm424, %v471, 0.0
    %490 = vadd.xlane.f32.xlu0 %v489
    %v491 = vpop.xlane.xlu0 %490
    %v492 = vsel %vm424, %v472, 0.0
    %493 = vadd.xlane.f32.xlu0 %v492
    %v494 = vpop.xlane.xlu0 %493
    %v495 = vsel %vm424, %v473, 0.0
    %496 = vadd.xlane.f32.xlu0 %v495
    %v497 = vpop.xlane.xlu0 %496
    %v498 = vmul.f32 %v476, %v449
    %v499 = vmul.f32 %v479, %v449
    %v500 = vmul.f32 %v482, %v449
    %v501 = vmul.f32 %v485, %v449
    %v502 = vmul.f32 %v488, %v449
    %v503 = vmul.f32 %v491, %v449
    %v504 = vmul.f32 %v494, %v449
    %v505 = vmul.f32 %v497, %v449
    %v506 = vadd.f32 %v498, 1e-05
    %v507 = vadd.f32 %v499, 1e-05
    %v508 = vadd.f32 %v500, 1e-05
    %v509 = vadd.f32 %v501, 1e-05
    %v510 = vadd.f32 %v502, 1e-05
    %v511 = vadd.f32 %v503, 1e-05
    %v512 = vadd.f32 %v504, 1e-05
    %v513 = vadd.f32 %v505, 1e-05
    %v514 = vrsqrt.pop %v506
    %v515 = vrsqrt.pop %v507
    %v516 = vrsqrt.pop %v508
    %v517 = vrsqrt.pop %v509
    %v518 = vrsqrt.pop %v510
    %v519 = vrsqrt.pop %v511
    %v520 = vrsqrt.pop %v512
    %v521 = vrsqrt.pop %v513
    %v522 = vmul.f32 %v458, %v514
    %v523 = vmul.f32 %v459, %v515
    %v524 = vmul.f32 %v460, %v516
    %v525 = vmul.f32 %v461, %v517
    %v526 = vmul.f32 %v462, %v518
    %v527 = vmul.f32 %v463, %v519
    %v528 = vmul.f32 %v464, %v520
    %v529 = vmul.f32 %v465, %v521
    %v531 = vlaneseq
    %v532 = vshrl.u32 %v531, 7
    %v533 = vsub.s32 0, %v532
    %v534 = vrot.slane %v274, %v533
    %v536 = vmul.f32 %v522, %v534
    %v537 = vmul.f32 %v523, %v534
    %v538 = vmul.f32 %v524, %v534
    %v539 = vmul.f32 %v525, %v534
    %v540 = vmul.f32 %v526, %v534
    %v541 = vmul.f32 %v527, %v534
    %v542 = vmul.f32 %v528, %v534
    %v543 = vmul.f32 %v529, %v534
    %v545 = vlaneseq
    %v546 = vshrl.u32 %v545, 7
    %v547 = vsub.s32 0, %v546
    %v548 = vrot.slane %v275, %v547
    %v550 = vadd.f32 %v536, %v548
    %v551 = vadd.f32 %v537, %v548
    %v552 = vadd.f32 %v538, %v548
    %v553 = vadd.f32 %v539, %v548
    %v554 = vadd.f32 %v540, %v548
    %v555 = vadd.f32 %v541, %v548
    %v556 = vadd.f32 %v542, %v548
    %v557 = vadd.f32 %v543, %v548
    %v558 = vld [vmem:[%s17] sm:$0xff]
    %v559 = vld [vmem:[%s17 + $0x8] sm:$0xff]
    %v560 = vld [vmem:[%s17 + $0x10] sm:$0xff]
    %v561 = vld [vmem:[%s17 + $0x18] sm:$0xff]
    %v562 = vld [vmem:[%s19] sm:$0x1]
    %v563 = vld [vmem:[%s21] sm:$0x1]
    %v564 = vld [vmem:[%s23] sm:$0x1]
    %v566 = vlaneseq
    %v567 = vshrl.u32 %v566, 7
    %v568 = vsub.s32 0, %v567
    %v569 = vrot.slane %v562, %v568
    %v572 = vsel %vm424, %v550, 0
    %v575 = vsel %vm424, %v551, 0
    %v578 = vsel %vm424, %v552, 0
    %v581 = vsel %vm424, %v553, 0
    %v584 = vsel %vm424, %v554, 0
    %v587 = vsel %vm424, %v555, 0
    %v590 = vsel %vm424, %v556, 0
    %v593 = vsel %vm424, %v557, 0
    %595 = vmatprep.subr.mxu0 0.0
    %596 = vmatpush1.msra.mxu0 %v558
    %597 = vmatprep.subr.mxu0 0.0
    %598 = vmatpush1.msra.mxu0 %v559
    %599 = vmatprep.subr.mxu0 0.0
    %600 = vmatpush1.msra.mxu0 %v560
    %601 = vmatprep.subr.mxu0 0.0
    %602 = vmatpush1.msra.mxu0 %v561
    %603 = vmatprep.subr.mxu0 0.0
    %604 = vmatpush1.msra.mxu0 0.0
    %605 = vmatprep.subr.mxu0 0.0
    %606 = vmatpush1.msra.mxu0 0.0
    %607 = vmatprep.subr.mxu0 0.0
    %608 = vmatpush1.msra.mxu0 0.0
    %609 = vmatprep.subr.mxu0 0.0
    %610 = vmatpush1.msra.mxu0 0.0
    %611 = vmatprep.subr.mxu0 0.0
    %612 = vmatpush1.msra.mxu0 0.0
    %613 = vmatprep.subr.mxu0 0.0
    %614 = vmatpush1.msra.mxu0 0.0
    %615 = vmatprep.subr.mxu0 0.0
    %616 = vmatpush1.msra.mxu0 0.0
    %617 = vmatprep.subr.mxu0 0.0
    %618 = vmatpush1.msra.mxu0 0.0
    %619 = vmatprep.subr.mxu0 0.0
    %620 = vmatpush1.msra.mxu0 0.0
    %621 = vmatprep.subr.mxu0 0.0
    %622 = vmatpush1.msra.mxu0 0.0
    %623 = vmatprep.subr.mxu0 0.0
    %624 = vmatpush1.msra.mxu0 0.0
    %625 = vmatprep.subr.mxu0 0.0
    %626 = vmatpush1.msra.mxu0 0.0
    %627 = vmatprep.subr.mxu0 0.0
    %628 = vmatpush1.msra.mxu0 0.0
    %629 = vmatprep.subr.mxu0 0.0
    %630 = vmatpush1.msra.mxu0 0.0
    %631 = vmatprep.subr.mxu0 0.0
    %632 = vmatpush1.msra.mxu0 0.0
    %633 = vmatprep.subr.mxu0 0.0
    %634 = vmatpush1.msra.mxu0 0.0
    %635 = vmatprep.subr.mxu0 0.0
    %636 = vmatpush1.msra.mxu0 0.0
    %637 = vmatprep.subr.mxu0 0.0
    %638 = vmatpush1.msra.mxu0 0.0
    %639 = vmatprep.subr.mxu0 0.0
    %640 = vmatpush1.msra.mxu0 0.0
    %641 = vmatprep.subr.mxu0 0.0
    %642 = vmatpush1.msra.mxu0 0.0
    %643 = vmatprep.subr.mxu0 0.0
    %644 = vmatpush1.msra.mxu0 0.0
    %645 = vmatprep.subr.mxu0 0.0
    %646 = vmatpush1.msra.mxu0 0.0
    %647 = vmatprep.subr.mxu0 0.0
    %648 = vmatpush1.msra.mxu0 0.0
    %649 = vmatprep.subr.mxu0 0.0
    %650 = vmatpush1.msra.mxu0 0.0
    %651 = vmatprep.subr.mxu0 0.0
    %652 = vmatpush1.msra.mxu0 0.0
    %653 = vmatprep.subr.mxu0 0.0
    %654 = vmatpush1.msra.mxu0 0.0
    %655 = vmatprep.subr.mxu0 0.0
    %656 = vmatpush1.msra.mxu0 0.0
    %657 = vmatprep.subr.mxu0 0.0
    %658 = vmatpush1.msra.mxu0 0.0
    %659 = vmatprep.mubr.f32.mxu0 0.0
    %660 = vmatmul.mubr.f32.gmra.mrb[0].mxu0 %v572
    %v661 = vpop.f32.mrb[0].mxu0
    %v662 = vadd.f32 %v569, %v661
    %v663 = vpop.f32.mrb[0].mxu0
    %664 = vmatprep.mubr.f32.mxu0 0.0
    %665 = vmatmul.mubr.f32.gmra.mrb[0].mxu0 %v575
    %v666 = vpop.f32.mrb[0].mxu0
    %v667 = vadd.f32 %v569, %v666
    %v668 = vpop.f32.mrb[0].mxu0
    %669 = vmatprep.mubr.f32.mxu0 0.0
    %670 = vmatmul.mubr.f32.gmra.mrb[0].mxu0 %v578
    %v671 = vpop.f32.mrb[0].mxu0
    %v672 = vadd.f32 %v569, %v671
    %v673 = vpop.f32.mrb[0].mxu0
    %674 = vmatprep.mubr.f32.mxu0 0.0
    %675 = vmatmul.mubr.f32.gmra.mrb[0].mxu0 %v581
    %v676 = vpop.f32.mrb[0].mxu0
    %v677 = vadd.f32 %v569, %v676
    %v678 = vpop.f32.mrb[0].mxu0
    %679 = vmatprep.mubr.f32.mxu0 0.0
    %680 = vmatmul.mubr.f32.gmra.mrb[0].mxu0 %v584
    %v681 = vpop.f32.mrb[0].mxu0
    %v682 = vadd.f32 %v569, %v681
    %v683 = vpop.f32.mrb[0].mxu0
    %684 = vmatprep.mubr.f32.mxu0 0.0
    %685 = vmatmul.mubr.f32.gmra.mrb[0].mxu0 %v587
    %v686 = vpop.f32.mrb[0].mxu0
    %v687 = vadd.f32 %v569, %v686
    %v688 = vpop.f32.mrb[0].mxu0
    %689 = vmatprep.mubr.f32.mxu0 0.0
    %690 = vmatmul.mubr.f32.gmra.mrb[0].mxu0 %v590
    %v691 = vpop.f32.mrb[0].mxu0
    %v692 = vadd.f32 %v569, %v691
    %v693 = vpop.f32.mrb[0].mxu0
    %694 = vmatprep.mubr.f32.mxu0 0.0
    %695 = vmatmul.mubr.f32.gmra.mrb[0].mxu0 %v593
    %v696 = vpop.f32.mrb[0].mxu0
    %v697 = vadd.f32 %v569, %v696
    %v698 = vpop.f32.mrb[0].mxu0
    %699 = vdwg.mxu0
    %v700 = vmax.f32 %v662, 0.0
    %v701 = vmax.f32 %v667, 0.0
    %v702 = vmax.f32 %v672, 0.0
    %v703 = vmax.f32 %v677, 0.0
    %v704 = vmax.f32 %v682, 0.0
    %v705 = vmax.f32 %v687, 0.0
    %v706 = vmax.f32 %v692, 0.0
    %v707 = vmax.f32 %v697, 0.0
    %vm708 = vcmask 130048
    %v709 = vsel %vm708, %v700, 0.0
    %710 = vadd.xlane.f32.xlu0 %v709
    %v711 = vpop.xlane.xlu0 %710
    %v712 = vsel %vm708, %v701, 0.0
    %713 = vadd.xlane.f32.xlu0 %v712
    %v714 = vpop.xlane.xlu0 %713
    %v715 = vsel %vm708, %v702, 0.0
    %716 = vadd.xlane.f32.xlu0 %v715
    %v717 = vpop.xlane.xlu0 %716
    %v718 = vsel %vm708, %v703, 0.0
    %719 = vadd.xlane.f32.xlu0 %v718
    %v720 = vpop.xlane.xlu0 %719
    %v721 = vsel %vm708, %v704, 0.0
    %722 = vadd.xlane.f32.xlu0 %v721
    %v723 = vpop.xlane.xlu0 %722
    %v724 = vsel %vm708, %v705, 0.0
    %725 = vadd.xlane.f32.xlu0 %v724
    %v726 = vpop.xlane.xlu0 %725
    %v727 = vsel %vm708, %v706, 0.0
    %728 = vadd.xlane.f32.xlu0 %v727
    %v729 = vpop.xlane.xlu0 %728
    %v730 = vsel %vm708, %v707, 0.0
    %731 = vadd.xlane.f32.xlu0 %v730
    %v732 = vpop.xlane.xlu0 %731
    %v733 = vrcp.pop 16.0
    %v734 = vmul.f32 %v711, %v733
    %v735 = vmul.f32 %v714, %v733
    %v736 = vmul.f32 %v717, %v733
    %v737 = vmul.f32 %v720, %v733
    %v738 = vmul.f32 %v723, %v733
    %v739 = vmul.f32 %v726, %v733
    %v740 = vmul.f32 %v729, %v733
    %v741 = vmul.f32 %v732, %v733
    %v742 = vsub.f32 %v700, %v734
    %v743 = vsub.f32 %v701, %v735
    %v744 = vsub.f32 %v702, %v736
    %v745 = vsub.f32 %v703, %v737
    %v746 = vsub.f32 %v704, %v738
    %v747 = vsub.f32 %v705, %v739
    %v748 = vsub.f32 %v706, %v740
    %v749 = vsub.f32 %v707, %v741
    %v750 = vmul.f32 %v742, %v742
    %v751 = vmul.f32 %v743, %v743
    %v752 = vmul.f32 %v744, %v744
    %v753 = vmul.f32 %v745, %v745
    %v754 = vmul.f32 %v746, %v746
    %v755 = vmul.f32 %v747, %v747
    %v756 = vmul.f32 %v748, %v748
    %v757 = vmul.f32 %v749, %v749
    %v758 = vsel %vm708, %v750, 0.0
    %759 = vadd.xlane.f32.xlu0 %v758
    %v760 = vpop.xlane.xlu0 %759
    %v761 = vsel %vm708, %v751, 0.0
    %762 = vadd.xlane.f32.xlu0 %v761
    %v763 = vpop.xlane.xlu0 %762
    %v764 = vsel %vm708, %v752, 0.0
    %765 = vadd.xlane.f32.xlu0 %v764
    %v766 = vpop.xlane.xlu0 %765
    %v767 = vsel %vm708, %v753, 0.0
    %768 = vadd.xlane.f32.xlu0 %v767
    %v769 = vpop.xlane.xlu0 %768
    %v770 = vsel %vm708, %v754, 0.0
    %771 = vadd.xlane.f32.xlu0 %v770
    %v772 = vpop.xlane.xlu0 %771
    %v773 = vsel %vm708, %v755, 0.0
    %774 = vadd.xlane.f32.xlu0 %v773
    %v775 = vpop.xlane.xlu0 %774
    %v776 = vsel %vm708, %v756, 0.0
    %777 = vadd.xlane.f32.xlu0 %v776
    %v778 = vpop.xlane.xlu0 %777
    %v779 = vsel %vm708, %v757, 0.0
    %780 = vadd.xlane.f32.xlu0 %v779
    %v781 = vpop.xlane.xlu0 %780
    %v782 = vmul.f32 %v760, %v733
    %v783 = vmul.f32 %v763, %v733
    %v784 = vmul.f32 %v766, %v733
    %v785 = vmul.f32 %v769, %v733
    %v786 = vmul.f32 %v772, %v733
    %v787 = vmul.f32 %v775, %v733
    %v788 = vmul.f32 %v778, %v733
    %v789 = vmul.f32 %v781, %v733
    %v790 = vadd.f32 %v782, 1e-05
    %v791 = vadd.f32 %v783, 1e-05
    %v792 = vadd.f32 %v784, 1e-05
    %v793 = vadd.f32 %v785, 1e-05
    %v794 = vadd.f32 %v786, 1e-05
    %v795 = vadd.f32 %v787, 1e-05
    %v796 = vadd.f32 %v788, 1e-05
    %v797 = vadd.f32 %v789, 1e-05
    %v798 = vrsqrt.pop %v790
    %v799 = vrsqrt.pop %v791
    %v800 = vrsqrt.pop %v792
    %v801 = vrsqrt.pop %v793
    %v802 = vrsqrt.pop %v794
    %v803 = vrsqrt.pop %v795
    %v804 = vrsqrt.pop %v796
    %v805 = vrsqrt.pop %v797
    %v806 = vmul.f32 %v742, %v798
    %v807 = vmul.f32 %v743, %v799
    %v808 = vmul.f32 %v744, %v800
    %v809 = vmul.f32 %v745, %v801
    %v810 = vmul.f32 %v746, %v802
    %v811 = vmul.f32 %v747, %v803
    %v812 = vmul.f32 %v748, %v804
    %v813 = vmul.f32 %v749, %v805
    %v815 = vlaneseq
    %v816 = vshrl.u32 %v815, 7
    %v817 = vsub.s32 0, %v816
    %v818 = vrot.slane %v563, %v817
    %v820 = vmul.f32 %v806, %v818
    %v821 = vmul.f32 %v807, %v818
    %v822 = vmul.f32 %v808, %v818
    %v823 = vmul.f32 %v809, %v818
    %v824 = vmul.f32 %v810, %v818
    %v825 = vmul.f32 %v811, %v818
    %v826 = vmul.f32 %v812, %v818
    %v827 = vmul.f32 %v813, %v818
    %v829 = vlaneseq
    %v830 = vshrl.u32 %v829, 7
    %v831 = vsub.s32 0, %v830
    %v832 = vrot.slane %v564, %v831
    %v834 = vadd.f32 %v820, %v832
    %v835 = vadd.f32 %v821, %v832
    %v836 = vadd.f32 %v822, %v832
    %v837 = vadd.f32 %v823, %v832
    %v838 = vadd.f32 %v824, %v832
    %v839 = vadd.f32 %v825, %v832
    %v840 = vadd.f32 %v826, %v832
    %v841 = vadd.f32 %v827, %v832
    %v842 = vld [vmem:[%s25] sm:$0x3f]
    %v843 = vld [vmem:[%s27] sm:$0xff]
    %v844 = vld [vmem:[%s27 + $0x8] sm:$0xff]
    %v845 = vld [vmem:[%s27 + $0x10] sm:$0xff]
    %v846 = vld [vmem:[%s27 + $0x18] sm:$0xff]
    %v847 = vld [vmem:[%s29] sm:$0x1]
    %v848 = vld [vmem:[%s31] sm:$0x3f]
    %v849 = vld [vmem:[%s33] sm:$0xff]
    %v850 = vld [vmem:[%s33 + $0x8] sm:$0xff]
    %v851 = vld [vmem:[%s33 + $0x10] sm:$0xff]
    %v852 = vld [vmem:[%s33 + $0x18] sm:$0xff]
    %v853 = vld [vmem:[%s35] sm:$0x1]
    %854 = vmatprep.subr.mxu0 0.0
    %855 = vmatpush1.msra.mxu0 %v843
    %856 = vmatprep.subr.mxu0 0.0
    %857 = vmatpush1.msra.mxu0 %v844
    %858 = vmatprep.subr.mxu0 0.0
    %859 = vmatpush1.msra.mxu0 %v845
    %860 = vmatprep.subr.mxu0 0.0
    %861 = vmatpush1.msra.mxu0 %v846
    %862 = vmatprep.subr.mxu0 0.0
    %863 = vmatpush1.msra.mxu0 0.0
    %864 = vmatprep.subr.mxu0 0.0
    %865 = vmatpush1.msra.mxu0 0.0
    %866 = vmatprep.subr.mxu0 0.0
    %867 = vmatpush1.msra.mxu0 0.0
    %868 = vmatprep.subr.mxu0 0.0
    %869 = vmatpush1.msra.mxu0 0.0
    %870 = vmatprep.subr.mxu0 0.0
    %871 = vmatpush1.msra.mxu0 0.0
    %872 = vmatprep.subr.mxu0 0.0
    %873 = vmatpush1.msra.mxu0 0.0
    %874 = vmatprep.subr.mxu0 0.0
    %875 = vmatpush1.msra.mxu0 0.0
    %876 = vmatprep.subr.mxu0 0.0
    %877 = vmatpush1.msra.mxu0 0.0
    %878 = vmatprep.subr.mxu0 0.0
    %879 = vmatpush1.msra.mxu0 0.0
    %880 = vmatprep.subr.mxu0 0.0
    %881 = vmatpush1.msra.mxu0 0.0
    %882 = vmatprep.subr.mxu0 0.0
    %883 = vmatpush1.msra.mxu0 0.0
    %884 = vmatprep.subr.mxu0 0.0
    %885 = vmatpush1.msra.mxu0 0.0
    %886 = vmatprep.subr.mxu0 0.0
    %887 = vmatpush1.msra.mxu0 0.0
    %888 = vmatprep.subr.mxu0 0.0
    %889 = vmatpush1.msra.mxu0 0.0
    %890 = vmatprep.subr.mxu0 0.0
    %891 = vmatpush1.msra.mxu0 0.0
    %892 = vmatprep.subr.mxu0 0.0
    %893 = vmatpush1.msra.mxu0 0.0
    %894 = vmatprep.subr.mxu0 0.0
    %895 = vmatpush1.msra.mxu0 0.0
    %896 = vmatprep.subr.mxu0 0.0
    %897 = vmatpush1.msra.mxu0 0.0
    %898 = vmatprep.subr.mxu0 0.0
    %899 = vmatpush1.msra.mxu0 0.0
    %900 = vmatprep.subr.mxu0 0.0
    %901 = vmatpush1.msra.mxu0 0.0
    %902 = vmatprep.subr.mxu0 0.0
    %903 = vmatpush1.msra.mxu0 0.0
    %904 = vmatprep.subr.mxu0 0.0
    %905 = vmatpush1.msra.mxu0 0.0
    %906 = vmatprep.subr.mxu0 0.0
    %907 = vmatpush1.msra.mxu0 0.0
    %908 = vmatprep.subr.mxu0 0.0
    %909 = vmatpush1.msra.mxu0 0.0
    %910 = vmatprep.subr.mxu0 0.0
    %911 = vmatpush1.msra.mxu0 0.0
    %912 = vmatprep.subr.mxu0 0.0
    %913 = vmatpush1.msra.mxu0 0.0
    %914 = vmatprep.subr.mxu0 0.0
    %915 = vmatpush1.msra.mxu0 0.0
    %916 = vmatprep.subr.mxu0 0.0
    %917 = vmatpush1.msra.mxu0 0.0
    %918 = vmatprep.mubr.f32.mxu0 0.0
    %919 = vmatmul.mubr.f32.gmra.mrb[0].mxu0 %v572
    %v920 = vpop.f32.mrb[0].mxu0
    %v921 = vadd.f32 0.0, %v920
    %v922 = vpop.f32.mrb[0].mxu0
    %923 = vmatprep.mubr.f32.mxu0 0.0
    %924 = vmatmul.mubr.f32.gmra.mrb[0].mxu0 %v575
    %v925 = vpop.f32.mrb[0].mxu0
    %v926 = vadd.f32 0.0, %v925
    %v927 = vpop.f32.mrb[0].mxu0
    %928 = vmatprep.mubr.f32.mxu0 0.0
    %929 = vmatmul.mubr.f32.gmra.mrb[0].mxu0 %v578
    %v930 = vpop.f32.mrb[0].mxu0
    %v931 = vadd.f32 0.0, %v930
    %v932 = vpop.f32.mrb[0].mxu0
    %933 = vmatprep.mubr.f32.mxu0 0.0
    %934 = vmatmul.mubr.f32.gmra.mrb[0].mxu0 %v581
    %v935 = vpop.f32.mrb[0].mxu0
    %v936 = vadd.f32 0.0, %v935
    %v937 = vpop.f32.mrb[0].mxu0
    %938 = vmatprep.mubr.f32.mxu0 0.0
    %939 = vmatmul.mubr.f32.gmra.mrb[0].mxu0 %v584
    %v940 = vpop.f32.mrb[0].mxu0
    %v941 = vadd.f32 0.0, %v940
    %v942 = vpop.f32.mrb[0].mxu0
    %943 = vmatprep.mubr.f32.mxu0 0.0
    %944 = vmatmul.mubr.f32.gmra.mrb[0].mxu0 %v587
    %v945 = vpop.f32.mrb[0].mxu0
    %v946 = vadd.f32 0.0, %v945
    %v947 = vpop.f32.mrb[0].mxu0
    %948 = vmatprep.mubr.f32.mxu0 0.0
    %949 = vmatmul.mubr.f32.gmra.mrb[0].mxu0 %v590
    %v950 = vpop.f32.mrb[0].mxu0
    %v951 = vadd.f32 0.0, %v950
    %v952 = vpop.f32.mrb[0].mxu0
    %953 = vmatprep.mubr.f32.mxu0 0.0
    %954 = vmatmul.mubr.f32.gmra.mrb[0].mxu0 %v593
    %v955 = vpop.f32.mrb[0].mxu0
    %v956 = vadd.f32 0.0, %v955
    %v957 = vpop.f32.mrb[0].mxu0
    %958 = vdwg.mxu0
    %vm959 = vcmask 48128
    %v961 = vsel %vm959, %v240, 0
    %v964 = vsel %vm959, %v241, 0
    %v967 = vsel %vm959, %v242, 0
    %v970 = vsel %vm959, %v243, 0
    %v973 = vsel %vm959, %v244, 0
    %v976 = vsel %vm959, %v245, 0
    %v979 = vsel %vm959, %v246, 0
    %v982 = vsel %vm959, %v247, 0
    %vm984 = vcmask 1045504
    %v986 = vsel %vm984, %v842, 0
    %988 = vmatprep.subr.mxu0 0.0
    %989 = vmatpush1.msra.mxu0 %v986
    %990 = vmatprep.subr.mxu0 0.0
    %991 = vmatpush1.msra.mxu0 0.0
    %992 = vmatprep.subr.mxu0 0.0
    %993 = vmatpush1.msra.mxu0 0.0
    %994 = vmatprep.subr.mxu0 0.0
    %995 = vmatpush1.msra.mxu0 0.0
    %996 = vmatprep.subr.mxu0 0.0
    %997 = vmatpush1.msra.mxu0 0.0
    %998 = vmatprep.subr.mxu0 0.0
    %999 = vmatpush1.msra.mxu0 0.0
    %1000 = vmatprep.subr.mxu0 0.0
    %1001 = vmatpush1.msra.mxu0 0.0
    %1002 = vmatprep.subr.mxu0 0.0
    %1003 = vmatpush1.msra.mxu0 0.0
    %1004 = vmatprep.subr.mxu0 0.0
    %1005 = vmatpush1.msra.mxu0 0.0
    %1006 = vmatprep.subr.mxu0 0.0
    %1007 = vmatpush1.msra.mxu0 0.0
    %1008 = vmatprep.subr.mxu0 0.0
    %1009 = vmatpush1.msra.mxu0 0.0
    %1010 = vmatprep.subr.mxu0 0.0
    %1011 = vmatpush1.msra.mxu0 0.0
    %1012 = vmatprep.subr.mxu0 0.0
    %1013 = vmatpush1.msra.mxu0 0.0
    %1014 = vmatprep.subr.mxu0 0.0
    %1015 = vmatpush1.msra.mxu0 0.0
    %1016 = vmatprep.subr.mxu0 0.0
    %1017 = vmatpush1.msra.mxu0 0.0
    %1018 = vmatprep.subr.mxu0 0.0
    %1019 = vmatpush1.msra.mxu0 0.0
    %1020 = vmatprep.subr.mxu0 0.0
    %1021 = vmatpush1.msra.mxu0 0.0
    %1022 = vmatprep.subr.mxu0 0.0
    %1023 = vmatpush1.msra.mxu0 0.0
    %1024 = vmatprep.subr.mxu0 0.0
    %1025 = vmatpush1.msra.mxu0 0.0
    %1026 = vmatprep.subr.mxu0 0.0
    %1027 = vmatpush1.msra.mxu0 0.0
    %1028 = vmatprep.subr.mxu0 0.0
    %1029 = vmatpush1.msra.mxu0 0.0
    %1030 = vmatprep.subr.mxu0 0.0
    %1031 = vmatpush1.msra.mxu0 0.0
    %1032 = vmatprep.subr.mxu0 0.0
    %1033 = vmatpush1.msra.mxu0 0.0
    %1034 = vmatprep.subr.mxu0 0.0
    %1035 = vmatpush1.msra.mxu0 0.0
    %1036 = vmatprep.subr.mxu0 0.0
    %1037 = vmatpush1.msra.mxu0 0.0
    %1038 = vmatprep.subr.mxu0 0.0
    %1039 = vmatpush1.msra.mxu0 0.0
    %1040 = vmatprep.subr.mxu0 0.0
    %1041 = vmatpush1.msra.mxu0 0.0
    %1042 = vmatprep.subr.mxu0 0.0
    %1043 = vmatpush1.msra.mxu0 0.0
    %1044 = vmatprep.subr.mxu0 0.0
    %1045 = vmatpush1.msra.mxu0 0.0
    %1046 = vmatprep.subr.mxu0 0.0
    %1047 = vmatpush1.msra.mxu0 0.0
    %1048 = vmatprep.subr.mxu0 0.0
    %1049 = vmatpush1.msra.mxu0 0.0
    %1050 = vmatprep.subr.mxu0 0.0
    %1051 = vmatpush1.msra.mxu0 0.0
    %1052 = vmatprep.mubr.f32.mxu0 0.0
    %1053 = vmatmul.mubr.f32.gmra.mrb[0].mxu0 %v961
    %v1054 = vpop.f32.mrb[0].mxu0
    %v1055 = vadd.f32 %v921, %v1054
    %v1056 = vpop.f32.mrb[0].mxu0
    %1057 = vmatprep.mubr.f32.mxu0 0.0
    %1058 = vmatmul.mubr.f32.gmra.mrb[0].mxu0 %v964
    %v1059 = vpop.f32.mrb[0].mxu0
    %v1060 = vadd.f32 %v926, %v1059
    %v1061 = vpop.f32.mrb[0].mxu0
    %1062 = vmatprep.mubr.f32.mxu0 0.0
    %1063 = vmatmul.mubr.f32.gmra.mrb[0].mxu0 %v967
    %v1064 = vpop.f32.mrb[0].mxu0
    %v1065 = vadd.f32 %v931, %v1064
    %v1066 = vpop.f32.mrb[0].mxu0
    %1067 = vmatprep.mubr.f32.mxu0 0.0
    %1068 = vmatmul.mubr.f32.gmra.mrb[0].mxu0 %v970
    %v1069 = vpop.f32.mrb[0].mxu0
    %v1070 = vadd.f32 %v936, %v1069
    %v1071 = vpop.f32.mrb[0].mxu0
    %1072 = vmatprep.mubr.f32.mxu0 0.0
    %1073 = vmatmul.mubr.f32.gmra.mrb[0].mxu0 %v973
    %v1074 = vpop.f32.mrb[0].mxu0
    %v1075 = vadd.f32 %v941, %v1074
    %v1076 = vpop.f32.mrb[0].mxu0
    %1077 = vmatprep.mubr.f32.mxu0 0.0
    %1078 = vmatmul.mubr.f32.gmra.mrb[0].mxu0 %v976
    %v1079 = vpop.f32.mrb[0].mxu0
    %v1080 = vadd.f32 %v946, %v1079
    %v1081 = vpop.f32.mrb[0].mxu0
    %1082 = vmatprep.mubr.f32.mxu0 0.0
    %1083 = vmatmul.mubr.f32.gmra.mrb[0].mxu0 %v979
    %v1084 = vpop.f32.mrb[0].mxu0
    %v1085 = vadd.f32 %v951, %v1084
    %v1086 = vpop.f32.mrb[0].mxu0
    %1087 = vmatprep.mubr.f32.mxu0 0.0
    %1088 = vmatmul.mubr.f32.gmra.mrb[0].mxu0 %v982
    %v1089 = vpop.f32.mrb[0].mxu0
    %v1090 = vadd.f32 %v956, %v1089
    %v1091 = vpop.f32.mrb[0].mxu0
    %1092 = vdwg.mxu0
    %v1094 = vlaneseq
    %v1095 = vshrl.u32 %v1094, 7
    %v1096 = vsub.s32 0, %v1095
    %v1097 = vrot.slane %v847, %v1096
    %v1099 = vadd.f32 %v1055, %v1097
    %v1100 = vadd.f32 %v1060, %v1097
    %v1101 = vadd.f32 %v1065, %v1097
    %v1102 = vadd.f32 %v1070, %v1097
    %v1103 = vadd.f32 %v1075, %v1097
    %v1104 = vadd.f32 %v1080, %v1097
    %v1105 = vadd.f32 %v1085, %v1097
    %v1106 = vadd.f32 %v1090, %v1097
    %1107 = vmatprep.subr.mxu0 0.0
    %1108 = vmatpush1.msra.mxu0 %v849
    %1109 = vmatprep.subr.mxu0 0.0
    %1110 = vmatpush1.msra.mxu0 %v850
    %1111 = vmatprep.subr.mxu0 0.0
    %1112 = vmatpush1.msra.mxu0 %v851
    %1113 = vmatprep.subr.mxu0 0.0
    %1114 = vmatpush1.msra.mxu0 %v852
    %1115 = vmatprep.subr.mxu0 0.0
    %1116 = vmatpush1.msra.mxu0 0.0
    %1117 = vmatprep.subr.mxu0 0.0
    %1118 = vmatpush1.msra.mxu0 0.0
    %1119 = vmatprep.subr.mxu0 0.0
    %1120 = vmatpush1.msra.mxu0 0.0
    %1121 = vmatprep.subr.mxu0 0.0
    %1122 = vmatpush1.msra.mxu0 0.0
    %1123 = vmatprep.subr.mxu0 0.0
    %1124 = vmatpush1.msra.mxu0 0.0
    %1125 = vmatprep.subr.mxu0 0.0
    %1126 = vmatpush1.msra.mxu0 0.0
    %1127 = vmatprep.subr.mxu0 0.0
    %1128 = vmatpush1.msra.mxu0 0.0
    %1129 = vmatprep.subr.mxu0 0.0
    %1130 = vmatpush1.msra.mxu0 0.0
    %1131 = vmatprep.subr.mxu0 0.0
    %1132 = vmatpush1.msra.mxu0 0.0
    %1133 = vmatprep.subr.mxu0 0.0
    %1134 = vmatpush1.msra.mxu0 0.0
    %1135 = vmatprep.subr.mxu0 0.0
    %1136 = vmatpush1.msra.mxu0 0.0
    %1137 = vmatprep.subr.mxu0 0.0
    %1138 = vmatpush1.msra.mxu0 0.0
    %1139 = vmatprep.subr.mxu0 0.0
    %1140 = vmatpush1.msra.mxu0 0.0
    %1141 = vmatprep.subr.mxu0 0.0
    %1142 = vmatpush1.msra.mxu0 0.0
    %1143 = vmatprep.subr.mxu0 0.0
    %1144 = vmatpush1.msra.mxu0 0.0
    %1145 = vmatprep.subr.mxu0 0.0
    %1146 = vmatpush1.msra.mxu0 0.0
    %1147 = vmatprep.subr.mxu0 0.0
    %1148 = vmatpush1.msra.mxu0 0.0
    %1149 = vmatprep.subr.mxu0 0.0
    %1150 = vmatpush1.msra.mxu0 0.0
    %1151 = vmatprep.subr.mxu0 0.0
    %1152 = vmatpush1.msra.mxu0 0.0
    %1153 = vmatprep.subr.mxu0 0.0
    %1154 = vmatpush1.msra.mxu0 0.0
    %1155 = vmatprep.subr.mxu0 0.0
    %1156 = vmatpush1.msra.mxu0 0.0
    %1157 = vmatprep.subr.mxu0 0.0
    %1158 = vmatpush1.msra.mxu0 0.0
    %1159 = vmatprep.subr.mxu0 0.0
    %1160 = vmatpush1.msra.mxu0 0.0
    %1161 = vmatprep.subr.mxu0 0.0
    %1162 = vmatpush1.msra.mxu0 0.0
    %1163 = vmatprep.subr.mxu0 0.0
    %1164 = vmatpush1.msra.mxu0 0.0
    %1165 = vmatprep.subr.mxu0 0.0
    %1166 = vmatpush1.msra.mxu0 0.0
    %1167 = vmatprep.subr.mxu0 0.0
    %1168 = vmatpush1.msra.mxu0 0.0
    %1169 = vmatprep.subr.mxu0 0.0
    %1170 = vmatpush1.msra.mxu0 0.0
    %1171 = vmatprep.mubr.f32.mxu0 0.0
    %1172 = vmatmul.mubr.f32.gmra.mrb[0].mxu0 %v572
    %v1173 = vpop.f32.mrb[0].mxu0
    %v1174 = vadd.f32 0.0, %v1173
    %v1175 = vpop.f32.mrb[0].mxu0
    %1176 = vmatprep.mubr.f32.mxu0 0.0
    %1177 = vmatmul.mubr.f32.gmra.mrb[0].mxu0 %v575
    %v1178 = vpop.f32.mrb[0].mxu0
    %v1179 = vadd.f32 0.0, %v1178
    %v1180 = vpop.f32.mrb[0].mxu0
    %1181 = vmatprep.mubr.f32.mxu0 0.0
    %1182 = vmatmul.mubr.f32.gmra.mrb[0].mxu0 %v578
    %v1183 = vpop.f32.mrb[0].mxu0
    %v1184 = vadd.f32 0.0, %v1183
    %v1185 = vpop.f32.mrb[0].mxu0
    %1186 = vmatprep.mubr.f32.mxu0 0.0
    %1187 = vmatmul.mubr.f32.gmra.mrb[0].mxu0 %v581
    %v1188 = vpop.f32.mrb[0].mxu0
    %v1189 = vadd.f32 0.0, %v1188
    %v1190 = vpop.f32.mrb[0].mxu0
    %1191 = vmatprep.mubr.f32.mxu0 0.0
    %1192 = vmatmul.mubr.f32.gmra.mrb[0].mxu0 %v584
    %v1193 = vpop.f32.mrb[0].mxu0
    %v1194 = vadd.f32 0.0, %v1193
    %v1195 = vpop.f32.mrb[0].mxu0
    %1196 = vmatprep.mubr.f32.mxu0 0.0
    %1197 = vmatmul.mubr.f32.gmra.mrb[0].mxu0 %v587
    %v1198 = vpop.f32.mrb[0].mxu0
    %v1199 = vadd.f32 0.0, %v1198
    %v1200 = vpop.f32.mrb[0].mxu0
    %1201 = vmatprep.mubr.f32.mxu0 0.0
    %1202 = vmatmul.mubr.f32.gmra.mrb[0].mxu0 %v590
    %v1203 = vpop.f32.mrb[0].mxu0
    %v1204 = vadd.f32 0.0, %v1203
    %v1205 = vpop.f32.mrb[0].mxu0
    %1206 = vmatprep.mubr.f32.mxu0 0.0
    %1207 = vmatmul.mubr.f32.gmra.mrb[0].mxu0 %v593
    %v1208 = vpop.f32.mrb[0].mxu0
    %v1209 = vadd.f32 0.0, %v1208
    %v1210 = vpop.f32.mrb[0].mxu0
    %1211 = vdwg.mxu0
    %v1213 = vsel %vm984, %v848, 0
    %1215 = vmatprep.subr.mxu0 0.0
    %1216 = vmatpush1.msra.mxu0 %v1213
    %1217 = vmatprep.subr.mxu0 0.0
    %1218 = vmatpush1.msra.mxu0 0.0
    %1219 = vmatprep.subr.mxu0 0.0
    %1220 = vmatpush1.msra.mxu0 0.0
    %1221 = vmatprep.subr.mxu0 0.0
    %1222 = vmatpush1.msra.mxu0 0.0
    %1223 = vmatprep.subr.mxu0 0.0
    %1224 = vmatpush1.msra.mxu0 0.0
    %1225 = vmatprep.subr.mxu0 0.0
    %1226 = vmatpush1.msra.mxu0 0.0
    %1227 = vmatprep.subr.mxu0 0.0
    %1228 = vmatpush1.msra.mxu0 0.0
    %1229 = vmatprep.subr.mxu0 0.0
    %1230 = vmatpush1.msra.mxu0 0.0
    %1231 = vmatprep.subr.mxu0 0.0
    %1232 = vmatpush1.msra.mxu0 0.0
    %1233 = vmatprep.subr.mxu0 0.0
    %1234 = vmatpush1.msra.mxu0 0.0
    %1235 = vmatprep.subr.mxu0 0.0
    %1236 = vmatpush1.msra.mxu0 0.0
    %1237 = vmatprep.subr.mxu0 0.0
    %1238 = vmatpush1.msra.mxu0 0.0
    %1239 = vmatprep.subr.mxu0 0.0
    %1240 = vmatpush1.msra.mxu0 0.0
    %1241 = vmatprep.subr.mxu0 0.0
    %1242 = vmatpush1.msra.mxu0 0.0
    %1243 = vmatprep.subr.mxu0 0.0
    %1244 = vmatpush1.msra.mxu0 0.0
    %1245 = vmatprep.subr.mxu0 0.0
    %1246 = vmatpush1.msra.mxu0 0.0
    %1247 = vmatprep.subr.mxu0 0.0
    %1248 = vmatpush1.msra.mxu0 0.0
    %1249 = vmatprep.subr.mxu0 0.0
    %1250 = vmatpush1.msra.mxu0 0.0
    %1251 = vmatprep.subr.mxu0 0.0
    %1252 = vmatpush1.msra.mxu0 0.0
    %1253 = vmatprep.subr.mxu0 0.0
    %1254 = vmatpush1.msra.mxu0 0.0
    %1255 = vmatprep.subr.mxu0 0.0
    %1256 = vmatpush1.msra.mxu0 0.0
    %1257 = vmatprep.subr.mxu0 0.0
    %1258 = vmatpush1.msra.mxu0 0.0
    %1259 = vmatprep.subr.mxu0 0.0
    %1260 = vmatpush1.msra.mxu0 0.0
    %1261 = vmatprep.subr.mxu0 0.0
    %1262 = vmatpush1.msra.mxu0 0.0
    %1263 = vmatprep.subr.mxu0 0.0
    %1264 = vmatpush1.msra.mxu0 0.0
    %1265 = vmatprep.subr.mxu0 0.0
    %1266 = vmatpush1.msra.mxu0 0.0
    %1267 = vmatprep.subr.mxu0 0.0
    %1268 = vmatpush1.msra.mxu0 0.0
    %1269 = vmatprep.subr.mxu0 0.0
    %1270 = vmatpush1.msra.mxu0 0.0
    %1271 = vmatprep.subr.mxu0 0.0
    %1272 = vmatpush1.msra.mxu0 0.0
    %1273 = vmatprep.subr.mxu0 0.0
    %1274 = vmatpush1.msra.mxu0 0.0
    %1275 = vmatprep.subr.mxu0 0.0
    %1276 = vmatpush1.msra.mxu0 0.0
    %1277 = vmatprep.subr.mxu0 0.0
    %1278 = vmatpush1.msra.mxu0 0.0
    %1279 = vmatprep.mubr.f32.mxu0 0.0
    %1280 = vmatmul.mubr.f32.gmra.mrb[0].mxu0 %v961
    %v1281 = vpop.f32.mrb[0].mxu0
    %v1282 = vadd.f32 %v1174, %v1281
    %v1283 = vpop.f32.mrb[0].mxu0
    %1284 = vmatprep.mubr.f32.mxu0 0.0
    %1285 = vmatmul.mubr.f32.gmra.mrb[0].mxu0 %v964
    %v1286 = vpop.f32.mrb[0].mxu0
    %v1287 = vadd.f32 %v1179, %v1286
    %v1288 = vpop.f32.mrb[0].mxu0
    %1289 = vmatprep.mubr.f32.mxu0 0.0
    %1290 = vmatmul.mubr.f32.gmra.mrb[0].mxu0 %v967
    %v1291 = vpop.f32.mrb[0].mxu0
    %v1292 = vadd.f32 %v1184, %v1291
    %v1293 = vpop.f32.mrb[0].mxu0
    %1294 = vmatprep.mubr.f32.mxu0 0.0
    %1295 = vmatmul.mubr.f32.gmra.mrb[0].mxu0 %v970
    %v1296 = vpop.f32.mrb[0].mxu0
    %v1297 = vadd.f32 %v1189, %v1296
    %v1298 = vpop.f32.mrb[0].mxu0
    %1299 = vmatprep.mubr.f32.mxu0 0.0
    %1300 = vmatmul.mubr.f32.gmra.mrb[0].mxu0 %v973
    %v1301 = vpop.f32.mrb[0].mxu0
    %v1302 = vadd.f32 %v1194, %v1301
    %v1303 = vpop.f32.mrb[0].mxu0
    %1304 = vmatprep.mubr.f32.mxu0 0.0
    %1305 = vmatmul.mubr.f32.gmra.mrb[0].mxu0 %v976
    %v1306 = vpop.f32.mrb[0].mxu0
    %v1307 = vadd.f32 %v1199, %v1306
    %v1308 = vpop.f32.mrb[0].mxu0
    %1309 = vmatprep.mubr.f32.mxu0 0.0
    %1310 = vmatmul.mubr.f32.gmra.mrb[0].mxu0 %v979
    %v1311 = vpop.f32.mrb[0].mxu0
    %v1312 = vadd.f32 %v1204, %v1311
    %v1313 = vpop.f32.mrb[0].mxu0
    %1314 = vmatprep.mubr.f32.mxu0 0.0
    %1315 = vmatmul.mubr.f32.gmra.mrb[0].mxu0 %v982
    %v1316 = vpop.f32.mrb[0].mxu0
    %v1317 = vadd.f32 %v1209, %v1316
    %v1318 = vpop.f32.mrb[0].mxu0
    %1319 = vdwg.mxu0
    %v1321 = vlaneseq
    %v1322 = vshrl.u32 %v1321, 7
    %v1323 = vsub.s32 0, %v1322
    %v1324 = vrot.slane %v853, %v1323
    %v1326 = vadd.f32 %v1282, %v1324
    %v1327 = vadd.f32 %v1287, %v1324
    %v1328 = vadd.f32 %v1292, %v1324
    %v1329 = vadd.f32 %v1297, %v1324
    %v1330 = vadd.f32 %v1302, %v1324
    %v1331 = vadd.f32 %v1307, %v1324
    %v1332 = vadd.f32 %v1312, %v1324
    %v1333 = vadd.f32 %v1317, %v1324
    %1342 = vrot.lane.b32.xlu0 %v1099, 112
    %v1343 = vpop.permute.xlu0 %1342
    %1344 = vrot.lane.b32.xlu0 %v1100, 112
    %v1345 = vpop.permute.xlu0 %1344
    %1346 = vrot.lane.b32.xlu0 %v1101, 112
    %v1347 = vpop.permute.xlu0 %1346
    %1348 = vrot.lane.b32.xlu0 %v1102, 112
    %v1349 = vpop.permute.xlu0 %1348
    %1350 = vrot.lane.b32.xlu0 %v1103, 112
    %v1351 = vpop.permute.xlu0 %1350
    %1352 = vrot.lane.b32.xlu0 %v1104, 112
    %v1353 = vpop.permute.xlu0 %1352
    %1354 = vrot.lane.b32.xlu0 %v1105, 112
    %v1355 = vpop.permute.xlu0 %1354
    %1356 = vrot.lane.b32.xlu0 %v1106, 112
    %v1357 = vpop.permute.xlu0 %1356
    %v1358 = vsel %vm708, %v1099, 0
    %v1360 = vsel %vm708, %v1100, 0
    %v1362 = vsel %vm708, %v1101, 0
    %v1364 = vsel %vm708, %v1102, 0
    %v1366 = vsel %vm708, %v1103, 0
    %v1368 = vsel %vm708, %v1104, 0
    %v1370 = vsel %vm708, %v1105, 0
    %v1372 = vsel %vm708, %v1106, 0
    %v1374 = vsel %vm708, %v1343, 0
    %v1376 = vsel %vm708, %v1345, 0
    %v1378 = vsel %vm708, %v1347, 0
    %v1380 = vsel %vm708, %v1349, 0
    %v1382 = vsel %vm708, %v1351, 0
    %v1384 = vsel %vm708, %v1353, 0
    %v1386 = vsel %vm708, %v1355, 0
    %v1388 = vsel %vm708, %v1357, 0
    %1390 = vmatprep.subr.mxu0 0.0
    %1391 = vmatpush1.xpose.msra.mxu0 %v1374
    %1392 = vmatprep.subr.mxu0 0.0
    %1393 = vmatpush1.xpose.msra.mxu0 %v1376
    %1394 = vmatprep.subr.mxu0 0.0
    %1395 = vmatpush1.xpose.msra.mxu0 %v1378
    %1396 = vmatprep.subr.mxu0 0.0
    %1397 = vmatpush1.xpose.msra.mxu0 %v1380
    %1398 = vmatprep.subr.mxu0 0.0
    %1399 = vmatpush1.xpose.msra.mxu0 %v1382
    %1400 = vmatprep.subr.mxu0 0.0
    %1401 = vmatpush1.xpose.msra.mxu0 %v1384
    %1402 = vmatprep.subr.mxu0 0.0
    %1403 = vmatpush1.xpose.msra.mxu0 %v1386
    %1404 = vmatprep.subr.mxu0 0.0
    %1405 = vmatpush1.xpose.msra.mxu0 %v1388
    %1406 = vmatprep.subr.mxu0 0.0
    %1407 = vmatpush1.xpose.msra.mxu0 0.0
    %1408 = vmatprep.subr.mxu0 0.0
    %1409 = vmatpush1.xpose.msra.mxu0 0.0
    %1410 = vmatprep.subr.mxu0 0.0
    %1411 = vmatpush1.xpose.msra.mxu0 0.0
    %1412 = vmatprep.subr.mxu0 0.0
    %1413 = vmatpush1.xpose.msra.mxu0 0.0
    %1414 = vmatprep.subr.mxu0 0.0
    %1415 = vmatpush1.xpose.msra.mxu0 0.0
    %1416 = vmatprep.subr.mxu0 0.0
    %1417 = vmatpush1.xpose.msra.mxu0 0.0
    %1418 = vmatprep.subr.mxu0 0.0
    %1419 = vmatpush1.xpose.msra.mxu0 0.0
    %1420 = vmatprep.subr.mxu0 0.0
    %1421 = vmatpush1.xpose.msra.mxu0 0.0
    %1422 = vmatprep.subr.mxu0 0.0
    %1423 = vmatpush1.xpose.msra.mxu0 0.0
    %1424 = vmatprep.subr.mxu0 0.0
    %1425 = vmatpush1.xpose.msra.mxu0 0.0
    %1426 = vmatprep.subr.mxu0 0.0
    %1427 = vmatpush1.xpose.msra.mxu0 0.0
    %1428 = vmatprep.subr.mxu0 0.0
    %1429 = vmatpush1.xpose.msra.mxu0 0.0
    %1430 = vmatprep.subr.mxu0 0.0
    %1431 = vmatpush1.xpose.msra.mxu0 0.0
    %1432 = vmatprep.subr.mxu0 0.0
    %1433 = vmatpush1.xpose.msra.mxu0 0.0
    %1434 = vmatprep.subr.mxu0 0.0
    %1435 = vmatpush1.xpose.msra.mxu0 0.0
    %1436 = vmatprep.subr.mxu0 0.0
    %1437 = vmatpush1.xpose.msra.mxu0 0.0
    %1438 = vmatprep.subr.mxu0 0.0
    %1439 = vmatpush1.xpose.msra.mxu0 0.0
    %1440 = vmatprep.subr.mxu0 0.0
    %1441 = vmatpush1.xpose.msra.mxu0 0.0
    %1442 = vmatprep.subr.mxu0 0.0
    %1443 = vmatpush1.xpose.msra.mxu0 0.0
    %1444 = vmatprep.subr.mxu0 0.0
    %1445 = vmatpush1.xpose.msra.mxu0 0.0
    %1446 = vmatprep.subr.mxu0 0.0
    %1447 = vmatpush1.xpose.msra.mxu0 0.0
    %1448 = vmatprep.subr.mxu0 0.0
    %1449 = vmatpush1.xpose.msra.mxu0 0.0
    %1450 = vmatprep.subr.mxu0 0.0
    %1451 = vmatpush1.xpose.msra.mxu0 0.0
    %1452 = vmatprep.subr.mxu0 0.0
    %1453 = vmatpush1.xpose.msra.mxu0 0.0
    %1454 = vmatprep.mubr.f32.mxu0 0.0
    %1455 = vmatmul.mubr.f32.gmra.mrb[0].mxu0 %v1358
    %v1456 = vpop.f32.mrb[0].mxu0
    %v1457 = vadd.f32 0.0, %v1456
    %v1458 = vpop.f32.mrb[0].mxu0
    %1459 = vmatprep.mubr.f32.mxu0 0.0
    %1460 = vmatmul.mubr.f32.gmra.mrb[0].mxu0 %v1360
    %v1461 = vpop.f32.mrb[0].mxu0
    %v1462 = vadd.f32 0.0, %v1461
    %v1463 = vpop.f32.mrb[0].mxu0
    %1464 = vmatprep.mubr.f32.mxu0 0.0
    %1465 = vmatmul.mubr.f32.gmra.mrb[0].mxu0 %v1362
    %v1466 = vpop.f32.mrb[0].mxu0
    %v1467 = vadd.f32 0.0, %v1466
    %v1468 = vpop.f32.mrb[0].mxu0
    %1469 = vmatprep.mubr.f32.mxu0 0.0
    %1470 = vmatmul.mubr.f32.gmra.mrb[0].mxu0 %v1364
    %v1471 = vpop.f32.mrb[0].mxu0
    %v1472 = vadd.f32 0.0, %v1471
    %v1473 = vpop.f32.mrb[0].mxu0
    %1474 = vmatprep.mubr.f32.mxu0 0.0
    %1475 = vmatmul.mubr.f32.gmra.mrb[0].mxu0 %v1366
    %v1476 = vpop.f32.mrb[0].mxu0
    %v1477 = vadd.f32 0.0, %v1476
    %v1478 = vpop.f32.mrb[0].mxu0
    %1479 = vmatprep.mubr.f32.mxu0 0.0
    %1480 = vmatmul.mubr.f32.gmra.mrb[0].mxu0 %v1368
    %v1481 = vpop.f32.mrb[0].mxu0
    %v1482 = vadd.f32 0.0, %v1481
    %v1483 = vpop.f32.mrb[0].mxu0
    %1484 = vmatprep.mubr.f32.mxu0 0.0
    %1485 = vmatmul.mubr.f32.gmra.mrb[0].mxu0 %v1370
    %v1486 = vpop.f32.mrb[0].mxu0
    %v1487 = vadd.f32 0.0, %v1486
    %v1488 = vpop.f32.mrb[0].mxu0
    %1489 = vmatprep.mubr.f32.mxu0 0.0
    %1490 = vmatmul.mubr.f32.gmra.mrb[0].mxu0 %v1372
    %v1491 = vpop.f32.mrb[0].mxu0
    %v1492 = vadd.f32 0.0, %v1491
    %v1493 = vpop.f32.mrb[0].mxu0
    %1494 = vdwg.mxu0
    %v1495 = vmul.f32 %v1457, 0.25
    %v1496 = vmul.f32 %v1462, 0.25
    %v1497 = vmul.f32 %v1467, 0.25
    %v1498 = vmul.f32 %v1472, 0.25
    %v1499 = vmul.f32 %v1477, 0.25
    %v1500 = vmul.f32 %v1482, 0.25
    %v1501 = vmul.f32 %v1487, 0.25
    %v1502 = vmul.f32 %v1492, 0.25
    %vm1503 = vcmp.gt.f32.partialorder %v256, 0.0
    %vm1504 = vcmp.gt.f32.partialorder %v257, 0.0
    %vm1505 = vcmp.gt.f32.partialorder %v258, 0.0
    %vm1506 = vcmp.gt.f32.partialorder %v259, 0.0
    %vm1507 = vcmp.gt.f32.partialorder %v260, 0.0
    %vm1508 = vcmp.gt.f32.partialorder %v261, 0.0
    %vm1509 = vcmp.gt.f32.partialorder %v262, 0.0
    %vm1510 = vcmp.gt.f32.partialorder %v263, 0.0
    %v1511 = vsel %vm1503, %v1495, -1e+30
    %v1512 = vsel %vm1504, %v1496, -1e+30
    %v1513 = vsel %vm1505, %v1497, -1e+30
    %v1514 = vsel %vm1506, %v1498, -1e+30
    %v1515 = vsel %vm1507, %v1499, -1e+30
    %v1516 = vsel %vm1508, %v1500, -1e+30
    %v1517 = vsel %vm1509, %v1501, -1e+30
    %v1518 = vsel %vm1510, %v1502, -1e+30
    %vm1519 = vcmask 523264
    %v1520 = vsel %vm1519, %v1511, -inf
    %1521 = vmax.xlane.f32.xlu0 %v1520
    %v1522 = vpop.xlane.xlu0 %1521
    %v1523 = vsel %vm1519, %v1512, -inf
    %1524 = vmax.xlane.f32.xlu0 %v1523
    %v1525 = vpop.xlane.xlu0 %1524
    %v1526 = vsel %vm1519, %v1513, -inf
    %1527 = vmax.xlane.f32.xlu0 %v1526
    %v1528 = vpop.xlane.xlu0 %1527
    %v1529 = vsel %vm1519, %v1514, -inf
    %1530 = vmax.xlane.f32.xlu0 %v1529
    %v1531 = vpop.xlane.xlu0 %1530
    %v1532 = vsel %vm1519, %v1515, -inf
    %1533 = vmax.xlane.f32.xlu0 %v1532
    %v1534 = vpop.xlane.xlu0 %1533
    %v1535 = vsel %vm1519, %v1516, -inf
    %1536 = vmax.xlane.f32.xlu0 %v1535
    %v1537 = vpop.xlane.xlu0 %1536
    %v1538 = vsel %vm1519, %v1517, -inf
    %1539 = vmax.xlane.f32.xlu0 %v1538
    %v1540 = vpop.xlane.xlu0 %1539
    %v1541 = vsel %vm1519, %v1518, -inf
    %1542 = vmax.xlane.f32.xlu0 %v1541
    %v1543 = vpop.xlane.xlu0 %1542
    %v1544 = vsub.f32 %v1511, %v1522
    %v1545 = vsub.f32 %v1512, %v1525
    %v1546 = vsub.f32 %v1513, %v1528
    %v1547 = vsub.f32 %v1514, %v1531
    %v1548 = vsub.f32 %v1515, %v1534
    %v1549 = vsub.f32 %v1516, %v1537
    %v1550 = vsub.f32 %v1517, %v1540
    %v1551 = vsub.f32 %v1518, %v1543
    %v1552 = vmul.f32 %v1544, 1.442695
    %v1553 = vpow.pop %v1552
    %v1554 = vmul.f32 %v1545, 1.442695
    %v1555 = vpow.pop %v1554
    %v1556 = vmul.f32 %v1546, 1.442695
    %v1557 = vpow.pop %v1556
    %v1558 = vmul.f32 %v1547, 1.442695
    %v1559 = vpow.pop %v1558
    %v1560 = vmul.f32 %v1548, 1.442695
    %v1561 = vpow.pop %v1560
    %v1562 = vmul.f32 %v1549, 1.442695
    %v1563 = vpow.pop %v1562
    %v1564 = vmul.f32 %v1550, 1.442695
    %v1565 = vpow.pop %v1564
    %v1566 = vmul.f32 %v1551, 1.442695
    %v1567 = vpow.pop %v1566
    %v1568 = vmul.f32 %v1553, %v256
    %v1569 = vmul.f32 %v1555, %v257
    %v1570 = vmul.f32 %v1557, %v258
    %v1571 = vmul.f32 %v1559, %v259
    %v1572 = vmul.f32 %v1561, %v260
    %v1573 = vmul.f32 %v1563, %v261
    %v1574 = vmul.f32 %v1565, %v262
    %v1575 = vmul.f32 %v1567, %v263
    %v1576 = vsel %vm1519, %v1568, 0.0
    %1577 = vadd.xlane.f32.xlu0 %v1576
    %v1578 = vpop.xlane.xlu0 %1577
    %v1579 = vsel %vm1519, %v1569, 0.0
    %1580 = vadd.xlane.f32.xlu0 %v1579
    %v1581 = vpop.xlane.xlu0 %1580
    %v1582 = vsel %vm1519, %v1570, 0.0
    %1583 = vadd.xlane.f32.xlu0 %v1582
    %v1584 = vpop.xlane.xlu0 %1583
    %v1585 = vsel %vm1519, %v1571, 0.0
    %1586 = vadd.xlane.f32.xlu0 %v1585
    %v1587 = vpop.xlane.xlu0 %1586
    %v1588 = vsel %vm1519, %v1572, 0.0
    %1589 = vadd.xlane.f32.xlu0 %v1588
    %v1590 = vpop.xlane.xlu0 %1589
    %v1591 = vsel %vm1519, %v1573, 0.0
    %1592 = vadd.xlane.f32.xlu0 %v1591
    %v1593 = vpop.xlane.xlu0 %1592
    %v1594 = vsel %vm1519, %v1574, 0.0
    %1595 = vadd.xlane.f32.xlu0 %v1594
    %v1596 = vpop.xlane.xlu0 %1595
    %v1597 = vsel %vm1519, %v1575, 0.0
    %1598 = vadd.xlane.f32.xlu0 %v1597
    %v1599 = vpop.xlane.xlu0 %1598
    %vm1600 = vcmp.gt.f32.partialorder %v1578, 0.0
    %vm1601 = vcmp.gt.f32.partialorder %v1581, 0.0
    %vm1602 = vcmp.gt.f32.partialorder %v1584, 0.0
    %vm1603 = vcmp.gt.f32.partialorder %v1587, 0.0
    %vm1604 = vcmp.gt.f32.partialorder %v1590, 0.0
    %vm1605 = vcmp.gt.f32.partialorder %v1593, 0.0
    %vm1606 = vcmp.gt.f32.partialorder %v1596, 0.0
    %vm1607 = vcmp.gt.f32.partialorder %v1599, 0.0
    %v1608 = vsel %vm1600, %v1578, 1.0
    %v1609 = vsel %vm1601, %v1581, 1.0
    %v1610 = vsel %vm1602, %v1584, 1.0
    %v1611 = vsel %vm1603, %v1587, 1.0
    %v1612 = vsel %vm1604, %v1590, 1.0
    %v1613 = vsel %vm1605, %v1593, 1.0
    %v1614 = vsel %vm1606, %v1596, 1.0
    %v1615 = vsel %vm1607, %v1599, 1.0
    %v1616 = vrcp.pop %v1608
    %v1617 = vrcp.pop %v1609
    %v1618 = vrcp.pop %v1610
    %v1619 = vrcp.pop %v1611
    %v1620 = vrcp.pop %v1612
    %v1621 = vrcp.pop %v1613
    %v1622 = vrcp.pop %v1614
    %v1623 = vrcp.pop %v1615
    %v1624 = vmul.f32 %v1568, %v1616
    %v1625 = vmul.f32 %v1569, %v1617
    %v1626 = vmul.f32 %v1570, %v1618
    %v1627 = vmul.f32 %v1571, %v1619
    %v1628 = vmul.f32 %v1572, %v1620
    %v1629 = vmul.f32 %v1573, %v1621
    %v1630 = vmul.f32 %v1574, %v1622
    %v1631 = vmul.f32 %v1575, %v1623
    %1632 = vrot.lane.b32.xlu0 %v1099, 96
    %v1633 = vpop.permute.xlu0 %1632
    %1634 = vrot.lane.b32.xlu0 %v1100, 96
    %v1635 = vpop.permute.xlu0 %1634
    %1636 = vrot.lane.b32.xlu0 %v1101, 96
    %v1637 = vpop.permute.xlu0 %1636
    %1638 = vrot.lane.b32.xlu0 %v1102, 96
    %v1639 = vpop.permute.xlu0 %1638
    %1640 = vrot.lane.b32.xlu0 %v1103, 96
    %v1641 = vpop.permute.xlu0 %1640
    %1642 = vrot.lane.b32.xlu0 %v1104, 96
    %v1643 = vpop.permute.xlu0 %1642
    %1644 = vrot.lane.b32.xlu0 %v1105, 96
    %v1645 = vpop.permute.xlu0 %1644
    %1646 = vrot.lane.b32.xlu0 %v1106, 96
    %v1647 = vpop.permute.xlu0 %1646
    %1656 = vrot.lane.b32.xlu0 %v1099, 80
    %v1657 = vpop.permute.xlu0 %1656
    %1658 = vrot.lane.b32.xlu0 %v1100, 80
    %v1659 = vpop.permute.xlu0 %1658
    %1660 = vrot.lane.b32.xlu0 %v1101, 80
    %v1661 = vpop.permute.xlu0 %1660
    %1662 = vrot.lane.b32.xlu0 %v1102, 80
    %v1663 = vpop.permute.xlu0 %1662
    %1664 = vrot.lane.b32.xlu0 %v1103, 80
    %v1665 = vpop.permute.xlu0 %1664
    %1666 = vrot.lane.b32.xlu0 %v1104, 80
    %v1667 = vpop.permute.xlu0 %1666
    %1668 = vrot.lane.b32.xlu0 %v1105, 80
    %v1669 = vpop.permute.xlu0 %1668
    %1670 = vrot.lane.b32.xlu0 %v1106, 80
    %v1671 = vpop.permute.xlu0 %1670
    %v1681 = vsel %vm1519, %v1624, 0
    %v1684 = vsel %vm1519, %v1625, 0
    %v1687 = vsel %vm1519, %v1626, 0
    %v1690 = vsel %vm1519, %v1627, 0
    %v1693 = vsel %vm1519, %v1628, 0
    %v1696 = vsel %vm1519, %v1629, 0
    %v1699 = vsel %vm1519, %v1630, 0
    %v1702 = vsel %vm1519, %v1631, 0
    %1704 = vmatprep.subr.mxu0 0.0
    %1705 = vmatpush1.msra.mxu0 %v1633
    %1706 = vmatprep.subr.mxu0 0.0
    %1707 = vmatpush1.msra.mxu0 %v1635
    %1708 = vmatprep.subr.mxu0 0.0
    %1709 = vmatpush1.msra.mxu0 %v1637
    %1710 = vmatprep.subr.mxu0 0.0
    %1711 = vmatpush1.msra.mxu0 %v1639
    %1712 = vmatprep.subr.mxu0 0.0
    %1713 = vmatpush1.msra.mxu0 %v1641
    %1714 = vmatprep.subr.mxu0 0.0
    %1715 = vmatpush1.msra.mxu0 %v1643
    %1716 = vmatprep.subr.mxu0 0.0
    %1717 = vmatpush1.msra.mxu0 %v1645
    %1718 = vmatprep.subr.mxu0 0.0
    %1719 = vmatpush1.msra.mxu0 %v1647
    %1720 = vmatprep.subr.mxu0 0.0
    %1721 = vmatpush1.msra.mxu0 0.0
    %1722 = vmatprep.subr.mxu0 0.0
    %1723 = vmatpush1.msra.mxu0 0.0
    %1724 = vmatprep.subr.mxu0 0.0
    %1725 = vmatpush1.msra.mxu0 0.0
    %1726 = vmatprep.subr.mxu0 0.0
    %1727 = vmatpush1.msra.mxu0 0.0
    %1728 = vmatprep.subr.mxu0 0.0
    %1729 = vmatpush1.msra.mxu0 0.0
    %1730 = vmatprep.subr.mxu0 0.0
    %1731 = vmatpush1.msra.mxu0 0.0
    %1732 = vmatprep.subr.mxu0 0.0
    %1733 = vmatpush1.msra.mxu0 0.0
    %1734 = vmatprep.subr.mxu0 0.0
    %1735 = vmatpush1.msra.mxu0 0.0
    %1736 = vmatprep.subr.mxu0 0.0
    %1737 = vmatpush1.msra.mxu0 0.0
    %1738 = vmatprep.subr.mxu0 0.0
    %1739 = vmatpush1.msra.mxu0 0.0
    %1740 = vmatprep.subr.mxu0 0.0
    %1741 = vmatpush1.msra.mxu0 0.0
    %1742 = vmatprep.subr.mxu0 0.0
    %1743 = vmatpush1.msra.mxu0 0.0
    %1744 = vmatprep.subr.mxu0 0.0
    %1745 = vmatpush1.msra.mxu0 0.0
    %1746 = vmatprep.subr.mxu0 0.0
    %1747 = vmatpush1.msra.mxu0 0.0
    %1748 = vmatprep.subr.mxu0 0.0
    %1749 = vmatpush1.msra.mxu0 0.0
    %1750 = vmatprep.subr.mxu0 0.0
    %1751 = vmatpush1.msra.mxu0 0.0
    %1752 = vmatprep.subr.mxu0 0.0
    %1753 = vmatpush1.msra.mxu0 0.0
    %1754 = vmatprep.subr.mxu0 0.0
    %1755 = vmatpush1.msra.mxu0 0.0
    %1756 = vmatprep.subr.mxu0 0.0
    %1757 = vmatpush1.msra.mxu0 0.0
    %1758 = vmatprep.subr.mxu0 0.0
    %1759 = vmatpush1.msra.mxu0 0.0
    %1760 = vmatprep.subr.mxu0 0.0
    %1761 = vmatpush1.msra.mxu0 0.0
    %1762 = vmatprep.subr.mxu0 0.0
    %1763 = vmatpush1.msra.mxu0 0.0
    %1764 = vmatprep.subr.mxu0 0.0
    %1765 = vmatpush1.msra.mxu0 0.0
    %1766 = vmatprep.subr.mxu0 0.0
    %1767 = vmatpush1.msra.mxu0 0.0
    %1768 = vmatprep.mubr.f32.mxu0 0.0
    %1769 = vmatmul.mubr.f32.gmra.mrb[0].mxu0 %v1681
    %v1770 = vpop.f32.mrb[0].mxu0
    %v1771 = vadd.f32 %v1657, %v1770
    %v1772 = vpop.f32.mrb[0].mxu0
    %1773 = vmatprep.mubr.f32.mxu0 0.0
    %1774 = vmatmul.mubr.f32.gmra.mrb[0].mxu0 %v1684
    %v1775 = vpop.f32.mrb[0].mxu0
    %v1776 = vadd.f32 %v1659, %v1775
    %v1777 = vpop.f32.mrb[0].mxu0
    %1778 = vmatprep.mubr.f32.mxu0 0.0
    %1779 = vmatmul.mubr.f32.gmra.mrb[0].mxu0 %v1687
    %v1780 = vpop.f32.mrb[0].mxu0
    %v1781 = vadd.f32 %v1661, %v1780
    %v1782 = vpop.f32.mrb[0].mxu0
    %1783 = vmatprep.mubr.f32.mxu0 0.0
    %1784 = vmatmul.mubr.f32.gmra.mrb[0].mxu0 %v1690
    %v1785 = vpop.f32.mrb[0].mxu0
    %v1786 = vadd.f32 %v1663, %v1785
    %v1787 = vpop.f32.mrb[0].mxu0
    %1788 = vmatprep.mubr.f32.mxu0 0.0
    %1789 = vmatmul.mubr.f32.gmra.mrb[0].mxu0 %v1693
    %v1790 = vpop.f32.mrb[0].mxu0
    %v1791 = vadd.f32 %v1665, %v1790
    %v1792 = vpop.f32.mrb[0].mxu0
    %1793 = vmatprep.mubr.f32.mxu0 0.0
    %1794 = vmatmul.mubr.f32.gmra.mrb[0].mxu0 %v1696
    %v1795 = vpop.f32.mrb[0].mxu0
    %v1796 = vadd.f32 %v1667, %v1795
    %v1797 = vpop.f32.mrb[0].mxu0
    %1798 = vmatprep.mubr.f32.mxu0 0.0
    %1799 = vmatmul.mubr.f32.gmra.mrb[0].mxu0 %v1699
    %v1800 = vpop.f32.mrb[0].mxu0
    %v1801 = vadd.f32 %v1669, %v1800
    %v1802 = vpop.f32.mrb[0].mxu0
    %1803 = vmatprep.mubr.f32.mxu0 0.0
    %1804 = vmatmul.mubr.f32.gmra.mrb[0].mxu0 %v1702
    %v1805 = vpop.f32.mrb[0].mxu0
    %v1806 = vadd.f32 %v1671, %v1805
    %v1807 = vpop.f32.mrb[0].mxu0
    %1808 = vdwg.mxu0
    %v1809 = vmax.f32 %v1771, 0.0
    %v1810 = vmax.f32 %v1776, 0.0
    %v1811 = vmax.f32 %v1781, 0.0
    %v1812 = vmax.f32 %v1786, 0.0
    %v1813 = vmax.f32 %v1791, 0.0
    %v1814 = vmax.f32 %v1796, 0.0
    %v1815 = vmax.f32 %v1801, 0.0
    %v1816 = vmax.f32 %v1806, 0.0
    %v1817 = vadd.f32 %v1809, %v1326
    %v1818 = vadd.f32 %v1810, %v1327
    %v1819 = vadd.f32 %v1811, %v1328
    %v1820 = vadd.f32 %v1812, %v1329
    %v1821 = vadd.f32 %v1813, %v1330
    %v1822 = vadd.f32 %v1814, %v1331
    %v1823 = vadd.f32 %v1815, %v1332
    %v1824 = vadd.f32 %v1816, %v1333
    %v1825 = vld [vmem:[%s37] sm:$0xff]
    %v1826 = vld [vmem:[%s37 + $0x8] sm:$0xff]
    %v1827 = vld [vmem:[%s39] sm:$0x1]
    %v1829 = vlaneseq
    %v1830 = vshrl.u32 %v1829, 7
    %v1831 = vsub.s32 0, %v1830
    %v1832 = vrot.slane %v1827, %v1831
    %v1835 = vsel %vm708, %v1817, 0
    %v1838 = vsel %vm708, %v1818, 0
    %v1841 = vsel %vm708, %v1819, 0
    %v1844 = vsel %vm708, %v1820, 0
    %v1847 = vsel %vm708, %v1821, 0
    %v1850 = vsel %vm708, %v1822, 0
    %v1853 = vsel %vm708, %v1823, 0
    %v1856 = vsel %vm708, %v1824, 0
    %1858 = vmatprep.subr.mxu0 0.0
    %1859 = vmatpush1.msra.mxu0 %v1825
    %1860 = vmatprep.subr.mxu0 0.0
    %1861 = vmatpush1.msra.mxu0 %v1826
    %1862 = vmatprep.subr.mxu0 0.0
    %1863 = vmatpush1.msra.mxu0 0.0
    %1864 = vmatprep.subr.mxu0 0.0
    %1865 = vmatpush1.msra.mxu0 0.0
    %1866 = vmatprep.subr.mxu0 0.0
    %1867 = vmatpush1.msra.mxu0 0.0
    %1868 = vmatprep.subr.mxu0 0.0
    %1869 = vmatpush1.msra.mxu0 0.0
    %1870 = vmatprep.subr.mxu0 0.0
    %1871 = vmatpush1.msra.mxu0 0.0
    %1872 = vmatprep.subr.mxu0 0.0
    %1873 = vmatpush1.msra.mxu0 0.0
    %1874 = vmatprep.subr.mxu0 0.0
    %1875 = vmatpush1.msra.mxu0 0.0
    %1876 = vmatprep.subr.mxu0 0.0
    %1877 = vmatpush1.msra.mxu0 0.0
    %1878 = vmatprep.subr.mxu0 0.0
    %1879 = vmatpush1.msra.mxu0 0.0
    %1880 = vmatprep.subr.mxu0 0.0
    %1881 = vmatpush1.msra.mxu0 0.0
    %1882 = vmatprep.subr.mxu0 0.0
    %1883 = vmatpush1.msra.mxu0 0.0
    %1884 = vmatprep.subr.mxu0 0.0
    %1885 = vmatpush1.msra.mxu0 0.0
    %1886 = vmatprep.subr.mxu0 0.0
    %1887 = vmatpush1.msra.mxu0 0.0
    %1888 = vmatprep.subr.mxu0 0.0
    %1889 = vmatpush1.msra.mxu0 0.0
    %1890 = vmatprep.subr.mxu0 0.0
    %1891 = vmatpush1.msra.mxu0 0.0
    %1892 = vmatprep.subr.mxu0 0.0
    %1893 = vmatpush1.msra.mxu0 0.0
    %1894 = vmatprep.subr.mxu0 0.0
    %1895 = vmatpush1.msra.mxu0 0.0
    %1896 = vmatprep.subr.mxu0 0.0
    %1897 = vmatpush1.msra.mxu0 0.0
    %1898 = vmatprep.subr.mxu0 0.0
    %1899 = vmatpush1.msra.mxu0 0.0
    %1900 = vmatprep.subr.mxu0 0.0
    %1901 = vmatpush1.msra.mxu0 0.0
    %1902 = vmatprep.subr.mxu0 0.0
    %1903 = vmatpush1.msra.mxu0 0.0
    %1904 = vmatprep.subr.mxu0 0.0
    %1905 = vmatpush1.msra.mxu0 0.0
    %1906 = vmatprep.subr.mxu0 0.0
    %1907 = vmatpush1.msra.mxu0 0.0
    %1908 = vmatprep.subr.mxu0 0.0
    %1909 = vmatpush1.msra.mxu0 0.0
    %1910 = vmatprep.subr.mxu0 0.0
    %1911 = vmatpush1.msra.mxu0 0.0
    %1912 = vmatprep.subr.mxu0 0.0
    %1913 = vmatpush1.msra.mxu0 0.0
    %1914 = vmatprep.subr.mxu0 0.0
    %1915 = vmatpush1.msra.mxu0 0.0
    %1916 = vmatprep.subr.mxu0 0.0
    %1917 = vmatpush1.msra.mxu0 0.0
    %1918 = vmatprep.subr.mxu0 0.0
    %1919 = vmatpush1.msra.mxu0 0.0
    %1920 = vmatprep.subr.mxu0 0.0
    %1921 = vmatpush1.msra.mxu0 0.0
    %1922 = vmatprep.mubr.f32.mxu0 0.0
    %1923 = vmatmul.mubr.f32.gmra.mrb[0].mxu0 %v1835
    %v1924 = vpop.f32.mrb[0].mxu0
    %v1925 = vadd.f32 %v1832, %v1924
    %v1926 = vpop.f32.mrb[0].mxu0
    %1927 = vmatprep.mubr.f32.mxu0 0.0
    %1928 = vmatmul.mubr.f32.gmra.mrb[0].mxu0 %v1838
    %v1929 = vpop.f32.mrb[0].mxu0
    %v1930 = vadd.f32 %v1832, %v1929
    %v1931 = vpop.f32.mrb[0].mxu0
    %1932 = vmatprep.mubr.f32.mxu0 0.0
    %1933 = vmatmul.mubr.f32.gmra.mrb[0].mxu0 %v1841
    %v1934 = vpop.f32.mrb[0].mxu0
    %v1935 = vadd.f32 %v1832, %v1934
    %v1936 = vpop.f32.mrb[0].mxu0
    %1937 = vmatprep.mubr.f32.mxu0 0.0
    %1938 = vmatmul.mubr.f32.gmra.mrb[0].mxu0 %v1844
    %v1939 = vpop.f32.mrb[0].mxu0
    %v1940 = vadd.f32 %v1832, %v1939
    %v1941 = vpop.f32.mrb[0].mxu0
    %1942 = vmatprep.mubr.f32.mxu0 0.0
    %1943 = vmatmul.mubr.f32.gmra.mrb[0].mxu0 %v1847
    %v1944 = vpop.f32.mrb[0].mxu0
    %v1945 = vadd.f32 %v1832, %v1944
    %v1946 = vpop.f32.mrb[0].mxu0
    %1947 = vmatprep.mubr.f32.mxu0 0.0
    %1948 = vmatmul.mubr.f32.gmra.mrb[0].mxu0 %v1850
    %v1949 = vpop.f32.mrb[0].mxu0
    %v1950 = vadd.f32 %v1832, %v1949
    %v1951 = vpop.f32.mrb[0].mxu0
    %1952 = vmatprep.mubr.f32.mxu0 0.0
    %1953 = vmatmul.mubr.f32.gmra.mrb[0].mxu0 %v1853
    %v1954 = vpop.f32.mrb[0].mxu0
    %v1955 = vadd.f32 %v1832, %v1954
    %v1956 = vpop.f32.mrb[0].mxu0
    %1957 = vmatprep.mubr.f32.mxu0 0.0
    %1958 = vmatmul.mubr.f32.gmra.mrb[0].mxu0 %v1856
    %v1959 = vpop.f32.mrb[0].mxu0
    %v1960 = vadd.f32 %v1832, %v1959
    %v1961 = vpop.f32.mrb[0].mxu0
    %1962 = vdwg.mxu0
    %1971 = vrot.lane.b32.xlu0 %v1925, 112
    %v1972 = vpop.permute.xlu0 %1971
    %1973 = vrot.lane.b32.xlu0 %v1930, 112
    %v1974 = vpop.permute.xlu0 %1973
    %1975 = vrot.lane.b32.xlu0 %v1935, 112
    %v1976 = vpop.permute.xlu0 %1975
    %1977 = vrot.lane.b32.xlu0 %v1940, 112
    %v1978 = vpop.permute.xlu0 %1977
    %1979 = vrot.lane.b32.xlu0 %v1945, 112
    %v1980 = vpop.permute.xlu0 %1979
    %1981 = vrot.lane.b32.xlu0 %v1950, 112
    %v1982 = vpop.permute.xlu0 %1981
    %1983 = vrot.lane.b32.xlu0 %v1955, 112
    %v1984 = vpop.permute.xlu0 %1983
    %1985 = vrot.lane.b32.xlu0 %v1960, 112
    %v1986 = vpop.permute.xlu0 %1985
    %v1987 = vsel %vm708, %v1925, 0
    %v1989 = vsel %vm708, %v1930, 0
    %v1991 = vsel %vm708, %v1935, 0
    %v1993 = vsel %vm708, %v1940, 0
    %v1995 = vsel %vm708, %v1945, 0
    %v1997 = vsel %vm708, %v1950, 0
    %v1999 = vsel %vm708, %v1955, 0
    %v2001 = vsel %vm708, %v1960, 0
    %v2003 = vsel %vm708, %v1972, 0
    %v2005 = vsel %vm708, %v1974, 0
    %v2007 = vsel %vm708, %v1976, 0
    %v2009 = vsel %vm708, %v1978, 0
    %v2011 = vsel %vm708, %v1980, 0
    %v2013 = vsel %vm708, %v1982, 0
    %v2015 = vsel %vm708, %v1984, 0
    %v2017 = vsel %vm708, %v1986, 0
    %2019 = vmatprep.subr.mxu0 0.0
    %2020 = vmatpush1.xpose.msra.mxu0 %v2003
    %2021 = vmatprep.subr.mxu0 0.0
    %2022 = vmatpush1.xpose.msra.mxu0 %v2005
    %2023 = vmatprep.subr.mxu0 0.0
    %2024 = vmatpush1.xpose.msra.mxu0 %v2007
    %2025 = vmatprep.subr.mxu0 0.0
    %2026 = vmatpush1.xpose.msra.mxu0 %v2009
    %2027 = vmatprep.subr.mxu0 0.0
    %2028 = vmatpush1.xpose.msra.mxu0 %v2011
    %2029 = vmatprep.subr.mxu0 0.0
    %2030 = vmatpush1.xpose.msra.mxu0 %v2013
    %2031 = vmatprep.subr.mxu0 0.0
    %2032 = vmatpush1.xpose.msra.mxu0 %v2015
    %2033 = vmatprep.subr.mxu0 0.0
    %2034 = vmatpush1.xpose.msra.mxu0 %v2017
    %2035 = vmatprep.subr.mxu0 0.0
    %2036 = vmatpush1.xpose.msra.mxu0 0.0
    %2037 = vmatprep.subr.mxu0 0.0
    %2038 = vmatpush1.xpose.msra.mxu0 0.0
    %2039 = vmatprep.subr.mxu0 0.0
    %2040 = vmatpush1.xpose.msra.mxu0 0.0
    %2041 = vmatprep.subr.mxu0 0.0
    %2042 = vmatpush1.xpose.msra.mxu0 0.0
    %2043 = vmatprep.subr.mxu0 0.0
    %2044 = vmatpush1.xpose.msra.mxu0 0.0
    %2045 = vmatprep.subr.mxu0 0.0
    %2046 = vmatpush1.xpose.msra.mxu0 0.0
    %2047 = vmatprep.subr.mxu0 0.0
    %2048 = vmatpush1.xpose.msra.mxu0 0.0
    %2049 = vmatprep.subr.mxu0 0.0
    %2050 = vmatpush1.xpose.msra.mxu0 0.0
    %2051 = vmatprep.subr.mxu0 0.0
    %2052 = vmatpush1.xpose.msra.mxu0 0.0
    %2053 = vmatprep.subr.mxu0 0.0
    %2054 = vmatpush1.xpose.msra.mxu0 0.0
    %2055 = vmatprep.subr.mxu0 0.0
    %2056 = vmatpush1.xpose.msra.mxu0 0.0
    %2057 = vmatprep.subr.mxu0 0.0
    %2058 = vmatpush1.xpose.msra.mxu0 0.0
    %2059 = vmatprep.subr.mxu0 0.0
    %2060 = vmatpush1.xpose.msra.mxu0 0.0
    %2061 = vmatprep.subr.mxu0 0.0
    %2062 = vmatpush1.xpose.msra.mxu0 0.0
    %2063 = vmatprep.subr.mxu0 0.0
    %2064 = vmatpush1.xpose.msra.mxu0 0.0
    %2065 = vmatprep.subr.mxu0 0.0
    %2066 = vmatpush1.xpose.msra.mxu0 0.0
    %2067 = vmatprep.subr.mxu0 0.0
    %2068 = vmatpush1.xpose.msra.mxu0 0.0
    %2069 = vmatprep.subr.mxu0 0.0
    %2070 = vmatpush1.xpose.msra.mxu0 0.0
    %2071 = vmatprep.subr.mxu0 0.0
    %2072 = vmatpush1.xpose.msra.mxu0 0.0
    %2073 = vmatprep.subr.mxu0 0.0
    %2074 = vmatpush1.xpose.msra.mxu0 0.0
    %2075 = vmatprep.subr.mxu0 0.0
    %2076 = vmatpush1.xpose.msra.mxu0 0.0
    %2077 = vmatprep.subr.mxu0 0.0
    %2078 = vmatpush1.xpose.msra.mxu0 0.0
    %2079 = vmatprep.subr.mxu0 0.0
    %2080 = vmatpush1.xpose.msra.mxu0 0.0
    %2081 = vmatprep.subr.mxu0 0.0
    %2082 = vmatpush1.xpose.msra.mxu0 0.0
    %2083 = vmatprep.mubr.f32.mxu0 0.0
    %2084 = vmatmul.mubr.f32.gmra.mrb[0].mxu0 %v1987
    %v2085 = vpop.f32.mrb[0].mxu0
    %v2086 = vadd.f32 0.0, %v2085
    %v2087 = vpop.f32.mrb[0].mxu0
    %2088 = vmatprep.mubr.f32.mxu0 0.0
    %2089 = vmatmul.mubr.f32.gmra.mrb[0].mxu0 %v1989
    %v2090 = vpop.f32.mrb[0].mxu0
    %v2091 = vadd.f32 0.0, %v2090
    %v2092 = vpop.f32.mrb[0].mxu0
    %2093 = vmatprep.mubr.f32.mxu0 0.0
    %2094 = vmatmul.mubr.f32.gmra.mrb[0].mxu0 %v1991
    %v2095 = vpop.f32.mrb[0].mxu0
    %v2096 = vadd.f32 0.0, %v2095
    %v2097 = vpop.f32.mrb[0].mxu0
    %2098 = vmatprep.mubr.f32.mxu0 0.0
    %2099 = vmatmul.mubr.f32.gmra.mrb[0].mxu0 %v1993
    %v2100 = vpop.f32.mrb[0].mxu0
    %v2101 = vadd.f32 0.0, %v2100
    %v2102 = vpop.f32.mrb[0].mxu0
    %2103 = vmatprep.mubr.f32.mxu0 0.0
    %2104 = vmatmul.mubr.f32.gmra.mrb[0].mxu0 %v1995
    %v2105 = vpop.f32.mrb[0].mxu0
    %v2106 = vadd.f32 0.0, %v2105
    %v2107 = vpop.f32.mrb[0].mxu0
    %2108 = vmatprep.mubr.f32.mxu0 0.0
    %2109 = vmatmul.mubr.f32.gmra.mrb[0].mxu0 %v1997
    %v2110 = vpop.f32.mrb[0].mxu0
    %v2111 = vadd.f32 0.0, %v2110
    %v2112 = vpop.f32.mrb[0].mxu0
    %2113 = vmatprep.mubr.f32.mxu0 0.0
    %2114 = vmatmul.mubr.f32.gmra.mrb[0].mxu0 %v1999
    %v2115 = vpop.f32.mrb[0].mxu0
    %v2116 = vadd.f32 0.0, %v2115
    %v2117 = vpop.f32.mrb[0].mxu0
    %2118 = vmatprep.mubr.f32.mxu0 0.0
    %2119 = vmatmul.mubr.f32.gmra.mrb[0].mxu0 %v2001
    %v2120 = vpop.f32.mrb[0].mxu0
    %v2121 = vadd.f32 0.0, %v2120
    %v2122 = vpop.f32.mrb[0].mxu0
    %2123 = vdwg.mxu0
    %v2124 = vmul.f32 %v2086, 0.25
    %v2125 = vmul.f32 %v2091, 0.25
    %v2126 = vmul.f32 %v2096, 0.25
    %v2127 = vmul.f32 %v2101, 0.25
    %v2128 = vmul.f32 %v2106, 0.25
    %v2129 = vmul.f32 %v2111, 0.25
    %v2130 = vmul.f32 %v2116, 0.25
    %v2131 = vmul.f32 %v2121, 0.25
    %v2132 = vsel %vm1503, %v2124, -1e+30
    %v2133 = vsel %vm1504, %v2125, -1e+30
    %v2134 = vsel %vm1505, %v2126, -1e+30
    %v2135 = vsel %vm1506, %v2127, -1e+30
    %v2136 = vsel %vm1507, %v2128, -1e+30
    %v2137 = vsel %vm1508, %v2129, -1e+30
    %v2138 = vsel %vm1509, %v2130, -1e+30
    %v2139 = vsel %vm1510, %v2131, -1e+30
    %v2140 = vsel %vm1519, %v2132, -inf
    %2141 = vmax.xlane.f32.xlu0 %v2140
    %v2142 = vpop.xlane.xlu0 %2141
    %v2143 = vsel %vm1519, %v2133, -inf
    %2144 = vmax.xlane.f32.xlu0 %v2143
    %v2145 = vpop.xlane.xlu0 %2144
    %v2146 = vsel %vm1519, %v2134, -inf
    %2147 = vmax.xlane.f32.xlu0 %v2146
    %v2148 = vpop.xlane.xlu0 %2147
    %v2149 = vsel %vm1519, %v2135, -inf
    %2150 = vmax.xlane.f32.xlu0 %v2149
    %v2151 = vpop.xlane.xlu0 %2150
    %v2152 = vsel %vm1519, %v2136, -inf
    %2153 = vmax.xlane.f32.xlu0 %v2152
    %v2154 = vpop.xlane.xlu0 %2153
    %v2155 = vsel %vm1519, %v2137, -inf
    %2156 = vmax.xlane.f32.xlu0 %v2155
    %v2157 = vpop.xlane.xlu0 %2156
    %v2158 = vsel %vm1519, %v2138, -inf
    %2159 = vmax.xlane.f32.xlu0 %v2158
    %v2160 = vpop.xlane.xlu0 %2159
    %v2161 = vsel %vm1519, %v2139, -inf
    %2162 = vmax.xlane.f32.xlu0 %v2161
    %v2163 = vpop.xlane.xlu0 %2162
    %v2164 = vsub.f32 %v2132, %v2142
    %v2165 = vsub.f32 %v2133, %v2145
    %v2166 = vsub.f32 %v2134, %v2148
    %v2167 = vsub.f32 %v2135, %v2151
    %v2168 = vsub.f32 %v2136, %v2154
    %v2169 = vsub.f32 %v2137, %v2157
    %v2170 = vsub.f32 %v2138, %v2160
    %v2171 = vsub.f32 %v2139, %v2163
    %v2172 = vmul.f32 %v2164, 1.442695
    %v2173 = vpow.pop %v2172
    %v2174 = vmul.f32 %v2165, 1.442695
    %v2175 = vpow.pop %v2174
    %v2176 = vmul.f32 %v2166, 1.442695
    %v2177 = vpow.pop %v2176
    %v2178 = vmul.f32 %v2167, 1.442695
    %v2179 = vpow.pop %v2178
    %v2180 = vmul.f32 %v2168, 1.442695
    %v2181 = vpow.pop %v2180
    %v2182 = vmul.f32 %v2169, 1.442695
    %v2183 = vpow.pop %v2182
    %v2184 = vmul.f32 %v2170, 1.442695
    %v2185 = vpow.pop %v2184
    %v2186 = vmul.f32 %v2171, 1.442695
    %v2187 = vpow.pop %v2186
    %v2188 = vmul.f32 %v2173, %v256
    %v2189 = vmul.f32 %v2175, %v257
    %v2190 = vmul.f32 %v2177, %v258
    %v2191 = vmul.f32 %v2179, %v259
    %v2192 = vmul.f32 %v2181, %v260
    %v2193 = vmul.f32 %v2183, %v261
    %v2194 = vmul.f32 %v2185, %v262
    %v2195 = vmul.f32 %v2187, %v263
    %v2196 = vsel %vm1519, %v2188, 0.0
    %2197 = vadd.xlane.f32.xlu0 %v2196
    %v2198 = vpop.xlane.xlu0 %2197
    %v2199 = vsel %vm1519, %v2189, 0.0
    %2200 = vadd.xlane.f32.xlu0 %v2199
    %v2201 = vpop.xlane.xlu0 %2200
    %v2202 = vsel %vm1519, %v2190, 0.0
    %2203 = vadd.xlane.f32.xlu0 %v2202
    %v2204 = vpop.xlane.xlu0 %2203
    %v2205 = vsel %vm1519, %v2191, 0.0
    %2206 = vadd.xlane.f32.xlu0 %v2205
    %v2207 = vpop.xlane.xlu0 %2206
    %v2208 = vsel %vm1519, %v2192, 0.0
    %2209 = vadd.xlane.f32.xlu0 %v2208
    %v2210 = vpop.xlane.xlu0 %2209
    %v2211 = vsel %vm1519, %v2193, 0.0
    %2212 = vadd.xlane.f32.xlu0 %v2211
    %v2213 = vpop.xlane.xlu0 %2212
    %v2214 = vsel %vm1519, %v2194, 0.0
    %2215 = vadd.xlane.f32.xlu0 %v2214
    %v2216 = vpop.xlane.xlu0 %2215
    %v2217 = vsel %vm1519, %v2195, 0.0
    %2218 = vadd.xlane.f32.xlu0 %v2217
    %v2219 = vpop.xlane.xlu0 %2218
    %vm2220 = vcmp.gt.f32.partialorder %v2198, 0.0
    %vm2221 = vcmp.gt.f32.partialorder %v2201, 0.0
    %vm2222 = vcmp.gt.f32.partialorder %v2204, 0.0
    %vm2223 = vcmp.gt.f32.partialorder %v2207, 0.0
    %vm2224 = vcmp.gt.f32.partialorder %v2210, 0.0
    %vm2225 = vcmp.gt.f32.partialorder %v2213, 0.0
    %vm2226 = vcmp.gt.f32.partialorder %v2216, 0.0
    %vm2227 = vcmp.gt.f32.partialorder %v2219, 0.0
    %v2228 = vsel %vm2220, %v2198, 1.0
    %v2229 = vsel %vm2221, %v2201, 1.0
    %v2230 = vsel %vm2222, %v2204, 1.0
    %v2231 = vsel %vm2223, %v2207, 1.0
    %v2232 = vsel %vm2224, %v2210, 1.0
    %v2233 = vsel %vm2225, %v2213, 1.0
    %v2234 = vsel %vm2226, %v2216, 1.0
    %v2235 = vsel %vm2227, %v2219, 1.0
    %v2236 = vrcp.pop %v2228
    %v2237 = vrcp.pop %v2229
    %v2238 = vrcp.pop %v2230
    %v2239 = vrcp.pop %v2231
    %v2240 = vrcp.pop %v2232
    %v2241 = vrcp.pop %v2233
    %v2242 = vrcp.pop %v2234
    %v2243 = vrcp.pop %v2235
    %v2244 = vmul.f32 %v2188, %v2236
    %v2245 = vmul.f32 %v2189, %v2237
    %v2246 = vmul.f32 %v2190, %v2238
    %v2247 = vmul.f32 %v2191, %v2239
    %v2248 = vmul.f32 %v2192, %v2240
    %v2249 = vmul.f32 %v2193, %v2241
    %v2250 = vmul.f32 %v2194, %v2242
    %v2251 = vmul.f32 %v2195, %v2243
    %2252 = vrot.lane.b32.xlu0 %v1925, 96
    %v2253 = vpop.permute.xlu0 %2252
    %2254 = vrot.lane.b32.xlu0 %v1930, 96
    %v2255 = vpop.permute.xlu0 %2254
    %2256 = vrot.lane.b32.xlu0 %v1935, 96
    %v2257 = vpop.permute.xlu0 %2256
    %2258 = vrot.lane.b32.xlu0 %v1940, 96
    %v2259 = vpop.permute.xlu0 %2258
    %2260 = vrot.lane.b32.xlu0 %v1945, 96
    %v2261 = vpop.permute.xlu0 %2260
    %2262 = vrot.lane.b32.xlu0 %v1950, 96
    %v2263 = vpop.permute.xlu0 %2262
    %2264 = vrot.lane.b32.xlu0 %v1955, 96
    %v2265 = vpop.permute.xlu0 %2264
    %2266 = vrot.lane.b32.xlu0 %v1960, 96
    %v2267 = vpop.permute.xlu0 %2266
    %2276 = vrot.lane.b32.xlu0 %v1925, 80
    %v2277 = vpop.permute.xlu0 %2276
    %2278 = vrot.lane.b32.xlu0 %v1930, 80
    %v2279 = vpop.permute.xlu0 %2278
    %2280 = vrot.lane.b32.xlu0 %v1935, 80
    %v2281 = vpop.permute.xlu0 %2280
    %2282 = vrot.lane.b32.xlu0 %v1940, 80
    %v2283 = vpop.permute.xlu0 %2282
    %2284 = vrot.lane.b32.xlu0 %v1945, 80
    %v2285 = vpop.permute.xlu0 %2284
    %2286 = vrot.lane.b32.xlu0 %v1950, 80
    %v2287 = vpop.permute.xlu0 %2286
    %2288 = vrot.lane.b32.xlu0 %v1955, 80
    %v2289 = vpop.permute.xlu0 %2288
    %2290 = vrot.lane.b32.xlu0 %v1960, 80
    %v2291 = vpop.permute.xlu0 %2290
    %v2301 = vsel %vm1519, %v2244, 0
    %v2304 = vsel %vm1519, %v2245, 0
    %v2307 = vsel %vm1519, %v2246, 0
    %v2310 = vsel %vm1519, %v2247, 0
    %v2313 = vsel %vm1519, %v2248, 0
    %v2316 = vsel %vm1519, %v2249, 0
    %v2319 = vsel %vm1519, %v2250, 0
    %v2322 = vsel %vm1519, %v2251, 0
    %2324 = vmatprep.subr.mxu0 0.0
    %2325 = vmatpush1.msra.mxu0 %v2253
    %2326 = vmatprep.subr.mxu0 0.0
    %2327 = vmatpush1.msra.mxu0 %v2255
    %2328 = vmatprep.subr.mxu0 0.0
    %2329 = vmatpush1.msra.mxu0 %v2257
    %2330 = vmatprep.subr.mxu0 0.0
    %2331 = vmatpush1.msra.mxu0 %v2259
    %2332 = vmatprep.subr.mxu0 0.0
    %2333 = vmatpush1.msra.mxu0 %v2261
    %2334 = vmatprep.subr.mxu0 0.0
    %2335 = vmatpush1.msra.mxu0 %v2263
    %2336 = vmatprep.subr.mxu0 0.0
    %2337 = vmatpush1.msra.mxu0 %v2265
    %2338 = vmatprep.subr.mxu0 0.0
    %2339 = vmatpush1.msra.mxu0 %v2267
    %2340 = vmatprep.subr.mxu0 0.0
    %2341 = vmatpush1.msra.mxu0 0.0
    %2342 = vmatprep.subr.mxu0 0.0
    %2343 = vmatpush1.msra.mxu0 0.0
    %2344 = vmatprep.subr.mxu0 0.0
    %2345 = vmatpush1.msra.mxu0 0.0
    %2346 = vmatprep.subr.mxu0 0.0
    %2347 = vmatpush1.msra.mxu0 0.0
    %2348 = vmatprep.subr.mxu0 0.0
    %2349 = vmatpush1.msra.mxu0 0.0
    %2350 = vmatprep.subr.mxu0 0.0
    %2351 = vmatpush1.msra.mxu0 0.0
    %2352 = vmatprep.subr.mxu0 0.0
    %2353 = vmatpush1.msra.mxu0 0.0
    %2354 = vmatprep.subr.mxu0 0.0
    %2355 = vmatpush1.msra.mxu0 0.0
    %2356 = vmatprep.subr.mxu0 0.0
    %2357 = vmatpush1.msra.mxu0 0.0
    %2358 = vmatprep.subr.mxu0 0.0
    %2359 = vmatpush1.msra.mxu0 0.0
    %2360 = vmatprep.subr.mxu0 0.0
    %2361 = vmatpush1.msra.mxu0 0.0
    %2362 = vmatprep.subr.mxu0 0.0
    %2363 = vmatpush1.msra.mxu0 0.0
    %2364 = vmatprep.subr.mxu0 0.0
    %2365 = vmatpush1.msra.mxu0 0.0
    %2366 = vmatprep.subr.mxu0 0.0
    %2367 = vmatpush1.msra.mxu0 0.0
    %2368 = vmatprep.subr.mxu0 0.0
    %2369 = vmatpush1.msra.mxu0 0.0
    %2370 = vmatprep.subr.mxu0 0.0
    %2371 = vmatpush1.msra.mxu0 0.0
    %2372 = vmatprep.subr.mxu0 0.0
    %2373 = vmatpush1.msra.mxu0 0.0
    %2374 = vmatprep.subr.mxu0 0.0
    %2375 = vmatpush1.msra.mxu0 0.0
    %2376 = vmatprep.subr.mxu0 0.0
    %2377 = vmatpush1.msra.mxu0 0.0
    %2378 = vmatprep.subr.mxu0 0.0
    %2379 = vmatpush1.msra.mxu0 0.0
    %2380 = vmatprep.subr.mxu0 0.0
    %2381 = vmatpush1.msra.mxu0 0.0
    %2382 = vmatprep.subr.mxu0 0.0
    %2383 = vmatpush1.msra.mxu0 0.0
    %2384 = vmatprep.subr.mxu0 0.0
    %2385 = vmatpush1.msra.mxu0 0.0
    %2386 = vmatprep.subr.mxu0 0.0
    %2387 = vmatpush1.msra.mxu0 0.0
    %2388 = vmatprep.mubr.f32.mxu0 0.0
    %2389 = vmatmul.mubr.f32.gmra.mrb[0].mxu0 %v2301
    %v2390 = vpop.f32.mrb[0].mxu0
    %v2391 = vadd.f32 %v2277, %v2390
    %v2392 = vpop.f32.mrb[0].mxu0
    %2393 = vmatprep.mubr.f32.mxu0 0.0
    %2394 = vmatmul.mubr.f32.gmra.mrb[0].mxu0 %v2304
    %v2395 = vpop.f32.mrb[0].mxu0
    %v2396 = vadd.f32 %v2279, %v2395
    %v2397 = vpop.f32.mrb[0].mxu0
    %2398 = vmatprep.mubr.f32.mxu0 0.0
    %2399 = vmatmul.mubr.f32.gmra.mrb[0].mxu0 %v2307
    %v2400 = vpop.f32.mrb[0].mxu0
    %v2401 = vadd.f32 %v2281, %v2400
    %v2402 = vpop.f32.mrb[0].mxu0
    %2403 = vmatprep.mubr.f32.mxu0 0.0
    %2404 = vmatmul.mubr.f32.gmra.mrb[0].mxu0 %v2310
    %v2405 = vpop.f32.mrb[0].mxu0
    %v2406 = vadd.f32 %v2283, %v2405
    %v2407 = vpop.f32.mrb[0].mxu0
    %2408 = vmatprep.mubr.f32.mxu0 0.0
    %2409 = vmatmul.mubr.f32.gmra.mrb[0].mxu0 %v2313
    %v2410 = vpop.f32.mrb[0].mxu0
    %v2411 = vadd.f32 %v2285, %v2410
    %v2412 = vpop.f32.mrb[0].mxu0
    %2413 = vmatprep.mubr.f32.mxu0 0.0
    %2414 = vmatmul.mubr.f32.gmra.mrb[0].mxu0 %v2316
    %v2415 = vpop.f32.mrb[0].mxu0
    %v2416 = vadd.f32 %v2287, %v2415
    %v2417 = vpop.f32.mrb[0].mxu0
    %2418 = vmatprep.mubr.f32.mxu0 0.0
    %2419 = vmatmul.mubr.f32.gmra.mrb[0].mxu0 %v2319
    %v2420 = vpop.f32.mrb[0].mxu0
    %v2421 = vadd.f32 %v2289, %v2420
    %v2422 = vpop.f32.mrb[0].mxu0
    %2423 = vmatprep.mubr.f32.mxu0 0.0
    %2424 = vmatmul.mubr.f32.gmra.mrb[0].mxu0 %v2322
    %v2425 = vpop.f32.mrb[0].mxu0
    %v2426 = vadd.f32 %v2291, %v2425
    %v2427 = vpop.f32.mrb[0].mxu0
    %2428 = vdwg.mxu0
    %v2429 = vmax.f32 %v2391, 0.0
    %v2430 = vmax.f32 %v2396, 0.0
    %v2431 = vmax.f32 %v2401, 0.0
    %v2432 = vmax.f32 %v2406, 0.0
    %v2433 = vmax.f32 %v2411, 0.0
    %v2434 = vmax.f32 %v2416, 0.0
    %v2435 = vmax.f32 %v2421, 0.0
    %v2436 = vmax.f32 %v2426, 0.0
    %v2437 = vadd.f32 %v2429, %v1817
    %v2438 = vadd.f32 %v2430, %v1818
    %v2439 = vadd.f32 %v2431, %v1819
    %v2440 = vadd.f32 %v2432, %v1820
    %v2441 = vadd.f32 %v2433, %v1821
    %v2442 = vadd.f32 %v2434, %v1822
    %v2443 = vadd.f32 %v2435, %v1823
    %v2444 = vadd.f32 %v2436, %v1824
    %v2445 = vld [vmem:[%s41] sm:$0xff]
    %v2446 = vld [vmem:[%s41 + $0x8] sm:$0xff]
    %v2447 = vld [vmem:[%s43] sm:$0x1]
    %v2449 = vlaneseq
    %v2450 = vshrl.u32 %v2449, 7
    %v2451 = vsub.s32 0, %v2450
    %v2452 = vrot.slane %v2447, %v2451
    %v2455 = vsel %vm708, %v2437, 0
    %v2458 = vsel %vm708, %v2438, 0
    %v2461 = vsel %vm708, %v2439, 0
    %v2464 = vsel %vm708, %v2440, 0
    %v2467 = vsel %vm708, %v2441, 0
    %v2470 = vsel %vm708, %v2442, 0
    %v2473 = vsel %vm708, %v2443, 0
    %v2476 = vsel %vm708, %v2444, 0
    %2478 = vmatprep.subr.mxu0 0.0
    %2479 = vmatpush1.msra.mxu0 %v2445
    %2480 = vmatprep.subr.mxu0 0.0
    %2481 = vmatpush1.msra.mxu0 %v2446
    %2482 = vmatprep.subr.mxu0 0.0
    %2483 = vmatpush1.msra.mxu0 0.0
    %2484 = vmatprep.subr.mxu0 0.0
    %2485 = vmatpush1.msra.mxu0 0.0
    %2486 = vmatprep.subr.mxu0 0.0
    %2487 = vmatpush1.msra.mxu0 0.0
    %2488 = vmatprep.subr.mxu0 0.0
    %2489 = vmatpush1.msra.mxu0 0.0
    %2490 = vmatprep.subr.mxu0 0.0
    %2491 = vmatpush1.msra.mxu0 0.0
    %2492 = vmatprep.subr.mxu0 0.0
    %2493 = vmatpush1.msra.mxu0 0.0
    %2494 = vmatprep.subr.mxu0 0.0
    %2495 = vmatpush1.msra.mxu0 0.0
    %2496 = vmatprep.subr.mxu0 0.0
    %2497 = vmatpush1.msra.mxu0 0.0
    %2498 = vmatprep.subr.mxu0 0.0
    %2499 = vmatpush1.msra.mxu0 0.0
    %2500 = vmatprep.subr.mxu0 0.0
    %2501 = vmatpush1.msra.mxu0 0.0
    %2502 = vmatprep.subr.mxu0 0.0
    %2503 = vmatpush1.msra.mxu0 0.0
    %2504 = vmatprep.subr.mxu0 0.0
    %2505 = vmatpush1.msra.mxu0 0.0
    %2506 = vmatprep.subr.mxu0 0.0
    %2507 = vmatpush1.msra.mxu0 0.0
    %2508 = vmatprep.subr.mxu0 0.0
    %2509 = vmatpush1.msra.mxu0 0.0
    %2510 = vmatprep.subr.mxu0 0.0
    %2511 = vmatpush1.msra.mxu0 0.0
    %2512 = vmatprep.subr.mxu0 0.0
    %2513 = vmatpush1.msra.mxu0 0.0
    %2514 = vmatprep.subr.mxu0 0.0
    %2515 = vmatpush1.msra.mxu0 0.0
    %2516 = vmatprep.subr.mxu0 0.0
    %2517 = vmatpush1.msra.mxu0 0.0
    %2518 = vmatprep.subr.mxu0 0.0
    %2519 = vmatpush1.msra.mxu0 0.0
    %2520 = vmatprep.subr.mxu0 0.0
    %2521 = vmatpush1.msra.mxu0 0.0
    %2522 = vmatprep.subr.mxu0 0.0
    %2523 = vmatpush1.msra.mxu0 0.0
    %2524 = vmatprep.subr.mxu0 0.0
    %2525 = vmatpush1.msra.mxu0 0.0
    %2526 = vmatprep.subr.mxu0 0.0
    %2527 = vmatpush1.msra.mxu0 0.0
    %2528 = vmatprep.subr.mxu0 0.0
    %2529 = vmatpush1.msra.mxu0 0.0
    %2530 = vmatprep.subr.mxu0 0.0
    %2531 = vmatpush1.msra.mxu0 0.0
    %2532 = vmatprep.subr.mxu0 0.0
    %2533 = vmatpush1.msra.mxu0 0.0
    %2534 = vmatprep.subr.mxu0 0.0
    %2535 = vmatpush1.msra.mxu0 0.0
    %2536 = vmatprep.subr.mxu0 0.0
    %2537 = vmatpush1.msra.mxu0 0.0
    %2538 = vmatprep.subr.mxu0 0.0
    %2539 = vmatpush1.msra.mxu0 0.0
    %2540 = vmatprep.subr.mxu0 0.0
    %2541 = vmatpush1.msra.mxu0 0.0
    %2542 = vmatprep.mubr.f32.mxu0 0.0
    %2543 = vmatmul.mubr.f32.gmra.mrb[0].mxu0 %v2455
    %v2544 = vpop.f32.mrb[0].mxu0
    %v2545 = vadd.f32 %v2452, %v2544
    %v2546 = vpop.f32.mrb[0].mxu0
    %2547 = vmatprep.mubr.f32.mxu0 0.0
    %2548 = vmatmul.mubr.f32.gmra.mrb[0].mxu0 %v2458
    %v2549 = vpop.f32.mrb[0].mxu0
    %v2550 = vadd.f32 %v2452, %v2549
    %v2551 = vpop.f32.mrb[0].mxu0
    %2552 = vmatprep.mubr.f32.mxu0 0.0
    %2553 = vmatmul.mubr.f32.gmra.mrb[0].mxu0 %v2461
    %v2554 = vpop.f32.mrb[0].mxu0
    %v2555 = vadd.f32 %v2452, %v2554
    %v2556 = vpop.f32.mrb[0].mxu0
    %2557 = vmatprep.mubr.f32.mxu0 0.0
    %2558 = vmatmul.mubr.f32.gmra.mrb[0].mxu0 %v2464
    %v2559 = vpop.f32.mrb[0].mxu0
    %v2560 = vadd.f32 %v2452, %v2559
    %v2561 = vpop.f32.mrb[0].mxu0
    %2562 = vmatprep.mubr.f32.mxu0 0.0
    %2563 = vmatmul.mubr.f32.gmra.mrb[0].mxu0 %v2467
    %v2564 = vpop.f32.mrb[0].mxu0
    %v2565 = vadd.f32 %v2452, %v2564
    %v2566 = vpop.f32.mrb[0].mxu0
    %2567 = vmatprep.mubr.f32.mxu0 0.0
    %2568 = vmatmul.mubr.f32.gmra.mrb[0].mxu0 %v2470
    %v2569 = vpop.f32.mrb[0].mxu0
    %v2570 = vadd.f32 %v2452, %v2569
    %v2571 = vpop.f32.mrb[0].mxu0
    %2572 = vmatprep.mubr.f32.mxu0 0.0
    %2573 = vmatmul.mubr.f32.gmra.mrb[0].mxu0 %v2473
    %v2574 = vpop.f32.mrb[0].mxu0
    %v2575 = vadd.f32 %v2452, %v2574
    %v2576 = vpop.f32.mrb[0].mxu0
    %2577 = vmatprep.mubr.f32.mxu0 0.0
    %2578 = vmatmul.mubr.f32.gmra.mrb[0].mxu0 %v2476
    %v2579 = vpop.f32.mrb[0].mxu0
    %v2580 = vadd.f32 %v2452, %v2579
    %v2581 = vpop.f32.mrb[0].mxu0
    %2582 = vdwg.mxu0
    %2591 = vrot.lane.b32.xlu0 %v2545, 112
    %v2592 = vpop.permute.xlu0 %2591
    %2593 = vrot.lane.b32.xlu0 %v2550, 112
    %v2594 = vpop.permute.xlu0 %2593
    %2595 = vrot.lane.b32.xlu0 %v2555, 112
    %v2596 = vpop.permute.xlu0 %2595
    %2597 = vrot.lane.b32.xlu0 %v2560, 112
    %v2598 = vpop.permute.xlu0 %2597
    %2599 = vrot.lane.b32.xlu0 %v2565, 112
    %v2600 = vpop.permute.xlu0 %2599
    %2601 = vrot.lane.b32.xlu0 %v2570, 112
    %v2602 = vpop.permute.xlu0 %2601
    %2603 = vrot.lane.b32.xlu0 %v2575, 112
    %v2604 = vpop.permute.xlu0 %2603
    %2605 = vrot.lane.b32.xlu0 %v2580, 112
    %v2606 = vpop.permute.xlu0 %2605
    %v2607 = vsel %vm708, %v2545, 0
    %v2609 = vsel %vm708, %v2550, 0
    %v2611 = vsel %vm708, %v2555, 0
    %v2613 = vsel %vm708, %v2560, 0
    %v2615 = vsel %vm708, %v2565, 0
    %v2617 = vsel %vm708, %v2570, 0
    %v2619 = vsel %vm708, %v2575, 0
    %v2621 = vsel %vm708, %v2580, 0
    %v2623 = vsel %vm708, %v2592, 0
    %v2625 = vsel %vm708, %v2594, 0
    %v2627 = vsel %vm708, %v2596, 0
    %v2629 = vsel %vm708, %v2598, 0
    %v2631 = vsel %vm708, %v2600, 0
    %v2633 = vsel %vm708, %v2602, 0
    %v2635 = vsel %vm708, %v2604, 0
    %v2637 = vsel %vm708, %v2606, 0
    %2639 = vmatprep.subr.mxu0 0.0
    %2640 = vmatpush1.xpose.msra.mxu0 %v2623
    %2641 = vmatprep.subr.mxu0 0.0
    %2642 = vmatpush1.xpose.msra.mxu0 %v2625
    %2643 = vmatprep.subr.mxu0 0.0
    %2644 = vmatpush1.xpose.msra.mxu0 %v2627
    %2645 = vmatprep.subr.mxu0 0.0
    %2646 = vmatpush1.xpose.msra.mxu0 %v2629
    %2647 = vmatprep.subr.mxu0 0.0
    %2648 = vmatpush1.xpose.msra.mxu0 %v2631
    %2649 = vmatprep.subr.mxu0 0.0
    %2650 = vmatpush1.xpose.msra.mxu0 %v2633
    %2651 = vmatprep.subr.mxu0 0.0
    %2652 = vmatpush1.xpose.msra.mxu0 %v2635
    %2653 = vmatprep.subr.mxu0 0.0
    %2654 = vmatpush1.xpose.msra.mxu0 %v2637
    %2655 = vmatprep.subr.mxu0 0.0
    %2656 = vmatpush1.xpose.msra.mxu0 0.0
    %2657 = vmatprep.subr.mxu0 0.0
    %2658 = vmatpush1.xpose.msra.mxu0 0.0
    %2659 = vmatprep.subr.mxu0 0.0
    %2660 = vmatpush1.xpose.msra.mxu0 0.0
    %2661 = vmatprep.subr.mxu0 0.0
    %2662 = vmatpush1.xpose.msra.mxu0 0.0
    %2663 = vmatprep.subr.mxu0 0.0
    %2664 = vmatpush1.xpose.msra.mxu0 0.0
    %2665 = vmatprep.subr.mxu0 0.0
    %2666 = vmatpush1.xpose.msra.mxu0 0.0
    %2667 = vmatprep.subr.mxu0 0.0
    %2668 = vmatpush1.xpose.msra.mxu0 0.0
    %2669 = vmatprep.subr.mxu0 0.0
    %2670 = vmatpush1.xpose.msra.mxu0 0.0
    %2671 = vmatprep.subr.mxu0 0.0
    %2672 = vmatpush1.xpose.msra.mxu0 0.0
    %2673 = vmatprep.subr.mxu0 0.0
    %2674 = vmatpush1.xpose.msra.mxu0 0.0
    %2675 = vmatprep.subr.mxu0 0.0
    %2676 = vmatpush1.xpose.msra.mxu0 0.0
    %2677 = vmatprep.subr.mxu0 0.0
    %2678 = vmatpush1.xpose.msra.mxu0 0.0
    %2679 = vmatprep.subr.mxu0 0.0
    %2680 = vmatpush1.xpose.msra.mxu0 0.0
    %2681 = vmatprep.subr.mxu0 0.0
    %2682 = vmatpush1.xpose.msra.mxu0 0.0
    %2683 = vmatprep.subr.mxu0 0.0
    %2684 = vmatpush1.xpose.msra.mxu0 0.0
    %2685 = vmatprep.subr.mxu0 0.0
    %2686 = vmatpush1.xpose.msra.mxu0 0.0
    %2687 = vmatprep.subr.mxu0 0.0
    %2688 = vmatpush1.xpose.msra.mxu0 0.0
    %2689 = vmatprep.subr.mxu0 0.0
    %2690 = vmatpush1.xpose.msra.mxu0 0.0
    %2691 = vmatprep.subr.mxu0 0.0
    %2692 = vmatpush1.xpose.msra.mxu0 0.0
    %2693 = vmatprep.subr.mxu0 0.0
    %2694 = vmatpush1.xpose.msra.mxu0 0.0
    %2695 = vmatprep.subr.mxu0 0.0
    %2696 = vmatpush1.xpose.msra.mxu0 0.0
    %2697 = vmatprep.subr.mxu0 0.0
    %2698 = vmatpush1.xpose.msra.mxu0 0.0
    %2699 = vmatprep.subr.mxu0 0.0
    %2700 = vmatpush1.xpose.msra.mxu0 0.0
    %2701 = vmatprep.subr.mxu0 0.0
    %2702 = vmatpush1.xpose.msra.mxu0 0.0
    %2703 = vmatprep.mubr.f32.mxu0 0.0
    %2704 = vmatmul.mubr.f32.gmra.mrb[0].mxu0 %v2607
    %v2705 = vpop.f32.mrb[0].mxu0
    %v2706 = vadd.f32 0.0, %v2705
    %v2707 = vpop.f32.mrb[0].mxu0
    %2708 = vmatprep.mubr.f32.mxu0 0.0
    %2709 = vmatmul.mubr.f32.gmra.mrb[0].mxu0 %v2609
    %v2710 = vpop.f32.mrb[0].mxu0
    %v2711 = vadd.f32 0.0, %v2710
    %v2712 = vpop.f32.mrb[0].mxu0
    %2713 = vmatprep.mubr.f32.mxu0 0.0
    %2714 = vmatmul.mubr.f32.gmra.mrb[0].mxu0 %v2611
    %v2715 = vpop.f32.mrb[0].mxu0
    %v2716 = vadd.f32 0.0, %v2715
    %v2717 = vpop.f32.mrb[0].mxu0
    %2718 = vmatprep.mubr.f32.mxu0 0.0
    %2719 = vmatmul.mubr.f32.gmra.mrb[0].mxu0 %v2613
    %v2720 = vpop.f32.mrb[0].mxu0
    %v2721 = vadd.f32 0.0, %v2720
    %v2722 = vpop.f32.mrb[0].mxu0
    %2723 = vmatprep.mubr.f32.mxu0 0.0
    %2724 = vmatmul.mubr.f32.gmra.mrb[0].mxu0 %v2615
    %v2725 = vpop.f32.mrb[0].mxu0
    %v2726 = vadd.f32 0.0, %v2725
    %v2727 = vpop.f32.mrb[0].mxu0
    %2728 = vmatprep.mubr.f32.mxu0 0.0
    %2729 = vmatmul.mubr.f32.gmra.mrb[0].mxu0 %v2617
    %v2730 = vpop.f32.mrb[0].mxu0
    %v2731 = vadd.f32 0.0, %v2730
    %v2732 = vpop.f32.mrb[0].mxu0
    %2733 = vmatprep.mubr.f32.mxu0 0.0
    %2734 = vmatmul.mubr.f32.gmra.mrb[0].mxu0 %v2619
    %v2735 = vpop.f32.mrb[0].mxu0
    %v2736 = vadd.f32 0.0, %v2735
    %v2737 = vpop.f32.mrb[0].mxu0
    %2738 = vmatprep.mubr.f32.mxu0 0.0
    %2739 = vmatmul.mubr.f32.gmra.mrb[0].mxu0 %v2621
    %v2740 = vpop.f32.mrb[0].mxu0
    %v2741 = vadd.f32 0.0, %v2740
    %v2742 = vpop.f32.mrb[0].mxu0
    %2743 = vdwg.mxu0
    %v2744 = vmul.f32 %v2706, 0.25
    %v2745 = vmul.f32 %v2711, 0.25
    %v2746 = vmul.f32 %v2716, 0.25
    %v2747 = vmul.f32 %v2721, 0.25
    %v2748 = vmul.f32 %v2726, 0.25
    %v2749 = vmul.f32 %v2731, 0.25
    %v2750 = vmul.f32 %v2736, 0.25
    %v2751 = vmul.f32 %v2741, 0.25
    %v2752 = vsel %vm1503, %v2744, -1e+30
    %v2753 = vsel %vm1504, %v2745, -1e+30
    %v2754 = vsel %vm1505, %v2746, -1e+30
    %v2755 = vsel %vm1506, %v2747, -1e+30
    %v2756 = vsel %vm1507, %v2748, -1e+30
    %v2757 = vsel %vm1508, %v2749, -1e+30
    %v2758 = vsel %vm1509, %v2750, -1e+30
    %v2759 = vsel %vm1510, %v2751, -1e+30
    %v2760 = vsel %vm1519, %v2752, -inf
    %2761 = vmax.xlane.f32.xlu0 %v2760
    %v2762 = vpop.xlane.xlu0 %2761
    %v2763 = vsel %vm1519, %v2753, -inf
    %2764 = vmax.xlane.f32.xlu0 %v2763
    %v2765 = vpop.xlane.xlu0 %2764
    %v2766 = vsel %vm1519, %v2754, -inf
    %2767 = vmax.xlane.f32.xlu0 %v2766
    %v2768 = vpop.xlane.xlu0 %2767
    %v2769 = vsel %vm1519, %v2755, -inf
    %2770 = vmax.xlane.f32.xlu0 %v2769
    %v2771 = vpop.xlane.xlu0 %2770
    %v2772 = vsel %vm1519, %v2756, -inf
    %2773 = vmax.xlane.f32.xlu0 %v2772
    %v2774 = vpop.xlane.xlu0 %2773
    %v2775 = vsel %vm1519, %v2757, -inf
    %2776 = vmax.xlane.f32.xlu0 %v2775
    %v2777 = vpop.xlane.xlu0 %2776
    %v2778 = vsel %vm1519, %v2758, -inf
    %2779 = vmax.xlane.f32.xlu0 %v2778
    %v2780 = vpop.xlane.xlu0 %2779
    %v2781 = vsel %vm1519, %v2759, -inf
    %2782 = vmax.xlane.f32.xlu0 %v2781
    %v2783 = vpop.xlane.xlu0 %2782
    %v2784 = vsub.f32 %v2752, %v2762
    %v2785 = vsub.f32 %v2753, %v2765
    %v2786 = vsub.f32 %v2754, %v2768
    %v2787 = vsub.f32 %v2755, %v2771
    %v2788 = vsub.f32 %v2756, %v2774
    %v2789 = vsub.f32 %v2757, %v2777
    %v2790 = vsub.f32 %v2758, %v2780
    %v2791 = vsub.f32 %v2759, %v2783
    %v2792 = vmul.f32 %v2784, 1.442695
    %v2793 = vpow.pop %v2792
    %v2794 = vmul.f32 %v2785, 1.442695
    %v2795 = vpow.pop %v2794
    %v2796 = vmul.f32 %v2786, 1.442695
    %v2797 = vpow.pop %v2796
    %v2798 = vmul.f32 %v2787, 1.442695
    %v2799 = vpow.pop %v2798
    %v2800 = vmul.f32 %v2788, 1.442695
    %v2801 = vpow.pop %v2800
    %v2802 = vmul.f32 %v2789, 1.442695
    %v2803 = vpow.pop %v2802
    %v2804 = vmul.f32 %v2790, 1.442695
    %v2805 = vpow.pop %v2804
    %v2806 = vmul.f32 %v2791, 1.442695
    %v2807 = vpow.pop %v2806
    %v2808 = vmul.f32 %v2793, %v256
    %v2809 = vmul.f32 %v2795, %v257
    %v2810 = vmul.f32 %v2797, %v258
    %v2811 = vmul.f32 %v2799, %v259
    %v2812 = vmul.f32 %v2801, %v260
    %v2813 = vmul.f32 %v2803, %v261
    %v2814 = vmul.f32 %v2805, %v262
    %v2815 = vmul.f32 %v2807, %v263
    %v2816 = vsel %vm1519, %v2808, 0.0
    %2817 = vadd.xlane.f32.xlu0 %v2816
    %v2818 = vpop.xlane.xlu0 %2817
    %v2819 = vsel %vm1519, %v2809, 0.0
    %2820 = vadd.xlane.f32.xlu0 %v2819
    %v2821 = vpop.xlane.xlu0 %2820
    %v2822 = vsel %vm1519, %v2810, 0.0
    %2823 = vadd.xlane.f32.xlu0 %v2822
    %v2824 = vpop.xlane.xlu0 %2823
    %v2825 = vsel %vm1519, %v2811, 0.0
    %2826 = vadd.xlane.f32.xlu0 %v2825
    %v2827 = vpop.xlane.xlu0 %2826
    %v2828 = vsel %vm1519, %v2812, 0.0
    %2829 = vadd.xlane.f32.xlu0 %v2828
    %v2830 = vpop.xlane.xlu0 %2829
    %v2831 = vsel %vm1519, %v2813, 0.0
    %2832 = vadd.xlane.f32.xlu0 %v2831
    %v2833 = vpop.xlane.xlu0 %2832
    %v2834 = vsel %vm1519, %v2814, 0.0
    %2835 = vadd.xlane.f32.xlu0 %v2834
    %v2836 = vpop.xlane.xlu0 %2835
    %v2837 = vsel %vm1519, %v2815, 0.0
    %2838 = vadd.xlane.f32.xlu0 %v2837
    %v2839 = vpop.xlane.xlu0 %2838
    %vm2840 = vcmp.gt.f32.partialorder %v2818, 0.0
    %vm2841 = vcmp.gt.f32.partialorder %v2821, 0.0
    %vm2842 = vcmp.gt.f32.partialorder %v2824, 0.0
    %vm2843 = vcmp.gt.f32.partialorder %v2827, 0.0
    %vm2844 = vcmp.gt.f32.partialorder %v2830, 0.0
    %vm2845 = vcmp.gt.f32.partialorder %v2833, 0.0
    %vm2846 = vcmp.gt.f32.partialorder %v2836, 0.0
    %vm2847 = vcmp.gt.f32.partialorder %v2839, 0.0
    %v2848 = vsel %vm2840, %v2818, 1.0
    %v2849 = vsel %vm2841, %v2821, 1.0
    %v2850 = vsel %vm2842, %v2824, 1.0
    %v2851 = vsel %vm2843, %v2827, 1.0
    %v2852 = vsel %vm2844, %v2830, 1.0
    %v2853 = vsel %vm2845, %v2833, 1.0
    %v2854 = vsel %vm2846, %v2836, 1.0
    %v2855 = vsel %vm2847, %v2839, 1.0
    %v2856 = vrcp.pop %v2848
    %v2857 = vrcp.pop %v2849
    %v2858 = vrcp.pop %v2850
    %v2859 = vrcp.pop %v2851
    %v2860 = vrcp.pop %v2852
    %v2861 = vrcp.pop %v2853
    %v2862 = vrcp.pop %v2854
    %v2863 = vrcp.pop %v2855
    %v2864 = vmul.f32 %v2808, %v2856
    %v2865 = vmul.f32 %v2809, %v2857
    %v2866 = vmul.f32 %v2810, %v2858
    %v2867 = vmul.f32 %v2811, %v2859
    %v2868 = vmul.f32 %v2812, %v2860
    %v2869 = vmul.f32 %v2813, %v2861
    %v2870 = vmul.f32 %v2814, %v2862
    %v2871 = vmul.f32 %v2815, %v2863
    %2872 = vrot.lane.b32.xlu0 %v2545, 96
    %v2873 = vpop.permute.xlu0 %2872
    %2874 = vrot.lane.b32.xlu0 %v2550, 96
    %v2875 = vpop.permute.xlu0 %2874
    %2876 = vrot.lane.b32.xlu0 %v2555, 96
    %v2877 = vpop.permute.xlu0 %2876
    %2878 = vrot.lane.b32.xlu0 %v2560, 96
    %v2879 = vpop.permute.xlu0 %2878
    %2880 = vrot.lane.b32.xlu0 %v2565, 96
    %v2881 = vpop.permute.xlu0 %2880
    %2882 = vrot.lane.b32.xlu0 %v2570, 96
    %v2883 = vpop.permute.xlu0 %2882
    %2884 = vrot.lane.b32.xlu0 %v2575, 96
    %v2885 = vpop.permute.xlu0 %2884
    %2886 = vrot.lane.b32.xlu0 %v2580, 96
    %v2887 = vpop.permute.xlu0 %2886
    %2896 = vrot.lane.b32.xlu0 %v2545, 80
    %v2897 = vpop.permute.xlu0 %2896
    %2898 = vrot.lane.b32.xlu0 %v2550, 80
    %v2899 = vpop.permute.xlu0 %2898
    %2900 = vrot.lane.b32.xlu0 %v2555, 80
    %v2901 = vpop.permute.xlu0 %2900
    %2902 = vrot.lane.b32.xlu0 %v2560, 80
    %v2903 = vpop.permute.xlu0 %2902
    %2904 = vrot.lane.b32.xlu0 %v2565, 80
    %v2905 = vpop.permute.xlu0 %2904
    %2906 = vrot.lane.b32.xlu0 %v2570, 80
    %v2907 = vpop.permute.xlu0 %2906
    %2908 = vrot.lane.b32.xlu0 %v2575, 80
    %v2909 = vpop.permute.xlu0 %2908
    %2910 = vrot.lane.b32.xlu0 %v2580, 80
    %v2911 = vpop.permute.xlu0 %2910
    %v2921 = vsel %vm1519, %v2864, 0
    %v2924 = vsel %vm1519, %v2865, 0
    %v2927 = vsel %vm1519, %v2866, 0
    %v2930 = vsel %vm1519, %v2867, 0
    %v2933 = vsel %vm1519, %v2868, 0
    %v2936 = vsel %vm1519, %v2869, 0
    %v2939 = vsel %vm1519, %v2870, 0
    %v2942 = vsel %vm1519, %v2871, 0
    %2944 = vmatprep.subr.mxu0 0.0
    %2945 = vmatpush1.msra.mxu0 %v2873
    %2946 = vmatprep.subr.mxu0 0.0
    %2947 = vmatpush1.msra.mxu0 %v2875
    %2948 = vmatprep.subr.mxu0 0.0
    %2949 = vmatpush1.msra.mxu0 %v2877
    %2950 = vmatprep.subr.mxu0 0.0
    %2951 = vmatpush1.msra.mxu0 %v2879
    %2952 = vmatprep.subr.mxu0 0.0
    %2953 = vmatpush1.msra.mxu0 %v2881
    %2954 = vmatprep.subr.mxu0 0.0
    %2955 = vmatpush1.msra.mxu0 %v2883
    %2956 = vmatprep.subr.mxu0 0.0
    %2957 = vmatpush1.msra.mxu0 %v2885
    %2958 = vmatprep.subr.mxu0 0.0
    %2959 = vmatpush1.msra.mxu0 %v2887
    %2960 = vmatprep.subr.mxu0 0.0
    %2961 = vmatpush1.msra.mxu0 0.0
    %2962 = vmatprep.subr.mxu0 0.0
    %2963 = vmatpush1.msra.mxu0 0.0
    %2964 = vmatprep.subr.mxu0 0.0
    %2965 = vmatpush1.msra.mxu0 0.0
    %2966 = vmatprep.subr.mxu0 0.0
    %2967 = vmatpush1.msra.mxu0 0.0
    %2968 = vmatprep.subr.mxu0 0.0
    %2969 = vmatpush1.msra.mxu0 0.0
    %2970 = vmatprep.subr.mxu0 0.0
    %2971 = vmatpush1.msra.mxu0 0.0
    %2972 = vmatprep.subr.mxu0 0.0
    %2973 = vmatpush1.msra.mxu0 0.0
    %2974 = vmatprep.subr.mxu0 0.0
    %2975 = vmatpush1.msra.mxu0 0.0
    %2976 = vmatprep.subr.mxu0 0.0
    %2977 = vmatpush1.msra.mxu0 0.0
    %2978 = vmatprep.subr.mxu0 0.0
    %2979 = vmatpush1.msra.mxu0 0.0
    %2980 = vmatprep.subr.mxu0 0.0
    %2981 = vmatpush1.msra.mxu0 0.0
    %2982 = vmatprep.subr.mxu0 0.0
    %2983 = vmatpush1.msra.mxu0 0.0
    %2984 = vmatprep.subr.mxu0 0.0
    %2985 = vmatpush1.msra.mxu0 0.0
    %2986 = vmatprep.subr.mxu0 0.0
    %2987 = vmatpush1.msra.mxu0 0.0
    %2988 = vmatprep.subr.mxu0 0.0
    %2989 = vmatpush1.msra.mxu0 0.0
    %2990 = vmatprep.subr.mxu0 0.0
    %2991 = vmatpush1.msra.mxu0 0.0
    %2992 = vmatprep.subr.mxu0 0.0
    %2993 = vmatpush1.msra.mxu0 0.0
    %2994 = vmatprep.subr.mxu0 0.0
    %2995 = vmatpush1.msra.mxu0 0.0
    %2996 = vmatprep.subr.mxu0 0.0
    %2997 = vmatpush1.msra.mxu0 0.0
    %2998 = vmatprep.subr.mxu0 0.0
    %2999 = vmatpush1.msra.mxu0 0.0
    %3000 = vmatprep.subr.mxu0 0.0
    %3001 = vmatpush1.msra.mxu0 0.0
    %3002 = vmatprep.subr.mxu0 0.0
    %3003 = vmatpush1.msra.mxu0 0.0
    %3004 = vmatprep.subr.mxu0 0.0
    %3005 = vmatpush1.msra.mxu0 0.0
    %3006 = vmatprep.subr.mxu0 0.0
    %3007 = vmatpush1.msra.mxu0 0.0
    %3008 = vmatprep.mubr.f32.mxu0 0.0
    %3009 = vmatmul.mubr.f32.gmra.mrb[0].mxu0 %v2921
    %v3010 = vpop.f32.mrb[0].mxu0
    %v3011 = vadd.f32 %v2897, %v3010
    %v3012 = vpop.f32.mrb[0].mxu0
    %3013 = vmatprep.mubr.f32.mxu0 0.0
    %3014 = vmatmul.mubr.f32.gmra.mrb[0].mxu0 %v2924
    %v3015 = vpop.f32.mrb[0].mxu0
    %v3016 = vadd.f32 %v2899, %v3015
    %v3017 = vpop.f32.mrb[0].mxu0
    %3018 = vmatprep.mubr.f32.mxu0 0.0
    %3019 = vmatmul.mubr.f32.gmra.mrb[0].mxu0 %v2927
    %v3020 = vpop.f32.mrb[0].mxu0
    %v3021 = vadd.f32 %v2901, %v3020
    %v3022 = vpop.f32.mrb[0].mxu0
    %3023 = vmatprep.mubr.f32.mxu0 0.0
    %3024 = vmatmul.mubr.f32.gmra.mrb[0].mxu0 %v2930
    %v3025 = vpop.f32.mrb[0].mxu0
    %v3026 = vadd.f32 %v2903, %v3025
    %v3027 = vpop.f32.mrb[0].mxu0
    %3028 = vmatprep.mubr.f32.mxu0 0.0
    %3029 = vmatmul.mubr.f32.gmra.mrb[0].mxu0 %v2933
    %v3030 = vpop.f32.mrb[0].mxu0
    %v3031 = vadd.f32 %v2905, %v3030
    %v3032 = vpop.f32.mrb[0].mxu0
    %3033 = vmatprep.mubr.f32.mxu0 0.0
    %3034 = vmatmul.mubr.f32.gmra.mrb[0].mxu0 %v2936
    %v3035 = vpop.f32.mrb[0].mxu0
    %v3036 = vadd.f32 %v2907, %v3035
    %v3037 = vpop.f32.mrb[0].mxu0
    %3038 = vmatprep.mubr.f32.mxu0 0.0
    %3039 = vmatmul.mubr.f32.gmra.mrb[0].mxu0 %v2939
    %v3040 = vpop.f32.mrb[0].mxu0
    %v3041 = vadd.f32 %v2909, %v3040
    %v3042 = vpop.f32.mrb[0].mxu0
    %3043 = vmatprep.mubr.f32.mxu0 0.0
    %3044 = vmatmul.mubr.f32.gmra.mrb[0].mxu0 %v2942
    %v3045 = vpop.f32.mrb[0].mxu0
    %v3046 = vadd.f32 %v2911, %v3045
    %v3047 = vpop.f32.mrb[0].mxu0
    %3048 = vdwg.mxu0
    %v3049 = vmax.f32 %v3011, 0.0
    %v3050 = vmax.f32 %v3016, 0.0
    %v3051 = vmax.f32 %v3021, 0.0
    %v3052 = vmax.f32 %v3026, 0.0
    %v3053 = vmax.f32 %v3031, 0.0
    %v3054 = vmax.f32 %v3036, 0.0
    %v3055 = vmax.f32 %v3041, 0.0
    %v3056 = vmax.f32 %v3046, 0.0
    %v3057 = vadd.f32 %v3049, %v2437
    %v3058 = vadd.f32 %v3050, %v2438
    %v3059 = vadd.f32 %v3051, %v2439
    %v3060 = vadd.f32 %v3052, %v2440
    %v3061 = vadd.f32 %v3053, %v2441
    %v3062 = vadd.f32 %v3054, %v2442
    %v3063 = vadd.f32 %v3055, %v2443
    %v3064 = vadd.f32 %v3056, %v2444
    %v3065 = vld [vmem:[%s45] sm:$0xff]
    %v3066 = vld [vmem:[%s45 + $0x8] sm:$0xff]
    %v3067 = vld [vmem:[%s47] sm:$0x1]
    %v3069 = vlaneseq
    %v3070 = vshrl.u32 %v3069, 7
    %v3071 = vsub.s32 0, %v3070
    %v3072 = vrot.slane %v3067, %v3071
    %v3075 = vsel %vm708, %v3057, 0
    %v3078 = vsel %vm708, %v3058, 0
    %v3081 = vsel %vm708, %v3059, 0
    %v3084 = vsel %vm708, %v3060, 0
    %v3087 = vsel %vm708, %v3061, 0
    %v3090 = vsel %vm708, %v3062, 0
    %v3093 = vsel %vm708, %v3063, 0
    %v3096 = vsel %vm708, %v3064, 0
    %3098 = vmatprep.subr.mxu0 0.0
    %3099 = vmatpush1.msra.mxu0 %v3065
    %3100 = vmatprep.subr.mxu0 0.0
    %3101 = vmatpush1.msra.mxu0 %v3066
    %3102 = vmatprep.subr.mxu0 0.0
    %3103 = vmatpush1.msra.mxu0 0.0
    %3104 = vmatprep.subr.mxu0 0.0
    %3105 = vmatpush1.msra.mxu0 0.0
    %3106 = vmatprep.subr.mxu0 0.0
    %3107 = vmatpush1.msra.mxu0 0.0
    %3108 = vmatprep.subr.mxu0 0.0
    %3109 = vmatpush1.msra.mxu0 0.0
    %3110 = vmatprep.subr.mxu0 0.0
    %3111 = vmatpush1.msra.mxu0 0.0
    %3112 = vmatprep.subr.mxu0 0.0
    %3113 = vmatpush1.msra.mxu0 0.0
    %3114 = vmatprep.subr.mxu0 0.0
    %3115 = vmatpush1.msra.mxu0 0.0
    %3116 = vmatprep.subr.mxu0 0.0
    %3117 = vmatpush1.msra.mxu0 0.0
    %3118 = vmatprep.subr.mxu0 0.0
    %3119 = vmatpush1.msra.mxu0 0.0
    %3120 = vmatprep.subr.mxu0 0.0
    %3121 = vmatpush1.msra.mxu0 0.0
    %3122 = vmatprep.subr.mxu0 0.0
    %3123 = vmatpush1.msra.mxu0 0.0
    %3124 = vmatprep.subr.mxu0 0.0
    %3125 = vmatpush1.msra.mxu0 0.0
    %3126 = vmatprep.subr.mxu0 0.0
    %3127 = vmatpush1.msra.mxu0 0.0
    %3128 = vmatprep.subr.mxu0 0.0
    %3129 = vmatpush1.msra.mxu0 0.0
    %3130 = vmatprep.subr.mxu0 0.0
    %3131 = vmatpush1.msra.mxu0 0.0
    %3132 = vmatprep.subr.mxu0 0.0
    %3133 = vmatpush1.msra.mxu0 0.0
    %3134 = vmatprep.subr.mxu0 0.0
    %3135 = vmatpush1.msra.mxu0 0.0
    %3136 = vmatprep.subr.mxu0 0.0
    %3137 = vmatpush1.msra.mxu0 0.0
    %3138 = vmatprep.subr.mxu0 0.0
    %3139 = vmatpush1.msra.mxu0 0.0
    %3140 = vmatprep.subr.mxu0 0.0
    %3141 = vmatpush1.msra.mxu0 0.0
    %3142 = vmatprep.subr.mxu0 0.0
    %3143 = vmatpush1.msra.mxu0 0.0
    %3144 = vmatprep.subr.mxu0 0.0
    %3145 = vmatpush1.msra.mxu0 0.0
    %3146 = vmatprep.subr.mxu0 0.0
    %3147 = vmatpush1.msra.mxu0 0.0
    %3148 = vmatprep.subr.mxu0 0.0
    %3149 = vmatpush1.msra.mxu0 0.0
    %3150 = vmatprep.subr.mxu0 0.0
    %3151 = vmatpush1.msra.mxu0 0.0
    %3152 = vmatprep.subr.mxu0 0.0
    %3153 = vmatpush1.msra.mxu0 0.0
    %3154 = vmatprep.subr.mxu0 0.0
    %3155 = vmatpush1.msra.mxu0 0.0
    %3156 = vmatprep.subr.mxu0 0.0
    %3157 = vmatpush1.msra.mxu0 0.0
    %3158 = vmatprep.subr.mxu0 0.0
    %3159 = vmatpush1.msra.mxu0 0.0
    %3160 = vmatprep.subr.mxu0 0.0
    %3161 = vmatpush1.msra.mxu0 0.0
    %3162 = vmatprep.mubr.f32.mxu0 0.0
    %3163 = vmatmul.mubr.f32.gmra.mrb[0].mxu0 %v3075
    %v3164 = vpop.f32.mrb[0].mxu0
    %v3165 = vadd.f32 %v3072, %v3164
    %v3166 = vpop.f32.mrb[0].mxu0
    %3167 = vmatprep.mubr.f32.mxu0 0.0
    %3168 = vmatmul.mubr.f32.gmra.mrb[0].mxu0 %v3078
    %v3169 = vpop.f32.mrb[0].mxu0
    %v3170 = vadd.f32 %v3072, %v3169
    %v3171 = vpop.f32.mrb[0].mxu0
    %3172 = vmatprep.mubr.f32.mxu0 0.0
    %3173 = vmatmul.mubr.f32.gmra.mrb[0].mxu0 %v3081
    %v3174 = vpop.f32.mrb[0].mxu0
    %v3175 = vadd.f32 %v3072, %v3174
    %v3176 = vpop.f32.mrb[0].mxu0
    %3177 = vmatprep.mubr.f32.mxu0 0.0
    %3178 = vmatmul.mubr.f32.gmra.mrb[0].mxu0 %v3084
    %v3179 = vpop.f32.mrb[0].mxu0
    %v3180 = vadd.f32 %v3072, %v3179
    %v3181 = vpop.f32.mrb[0].mxu0
    %3182 = vmatprep.mubr.f32.mxu0 0.0
    %3183 = vmatmul.mubr.f32.gmra.mrb[0].mxu0 %v3087
    %v3184 = vpop.f32.mrb[0].mxu0
    %v3185 = vadd.f32 %v3072, %v3184
    %v3186 = vpop.f32.mrb[0].mxu0
    %3187 = vmatprep.mubr.f32.mxu0 0.0
    %3188 = vmatmul.mubr.f32.gmra.mrb[0].mxu0 %v3090
    %v3189 = vpop.f32.mrb[0].mxu0
    %v3190 = vadd.f32 %v3072, %v3189
    %v3191 = vpop.f32.mrb[0].mxu0
    %3192 = vmatprep.mubr.f32.mxu0 0.0
    %3193 = vmatmul.mubr.f32.gmra.mrb[0].mxu0 %v3093
    %v3194 = vpop.f32.mrb[0].mxu0
    %v3195 = vadd.f32 %v3072, %v3194
    %v3196 = vpop.f32.mrb[0].mxu0
    %3197 = vmatprep.mubr.f32.mxu0 0.0
    %3198 = vmatmul.mubr.f32.gmra.mrb[0].mxu0 %v3096
    %v3199 = vpop.f32.mrb[0].mxu0
    %v3200 = vadd.f32 %v3072, %v3199
    %v3201 = vpop.f32.mrb[0].mxu0
    %3202 = vdwg.mxu0
    %3211 = vrot.lane.b32.xlu0 %v3165, 112
    %v3212 = vpop.permute.xlu0 %3211
    %3213 = vrot.lane.b32.xlu0 %v3170, 112
    %v3214 = vpop.permute.xlu0 %3213
    %3215 = vrot.lane.b32.xlu0 %v3175, 112
    %v3216 = vpop.permute.xlu0 %3215
    %3217 = vrot.lane.b32.xlu0 %v3180, 112
    %v3218 = vpop.permute.xlu0 %3217
    %3219 = vrot.lane.b32.xlu0 %v3185, 112
    %v3220 = vpop.permute.xlu0 %3219
    %3221 = vrot.lane.b32.xlu0 %v3190, 112
    %v3222 = vpop.permute.xlu0 %3221
    %3223 = vrot.lane.b32.xlu0 %v3195, 112
    %v3224 = vpop.permute.xlu0 %3223
    %3225 = vrot.lane.b32.xlu0 %v3200, 112
    %v3226 = vpop.permute.xlu0 %3225
    %v3227 = vsel %vm708, %v3165, 0
    %v3229 = vsel %vm708, %v3170, 0
    %v3231 = vsel %vm708, %v3175, 0
    %v3233 = vsel %vm708, %v3180, 0
    %v3235 = vsel %vm708, %v3185, 0
    %v3237 = vsel %vm708, %v3190, 0
    %v3239 = vsel %vm708, %v3195, 0
    %v3241 = vsel %vm708, %v3200, 0
    %v3243 = vsel %vm708, %v3212, 0
    %v3245 = vsel %vm708, %v3214, 0
    %v3247 = vsel %vm708, %v3216, 0
    %v3249 = vsel %vm708, %v3218, 0
    %v3251 = vsel %vm708, %v3220, 0
    %v3253 = vsel %vm708, %v3222, 0
    %v3255 = vsel %vm708, %v3224, 0
    %v3257 = vsel %vm708, %v3226, 0
    %3259 = vmatprep.subr.mxu0 0.0
    %3260 = vmatpush1.xpose.msra.mxu0 %v3243
    %3261 = vmatprep.subr.mxu0 0.0
    %3262 = vmatpush1.xpose.msra.mxu0 %v3245
    %3263 = vmatprep.subr.mxu0 0.0
    %3264 = vmatpush1.xpose.msra.mxu0 %v3247
    %3265 = vmatprep.subr.mxu0 0.0
    %3266 = vmatpush1.xpose.msra.mxu0 %v3249
    %3267 = vmatprep.subr.mxu0 0.0
    %3268 = vmatpush1.xpose.msra.mxu0 %v3251
    %3269 = vmatprep.subr.mxu0 0.0
    %3270 = vmatpush1.xpose.msra.mxu0 %v3253
    %3271 = vmatprep.subr.mxu0 0.0
    %3272 = vmatpush1.xpose.msra.mxu0 %v3255
    %3273 = vmatprep.subr.mxu0 0.0
    %3274 = vmatpush1.xpose.msra.mxu0 %v3257
    %3275 = vmatprep.subr.mxu0 0.0
    %3276 = vmatpush1.xpose.msra.mxu0 0.0
    %3277 = vmatprep.subr.mxu0 0.0
    %3278 = vmatpush1.xpose.msra.mxu0 0.0
    %3279 = vmatprep.subr.mxu0 0.0
    %3280 = vmatpush1.xpose.msra.mxu0 0.0
    %3281 = vmatprep.subr.mxu0 0.0
    %3282 = vmatpush1.xpose.msra.mxu0 0.0
    %3283 = vmatprep.subr.mxu0 0.0
    %3284 = vmatpush1.xpose.msra.mxu0 0.0
    %3285 = vmatprep.subr.mxu0 0.0
    %3286 = vmatpush1.xpose.msra.mxu0 0.0
    %3287 = vmatprep.subr.mxu0 0.0
    %3288 = vmatpush1.xpose.msra.mxu0 0.0
    %3289 = vmatprep.subr.mxu0 0.0
    %3290 = vmatpush1.xpose.msra.mxu0 0.0
    %3291 = vmatprep.subr.mxu0 0.0
    %3292 = vmatpush1.xpose.msra.mxu0 0.0
    %3293 = vmatprep.subr.mxu0 0.0
    %3294 = vmatpush1.xpose.msra.mxu0 0.0
    %3295 = vmatprep.subr.mxu0 0.0
    %3296 = vmatpush1.xpose.msra.mxu0 0.0
    %3297 = vmatprep.subr.mxu0 0.0
    %3298 = vmatpush1.xpose.msra.mxu0 0.0
    %3299 = vmatprep.subr.mxu0 0.0
    %3300 = vmatpush1.xpose.msra.mxu0 0.0
    %3301 = vmatprep.subr.mxu0 0.0
    %3302 = vmatpush1.xpose.msra.mxu0 0.0
    %3303 = vmatprep.subr.mxu0 0.0
    %3304 = vmatpush1.xpose.msra.mxu0 0.0
    %3305 = vmatprep.subr.mxu0 0.0
    %3306 = vmatpush1.xpose.msra.mxu0 0.0
    %3307 = vmatprep.subr.mxu0 0.0
    %3308 = vmatpush1.xpose.msra.mxu0 0.0
    %3309 = vmatprep.subr.mxu0 0.0
    %3310 = vmatpush1.xpose.msra.mxu0 0.0
    %3311 = vmatprep.subr.mxu0 0.0
    %3312 = vmatpush1.xpose.msra.mxu0 0.0
    %3313 = vmatprep.subr.mxu0 0.0
    %3314 = vmatpush1.xpose.msra.mxu0 0.0
    %3315 = vmatprep.subr.mxu0 0.0
    %3316 = vmatpush1.xpose.msra.mxu0 0.0
    %3317 = vmatprep.subr.mxu0 0.0
    %3318 = vmatpush1.xpose.msra.mxu0 0.0
    %3319 = vmatprep.subr.mxu0 0.0
    %3320 = vmatpush1.xpose.msra.mxu0 0.0
    %3321 = vmatprep.subr.mxu0 0.0
    %3322 = vmatpush1.xpose.msra.mxu0 0.0
    %3323 = vmatprep.mubr.f32.mxu0 0.0
    %3324 = vmatmul.mubr.f32.gmra.mrb[0].mxu0 %v3227
    %v3325 = vpop.f32.mrb[0].mxu0
    %v3326 = vadd.f32 0.0, %v3325
    %v3327 = vpop.f32.mrb[0].mxu0
    %3328 = vmatprep.mubr.f32.mxu0 0.0
    %3329 = vmatmul.mubr.f32.gmra.mrb[0].mxu0 %v3229
    %v3330 = vpop.f32.mrb[0].mxu0
    %v3331 = vadd.f32 0.0, %v3330
    %v3332 = vpop.f32.mrb[0].mxu0
    %3333 = vmatprep.mubr.f32.mxu0 0.0
    %3334 = vmatmul.mubr.f32.gmra.mrb[0].mxu0 %v3231
    %v3335 = vpop.f32.mrb[0].mxu0
    %v3336 = vadd.f32 0.0, %v3335
    %v3337 = vpop.f32.mrb[0].mxu0
    %3338 = vmatprep.mubr.f32.mxu0 0.0
    %3339 = vmatmul.mubr.f32.gmra.mrb[0].mxu0 %v3233
    %v3340 = vpop.f32.mrb[0].mxu0
    %v3341 = vadd.f32 0.0, %v3340
    %v3342 = vpop.f32.mrb[0].mxu0
    %3343 = vmatprep.mubr.f32.mxu0 0.0
    %3344 = vmatmul.mubr.f32.gmra.mrb[0].mxu0 %v3235
    %v3345 = vpop.f32.mrb[0].mxu0
    %v3346 = vadd.f32 0.0, %v3345
    %v3347 = vpop.f32.mrb[0].mxu0
    %3348 = vmatprep.mubr.f32.mxu0 0.0
    %3349 = vmatmul.mubr.f32.gmra.mrb[0].mxu0 %v3237
    %v3350 = vpop.f32.mrb[0].mxu0
    %v3351 = vadd.f32 0.0, %v3350
    %v3352 = vpop.f32.mrb[0].mxu0
    %3353 = vmatprep.mubr.f32.mxu0 0.0
    %3354 = vmatmul.mubr.f32.gmra.mrb[0].mxu0 %v3239
    %v3355 = vpop.f32.mrb[0].mxu0
    %v3356 = vadd.f32 0.0, %v3355
    %v3357 = vpop.f32.mrb[0].mxu0
    %3358 = vmatprep.mubr.f32.mxu0 0.0
    %3359 = vmatmul.mubr.f32.gmra.mrb[0].mxu0 %v3241
    %v3360 = vpop.f32.mrb[0].mxu0
    %v3361 = vadd.f32 0.0, %v3360
    %v3362 = vpop.f32.mrb[0].mxu0
    %3363 = vdwg.mxu0
    %v3364 = vmul.f32 %v3326, 0.25
    %v3365 = vmul.f32 %v3331, 0.25
    %v3366 = vmul.f32 %v3336, 0.25
    %v3367 = vmul.f32 %v3341, 0.25
    %v3368 = vmul.f32 %v3346, 0.25
    %v3369 = vmul.f32 %v3351, 0.25
    %v3370 = vmul.f32 %v3356, 0.25
    %v3371 = vmul.f32 %v3361, 0.25
    %v3372 = vsel %vm1503, %v3364, -1e+30
    %v3373 = vsel %vm1504, %v3365, -1e+30
    %v3374 = vsel %vm1505, %v3366, -1e+30
    %v3375 = vsel %vm1506, %v3367, -1e+30
    %v3376 = vsel %vm1507, %v3368, -1e+30
    %v3377 = vsel %vm1508, %v3369, -1e+30
    %v3378 = vsel %vm1509, %v3370, -1e+30
    %v3379 = vsel %vm1510, %v3371, -1e+30
    %v3380 = vsel %vm1519, %v3372, -inf
    %3381 = vmax.xlane.f32.xlu0 %v3380
    %v3382 = vpop.xlane.xlu0 %3381
    %v3383 = vsel %vm1519, %v3373, -inf
    %3384 = vmax.xlane.f32.xlu0 %v3383
    %v3385 = vpop.xlane.xlu0 %3384
    %v3386 = vsel %vm1519, %v3374, -inf
    %3387 = vmax.xlane.f32.xlu0 %v3386
    %v3388 = vpop.xlane.xlu0 %3387
    %v3389 = vsel %vm1519, %v3375, -inf
    %3390 = vmax.xlane.f32.xlu0 %v3389
    %v3391 = vpop.xlane.xlu0 %3390
    %v3392 = vsel %vm1519, %v3376, -inf
    %3393 = vmax.xlane.f32.xlu0 %v3392
    %v3394 = vpop.xlane.xlu0 %3393
    %v3395 = vsel %vm1519, %v3377, -inf
    %3396 = vmax.xlane.f32.xlu0 %v3395
    %v3397 = vpop.xlane.xlu0 %3396
    %v3398 = vsel %vm1519, %v3378, -inf
    %3399 = vmax.xlane.f32.xlu0 %v3398
    %v3400 = vpop.xlane.xlu0 %3399
    %v3401 = vsel %vm1519, %v3379, -inf
    %3402 = vmax.xlane.f32.xlu0 %v3401
    %v3403 = vpop.xlane.xlu0 %3402
    %v3404 = vsub.f32 %v3372, %v3382
    %v3405 = vsub.f32 %v3373, %v3385
    %v3406 = vsub.f32 %v3374, %v3388
    %v3407 = vsub.f32 %v3375, %v3391
    %v3408 = vsub.f32 %v3376, %v3394
    %v3409 = vsub.f32 %v3377, %v3397
    %v3410 = vsub.f32 %v3378, %v3400
    %v3411 = vsub.f32 %v3379, %v3403
    %v3412 = vmul.f32 %v3404, 1.442695
    %v3413 = vpow.pop %v3412
    %v3414 = vmul.f32 %v3405, 1.442695
    %v3415 = vpow.pop %v3414
    %v3416 = vmul.f32 %v3406, 1.442695
    %v3417 = vpow.pop %v3416
    %v3418 = vmul.f32 %v3407, 1.442695
    %v3419 = vpow.pop %v3418
    %v3420 = vmul.f32 %v3408, 1.442695
    %v3421 = vpow.pop %v3420
    %v3422 = vmul.f32 %v3409, 1.442695
    %v3423 = vpow.pop %v3422
    %v3424 = vmul.f32 %v3410, 1.442695
    %v3425 = vpow.pop %v3424
    %v3426 = vmul.f32 %v3411, 1.442695
    %v3427 = vpow.pop %v3426
    %v3428 = vmul.f32 %v3413, %v256
    %v3429 = vmul.f32 %v3415, %v257
    %v3430 = vmul.f32 %v3417, %v258
    %v3431 = vmul.f32 %v3419, %v259
    %v3432 = vmul.f32 %v3421, %v260
    %v3433 = vmul.f32 %v3423, %v261
    %v3434 = vmul.f32 %v3425, %v262
    %v3435 = vmul.f32 %v3427, %v263
    %v3436 = vsel %vm1519, %v3428, 0.0
    %3437 = vadd.xlane.f32.xlu0 %v3436
    %v3438 = vpop.xlane.xlu0 %3437
    %v3439 = vsel %vm1519, %v3429, 0.0
    %3440 = vadd.xlane.f32.xlu0 %v3439
    %v3441 = vpop.xlane.xlu0 %3440
    %v3442 = vsel %vm1519, %v3430, 0.0
    %3443 = vadd.xlane.f32.xlu0 %v3442
    %v3444 = vpop.xlane.xlu0 %3443
    %v3445 = vsel %vm1519, %v3431, 0.0
    %3446 = vadd.xlane.f32.xlu0 %v3445
    %v3447 = vpop.xlane.xlu0 %3446
    %v3448 = vsel %vm1519, %v3432, 0.0
    %3449 = vadd.xlane.f32.xlu0 %v3448
    %v3450 = vpop.xlane.xlu0 %3449
    %v3451 = vsel %vm1519, %v3433, 0.0
    %3452 = vadd.xlane.f32.xlu0 %v3451
    %v3453 = vpop.xlane.xlu0 %3452
    %v3454 = vsel %vm1519, %v3434, 0.0
    %3455 = vadd.xlane.f32.xlu0 %v3454
    %v3456 = vpop.xlane.xlu0 %3455
    %v3457 = vsel %vm1519, %v3435, 0.0
    %3458 = vadd.xlane.f32.xlu0 %v3457
    %v3459 = vpop.xlane.xlu0 %3458
    %vm3460 = vcmp.gt.f32.partialorder %v3438, 0.0
    %vm3461 = vcmp.gt.f32.partialorder %v3441, 0.0
    %vm3462 = vcmp.gt.f32.partialorder %v3444, 0.0
    %vm3463 = vcmp.gt.f32.partialorder %v3447, 0.0
    %vm3464 = vcmp.gt.f32.partialorder %v3450, 0.0
    %vm3465 = vcmp.gt.f32.partialorder %v3453, 0.0
    %vm3466 = vcmp.gt.f32.partialorder %v3456, 0.0
    %vm3467 = vcmp.gt.f32.partialorder %v3459, 0.0
    %v3468 = vsel %vm3460, %v3438, 1.0
    %v3469 = vsel %vm3461, %v3441, 1.0
    %v3470 = vsel %vm3462, %v3444, 1.0
    %v3471 = vsel %vm3463, %v3447, 1.0
    %v3472 = vsel %vm3464, %v3450, 1.0
    %v3473 = vsel %vm3465, %v3453, 1.0
    %v3474 = vsel %vm3466, %v3456, 1.0
    %v3475 = vsel %vm3467, %v3459, 1.0
    %v3476 = vrcp.pop %v3468
    %v3477 = vrcp.pop %v3469
    %v3478 = vrcp.pop %v3470
    %v3479 = vrcp.pop %v3471
    %v3480 = vrcp.pop %v3472
    %v3481 = vrcp.pop %v3473
    %v3482 = vrcp.pop %v3474
    %v3483 = vrcp.pop %v3475
    %v3484 = vmul.f32 %v3428, %v3476
    %v3485 = vmul.f32 %v3429, %v3477
    %v3486 = vmul.f32 %v3430, %v3478
    %v3487 = vmul.f32 %v3431, %v3479
    %v3488 = vmul.f32 %v3432, %v3480
    %v3489 = vmul.f32 %v3433, %v3481
    %v3490 = vmul.f32 %v3434, %v3482
    %v3491 = vmul.f32 %v3435, %v3483
    %3492 = vrot.lane.b32.xlu0 %v3165, 96
    %v3493 = vpop.permute.xlu0 %3492
    %3494 = vrot.lane.b32.xlu0 %v3170, 96
    %v3495 = vpop.permute.xlu0 %3494
    %3496 = vrot.lane.b32.xlu0 %v3175, 96
    %v3497 = vpop.permute.xlu0 %3496
    %3498 = vrot.lane.b32.xlu0 %v3180, 96
    %v3499 = vpop.permute.xlu0 %3498
    %3500 = vrot.lane.b32.xlu0 %v3185, 96
    %v3501 = vpop.permute.xlu0 %3500
    %3502 = vrot.lane.b32.xlu0 %v3190, 96
    %v3503 = vpop.permute.xlu0 %3502
    %3504 = vrot.lane.b32.xlu0 %v3195, 96
    %v3505 = vpop.permute.xlu0 %3504
    %3506 = vrot.lane.b32.xlu0 %v3200, 96
    %v3507 = vpop.permute.xlu0 %3506
    %3516 = vrot.lane.b32.xlu0 %v3165, 80
    %v3517 = vpop.permute.xlu0 %3516
    %3518 = vrot.lane.b32.xlu0 %v3170, 80
    %v3519 = vpop.permute.xlu0 %3518
    %3520 = vrot.lane.b32.xlu0 %v3175, 80
    %v3521 = vpop.permute.xlu0 %3520
    %3522 = vrot.lane.b32.xlu0 %v3180, 80
    %v3523 = vpop.permute.xlu0 %3522
    %3524 = vrot.lane.b32.xlu0 %v3185, 80
    %v3525 = vpop.permute.xlu0 %3524
    %3526 = vrot.lane.b32.xlu0 %v3190, 80
    %v3527 = vpop.permute.xlu0 %3526
    %3528 = vrot.lane.b32.xlu0 %v3195, 80
    %v3529 = vpop.permute.xlu0 %3528
    %3530 = vrot.lane.b32.xlu0 %v3200, 80
    %v3531 = vpop.permute.xlu0 %3530
    %v3541 = vsel %vm1519, %v3484, 0
    %v3544 = vsel %vm1519, %v3485, 0
    %v3547 = vsel %vm1519, %v3486, 0
    %v3550 = vsel %vm1519, %v3487, 0
    %v3553 = vsel %vm1519, %v3488, 0
    %v3556 = vsel %vm1519, %v3489, 0
    %v3559 = vsel %vm1519, %v3490, 0
    %v3562 = vsel %vm1519, %v3491, 0
    %3564 = vmatprep.subr.mxu0 0.0
    %3565 = vmatpush1.msra.mxu0 %v3493
    %3566 = vmatprep.subr.mxu0 0.0
    %3567 = vmatpush1.msra.mxu0 %v3495
    %3568 = vmatprep.subr.mxu0 0.0
    %3569 = vmatpush1.msra.mxu0 %v3497
    %3570 = vmatprep.subr.mxu0 0.0
    %3571 = vmatpush1.msra.mxu0 %v3499
    %3572 = vmatprep.subr.mxu0 0.0
    %3573 = vmatpush1.msra.mxu0 %v3501
    %3574 = vmatprep.subr.mxu0 0.0
    %3575 = vmatpush1.msra.mxu0 %v3503
    %3576 = vmatprep.subr.mxu0 0.0
    %3577 = vmatpush1.msra.mxu0 %v3505
    %3578 = vmatprep.subr.mxu0 0.0
    %3579 = vmatpush1.msra.mxu0 %v3507
    %3580 = vmatprep.subr.mxu0 0.0
    %3581 = vmatpush1.msra.mxu0 0.0
    %3582 = vmatprep.subr.mxu0 0.0
    %3583 = vmatpush1.msra.mxu0 0.0
    %3584 = vmatprep.subr.mxu0 0.0
    %3585 = vmatpush1.msra.mxu0 0.0
    %3586 = vmatprep.subr.mxu0 0.0
    %3587 = vmatpush1.msra.mxu0 0.0
    %3588 = vmatprep.subr.mxu0 0.0
    %3589 = vmatpush1.msra.mxu0 0.0
    %3590 = vmatprep.subr.mxu0 0.0
    %3591 = vmatpush1.msra.mxu0 0.0
    %3592 = vmatprep.subr.mxu0 0.0
    %3593 = vmatpush1.msra.mxu0 0.0
    %3594 = vmatprep.subr.mxu0 0.0
    %3595 = vmatpush1.msra.mxu0 0.0
    %3596 = vmatprep.subr.mxu0 0.0
    %3597 = vmatpush1.msra.mxu0 0.0
    %3598 = vmatprep.subr.mxu0 0.0
    %3599 = vmatpush1.msra.mxu0 0.0
    %3600 = vmatprep.subr.mxu0 0.0
    %3601 = vmatpush1.msra.mxu0 0.0
    %3602 = vmatprep.subr.mxu0 0.0
    %3603 = vmatpush1.msra.mxu0 0.0
    %3604 = vmatprep.subr.mxu0 0.0
    %3605 = vmatpush1.msra.mxu0 0.0
    %3606 = vmatprep.subr.mxu0 0.0
    %3607 = vmatpush1.msra.mxu0 0.0
    %3608 = vmatprep.subr.mxu0 0.0
    %3609 = vmatpush1.msra.mxu0 0.0
    %3610 = vmatprep.subr.mxu0 0.0
    %3611 = vmatpush1.msra.mxu0 0.0
    %3612 = vmatprep.subr.mxu0 0.0
    %3613 = vmatpush1.msra.mxu0 0.0
    %3614 = vmatprep.subr.mxu0 0.0
    %3615 = vmatpush1.msra.mxu0 0.0
    %3616 = vmatprep.subr.mxu0 0.0
    %3617 = vmatpush1.msra.mxu0 0.0
    %3618 = vmatprep.subr.mxu0 0.0
    %3619 = vmatpush1.msra.mxu0 0.0
    %3620 = vmatprep.subr.mxu0 0.0
    %3621 = vmatpush1.msra.mxu0 0.0
    %3622 = vmatprep.subr.mxu0 0.0
    %3623 = vmatpush1.msra.mxu0 0.0
    %3624 = vmatprep.subr.mxu0 0.0
    %3625 = vmatpush1.msra.mxu0 0.0
    %3626 = vmatprep.subr.mxu0 0.0
    %3627 = vmatpush1.msra.mxu0 0.0
    %3628 = vmatprep.mubr.f32.mxu0 0.0
    %3629 = vmatmul.mubr.f32.gmra.mrb[0].mxu0 %v3541
    %v3630 = vpop.f32.mrb[0].mxu0
    %v3631 = vadd.f32 %v3517, %v3630
    %v3632 = vpop.f32.mrb[0].mxu0
    %3633 = vmatprep.mubr.f32.mxu0 0.0
    %3634 = vmatmul.mubr.f32.gmra.mrb[0].mxu0 %v3544
    %v3635 = vpop.f32.mrb[0].mxu0
    %v3636 = vadd.f32 %v3519, %v3635
    %v3637 = vpop.f32.mrb[0].mxu0
    %3638 = vmatprep.mubr.f32.mxu0 0.0
    %3639 = vmatmul.mubr.f32.gmra.mrb[0].mxu0 %v3547
    %v3640 = vpop.f32.mrb[0].mxu0
    %v3641 = vadd.f32 %v3521, %v3640
    %v3642 = vpop.f32.mrb[0].mxu0
    %3643 = vmatprep.mubr.f32.mxu0 0.0
    %3644 = vmatmul.mubr.f32.gmra.mrb[0].mxu0 %v3550
    %v3645 = vpop.f32.mrb[0].mxu0
    %v3646 = vadd.f32 %v3523, %v3645
    %v3647 = vpop.f32.mrb[0].mxu0
    %3648 = vmatprep.mubr.f32.mxu0 0.0
    %3649 = vmatmul.mubr.f32.gmra.mrb[0].mxu0 %v3553
    %v3650 = vpop.f32.mrb[0].mxu0
    %v3651 = vadd.f32 %v3525, %v3650
    %v3652 = vpop.f32.mrb[0].mxu0
    %3653 = vmatprep.mubr.f32.mxu0 0.0
    %3654 = vmatmul.mubr.f32.gmra.mrb[0].mxu0 %v3556
    %v3655 = vpop.f32.mrb[0].mxu0
    %v3656 = vadd.f32 %v3527, %v3655
    %v3657 = vpop.f32.mrb[0].mxu0
    %3658 = vmatprep.mubr.f32.mxu0 0.0
    %3659 = vmatmul.mubr.f32.gmra.mrb[0].mxu0 %v3559
    %v3660 = vpop.f32.mrb[0].mxu0
    %v3661 = vadd.f32 %v3529, %v3660
    %v3662 = vpop.f32.mrb[0].mxu0
    %3663 = vmatprep.mubr.f32.mxu0 0.0
    %3664 = vmatmul.mubr.f32.gmra.mrb[0].mxu0 %v3562
    %v3665 = vpop.f32.mrb[0].mxu0
    %v3666 = vadd.f32 %v3531, %v3665
    %v3667 = vpop.f32.mrb[0].mxu0
    %3668 = vdwg.mxu0
    %v3669 = vmax.f32 %v3631, 0.0
    %v3670 = vmax.f32 %v3636, 0.0
    %v3671 = vmax.f32 %v3641, 0.0
    %v3672 = vmax.f32 %v3646, 0.0
    %v3673 = vmax.f32 %v3651, 0.0
    %v3674 = vmax.f32 %v3656, 0.0
    %v3675 = vmax.f32 %v3661, 0.0
    %v3676 = vmax.f32 %v3666, 0.0
    %v3677 = vadd.f32 %v3669, %v3057
    %v3678 = vadd.f32 %v3670, %v3058
    %v3679 = vadd.f32 %v3671, %v3059
    %v3680 = vadd.f32 %v3672, %v3060
    %v3681 = vadd.f32 %v3673, %v3061
    %v3682 = vadd.f32 %v3674, %v3062
    %v3683 = vadd.f32 %v3675, %v3063
    %v3684 = vadd.f32 %v3676, %v3064
    %v3685 = vld [vmem:[%s49] sm:$0xff]
    %v3686 = vld [vmem:[%s49 + $0x8] sm:$0xff]
    %v3687 = vld [vmem:[%s51] sm:$0xff]
    %v3688 = vld [vmem:[%s51 + $0x8] sm:$0xff]
    %v3689 = vld [vmem:[%s53] sm:$0x1]
    %v3690 = vld [vmem:[%s55] sm:$0x1]
    %v3691 = vld [vmem:[%s57] sm:$0x1]
    %v3693 = vsel %vm708, %v834, 0
    %v3696 = vsel %vm708, %v835, 0
    %v3699 = vsel %vm708, %v836, 0
    %v3702 = vsel %vm708, %v837, 0
    %v3705 = vsel %vm708, %v838, 0
    %v3708 = vsel %vm708, %v839, 0
    %v3711 = vsel %vm708, %v840, 0
    %v3714 = vsel %vm708, %v841, 0
    %3716 = vmatprep.subr.mxu0 0.0
    %3717 = vmatpush1.msra.mxu0 %v3687
    %3718 = vmatprep.subr.mxu0 0.0
    %3719 = vmatpush1.msra.mxu0 %v3688
    %3720 = vmatprep.subr.mxu0 0.0
    %3721 = vmatpush1.msra.mxu0 0.0
    %3722 = vmatprep.subr.mxu0 0.0
    %3723 = vmatpush1.msra.mxu0 0.0
    %3724 = vmatprep.subr.mxu0 0.0
    %3725 = vmatpush1.msra.mxu0 0.0
    %3726 = vmatprep.subr.mxu0 0.0
    %3727 = vmatpush1.msra.mxu0 0.0
    %3728 = vmatprep.subr.mxu0 0.0
    %3729 = vmatpush1.msra.mxu0 0.0
    %3730 = vmatprep.subr.mxu0 0.0
    %3731 = vmatpush1.msra.mxu0 0.0
    %3732 = vmatprep.subr.mxu0 0.0
    %3733 = vmatpush1.msra.mxu0 0.0
    %3734 = vmatprep.subr.mxu0 0.0
    %3735 = vmatpush1.msra.mxu0 0.0
    %3736 = vmatprep.subr.mxu0 0.0
    %3737 = vmatpush1.msra.mxu0 0.0
    %3738 = vmatprep.subr.mxu0 0.0
    %3739 = vmatpush1.msra.mxu0 0.0
    %3740 = vmatprep.subr.mxu0 0.0
    %3741 = vmatpush1.msra.mxu0 0.0
    %3742 = vmatprep.subr.mxu0 0.0
    %3743 = vmatpush1.msra.mxu0 0.0
    %3744 = vmatprep.subr.mxu0 0.0
    %3745 = vmatpush1.msra.mxu0 0.0
    %3746 = vmatprep.subr.mxu0 0.0
    %3747 = vmatpush1.msra.mxu0 0.0
    %3748 = vmatprep.subr.mxu0 0.0
    %3749 = vmatpush1.msra.mxu0 0.0
    %3750 = vmatprep.subr.mxu0 0.0
    %3751 = vmatpush1.msra.mxu0 0.0
    %3752 = vmatprep.subr.mxu0 0.0
    %3753 = vmatpush1.msra.mxu0 0.0
    %3754 = vmatprep.subr.mxu0 0.0
    %3755 = vmatpush1.msra.mxu0 0.0
    %3756 = vmatprep.subr.mxu0 0.0
    %3757 = vmatpush1.msra.mxu0 0.0
    %3758 = vmatprep.subr.mxu0 0.0
    %3759 = vmatpush1.msra.mxu0 0.0
    %3760 = vmatprep.subr.mxu0 0.0
    %3761 = vmatpush1.msra.mxu0 0.0
    %3762 = vmatprep.subr.mxu0 0.0
    %3763 = vmatpush1.msra.mxu0 0.0
    %3764 = vmatprep.subr.mxu0 0.0
    %3765 = vmatpush1.msra.mxu0 0.0
    %3766 = vmatprep.subr.mxu0 0.0
    %3767 = vmatpush1.msra.mxu0 0.0
    %3768 = vmatprep.subr.mxu0 0.0
    %3769 = vmatpush1.msra.mxu0 0.0
    %3770 = vmatprep.subr.mxu0 0.0
    %3771 = vmatpush1.msra.mxu0 0.0
    %3772 = vmatprep.subr.mxu0 0.0
    %3773 = vmatpush1.msra.mxu0 0.0
    %3774 = vmatprep.subr.mxu0 0.0
    %3775 = vmatpush1.msra.mxu0 0.0
    %3776 = vmatprep.subr.mxu0 0.0
    %3777 = vmatpush1.msra.mxu0 0.0
    %3778 = vmatprep.subr.mxu0 0.0
    %3779 = vmatpush1.msra.mxu0 0.0
    %3780 = vmatprep.mubr.f32.mxu0 0.0
    %3781 = vmatmul.mubr.f32.gmra.mrb[0].mxu0 %v3693
    %v3782 = vpop.f32.mrb[0].mxu0
    %v3783 = vadd.f32 0.0, %v3782
    %v3784 = vpop.f32.mrb[0].mxu0
    %3785 = vmatprep.mubr.f32.mxu0 0.0
    %3786 = vmatmul.mubr.f32.gmra.mrb[0].mxu0 %v3696
    %v3787 = vpop.f32.mrb[0].mxu0
    %v3788 = vadd.f32 0.0, %v3787
    %v3789 = vpop.f32.mrb[0].mxu0
    %3790 = vmatprep.mubr.f32.mxu0 0.0
    %3791 = vmatmul.mubr.f32.gmra.mrb[0].mxu0 %v3699
    %v3792 = vpop.f32.mrb[0].mxu0
    %v3793 = vadd.f32 0.0, %v3792
    %v3794 = vpop.f32.mrb[0].mxu0
    %3795 = vmatprep.mubr.f32.mxu0 0.0
    %3796 = vmatmul.mubr.f32.gmra.mrb[0].mxu0 %v3702
    %v3797 = vpop.f32.mrb[0].mxu0
    %v3798 = vadd.f32 0.0, %v3797
    %v3799 = vpop.f32.mrb[0].mxu0
    %3800 = vmatprep.mubr.f32.mxu0 0.0
    %3801 = vmatmul.mubr.f32.gmra.mrb[0].mxu0 %v3705
    %v3802 = vpop.f32.mrb[0].mxu0
    %v3803 = vadd.f32 0.0, %v3802
    %v3804 = vpop.f32.mrb[0].mxu0
    %3805 = vmatprep.mubr.f32.mxu0 0.0
    %3806 = vmatmul.mubr.f32.gmra.mrb[0].mxu0 %v3708
    %v3807 = vpop.f32.mrb[0].mxu0
    %v3808 = vadd.f32 0.0, %v3807
    %v3809 = vpop.f32.mrb[0].mxu0
    %3810 = vmatprep.mubr.f32.mxu0 0.0
    %3811 = vmatmul.mubr.f32.gmra.mrb[0].mxu0 %v3711
    %v3812 = vpop.f32.mrb[0].mxu0
    %v3813 = vadd.f32 0.0, %v3812
    %v3814 = vpop.f32.mrb[0].mxu0
    %3815 = vmatprep.mubr.f32.mxu0 0.0
    %3816 = vmatmul.mubr.f32.gmra.mrb[0].mxu0 %v3714
    %v3817 = vpop.f32.mrb[0].mxu0
    %v3818 = vadd.f32 0.0, %v3817
    %v3819 = vpop.f32.mrb[0].mxu0
    %3820 = vdwg.mxu0
    %v3822 = vsel %vm708, %v3677, 0
    %v3825 = vsel %vm708, %v3678, 0
    %v3828 = vsel %vm708, %v3679, 0
    %v3831 = vsel %vm708, %v3680, 0
    %v3834 = vsel %vm708, %v3681, 0
    %v3837 = vsel %vm708, %v3682, 0
    %v3840 = vsel %vm708, %v3683, 0
    %v3843 = vsel %vm708, %v3684, 0
    %3845 = vmatprep.subr.mxu0 0.0
    %3846 = vmatpush1.msra.mxu0 %v3685
    %3847 = vmatprep.subr.mxu0 0.0
    %3848 = vmatpush1.msra.mxu0 %v3686
    %3849 = vmatprep.subr.mxu0 0.0
    %3850 = vmatpush1.msra.mxu0 0.0
    %3851 = vmatprep.subr.mxu0 0.0
    %3852 = vmatpush1.msra.mxu0 0.0
    %3853 = vmatprep.subr.mxu0 0.0
    %3854 = vmatpush1.msra.mxu0 0.0
    %3855 = vmatprep.subr.mxu0 0.0
    %3856 = vmatpush1.msra.mxu0 0.0
    %3857 = vmatprep.subr.mxu0 0.0
    %3858 = vmatpush1.msra.mxu0 0.0
    %3859 = vmatprep.subr.mxu0 0.0
    %3860 = vmatpush1.msra.mxu0 0.0
    %3861 = vmatprep.subr.mxu0 0.0
    %3862 = vmatpush1.msra.mxu0 0.0
    %3863 = vmatprep.subr.mxu0 0.0
    %3864 = vmatpush1.msra.mxu0 0.0
    %3865 = vmatprep.subr.mxu0 0.0
    %3866 = vmatpush1.msra.mxu0 0.0
    %3867 = vmatprep.subr.mxu0 0.0
    %3868 = vmatpush1.msra.mxu0 0.0
    %3869 = vmatprep.subr.mxu0 0.0
    %3870 = vmatpush1.msra.mxu0 0.0
    %3871 = vmatprep.subr.mxu0 0.0
    %3872 = vmatpush1.msra.mxu0 0.0
    %3873 = vmatprep.subr.mxu0 0.0
    %3874 = vmatpush1.msra.mxu0 0.0
    %3875 = vmatprep.subr.mxu0 0.0
    %3876 = vmatpush1.msra.mxu0 0.0
    %3877 = vmatprep.subr.mxu0 0.0
    %3878 = vmatpush1.msra.mxu0 0.0
    %3879 = vmatprep.subr.mxu0 0.0
    %3880 = vmatpush1.msra.mxu0 0.0
    %3881 = vmatprep.subr.mxu0 0.0
    %3882 = vmatpush1.msra.mxu0 0.0
    %3883 = vmatprep.subr.mxu0 0.0
    %3884 = vmatpush1.msra.mxu0 0.0
    %3885 = vmatprep.subr.mxu0 0.0
    %3886 = vmatpush1.msra.mxu0 0.0
    %3887 = vmatprep.subr.mxu0 0.0
    %3888 = vmatpush1.msra.mxu0 0.0
    %3889 = vmatprep.subr.mxu0 0.0
    %3890 = vmatpush1.msra.mxu0 0.0
    %3891 = vmatprep.subr.mxu0 0.0
    %3892 = vmatpush1.msra.mxu0 0.0
    %3893 = vmatprep.subr.mxu0 0.0
    %3894 = vmatpush1.msra.mxu0 0.0
    %3895 = vmatprep.subr.mxu0 0.0
    %3896 = vmatpush1.msra.mxu0 0.0
    %3897 = vmatprep.subr.mxu0 0.0
    %3898 = vmatpush1.msra.mxu0 0.0
    %3899 = vmatprep.subr.mxu0 0.0
    %3900 = vmatpush1.msra.mxu0 0.0
    %3901 = vmatprep.subr.mxu0 0.0
    %3902 = vmatpush1.msra.mxu0 0.0
    %3903 = vmatprep.subr.mxu0 0.0
    %3904 = vmatpush1.msra.mxu0 0.0
    %3905 = vmatprep.subr.mxu0 0.0
    %3906 = vmatpush1.msra.mxu0 0.0
    %3907 = vmatprep.subr.mxu0 0.0
    %3908 = vmatpush1.msra.mxu0 0.0
    %3909 = vmatprep.mubr.f32.mxu0 0.0
    %3910 = vmatmul.mubr.f32.gmra.mrb[0].mxu0 %v3822
    %v3911 = vpop.f32.mrb[0].mxu0
    %v3912 = vadd.f32 %v3783, %v3911
    %v3913 = vpop.f32.mrb[0].mxu0
    %3914 = vmatprep.mubr.f32.mxu0 0.0
    %3915 = vmatmul.mubr.f32.gmra.mrb[0].mxu0 %v3825
    %v3916 = vpop.f32.mrb[0].mxu0
    %v3917 = vadd.f32 %v3788, %v3916
    %v3918 = vpop.f32.mrb[0].mxu0
    %3919 = vmatprep.mubr.f32.mxu0 0.0
    %3920 = vmatmul.mubr.f32.gmra.mrb[0].mxu0 %v3828
    %v3921 = vpop.f32.mrb[0].mxu0
    %v3922 = vadd.f32 %v3793, %v3921
    %v3923 = vpop.f32.mrb[0].mxu0
    %3924 = vmatprep.mubr.f32.mxu0 0.0
    %3925 = vmatmul.mubr.f32.gmra.mrb[0].mxu0 %v3831
    %v3926 = vpop.f32.mrb[0].mxu0
    %v3927 = vadd.f32 %v3798, %v3926
    %v3928 = vpop.f32.mrb[0].mxu0
    %3929 = vmatprep.mubr.f32.mxu0 0.0
    %3930 = vmatmul.mubr.f32.gmra.mrb[0].mxu0 %v3834
    %v3931 = vpop.f32.mrb[0].mxu0
    %v3932 = vadd.f32 %v3803, %v3931
    %v3933 = vpop.f32.mrb[0].mxu0
    %3934 = vmatprep.mubr.f32.mxu0 0.0
    %3935 = vmatmul.mubr.f32.gmra.mrb[0].mxu0 %v3837
    %v3936 = vpop.f32.mrb[0].mxu0
    %v3937 = vadd.f32 %v3808, %v3936
    %v3938 = vpop.f32.mrb[0].mxu0
    %3939 = vmatprep.mubr.f32.mxu0 0.0
    %3940 = vmatmul.mubr.f32.gmra.mrb[0].mxu0 %v3840
    %v3941 = vpop.f32.mrb[0].mxu0
    %v3942 = vadd.f32 %v3813, %v3941
    %v3943 = vpop.f32.mrb[0].mxu0
    %3944 = vmatprep.mubr.f32.mxu0 0.0
    %3945 = vmatmul.mubr.f32.gmra.mrb[0].mxu0 %v3843
    %v3946 = vpop.f32.mrb[0].mxu0
    %v3947 = vadd.f32 %v3818, %v3946
    %v3948 = vpop.f32.mrb[0].mxu0
    %3949 = vdwg.mxu0
    %v3951 = vlaneseq
    %v3952 = vshrl.u32 %v3951, 7
    %v3953 = vsub.s32 0, %v3952
    %v3954 = vrot.slane %v3689, %v3953
    %v3956 = vadd.f32 %v3912, %v3954
    %v3957 = vadd.f32 %v3917, %v3954
    %v3958 = vadd.f32 %v3922, %v3954
    %v3959 = vadd.f32 %v3927, %v3954
    %v3960 = vadd.f32 %v3932, %v3954
    %v3961 = vadd.f32 %v3937, %v3954
    %v3962 = vadd.f32 %v3942, %v3954
    %v3963 = vadd.f32 %v3947, %v3954
    %v3964 = vmax.f32 %v3956, 0.0
    %v3965 = vmax.f32 %v3957, 0.0
    %v3966 = vmax.f32 %v3958, 0.0
    %v3967 = vmax.f32 %v3959, 0.0
    %v3968 = vmax.f32 %v3960, 0.0
    %v3969 = vmax.f32 %v3961, 0.0
    %v3970 = vmax.f32 %v3962, 0.0
    %v3971 = vmax.f32 %v3963, 0.0
    %v3972 = vsel %vm708, %v3964, 0.0
    %3973 = vadd.xlane.f32.xlu0 %v3972
    %v3974 = vpop.xlane.xlu0 %3973
    %v3975 = vsel %vm708, %v3965, 0.0
    %3976 = vadd.xlane.f32.xlu0 %v3975
    %v3977 = vpop.xlane.xlu0 %3976
    %v3978 = vsel %vm708, %v3966, 0.0
    %3979 = vadd.xlane.f32.xlu0 %v3978
    %v3980 = vpop.xlane.xlu0 %3979
    %v3981 = vsel %vm708, %v3967, 0.0
    %3982 = vadd.xlane.f32.xlu0 %v3981
    %v3983 = vpop.xlane.xlu0 %3982
    %v3984 = vsel %vm708, %v3968, 0.0
    %3985 = vadd.xlane.f32.xlu0 %v3984
    %v3986 = vpop.xlane.xlu0 %3985
    %v3987 = vsel %vm708, %v3969, 0.0
    %3988 = vadd.xlane.f32.xlu0 %v3987
    %v3989 = vpop.xlane.xlu0 %3988
    %v3990 = vsel %vm708, %v3970, 0.0
    %3991 = vadd.xlane.f32.xlu0 %v3990
    %v3992 = vpop.xlane.xlu0 %3991
    %v3993 = vsel %vm708, %v3971, 0.0
    %3994 = vadd.xlane.f32.xlu0 %v3993
    %v3995 = vpop.xlane.xlu0 %3994
    %v3996 = vmul.f32 %v3974, %v733
    %v3997 = vmul.f32 %v3977, %v733
    %v3998 = vmul.f32 %v3980, %v733
    %v3999 = vmul.f32 %v3983, %v733
    %v4000 = vmul.f32 %v3986, %v733
    %v4001 = vmul.f32 %v3989, %v733
    %v4002 = vmul.f32 %v3992, %v733
    %v4003 = vmul.f32 %v3995, %v733
    %v4004 = vsub.f32 %v3964, %v3996
    %v4005 = vsub.f32 %v3965, %v3997
    %v4006 = vsub.f32 %v3966, %v3998
    %v4007 = vsub.f32 %v3967, %v3999
    %v4008 = vsub.f32 %v3968, %v4000
    %v4009 = vsub.f32 %v3969, %v4001
    %v4010 = vsub.f32 %v3970, %v4002
    %v4011 = vsub.f32 %v3971, %v4003
    %v4012 = vmul.f32 %v4004, %v4004
    %v4013 = vmul.f32 %v4005, %v4005
    %v4014 = vmul.f32 %v4006, %v4006
    %v4015 = vmul.f32 %v4007, %v4007
    %v4016 = vmul.f32 %v4008, %v4008
    %v4017 = vmul.f32 %v4009, %v4009
    %v4018 = vmul.f32 %v4010, %v4010
    %v4019 = vmul.f32 %v4011, %v4011
    %v4020 = vsel %vm708, %v4012, 0.0
    %4021 = vadd.xlane.f32.xlu0 %v4020
    %v4022 = vpop.xlane.xlu0 %4021
    %v4023 = vsel %vm708, %v4013, 0.0
    %4024 = vadd.xlane.f32.xlu0 %v4023
    %v4025 = vpop.xlane.xlu0 %4024
    %v4026 = vsel %vm708, %v4014, 0.0
    %4027 = vadd.xlane.f32.xlu0 %v4026
    %v4028 = vpop.xlane.xlu0 %4027
    %v4029 = vsel %vm708, %v4015, 0.0
    %4030 = vadd.xlane.f32.xlu0 %v4029
    %v4031 = vpop.xlane.xlu0 %4030
    %v4032 = vsel %vm708, %v4016, 0.0
    %4033 = vadd.xlane.f32.xlu0 %v4032
    %v4034 = vpop.xlane.xlu0 %4033
    %v4035 = vsel %vm708, %v4017, 0.0
    %4036 = vadd.xlane.f32.xlu0 %v4035
    %v4037 = vpop.xlane.xlu0 %4036
    %v4038 = vsel %vm708, %v4018, 0.0
    %4039 = vadd.xlane.f32.xlu0 %v4038
    %v4040 = vpop.xlane.xlu0 %4039
    %v4041 = vsel %vm708, %v4019, 0.0
    %4042 = vadd.xlane.f32.xlu0 %v4041
    %v4043 = vpop.xlane.xlu0 %4042
    %v4044 = vmul.f32 %v4022, %v733
    %v4045 = vmul.f32 %v4025, %v733
    %v4046 = vmul.f32 %v4028, %v733
    %v4047 = vmul.f32 %v4031, %v733
    %v4048 = vmul.f32 %v4034, %v733
    %v4049 = vmul.f32 %v4037, %v733
    %v4050 = vmul.f32 %v4040, %v733
    %v4051 = vmul.f32 %v4043, %v733
    %v4052 = vadd.f32 %v4044, 1e-05
    %v4053 = vadd.f32 %v4045, 1e-05
    %v4054 = vadd.f32 %v4046, 1e-05
    %v4055 = vadd.f32 %v4047, 1e-05
    %v4056 = vadd.f32 %v4048, 1e-05
    %v4057 = vadd.f32 %v4049, 1e-05
    %v4058 = vadd.f32 %v4050, 1e-05
    %v4059 = vadd.f32 %v4051, 1e-05
    %v4060 = vrsqrt.pop %v4052
    %v4061 = vrsqrt.pop %v4053
    %v4062 = vrsqrt.pop %v4054
    %v4063 = vrsqrt.pop %v4055
    %v4064 = vrsqrt.pop %v4056
    %v4065 = vrsqrt.pop %v4057
    %v4066 = vrsqrt.pop %v4058
    %v4067 = vrsqrt.pop %v4059
    %v4068 = vmul.f32 %v4004, %v4060
    %v4069 = vmul.f32 %v4005, %v4061
    %v4070 = vmul.f32 %v4006, %v4062
    %v4071 = vmul.f32 %v4007, %v4063
    %v4072 = vmul.f32 %v4008, %v4064
    %v4073 = vmul.f32 %v4009, %v4065
    %v4074 = vmul.f32 %v4010, %v4066
    %v4075 = vmul.f32 %v4011, %v4067
    %v4077 = vlaneseq
    %v4078 = vshrl.u32 %v4077, 7
    %v4079 = vsub.s32 0, %v4078
    %v4080 = vrot.slane %v3690, %v4079
    %v4082 = vmul.f32 %v4068, %v4080
    %v4083 = vmul.f32 %v4069, %v4080
    %v4084 = vmul.f32 %v4070, %v4080
    %v4085 = vmul.f32 %v4071, %v4080
    %v4086 = vmul.f32 %v4072, %v4080
    %v4087 = vmul.f32 %v4073, %v4080
    %v4088 = vmul.f32 %v4074, %v4080
    %v4089 = vmul.f32 %v4075, %v4080
    %v4091 = vlaneseq
    %v4092 = vshrl.u32 %v4091, 7
    %v4093 = vsub.s32 0, %v4092
    %v4094 = vrot.slane %v3691, %v4093
    %v4096 = vadd.f32 %v4082, %v4094
    %v4097 = vadd.f32 %v4083, %v4094
    %v4098 = vadd.f32 %v4084, %v4094
    %v4099 = vadd.f32 %v4085, %v4094
    %v4100 = vadd.f32 %v4086, %v4094
    %v4101 = vadd.f32 %v4087, %v4094
    %v4102 = vadd.f32 %v4088, %v4094
    %v4103 = vadd.f32 %v4089, %v4094
    %v4104 = vld [vmem:[%s59] sm:$0xff]
    %v4105 = vld [vmem:[%s59 + $0x8] sm:$0xff]
    %v4106 = vld [vmem:[%s61] sm:$0x1]
    %v4108 = vlaneseq
    %v4109 = vshrl.u32 %v4108, 7
    %v4110 = vsub.s32 0, %v4109
    %v4111 = vrot.slane %v4106, %v4110
    %v4114 = vsel %vm708, %v4096, 0
    %v4117 = vsel %vm708, %v4097, 0
    %v4120 = vsel %vm708, %v4098, 0
    %v4123 = vsel %vm708, %v4099, 0
    %v4126 = vsel %vm708, %v4100, 0
    %v4129 = vsel %vm708, %v4101, 0
    %v4132 = vsel %vm708, %v4102, 0
    %v4135 = vsel %vm708, %v4103, 0
    %4137 = vmatprep.subr.mxu0 0.0
    %4138 = vmatpush1.msra.mxu0 %v4104
    %4139 = vmatprep.subr.mxu0 0.0
    %4140 = vmatpush1.msra.mxu0 %v4105
    %4141 = vmatprep.subr.mxu0 0.0
    %4142 = vmatpush1.msra.mxu0 0.0
    %4143 = vmatprep.subr.mxu0 0.0
    %4144 = vmatpush1.msra.mxu0 0.0
    %4145 = vmatprep.subr.mxu0 0.0
    %4146 = vmatpush1.msra.mxu0 0.0
    %4147 = vmatprep.subr.mxu0 0.0
    %4148 = vmatpush1.msra.mxu0 0.0
    %4149 = vmatprep.subr.mxu0 0.0
    %4150 = vmatpush1.msra.mxu0 0.0
    %4151 = vmatprep.subr.mxu0 0.0
    %4152 = vmatpush1.msra.mxu0 0.0
    %4153 = vmatprep.subr.mxu0 0.0
    %4154 = vmatpush1.msra.mxu0 0.0
    %4155 = vmatprep.subr.mxu0 0.0
    %4156 = vmatpush1.msra.mxu0 0.0
    %4157 = vmatprep.subr.mxu0 0.0
    %4158 = vmatpush1.msra.mxu0 0.0
    %4159 = vmatprep.subr.mxu0 0.0
    %4160 = vmatpush1.msra.mxu0 0.0
    %4161 = vmatprep.subr.mxu0 0.0
    %4162 = vmatpush1.msra.mxu0 0.0
    %4163 = vmatprep.subr.mxu0 0.0
    %4164 = vmatpush1.msra.mxu0 0.0
    %4165 = vmatprep.subr.mxu0 0.0
    %4166 = vmatpush1.msra.mxu0 0.0
    %4167 = vmatprep.subr.mxu0 0.0
    %4168 = vmatpush1.msra.mxu0 0.0
    %4169 = vmatprep.subr.mxu0 0.0
    %4170 = vmatpush1.msra.mxu0 0.0
    %4171 = vmatprep.subr.mxu0 0.0
    %4172 = vmatpush1.msra.mxu0 0.0
    %4173 = vmatprep.subr.mxu0 0.0
    %4174 = vmatpush1.msra.mxu0 0.0
    %4175 = vmatprep.subr.mxu0 0.0
    %4176 = vmatpush1.msra.mxu0 0.0
    %4177 = vmatprep.subr.mxu0 0.0
    %4178 = vmatpush1.msra.mxu0 0.0
    %4179 = vmatprep.subr.mxu0 0.0
    %4180 = vmatpush1.msra.mxu0 0.0
    %4181 = vmatprep.subr.mxu0 0.0
    %4182 = vmatpush1.msra.mxu0 0.0
    %4183 = vmatprep.subr.mxu0 0.0
    %4184 = vmatpush1.msra.mxu0 0.0
    %4185 = vmatprep.subr.mxu0 0.0
    %4186 = vmatpush1.msra.mxu0 0.0
    %4187 = vmatprep.subr.mxu0 0.0
    %4188 = vmatpush1.msra.mxu0 0.0
    %4189 = vmatprep.subr.mxu0 0.0
    %4190 = vmatpush1.msra.mxu0 0.0
    %4191 = vmatprep.subr.mxu0 0.0
    %4192 = vmatpush1.msra.mxu0 0.0
    %4193 = vmatprep.subr.mxu0 0.0
    %4194 = vmatpush1.msra.mxu0 0.0
    %4195 = vmatprep.subr.mxu0 0.0
    %4196 = vmatpush1.msra.mxu0 0.0
    %4197 = vmatprep.subr.mxu0 0.0
    %4198 = vmatpush1.msra.mxu0 0.0
    %4199 = vmatprep.subr.mxu0 0.0
    %4200 = vmatpush1.msra.mxu0 0.0
    %4201 = vmatprep.mubr.f32.mxu0 0.0
    %4202 = vmatmul.mubr.f32.gmra.mrb[0].mxu0 %v4114
    %v4203 = vpop.f32.mrb[0].mxu0
    %v4204 = vadd.f32 %v4111, %v4203
    %v4205 = vpop.f32.mrb[0].mxu0
    %4206 = vmatprep.mubr.f32.mxu0 0.0
    %4207 = vmatmul.mubr.f32.gmra.mrb[0].mxu0 %v4117
    %v4208 = vpop.f32.mrb[0].mxu0
    %v4209 = vadd.f32 %v4111, %v4208
    %v4210 = vpop.f32.mrb[0].mxu0
    %4211 = vmatprep.mubr.f32.mxu0 0.0
    %4212 = vmatmul.mubr.f32.gmra.mrb[0].mxu0 %v4120
    %v4213 = vpop.f32.mrb[0].mxu0
    %v4214 = vadd.f32 %v4111, %v4213
    %v4215 = vpop.f32.mrb[0].mxu0
    %4216 = vmatprep.mubr.f32.mxu0 0.0
    %4217 = vmatmul.mubr.f32.gmra.mrb[0].mxu0 %v4123
    %v4218 = vpop.f32.mrb[0].mxu0
    %v4219 = vadd.f32 %v4111, %v4218
    %v4220 = vpop.f32.mrb[0].mxu0
    %4221 = vmatprep.mubr.f32.mxu0 0.0
    %4222 = vmatmul.mubr.f32.gmra.mrb[0].mxu0 %v4126
    %v4223 = vpop.f32.mrb[0].mxu0
    %v4224 = vadd.f32 %v4111, %v4223
    %v4225 = vpop.f32.mrb[0].mxu0
    %4226 = vmatprep.mubr.f32.mxu0 0.0
    %4227 = vmatmul.mubr.f32.gmra.mrb[0].mxu0 %v4129
    %v4228 = vpop.f32.mrb[0].mxu0
    %v4229 = vadd.f32 %v4111, %v4228
    %v4230 = vpop.f32.mrb[0].mxu0
    %4231 = vmatprep.mubr.f32.mxu0 0.0
    %4232 = vmatmul.mubr.f32.gmra.mrb[0].mxu0 %v4132
    %v4233 = vpop.f32.mrb[0].mxu0
    %v4234 = vadd.f32 %v4111, %v4233
    %v4235 = vpop.f32.mrb[0].mxu0
    %4236 = vmatprep.mubr.f32.mxu0 0.0
    %4237 = vmatmul.mubr.f32.gmra.mrb[0].mxu0 %v4135
    %v4238 = vpop.f32.mrb[0].mxu0
    %v4239 = vadd.f32 %v4111, %v4238
    %v4240 = vpop.f32.mrb[0].mxu0
    %4241 = vdwg.mxu0
    %v4242 = vld [vmem:[%s63] sm:$0xff]
    %v4243 = vld [vmem:[%s63 + $0x8] sm:$0xff]
    %v4244 = vld [vmem:[%s63 + $0x10] sm:$0xff]
    %v4245 = vld [vmem:[%s63 + $0x18] sm:$0xff]
    %v4246 = vld [vmem:[%s65] sm:$0x1]
    %v4247 = vld [vmem:[%s67] sm:$0xff]
    %v4248 = vld [vmem:[%s67 + $0x8] sm:$0xff]
    %v4249 = vld [vmem:[%s67 + $0x10] sm:$0xff]
    %v4250 = vld [vmem:[%s67 + $0x18] sm:$0xff]
    %v4251 = vld [vmem:[%s69] sm:$0x1]
    %v4253 = vlaneseq
    %v4254 = vshrl.u32 %v4253, 7
    %v4255 = vsub.s32 0, %v4254
    %v4256 = vrot.slane %v4246, %v4255
    %4258 = vmatprep.subr.mxu0 0.0
    %4259 = vmatpush1.msra.mxu0 %v4242
    %4260 = vmatprep.subr.mxu0 0.0
    %4261 = vmatpush1.msra.mxu0 %v4243
    %4262 = vmatprep.subr.mxu0 0.0
    %4263 = vmatpush1.msra.mxu0 %v4244
    %4264 = vmatprep.subr.mxu0 0.0
    %4265 = vmatpush1.msra.mxu0 %v4245
    %4266 = vmatprep.subr.mxu0 0.0
    %4267 = vmatpush1.msra.mxu0 0.0
    %4268 = vmatprep.subr.mxu0 0.0
    %4269 = vmatpush1.msra.mxu0 0.0
    %4270 = vmatprep.subr.mxu0 0.0
    %4271 = vmatpush1.msra.mxu0 0.0
    %4272 = vmatprep.subr.mxu0 0.0
    %4273 = vmatpush1.msra.mxu0 0.0
    %4274 = vmatprep.subr.mxu0 0.0
    %4275 = vmatpush1.msra.mxu0 0.0
    %4276 = vmatprep.subr.mxu0 0.0
    %4277 = vmatpush1.msra.mxu0 0.0
    %4278 = vmatprep.subr.mxu0 0.0
    %4279 = vmatpush1.msra.mxu0 0.0
    %4280 = vmatprep.subr.mxu0 0.0
    %4281 = vmatpush1.msra.mxu0 0.0
    %4282 = vmatprep.subr.mxu0 0.0
    %4283 = vmatpush1.msra.mxu0 0.0
    %4284 = vmatprep.subr.mxu0 0.0
    %4285 = vmatpush1.msra.mxu0 0.0
    %4286 = vmatprep.subr.mxu0 0.0
    %4287 = vmatpush1.msra.mxu0 0.0
    %4288 = vmatprep.subr.mxu0 0.0
    %4289 = vmatpush1.msra.mxu0 0.0
    %4290 = vmatprep.subr.mxu0 0.0
    %4291 = vmatpush1.msra.mxu0 0.0
    %4292 = vmatprep.subr.mxu0 0.0
    %4293 = vmatpush1.msra.mxu0 0.0
    %4294 = vmatprep.subr.mxu0 0.0
    %4295 = vmatpush1.msra.mxu0 0.0
    %4296 = vmatprep.subr.mxu0 0.0
    %4297 = vmatpush1.msra.mxu0 0.0
    %4298 = vmatprep.subr.mxu0 0.0
    %4299 = vmatpush1.msra.mxu0 0.0
    %4300 = vmatprep.subr.mxu0 0.0
    %4301 = vmatpush1.msra.mxu0 0.0
    %4302 = vmatprep.subr.mxu0 0.0
    %4303 = vmatpush1.msra.mxu0 0.0
    %4304 = vmatprep.subr.mxu0 0.0
    %4305 = vmatpush1.msra.mxu0 0.0
    %4306 = vmatprep.subr.mxu0 0.0
    %4307 = vmatpush1.msra.mxu0 0.0
    %4308 = vmatprep.subr.mxu0 0.0
    %4309 = vmatpush1.msra.mxu0 0.0
    %4310 = vmatprep.subr.mxu0 0.0
    %4311 = vmatpush1.msra.mxu0 0.0
    %4312 = vmatprep.subr.mxu0 0.0
    %4313 = vmatpush1.msra.mxu0 0.0
    %4314 = vmatprep.subr.mxu0 0.0
    %4315 = vmatpush1.msra.mxu0 0.0
    %4316 = vmatprep.subr.mxu0 0.0
    %4317 = vmatpush1.msra.mxu0 0.0
    %4318 = vmatprep.subr.mxu0 0.0
    %4319 = vmatpush1.msra.mxu0 0.0
    %4320 = vmatprep.subr.mxu0 0.0
    %4321 = vmatpush1.msra.mxu0 0.0
    %4322 = vmatprep.mubr.f32.mxu0 0.0
    %4323 = vmatmul.mubr.f32.gmra.mrb[0].mxu0 %v572
    %v4324 = vpop.f32.mrb[0].mxu0
    %v4325 = vadd.f32 %v4256, %v4324
    %v4326 = vpop.f32.mrb[0].mxu0
    %4327 = vmatprep.mubr.f32.mxu0 0.0
    %4328 = vmatmul.mubr.f32.gmra.mrb[0].mxu0 %v575
    %v4329 = vpop.f32.mrb[0].mxu0
    %v4330 = vadd.f32 %v4256, %v4329
    %v4331 = vpop.f32.mrb[0].mxu0
    %4332 = vmatprep.mubr.f32.mxu0 0.0
    %4333 = vmatmul.mubr.f32.gmra.mrb[0].mxu0 %v578
    %v4334 = vpop.f32.mrb[0].mxu0
    %v4335 = vadd.f32 %v4256, %v4334
    %v4336 = vpop.f32.mrb[0].mxu0
    %4337 = vmatprep.mubr.f32.mxu0 0.0
    %4338 = vmatmul.mubr.f32.gmra.mrb[0].mxu0 %v581
    %v4339 = vpop.f32.mrb[0].mxu0
    %v4340 = vadd.f32 %v4256, %v4339
    %v4341 = vpop.f32.mrb[0].mxu0
    %4342 = vmatprep.mubr.f32.mxu0 0.0
    %4343 = vmatmul.mubr.f32.gmra.mrb[0].mxu0 %v584
    %v4344 = vpop.f32.mrb[0].mxu0
    %v4345 = vadd.f32 %v4256, %v4344
    %v4346 = vpop.f32.mrb[0].mxu0
    %4347 = vmatprep.mubr.f32.mxu0 0.0
    %4348 = vmatmul.mubr.f32.gmra.mrb[0].mxu0 %v587
    %v4349 = vpop.f32.mrb[0].mxu0
    %v4350 = vadd.f32 %v4256, %v4349
    %v4351 = vpop.f32.mrb[0].mxu0
    %4352 = vmatprep.mubr.f32.mxu0 0.0
    %4353 = vmatmul.mubr.f32.gmra.mrb[0].mxu0 %v590
    %v4354 = vpop.f32.mrb[0].mxu0
    %v4355 = vadd.f32 %v4256, %v4354
    %v4356 = vpop.f32.mrb[0].mxu0
    %4357 = vmatprep.mubr.f32.mxu0 0.0
    %4358 = vmatmul.mubr.f32.gmra.mrb[0].mxu0 %v593
    %v4359 = vpop.f32.mrb[0].mxu0
    %v4360 = vadd.f32 %v4256, %v4359
    %v4361 = vpop.f32.mrb[0].mxu0
    %4362 = vdwg.mxu0
    %4371 = vrot.lane.b32.xlu0 %v4325, 96
    %v4372 = vpop.permute.xlu0 %4371
    %4373 = vrot.lane.b32.xlu0 %v4330, 96
    %v4374 = vpop.permute.xlu0 %4373
    %4375 = vrot.lane.b32.xlu0 %v4335, 96
    %v4376 = vpop.permute.xlu0 %4375
    %4377 = vrot.lane.b32.xlu0 %v4340, 96
    %v4378 = vpop.permute.xlu0 %4377
    %4379 = vrot.lane.b32.xlu0 %v4345, 96
    %v4380 = vpop.permute.xlu0 %4379
    %4381 = vrot.lane.b32.xlu0 %v4350, 96
    %v4382 = vpop.permute.xlu0 %4381
    %4383 = vrot.lane.b32.xlu0 %v4355, 96
    %v4384 = vpop.permute.xlu0 %4383
    %4385 = vrot.lane.b32.xlu0 %v4360, 96
    %v4386 = vpop.permute.xlu0 %4385
    %v4387 = vsel %vm424, %v4325, 0
    %v4389 = vsel %vm424, %v4330, 0
    %v4391 = vsel %vm424, %v4335, 0
    %v4393 = vsel %vm424, %v4340, 0
    %v4395 = vsel %vm424, %v4345, 0
    %v4397 = vsel %vm424, %v4350, 0
    %v4399 = vsel %vm424, %v4355, 0
    %v4401 = vsel %vm424, %v4360, 0
    %v4403 = vsel %vm424, %v4372, 0
    %v4405 = vsel %vm424, %v4374, 0
    %v4407 = vsel %vm424, %v4376, 0
    %v4409 = vsel %vm424, %v4378, 0
    %v4411 = vsel %vm424, %v4380, 0
    %v4413 = vsel %vm424, %v4382, 0
    %v4415 = vsel %vm424, %v4384, 0
    %v4417 = vsel %vm424, %v4386, 0
    %4419 = vmatprep.subr.mxu0 0.0
    %4420 = vmatpush1.xpose.msra.mxu0 %v4403
    %4421 = vmatprep.subr.mxu0 0.0
    %4422 = vmatpush1.xpose.msra.mxu0 %v4405
    %4423 = vmatprep.subr.mxu0 0.0
    %4424 = vmatpush1.xpose.msra.mxu0 %v4407
    %4425 = vmatprep.subr.mxu0 0.0
    %4426 = vmatpush1.xpose.msra.mxu0 %v4409
    %4427 = vmatprep.subr.mxu0 0.0
    %4428 = vmatpush1.xpose.msra.mxu0 %v4411
    %4429 = vmatprep.subr.mxu0 0.0
    %4430 = vmatpush1.xpose.msra.mxu0 %v4413
    %4431 = vmatprep.subr.mxu0 0.0
    %4432 = vmatpush1.xpose.msra.mxu0 %v4415
    %4433 = vmatprep.subr.mxu0 0.0
    %4434 = vmatpush1.xpose.msra.mxu0 %v4417
    %4435 = vmatprep.subr.mxu0 0.0
    %4436 = vmatpush1.xpose.msra.mxu0 0.0
    %4437 = vmatprep.subr.mxu0 0.0
    %4438 = vmatpush1.xpose.msra.mxu0 0.0
    %4439 = vmatprep.subr.mxu0 0.0
    %4440 = vmatpush1.xpose.msra.mxu0 0.0
    %4441 = vmatprep.subr.mxu0 0.0
    %4442 = vmatpush1.xpose.msra.mxu0 0.0
    %4443 = vmatprep.subr.mxu0 0.0
    %4444 = vmatpush1.xpose.msra.mxu0 0.0
    %4445 = vmatprep.subr.mxu0 0.0
    %4446 = vmatpush1.xpose.msra.mxu0 0.0
    %4447 = vmatprep.subr.mxu0 0.0
    %4448 = vmatpush1.xpose.msra.mxu0 0.0
    %4449 = vmatprep.subr.mxu0 0.0
    %4450 = vmatpush1.xpose.msra.mxu0 0.0
    %4451 = vmatprep.subr.mxu0 0.0
    %4452 = vmatpush1.xpose.msra.mxu0 0.0
    %4453 = vmatprep.subr.mxu0 0.0
    %4454 = vmatpush1.xpose.msra.mxu0 0.0
    %4455 = vmatprep.subr.mxu0 0.0
    %4456 = vmatpush1.xpose.msra.mxu0 0.0
    %4457 = vmatprep.subr.mxu0 0.0
    %4458 = vmatpush1.xpose.msra.mxu0 0.0
    %4459 = vmatprep.subr.mxu0 0.0
    %4460 = vmatpush1.xpose.msra.mxu0 0.0
    %4461 = vmatprep.subr.mxu0 0.0
    %4462 = vmatpush1.xpose.msra.mxu0 0.0
    %4463 = vmatprep.subr.mxu0 0.0
    %4464 = vmatpush1.xpose.msra.mxu0 0.0
    %4465 = vmatprep.subr.mxu0 0.0
    %4466 = vmatpush1.xpose.msra.mxu0 0.0
    %4467 = vmatprep.subr.mxu0 0.0
    %4468 = vmatpush1.xpose.msra.mxu0 0.0
    %4469 = vmatprep.subr.mxu0 0.0
    %4470 = vmatpush1.xpose.msra.mxu0 0.0
    %4471 = vmatprep.subr.mxu0 0.0
    %4472 = vmatpush1.xpose.msra.mxu0 0.0
    %4473 = vmatprep.subr.mxu0 0.0
    %4474 = vmatpush1.xpose.msra.mxu0 0.0
    %4475 = vmatprep.subr.mxu0 0.0
    %4476 = vmatpush1.xpose.msra.mxu0 0.0
    %4477 = vmatprep.subr.mxu0 0.0
    %4478 = vmatpush1.xpose.msra.mxu0 0.0
    %4479 = vmatprep.subr.mxu0 0.0
    %4480 = vmatpush1.xpose.msra.mxu0 0.0
    %4481 = vmatprep.subr.mxu0 0.0
    %4482 = vmatpush1.xpose.msra.mxu0 0.0
    %4483 = vmatprep.mubr.f32.mxu0 0.0
    %4484 = vmatmul.mubr.f32.gmra.mrb[0].mxu0 %v4387
    %v4485 = vpop.f32.mrb[0].mxu0
    %v4486 = vadd.f32 0.0, %v4485
    %v4487 = vpop.f32.mrb[0].mxu0
    %4488 = vmatprep.mubr.f32.mxu0 0.0
    %4489 = vmatmul.mubr.f32.gmra.mrb[0].mxu0 %v4389
    %v4490 = vpop.f32.mrb[0].mxu0
    %v4491 = vadd.f32 0.0, %v4490
    %v4492 = vpop.f32.mrb[0].mxu0
    %4493 = vmatprep.mubr.f32.mxu0 0.0
    %4494 = vmatmul.mubr.f32.gmra.mrb[0].mxu0 %v4391
    %v4495 = vpop.f32.mrb[0].mxu0
    %v4496 = vadd.f32 0.0, %v4495
    %v4497 = vpop.f32.mrb[0].mxu0
    %4498 = vmatprep.mubr.f32.mxu0 0.0
    %4499 = vmatmul.mubr.f32.gmra.mrb[0].mxu0 %v4393
    %v4500 = vpop.f32.mrb[0].mxu0
    %v4501 = vadd.f32 0.0, %v4500
    %v4502 = vpop.f32.mrb[0].mxu0
    %4503 = vmatprep.mubr.f32.mxu0 0.0
    %4504 = vmatmul.mubr.f32.gmra.mrb[0].mxu0 %v4395
    %v4505 = vpop.f32.mrb[0].mxu0
    %v4506 = vadd.f32 0.0, %v4505
    %v4507 = vpop.f32.mrb[0].mxu0
    %4508 = vmatprep.mubr.f32.mxu0 0.0
    %4509 = vmatmul.mubr.f32.gmra.mrb[0].mxu0 %v4397
    %v4510 = vpop.f32.mrb[0].mxu0
    %v4511 = vadd.f32 0.0, %v4510
    %v4512 = vpop.f32.mrb[0].mxu0
    %4513 = vmatprep.mubr.f32.mxu0 0.0
    %4514 = vmatmul.mubr.f32.gmra.mrb[0].mxu0 %v4399
    %v4515 = vpop.f32.mrb[0].mxu0
    %v4516 = vadd.f32 0.0, %v4515
    %v4517 = vpop.f32.mrb[0].mxu0
    %4518 = vmatprep.mubr.f32.mxu0 0.0
    %4519 = vmatmul.mubr.f32.gmra.mrb[0].mxu0 %v4401
    %v4520 = vpop.f32.mrb[0].mxu0
    %v4521 = vadd.f32 0.0, %v4520
    %v4522 = vpop.f32.mrb[0].mxu0
    %4523 = vdwg.mxu0
    %v4524 = vmul.f32 %v4486, 0.17677669
    %v4525 = vmul.f32 %v4491, 0.17677669
    %v4526 = vmul.f32 %v4496, 0.17677669
    %v4527 = vmul.f32 %v4501, 0.17677669
    %v4528 = vmul.f32 %v4506, 0.17677669
    %v4529 = vmul.f32 %v4511, 0.17677669
    %v4530 = vmul.f32 %v4516, 0.17677669
    %v4531 = vmul.f32 %v4521, 0.17677669
    %vm4532 = vcmp.gt.f32.partialorder %v264, 0.0
    %vm4533 = vcmp.gt.f32.partialorder %v265, 0.0
    %vm4534 = vcmp.gt.f32.partialorder %v266, 0.0
    %vm4535 = vcmp.gt.f32.partialorder %v267, 0.0
    %vm4536 = vcmp.gt.f32.partialorder %v268, 0.0
    %vm4537 = vcmp.gt.f32.partialorder %v269, 0.0
    %vm4538 = vcmp.gt.f32.partialorder %v270, 0.0
    %vm4539 = vcmp.gt.f32.partialorder %v271, 0.0
    %v4540 = vsel %vm4532, %v4524, -1e+30
    %v4541 = vsel %vm4533, %v4525, -1e+30
    %v4542 = vsel %vm4534, %v4526, -1e+30
    %v4543 = vsel %vm4535, %v4527, -1e+30
    %v4544 = vsel %vm4536, %v4528, -1e+30
    %v4545 = vsel %vm4537, %v4529, -1e+30
    %v4546 = vsel %vm4538, %v4530, -1e+30
    %v4547 = vsel %vm4539, %v4531, -1e+30
    %v4548 = vsel %vm1519, %v4540, -inf
    %4549 = vmax.xlane.f32.xlu0 %v4548
    %v4550 = vpop.xlane.xlu0 %4549
    %v4551 = vsel %vm1519, %v4541, -inf
    %4552 = vmax.xlane.f32.xlu0 %v4551
    %v4553 = vpop.xlane.xlu0 %4552
    %v4554 = vsel %vm1519, %v4542, -inf
    %4555 = vmax.xlane.f32.xlu0 %v4554
    %v4556 = vpop.xlane.xlu0 %4555
    %v4557 = vsel %vm1519, %v4543, -inf
    %4558 = vmax.xlane.f32.xlu0 %v4557
    %v4559 = vpop.xlane.xlu0 %4558
    %v4560 = vsel %vm1519, %v4544, -inf
    %4561 = vmax.xlane.f32.xlu0 %v4560
    %v4562 = vpop.xlane.xlu0 %4561
    %v4563 = vsel %vm1519, %v4545, -inf
    %4564 = vmax.xlane.f32.xlu0 %v4563
    %v4565 = vpop.xlane.xlu0 %4564
    %v4566 = vsel %vm1519, %v4546, -inf
    %4567 = vmax.xlane.f32.xlu0 %v4566
    %v4568 = vpop.xlane.xlu0 %4567
    %v4569 = vsel %vm1519, %v4547, -inf
    %4570 = vmax.xlane.f32.xlu0 %v4569
    %v4571 = vpop.xlane.xlu0 %4570
    %v4572 = vsub.f32 %v4540, %v4550
    %v4573 = vsub.f32 %v4541, %v4553
    %v4574 = vsub.f32 %v4542, %v4556
    %v4575 = vsub.f32 %v4543, %v4559
    %v4576 = vsub.f32 %v4544, %v4562
    %v4577 = vsub.f32 %v4545, %v4565
    %v4578 = vsub.f32 %v4546, %v4568
    %v4579 = vsub.f32 %v4547, %v4571
    %v4580 = vmul.f32 %v4572, 1.442695
    %v4581 = vpow.pop %v4580
    %v4582 = vmul.f32 %v4573, 1.442695
    %v4583 = vpow.pop %v4582
    %v4584 = vmul.f32 %v4574, 1.442695
    %v4585 = vpow.pop %v4584
    %v4586 = vmul.f32 %v4575, 1.442695
    %v4587 = vpow.pop %v4586
    %v4588 = vmul.f32 %v4576, 1.442695
    %v4589 = vpow.pop %v4588
    %v4590 = vmul.f32 %v4577, 1.442695
    %v4591 = vpow.pop %v4590
    %v4592 = vmul.f32 %v4578, 1.442695
    %v4593 = vpow.pop %v4592
    %v4594 = vmul.f32 %v4579, 1.442695
    %v4595 = vpow.pop %v4594
    %v4596 = vmul.f32 %v4581, %v264
    %v4597 = vmul.f32 %v4583, %v265
    %v4598 = vmul.f32 %v4585, %v266
    %v4599 = vmul.f32 %v4587, %v267
    %v4600 = vmul.f32 %v4589, %v268
    %v4601 = vmul.f32 %v4591, %v269
    %v4602 = vmul.f32 %v4593, %v270
    %v4603 = vmul.f32 %v4595, %v271
    %v4604 = vsel %vm1519, %v4596, 0.0
    %4605 = vadd.xlane.f32.xlu0 %v4604
    %v4606 = vpop.xlane.xlu0 %4605
    %v4607 = vsel %vm1519, %v4597, 0.0
    %4608 = vadd.xlane.f32.xlu0 %v4607
    %v4609 = vpop.xlane.xlu0 %4608
    %v4610 = vsel %vm1519, %v4598, 0.0
    %4611 = vadd.xlane.f32.xlu0 %v4610
    %v4612 = vpop.xlane.xlu0 %4611
    %v4613 = vsel %vm1519, %v4599, 0.0
    %4614 = vadd.xlane.f32.xlu0 %v4613
    %v4615 = vpop.xlane.xlu0 %4614
    %v4616 = vsel %vm1519, %v4600, 0.0
    %4617 = vadd.xlane.f32.xlu0 %v4616
    %v4618 = vpop.xlane.xlu0 %4617
    %v4619 = vsel %vm1519, %v4601, 0.0
    %4620 = vadd.xlane.f32.xlu0 %v4619
    %v4621 = vpop.xlane.xlu0 %4620
    %v4622 = vsel %vm1519, %v4602, 0.0
    %4623 = vadd.xlane.f32.xlu0 %v4622
    %v4624 = vpop.xlane.xlu0 %4623
    %v4625 = vsel %vm1519, %v4603, 0.0
    %4626 = vadd.xlane.f32.xlu0 %v4625
    %v4627 = vpop.xlane.xlu0 %4626
    %vm4628 = vcmp.gt.f32.partialorder %v4606, 0.0
    %vm4629 = vcmp.gt.f32.partialorder %v4609, 0.0
    %vm4630 = vcmp.gt.f32.partialorder %v4612, 0.0
    %vm4631 = vcmp.gt.f32.partialorder %v4615, 0.0
    %vm4632 = vcmp.gt.f32.partialorder %v4618, 0.0
    %vm4633 = vcmp.gt.f32.partialorder %v4621, 0.0
    %vm4634 = vcmp.gt.f32.partialorder %v4624, 0.0
    %vm4635 = vcmp.gt.f32.partialorder %v4627, 0.0
    %v4636 = vsel %vm4628, %v4606, 1.0
    %v4637 = vsel %vm4629, %v4609, 1.0
    %v4638 = vsel %vm4630, %v4612, 1.0
    %v4639 = vsel %vm4631, %v4615, 1.0
    %v4640 = vsel %vm4632, %v4618, 1.0
    %v4641 = vsel %vm4633, %v4621, 1.0
    %v4642 = vsel %vm4634, %v4624, 1.0
    %v4643 = vsel %vm4635, %v4627, 1.0
    %v4644 = vrcp.pop %v4636
    %v4645 = vrcp.pop %v4637
    %v4646 = vrcp.pop %v4638
    %v4647 = vrcp.pop %v4639
    %v4648 = vrcp.pop %v4640
    %v4649 = vrcp.pop %v4641
    %v4650 = vrcp.pop %v4642
    %v4651 = vrcp.pop %v4643
    %v4652 = vmul.f32 %v4596, %v4644
    %v4653 = vmul.f32 %v4597, %v4645
    %v4654 = vmul.f32 %v4598, %v4646
    %v4655 = vmul.f32 %v4599, %v4647
    %v4656 = vmul.f32 %v4600, %v4648
    %v4657 = vmul.f32 %v4601, %v4649
    %v4658 = vmul.f32 %v4602, %v4650
    %v4659 = vmul.f32 %v4603, %v4651
    %4660 = vrot.lane.b32.xlu0 %v4325, 64
    %v4661 = vpop.permute.xlu0 %4660
    %4662 = vrot.lane.b32.xlu0 %v4330, 64
    %v4663 = vpop.permute.xlu0 %4662
    %4664 = vrot.lane.b32.xlu0 %v4335, 64
    %v4665 = vpop.permute.xlu0 %4664
    %4666 = vrot.lane.b32.xlu0 %v4340, 64
    %v4667 = vpop.permute.xlu0 %4666
    %4668 = vrot.lane.b32.xlu0 %v4345, 64
    %v4669 = vpop.permute.xlu0 %4668
    %4670 = vrot.lane.b32.xlu0 %v4350, 64
    %v4671 = vpop.permute.xlu0 %4670
    %4672 = vrot.lane.b32.xlu0 %v4355, 64
    %v4673 = vpop.permute.xlu0 %4672
    %4674 = vrot.lane.b32.xlu0 %v4360, 64
    %v4675 = vpop.permute.xlu0 %4674
    %v4685 = vsel %vm1519, %v4652, 0
    %v4688 = vsel %vm1519, %v4653, 0
    %v4691 = vsel %vm1519, %v4654, 0
    %v4694 = vsel %vm1519, %v4655, 0
    %v4697 = vsel %vm1519, %v4656, 0
    %v4700 = vsel %vm1519, %v4657, 0
    %v4703 = vsel %vm1519, %v4658, 0
    %v4706 = vsel %vm1519, %v4659, 0
    %4708 = vmatprep.subr.mxu0 0.0
    %4709 = vmatpush1.msra.mxu0 %v4661
    %4710 = vmatprep.subr.mxu0 0.0
    %4711 = vmatpush1.msra.mxu0 %v4663
    %4712 = vmatprep.subr.mxu0 0.0
    %4713 = vmatpush1.msra.mxu0 %v4665
    %4714 = vmatprep.subr.mxu0 0.0
    %4715 = vmatpush1.msra.mxu0 %v4667
    %4716 = vmatprep.subr.mxu0 0.0
    %4717 = vmatpush1.msra.mxu0 %v4669
    %4718 = vmatprep.subr.mxu0 0.0
    %4719 = vmatpush1.msra.mxu0 %v4671
    %4720 = vmatprep.subr.mxu0 0.0
    %4721 = vmatpush1.msra.mxu0 %v4673
    %4722 = vmatprep.subr.mxu0 0.0
    %4723 = vmatpush1.msra.mxu0 %v4675
    %4724 = vmatprep.subr.mxu0 0.0
    %4725 = vmatpush1.msra.mxu0 0.0
    %4726 = vmatprep.subr.mxu0 0.0
    %4727 = vmatpush1.msra.mxu0 0.0
    %4728 = vmatprep.subr.mxu0 0.0
    %4729 = vmatpush1.msra.mxu0 0.0
    %4730 = vmatprep.subr.mxu0 0.0
    %4731 = vmatpush1.msra.mxu0 0.0
    %4732 = vmatprep.subr.mxu0 0.0
    %4733 = vmatpush1.msra.mxu0 0.0
    %4734 = vmatprep.subr.mxu0 0.0
    %4735 = vmatpush1.msra.mxu0 0.0
    %4736 = vmatprep.subr.mxu0 0.0
    %4737 = vmatpush1.msra.mxu0 0.0
    %4738 = vmatprep.subr.mxu0 0.0
    %4739 = vmatpush1.msra.mxu0 0.0
    %4740 = vmatprep.subr.mxu0 0.0
    %4741 = vmatpush1.msra.mxu0 0.0
    %4742 = vmatprep.subr.mxu0 0.0
    %4743 = vmatpush1.msra.mxu0 0.0
    %4744 = vmatprep.subr.mxu0 0.0
    %4745 = vmatpush1.msra.mxu0 0.0
    %4746 = vmatprep.subr.mxu0 0.0
    %4747 = vmatpush1.msra.mxu0 0.0
    %4748 = vmatprep.subr.mxu0 0.0
    %4749 = vmatpush1.msra.mxu0 0.0
    %4750 = vmatprep.subr.mxu0 0.0
    %4751 = vmatpush1.msra.mxu0 0.0
    %4752 = vmatprep.subr.mxu0 0.0
    %4753 = vmatpush1.msra.mxu0 0.0
    %4754 = vmatprep.subr.mxu0 0.0
    %4755 = vmatpush1.msra.mxu0 0.0
    %4756 = vmatprep.subr.mxu0 0.0
    %4757 = vmatpush1.msra.mxu0 0.0
    %4758 = vmatprep.subr.mxu0 0.0
    %4759 = vmatpush1.msra.mxu0 0.0
    %4760 = vmatprep.subr.mxu0 0.0
    %4761 = vmatpush1.msra.mxu0 0.0
    %4762 = vmatprep.subr.mxu0 0.0
    %4763 = vmatpush1.msra.mxu0 0.0
    %4764 = vmatprep.subr.mxu0 0.0
    %4765 = vmatpush1.msra.mxu0 0.0
    %4766 = vmatprep.subr.mxu0 0.0
    %4767 = vmatpush1.msra.mxu0 0.0
    %4768 = vmatprep.subr.mxu0 0.0
    %4769 = vmatpush1.msra.mxu0 0.0
    %4770 = vmatprep.subr.mxu0 0.0
    %4771 = vmatpush1.msra.mxu0 0.0
    %4772 = vmatprep.mubr.f32.mxu0 0.0
    %4773 = vmatmul.mubr.f32.gmra.mrb[0].mxu0 %v4685
    %v4774 = vpop.f32.mrb[0].mxu0
    %v4775 = vadd.f32 0.0, %v4774
    %v4776 = vpop.f32.mrb[0].mxu0
    %4777 = vmatprep.mubr.f32.mxu0 0.0
    %4778 = vmatmul.mubr.f32.gmra.mrb[0].mxu0 %v4688
    %v4779 = vpop.f32.mrb[0].mxu0
    %v4780 = vadd.f32 0.0, %v4779
    %v4781 = vpop.f32.mrb[0].mxu0
    %4782 = vmatprep.mubr.f32.mxu0 0.0
    %4783 = vmatmul.mubr.f32.gmra.mrb[0].mxu0 %v4691
    %v4784 = vpop.f32.mrb[0].mxu0
    %v4785 = vadd.f32 0.0, %v4784
    %v4786 = vpop.f32.mrb[0].mxu0
    %4787 = vmatprep.mubr.f32.mxu0 0.0
    %4788 = vmatmul.mubr.f32.gmra.mrb[0].mxu0 %v4694
    %v4789 = vpop.f32.mrb[0].mxu0
    %v4790 = vadd.f32 0.0, %v4789
    %v4791 = vpop.f32.mrb[0].mxu0
    %4792 = vmatprep.mubr.f32.mxu0 0.0
    %4793 = vmatmul.mubr.f32.gmra.mrb[0].mxu0 %v4697
    %v4794 = vpop.f32.mrb[0].mxu0
    %v4795 = vadd.f32 0.0, %v4794
    %v4796 = vpop.f32.mrb[0].mxu0
    %4797 = vmatprep.mubr.f32.mxu0 0.0
    %4798 = vmatmul.mubr.f32.gmra.mrb[0].mxu0 %v4700
    %v4799 = vpop.f32.mrb[0].mxu0
    %v4800 = vadd.f32 0.0, %v4799
    %v4801 = vpop.f32.mrb[0].mxu0
    %4802 = vmatprep.mubr.f32.mxu0 0.0
    %4803 = vmatmul.mubr.f32.gmra.mrb[0].mxu0 %v4703
    %v4804 = vpop.f32.mrb[0].mxu0
    %v4805 = vadd.f32 0.0, %v4804
    %v4806 = vpop.f32.mrb[0].mxu0
    %4807 = vmatprep.mubr.f32.mxu0 0.0
    %4808 = vmatmul.mubr.f32.gmra.mrb[0].mxu0 %v4706
    %v4809 = vpop.f32.mrb[0].mxu0
    %v4810 = vadd.f32 0.0, %v4809
    %v4811 = vpop.f32.mrb[0].mxu0
    %4812 = vdwg.mxu0
    %v4814 = vlaneseq
    %v4815 = vshrl.u32 %v4814, 7
    %v4816 = vsub.s32 0, %v4815
    %v4817 = vrot.slane %v4251, %v4816
    %v4820 = vsel %vm424, %v4775, 0
    %v4823 = vsel %vm424, %v4780, 0
    %v4826 = vsel %vm424, %v4785, 0
    %v4829 = vsel %vm424, %v4790, 0
    %v4832 = vsel %vm424, %v4795, 0
    %v4835 = vsel %vm424, %v4800, 0
    %v4838 = vsel %vm424, %v4805, 0
    %v4841 = vsel %vm424, %v4810, 0
    %4843 = vmatprep.subr.mxu0 0.0
    %4844 = vmatpush1.msra.mxu0 %v4247
    %4845 = vmatprep.subr.mxu0 0.0
    %4846 = vmatpush1.msra.mxu0 %v4248
    %4847 = vmatprep.subr.mxu0 0.0
    %4848 = vmatpush1.msra.mxu0 %v4249
    %4849 = vmatprep.subr.mxu0 0.0
    %4850 = vmatpush1.msra.mxu0 %v4250
    %4851 = vmatprep.subr.mxu0 0.0
    %4852 = vmatpush1.msra.mxu0 0.0
    %4853 = vmatprep.subr.mxu0 0.0
    %4854 = vmatpush1.msra.mxu0 0.0
    %4855 = vmatprep.subr.mxu0 0.0
    %4856 = vmatpush1.msra.mxu0 0.0
    %4857 = vmatprep.subr.mxu0 0.0
    %4858 = vmatpush1.msra.mxu0 0.0
    %4859 = vmatprep.subr.mxu0 0.0
    %4860 = vmatpush1.msra.mxu0 0.0
    %4861 = vmatprep.subr.mxu0 0.0
    %4862 = vmatpush1.msra.mxu0 0.0
    %4863 = vmatprep.subr.mxu0 0.0
    %4864 = vmatpush1.msra.mxu0 0.0
    %4865 = vmatprep.subr.mxu0 0.0
    %4866 = vmatpush1.msra.mxu0 0.0
    %4867 = vmatprep.subr.mxu0 0.0
    %4868 = vmatpush1.msra.mxu0 0.0
    %4869 = vmatprep.subr.mxu0 0.0
    %4870 = vmatpush1.msra.mxu0 0.0
    %4871 = vmatprep.subr.mxu0 0.0
    %4872 = vmatpush1.msra.mxu0 0.0
    %4873 = vmatprep.subr.mxu0 0.0
    %4874 = vmatpush1.msra.mxu0 0.0
    %4875 = vmatprep.subr.mxu0 0.0
    %4876 = vmatpush1.msra.mxu0 0.0
    %4877 = vmatprep.subr.mxu0 0.0
    %4878 = vmatpush1.msra.mxu0 0.0
    %4879 = vmatprep.subr.mxu0 0.0
    %4880 = vmatpush1.msra.mxu0 0.0
    %4881 = vmatprep.subr.mxu0 0.0
    %4882 = vmatpush1.msra.mxu0 0.0
    %4883 = vmatprep.subr.mxu0 0.0
    %4884 = vmatpush1.msra.mxu0 0.0
    %4885 = vmatprep.subr.mxu0 0.0
    %4886 = vmatpush1.msra.mxu0 0.0
    %4887 = vmatprep.subr.mxu0 0.0
    %4888 = vmatpush1.msra.mxu0 0.0
    %4889 = vmatprep.subr.mxu0 0.0
    %4890 = vmatpush1.msra.mxu0 0.0
    %4891 = vmatprep.subr.mxu0 0.0
    %4892 = vmatpush1.msra.mxu0 0.0
    %4893 = vmatprep.subr.mxu0 0.0
    %4894 = vmatpush1.msra.mxu0 0.0
    %4895 = vmatprep.subr.mxu0 0.0
    %4896 = vmatpush1.msra.mxu0 0.0
    %4897 = vmatprep.subr.mxu0 0.0
    %4898 = vmatpush1.msra.mxu0 0.0
    %4899 = vmatprep.subr.mxu0 0.0
    %4900 = vmatpush1.msra.mxu0 0.0
    %4901 = vmatprep.subr.mxu0 0.0
    %4902 = vmatpush1.msra.mxu0 0.0
    %4903 = vmatprep.subr.mxu0 0.0
    %4904 = vmatpush1.msra.mxu0 0.0
    %4905 = vmatprep.subr.mxu0 0.0
    %4906 = vmatpush1.msra.mxu0 0.0
    %4907 = vmatprep.mubr.f32.mxu0 0.0
    %4908 = vmatmul.mubr.f32.gmra.mrb[0].mxu0 %v4820
    %v4909 = vpop.f32.mrb[0].mxu0
    %v4910 = vadd.f32 %v4817, %v4909
    %v4911 = vpop.f32.mrb[0].mxu0
    %4912 = vmatprep.mubr.f32.mxu0 0.0
    %4913 = vmatmul.mubr.f32.gmra.mrb[0].mxu0 %v4823
    %v4914 = vpop.f32.mrb[0].mxu0
    %v4915 = vadd.f32 %v4817, %v4914
    %v4916 = vpop.f32.mrb[0].mxu0
    %4917 = vmatprep.mubr.f32.mxu0 0.0
    %4918 = vmatmul.mubr.f32.gmra.mrb[0].mxu0 %v4826
    %v4919 = vpop.f32.mrb[0].mxu0
    %v4920 = vadd.f32 %v4817, %v4919
    %v4921 = vpop.f32.mrb[0].mxu0
    %4922 = vmatprep.mubr.f32.mxu0 0.0
    %4923 = vmatmul.mubr.f32.gmra.mrb[0].mxu0 %v4829
    %v4924 = vpop.f32.mrb[0].mxu0
    %v4925 = vadd.f32 %v4817, %v4924
    %v4926 = vpop.f32.mrb[0].mxu0
    %4927 = vmatprep.mubr.f32.mxu0 0.0
    %4928 = vmatmul.mubr.f32.gmra.mrb[0].mxu0 %v4832
    %v4929 = vpop.f32.mrb[0].mxu0
    %v4930 = vadd.f32 %v4817, %v4929
    %v4931 = vpop.f32.mrb[0].mxu0
    %4932 = vmatprep.mubr.f32.mxu0 0.0
    %4933 = vmatmul.mubr.f32.gmra.mrb[0].mxu0 %v4835
    %v4934 = vpop.f32.mrb[0].mxu0
    %v4935 = vadd.f32 %v4817, %v4934
    %v4936 = vpop.f32.mrb[0].mxu0
    %4937 = vmatprep.mubr.f32.mxu0 0.0
    %4938 = vmatmul.mubr.f32.gmra.mrb[0].mxu0 %v4838
    %v4939 = vpop.f32.mrb[0].mxu0
    %v4940 = vadd.f32 %v4817, %v4939
    %v4941 = vpop.f32.mrb[0].mxu0
    %4942 = vmatprep.mubr.f32.mxu0 0.0
    %4943 = vmatmul.mubr.f32.gmra.mrb[0].mxu0 %v4841
    %v4944 = vpop.f32.mrb[0].mxu0
    %v4945 = vadd.f32 %v4817, %v4944
    %v4946 = vpop.f32.mrb[0].mxu0
    %4947 = vdwg.mxu0
    %v4948 = vld [vmem:[%s71] sm:$0xff]
    %v4949 = vld [vmem:[%s71 + $0x8] sm:$0xff]
    %v4950 = vld [vmem:[%s71 + $0x10] sm:$0xff]
    %v4951 = vld [vmem:[%s71 + $0x18] sm:$0xff]
    %v4952 = vld [vmem:[%s73] sm:$0xff]
    %v4953 = vld [vmem:[%s73 + $0x8] sm:$0xff]
    %v4954 = vld [vmem:[%s73 + $0x10] sm:$0xff]
    %v4955 = vld [vmem:[%s73 + $0x18] sm:$0xff]
    %v4956 = vld [vmem:[%s75] sm:$0xff]
    %v4957 = vld [vmem:[%s75 + $0x8] sm:$0xff]
    %v4958 = vld [vmem:[%s75 + $0x10] sm:$0xff]
    %v4959 = vld [vmem:[%s75 + $0x18] sm:$0xff]
    %v4960 = vld [vmem:[%s77] sm:$0x1]
    %v4961 = vld [vmem:[%s79] sm:$0x1]
    %v4962 = vld [vmem:[%s81] sm:$0x1]
    %4963 = vmatprep.subr.mxu0 0.0
    %4964 = vmatpush1.msra.mxu0 %v4952
    %4965 = vmatprep.subr.mxu0 0.0
    %4966 = vmatpush1.msra.mxu0 %v4953
    %4967 = vmatprep.subr.mxu0 0.0
    %4968 = vmatpush1.msra.mxu0 %v4954
    %4969 = vmatprep.subr.mxu0 0.0
    %4970 = vmatpush1.msra.mxu0 %v4955
    %4971 = vmatprep.subr.mxu0 0.0
    %4972 = vmatpush1.msra.mxu0 0.0
    %4973 = vmatprep.subr.mxu0 0.0
    %4974 = vmatpush1.msra.mxu0 0.0
    %4975 = vmatprep.subr.mxu0 0.0
    %4976 = vmatpush1.msra.mxu0 0.0
    %4977 = vmatprep.subr.mxu0 0.0
    %4978 = vmatpush1.msra.mxu0 0.0
    %4979 = vmatprep.subr.mxu0 0.0
    %4980 = vmatpush1.msra.mxu0 0.0
    %4981 = vmatprep.subr.mxu0 0.0
    %4982 = vmatpush1.msra.mxu0 0.0
    %4983 = vmatprep.subr.mxu0 0.0
    %4984 = vmatpush1.msra.mxu0 0.0
    %4985 = vmatprep.subr.mxu0 0.0
    %4986 = vmatpush1.msra.mxu0 0.0
    %4987 = vmatprep.subr.mxu0 0.0
    %4988 = vmatpush1.msra.mxu0 0.0
    %4989 = vmatprep.subr.mxu0 0.0
    %4990 = vmatpush1.msra.mxu0 0.0
    %4991 = vmatprep.subr.mxu0 0.0
    %4992 = vmatpush1.msra.mxu0 0.0
    %4993 = vmatprep.subr.mxu0 0.0
    %4994 = vmatpush1.msra.mxu0 0.0
    %4995 = vmatprep.subr.mxu0 0.0
    %4996 = vmatpush1.msra.mxu0 0.0
    %4997 = vmatprep.subr.mxu0 0.0
    %4998 = vmatpush1.msra.mxu0 0.0
    %4999 = vmatprep.subr.mxu0 0.0
    %5000 = vmatpush1.msra.mxu0 0.0
    %5001 = vmatprep.subr.mxu0 0.0
    %5002 = vmatpush1.msra.mxu0 0.0
    %5003 = vmatprep.subr.mxu0 0.0
    %5004 = vmatpush1.msra.mxu0 0.0
    %5005 = vmatprep.subr.mxu0 0.0
    %5006 = vmatpush1.msra.mxu0 0.0
    %5007 = vmatprep.subr.mxu0 0.0
    %5008 = vmatpush1.msra.mxu0 0.0
    %5009 = vmatprep.subr.mxu0 0.0
    %5010 = vmatpush1.msra.mxu0 0.0
    %5011 = vmatprep.subr.mxu0 0.0
    %5012 = vmatpush1.msra.mxu0 0.0
    %5013 = vmatprep.subr.mxu0 0.0
    %5014 = vmatpush1.msra.mxu0 0.0
    %5015 = vmatprep.subr.mxu0 0.0
    %5016 = vmatpush1.msra.mxu0 0.0
    %5017 = vmatprep.subr.mxu0 0.0
    %5018 = vmatpush1.msra.mxu0 0.0
    %5019 = vmatprep.subr.mxu0 0.0
    %5020 = vmatpush1.msra.mxu0 0.0
    %5021 = vmatprep.subr.mxu0 0.0
    %5022 = vmatpush1.msra.mxu0 0.0
    %5023 = vmatprep.subr.mxu0 0.0
    %5024 = vmatpush1.msra.mxu0 0.0
    %5025 = vmatprep.subr.mxu0 0.0
    %5026 = vmatpush1.msra.mxu0 0.0
    %5027 = vmatprep.mubr.f32.mxu0 0.0
    %5028 = vmatmul.mubr.f32.gmra.mrb[0].mxu0 %v572
    %v5029 = vpop.f32.mrb[0].mxu0
    %v5030 = vadd.f32 0.0, %v5029
    %v5031 = vpop.f32.mrb[0].mxu0
    %5032 = vmatprep.mubr.f32.mxu0 0.0
    %5033 = vmatmul.mubr.f32.gmra.mrb[0].mxu0 %v575
    %v5034 = vpop.f32.mrb[0].mxu0
    %v5035 = vadd.f32 0.0, %v5034
    %v5036 = vpop.f32.mrb[0].mxu0
    %5037 = vmatprep.mubr.f32.mxu0 0.0
    %5038 = vmatmul.mubr.f32.gmra.mrb[0].mxu0 %v578
    %v5039 = vpop.f32.mrb[0].mxu0
    %v5040 = vadd.f32 0.0, %v5039
    %v5041 = vpop.f32.mrb[0].mxu0
    %5042 = vmatprep.mubr.f32.mxu0 0.0
    %5043 = vmatmul.mubr.f32.gmra.mrb[0].mxu0 %v581
    %v5044 = vpop.f32.mrb[0].mxu0
    %v5045 = vadd.f32 0.0, %v5044
    %v5046 = vpop.f32.mrb[0].mxu0
    %5047 = vmatprep.mubr.f32.mxu0 0.0
    %5048 = vmatmul.mubr.f32.gmra.mrb[0].mxu0 %v584
    %v5049 = vpop.f32.mrb[0].mxu0
    %v5050 = vadd.f32 0.0, %v5049
    %v5051 = vpop.f32.mrb[0].mxu0
    %5052 = vmatprep.mubr.f32.mxu0 0.0
    %5053 = vmatmul.mubr.f32.gmra.mrb[0].mxu0 %v587
    %v5054 = vpop.f32.mrb[0].mxu0
    %v5055 = vadd.f32 0.0, %v5054
    %v5056 = vpop.f32.mrb[0].mxu0
    %5057 = vmatprep.mubr.f32.mxu0 0.0
    %5058 = vmatmul.mubr.f32.gmra.mrb[0].mxu0 %v590
    %v5059 = vpop.f32.mrb[0].mxu0
    %v5060 = vadd.f32 0.0, %v5059
    %v5061 = vpop.f32.mrb[0].mxu0
    %5062 = vmatprep.mubr.f32.mxu0 0.0
    %5063 = vmatmul.mubr.f32.gmra.mrb[0].mxu0 %v593
    %v5064 = vpop.f32.mrb[0].mxu0
    %v5065 = vadd.f32 0.0, %v5064
    %v5066 = vpop.f32.mrb[0].mxu0
    %5067 = vdwg.mxu0
    %v5069 = vsel %vm424, %v4204, 0
    %v5072 = vsel %vm424, %v4209, 0
    %v5075 = vsel %vm424, %v4214, 0
    %v5078 = vsel %vm424, %v4219, 0
    %v5081 = vsel %vm424, %v4224, 0
    %v5084 = vsel %vm424, %v4229, 0
    %v5087 = vsel %vm424, %v4234, 0
    %v5090 = vsel %vm424, %v4239, 0
    %5092 = vmatprep.subr.mxu0 0.0
    %5093 = vmatpush1.msra.mxu0 %v4948
    %5094 = vmatprep.subr.mxu0 0.0
    %5095 = vmatpush1.msra.mxu0 %v4949
    %5096 = vmatprep.subr.mxu0 0.0
    %5097 = vmatpush1.msra.mxu0 %v4950
    %5098 = vmatprep.subr.mxu0 0.0
    %5099 = vmatpush1.msra.mxu0 %v4951
    %5100 = vmatprep.subr.mxu0 0.0
    %5101 = vmatpush1.msra.mxu0 0.0
    %5102 = vmatprep.subr.mxu0 0.0
    %5103 = vmatpush1.msra.mxu0 0.0
    %5104 = vmatprep.subr.mxu0 0.0
    %5105 = vmatpush1.msra.mxu0 0.0
    %5106 = vmatprep.subr.mxu0 0.0
    %5107 = vmatpush1.msra.mxu0 0.0
    %5108 = vmatprep.subr.mxu0 0.0
    %5109 = vmatpush1.msra.mxu0 0.0
    %5110 = vmatprep.subr.mxu0 0.0
    %5111 = vmatpush1.msra.mxu0 0.0
    %5112 = vmatprep.subr.mxu0 0.0
    %5113 = vmatpush1.msra.mxu0 0.0
    %5114 = vmatprep.subr.mxu0 0.0
    %5115 = vmatpush1.msra.mxu0 0.0
    %5116 = vmatprep.subr.mxu0 0.0
    %5117 = vmatpush1.msra.mxu0 0.0
    %5118 = vmatprep.subr.mxu0 0.0
    %5119 = vmatpush1.msra.mxu0 0.0
    %5120 = vmatprep.subr.mxu0 0.0
    %5121 = vmatpush1.msra.mxu0 0.0
    %5122 = vmatprep.subr.mxu0 0.0
    %5123 = vmatpush1.msra.mxu0 0.0
    %5124 = vmatprep.subr.mxu0 0.0
    %5125 = vmatpush1.msra.mxu0 0.0
    %5126 = vmatprep.subr.mxu0 0.0
    %5127 = vmatpush1.msra.mxu0 0.0
    %5128 = vmatprep.subr.mxu0 0.0
    %5129 = vmatpush1.msra.mxu0 0.0
    %5130 = vmatprep.subr.mxu0 0.0
    %5131 = vmatpush1.msra.mxu0 0.0
    %5132 = vmatprep.subr.mxu0 0.0
    %5133 = vmatpush1.msra.mxu0 0.0
    %5134 = vmatprep.subr.mxu0 0.0
    %5135 = vmatpush1.msra.mxu0 0.0
    %5136 = vmatprep.subr.mxu0 0.0
    %5137 = vmatpush1.msra.mxu0 0.0
    %5138 = vmatprep.subr.mxu0 0.0
    %5139 = vmatpush1.msra.mxu0 0.0
    %5140 = vmatprep.subr.mxu0 0.0
    %5141 = vmatpush1.msra.mxu0 0.0
    %5142 = vmatprep.subr.mxu0 0.0
    %5143 = vmatpush1.msra.mxu0 0.0
    %5144 = vmatprep.subr.mxu0 0.0
    %5145 = vmatpush1.msra.mxu0 0.0
    %5146 = vmatprep.subr.mxu0 0.0
    %5147 = vmatpush1.msra.mxu0 0.0
    %5148 = vmatprep.subr.mxu0 0.0
    %5149 = vmatpush1.msra.mxu0 0.0
    %5150 = vmatprep.subr.mxu0 0.0
    %5151 = vmatpush1.msra.mxu0 0.0
    %5152 = vmatprep.subr.mxu0 0.0
    %5153 = vmatpush1.msra.mxu0 0.0
    %5154 = vmatprep.subr.mxu0 0.0
    %5155 = vmatpush1.msra.mxu0 0.0
    %5156 = vmatprep.mubr.f32.mxu0 0.0
    %5157 = vmatmul.mubr.f32.gmra.mrb[0].mxu0 %v5069
    %v5158 = vpop.f32.mrb[0].mxu0
    %v5159 = vadd.f32 %v5030, %v5158
    %v5160 = vpop.f32.mrb[0].mxu0
    %5161 = vmatprep.mubr.f32.mxu0 0.0
    %5162 = vmatmul.mubr.f32.gmra.mrb[0].mxu0 %v5072
    %v5163 = vpop.f32.mrb[0].mxu0
    %v5164 = vadd.f32 %v5035, %v5163
    %v5165 = vpop.f32.mrb[0].mxu0
    %5166 = vmatprep.mubr.f32.mxu0 0.0
    %5167 = vmatmul.mubr.f32.gmra.mrb[0].mxu0 %v5075
    %v5168 = vpop.f32.mrb[0].mxu0
    %v5169 = vadd.f32 %v5040, %v5168
    %v5170 = vpop.f32.mrb[0].mxu0
    %5171 = vmatprep.mubr.f32.mxu0 0.0
    %5172 = vmatmul.mubr.f32.gmra.mrb[0].mxu0 %v5078
    %v5173 = vpop.f32.mrb[0].mxu0
    %v5174 = vadd.f32 %v5045, %v5173
    %v5175 = vpop.f32.mrb[0].mxu0
    %5176 = vmatprep.mubr.f32.mxu0 0.0
    %5177 = vmatmul.mubr.f32.gmra.mrb[0].mxu0 %v5081
    %v5178 = vpop.f32.mrb[0].mxu0
    %v5179 = vadd.f32 %v5050, %v5178
    %v5180 = vpop.f32.mrb[0].mxu0
    %5181 = vmatprep.mubr.f32.mxu0 0.0
    %5182 = vmatmul.mubr.f32.gmra.mrb[0].mxu0 %v5084
    %v5183 = vpop.f32.mrb[0].mxu0
    %v5184 = vadd.f32 %v5055, %v5183
    %v5185 = vpop.f32.mrb[0].mxu0
    %5186 = vmatprep.mubr.f32.mxu0 0.0
    %5187 = vmatmul.mubr.f32.gmra.mrb[0].mxu0 %v5087
    %v5188 = vpop.f32.mrb[0].mxu0
    %v5189 = vadd.f32 %v5060, %v5188
    %v5190 = vpop.f32.mrb[0].mxu0
    %5191 = vmatprep.mubr.f32.mxu0 0.0
    %5192 = vmatmul.mubr.f32.gmra.mrb[0].mxu0 %v5090
    %v5193 = vpop.f32.mrb[0].mxu0
    %v5194 = vadd.f32 %v5065, %v5193
    %v5195 = vpop.f32.mrb[0].mxu0
    %5196 = vdwg.mxu0
    %v5198 = vsel %vm424, %v4910, 0
    %v5201 = vsel %vm424, %v4915, 0
    %v5204 = vsel %vm424, %v4920, 0
    %v5207 = vsel %vm424, %v4925, 0
    %v5210 = vsel %vm424, %v4930, 0
    %v5213 = vsel %vm424, %v4935, 0
    %v5216 = vsel %vm424, %v4940, 0
    %v5219 = vsel %vm424, %v4945, 0
    %5221 = vmatprep.subr.mxu0 0.0
    %5222 = vmatpush1.msra.mxu0 %v4956
    %5223 = vmatprep.subr.mxu0 0.0
    %5224 = vmatpush1.msra.mxu0 %v4957
    %5225 = vmatprep.subr.mxu0 0.0
    %5226 = vmatpush1.msra.mxu0 %v4958
    %5227 = vmatprep.subr.mxu0 0.0
    %5228 = vmatpush1.msra.mxu0 %v4959
    %5229 = vmatprep.subr.mxu0 0.0
    %5230 = vmatpush1.msra.mxu0 0.0
    %5231 = vmatprep.subr.mxu0 0.0
    %5232 = vmatpush1.msra.mxu0 0.0
    %5233 = vmatprep.subr.mxu0 0.0
    %5234 = vmatpush1.msra.mxu0 0.0
    %5235 = vmatprep.subr.mxu0 0.0
    %5236 = vmatpush1.msra.mxu0 0.0
    %5237 = vmatprep.subr.mxu0 0.0
    %5238 = vmatpush1.msra.mxu0 0.0
    %5239 = vmatprep.subr.mxu0 0.0
    %5240 = vmatpush1.msra.mxu0 0.0
    %5241 = vmatprep.subr.mxu0 0.0
    %5242 = vmatpush1.msra.mxu0 0.0
    %5243 = vmatprep.subr.mxu0 0.0
    %5244 = vmatpush1.msra.mxu0 0.0
    %5245 = vmatprep.subr.mxu0 0.0
    %5246 = vmatpush1.msra.mxu0 0.0
    %5247 = vmatprep.subr.mxu0 0.0
    %5248 = vmatpush1.msra.mxu0 0.0
    %5249 = vmatprep.subr.mxu0 0.0
    %5250 = vmatpush1.msra.mxu0 0.0
    %5251 = vmatprep.subr.mxu0 0.0
    %5252 = vmatpush1.msra.mxu0 0.0
    %5253 = vmatprep.subr.mxu0 0.0
    %5254 = vmatpush1.msra.mxu0 0.0
    %5255 = vmatprep.subr.mxu0 0.0
    %5256 = vmatpush1.msra.mxu0 0.0
    %5257 = vmatprep.subr.mxu0 0.0
    %5258 = vmatpush1.msra.mxu0 0.0
    %5259 = vmatprep.subr.mxu0 0.0
    %5260 = vmatpush1.msra.mxu0 0.0
    %5261 = vmatprep.subr.mxu0 0.0
    %5262 = vmatpush1.msra.mxu0 0.0
    %5263 = vmatprep.subr.mxu0 0.0
    %5264 = vmatpush1.msra.mxu0 0.0
    %5265 = vmatprep.subr.mxu0 0.0
    %5266 = vmatpush1.msra.mxu0 0.0
    %5267 = vmatprep.subr.mxu0 0.0
    %5268 = vmatpush1.msra.mxu0 0.0
    %5269 = vmatprep.subr.mxu0 0.0
    %5270 = vmatpush1.msra.mxu0 0.0
    %5271 = vmatprep.subr.mxu0 0.0
    %5272 = vmatpush1.msra.mxu0 0.0
    %5273 = vmatprep.subr.mxu0 0.0
    %5274 = vmatpush1.msra.mxu0 0.0
    %5275 = vmatprep.subr.mxu0 0.0
    %5276 = vmatpush1.msra.mxu0 0.0
    %5277 = vmatprep.subr.mxu0 0.0
    %5278 = vmatpush1.msra.mxu0 0.0
    %5279 = vmatprep.subr.mxu0 0.0
    %5280 = vmatpush1.msra.mxu0 0.0
    %5281 = vmatprep.subr.mxu0 0.0
    %5282 = vmatpush1.msra.mxu0 0.0
    %5283 = vmatprep.subr.mxu0 0.0
    %5284 = vmatpush1.msra.mxu0 0.0
    %5285 = vmatprep.mubr.f32.mxu0 0.0
    %5286 = vmatmul.mubr.f32.gmra.mrb[0].mxu0 %v5198
    %v5287 = vpop.f32.mrb[0].mxu0
    %v5288 = vadd.f32 0.0, %v5287
    %v5289 = vpop.f32.mrb[0].mxu0
    %5290 = vmatprep.mubr.f32.mxu0 0.0
    %5291 = vmatmul.mubr.f32.gmra.mrb[0].mxu0 %v5201
    %v5292 = vpop.f32.mrb[0].mxu0
    %v5293 = vadd.f32 0.0, %v5292
    %v5294 = vpop.f32.mrb[0].mxu0
    %5295 = vmatprep.mubr.f32.mxu0 0.0
    %5296 = vmatmul.mubr.f32.gmra.mrb[0].mxu0 %v5204
    %v5297 = vpop.f32.mrb[0].mxu0
    %v5298 = vadd.f32 0.0, %v5297
    %v5299 = vpop.f32.mrb[0].mxu0
    %5300 = vmatprep.mubr.f32.mxu0 0.0
    %5301 = vmatmul.mubr.f32.gmra.mrb[0].mxu0 %v5207
    %v5302 = vpop.f32.mrb[0].mxu0
    %v5303 = vadd.f32 0.0, %v5302
    %v5304 = vpop.f32.mrb[0].mxu0
    %5305 = vmatprep.mubr.f32.mxu0 0.0
    %5306 = vmatmul.mubr.f32.gmra.mrb[0].mxu0 %v5210
    %v5307 = vpop.f32.mrb[0].mxu0
    %v5308 = vadd.f32 0.0, %v5307
    %v5309 = vpop.f32.mrb[0].mxu0
    %5310 = vmatprep.mubr.f32.mxu0 0.0
    %5311 = vmatmul.mubr.f32.gmra.mrb[0].mxu0 %v5213
    %v5312 = vpop.f32.mrb[0].mxu0
    %v5313 = vadd.f32 0.0, %v5312
    %v5314 = vpop.f32.mrb[0].mxu0
    %5315 = vmatprep.mubr.f32.mxu0 0.0
    %5316 = vmatmul.mubr.f32.gmra.mrb[0].mxu0 %v5216
    %v5317 = vpop.f32.mrb[0].mxu0
    %v5318 = vadd.f32 0.0, %v5317
    %v5319 = vpop.f32.mrb[0].mxu0
    %5320 = vmatprep.mubr.f32.mxu0 0.0
    %5321 = vmatmul.mubr.f32.gmra.mrb[0].mxu0 %v5219
    %v5322 = vpop.f32.mrb[0].mxu0
    %v5323 = vadd.f32 0.0, %v5322
    %v5324 = vpop.f32.mrb[0].mxu0
    %5325 = vdwg.mxu0
    %v5326 = vadd.f32 %v5159, %v5288
    %v5327 = vadd.f32 %v5164, %v5293
    %v5328 = vadd.f32 %v5169, %v5298
    %v5329 = vadd.f32 %v5174, %v5303
    %v5330 = vadd.f32 %v5179, %v5308
    %v5331 = vadd.f32 %v5184, %v5313
    %v5332 = vadd.f32 %v5189, %v5318
    %v5333 = vadd.f32 %v5194, %v5323
    %v5335 = vlaneseq
    %v5336 = vshrl.u32 %v5335, 7
    %v5337 = vsub.s32 0, %v5336
    %v5338 = vrot.slane %v4960, %v5337
    %v5340 = vadd.f32 %v5326, %v5338
    %v5341 = vadd.f32 %v5327, %v5338
    %v5342 = vadd.f32 %v5328, %v5338
    %v5343 = vadd.f32 %v5329, %v5338
    %v5344 = vadd.f32 %v5330, %v5338
    %v5345 = vadd.f32 %v5331, %v5338
    %v5346 = vadd.f32 %v5332, %v5338
    %v5347 = vadd.f32 %v5333, %v5338
    %v5348 = vmax.f32 %v5340, 0.0
    %v5349 = vmax.f32 %v5341, 0.0
    %v5350 = vmax.f32 %v5342, 0.0
    %v5351 = vmax.f32 %v5343, 0.0
    %v5352 = vmax.f32 %v5344, 0.0
    %v5353 = vmax.f32 %v5345, 0.0
    %v5354 = vmax.f32 %v5346, 0.0
    %v5355 = vmax.f32 %v5347, 0.0
    %v5356 = vsel %vm424, %v5348, 0.0
    %5357 = vadd.xlane.f32.xlu0 %v5356
    %v5358 = vpop.xlane.xlu0 %5357
    %v5359 = vsel %vm424, %v5349, 0.0
    %5360 = vadd.xlane.f32.xlu0 %v5359
    %v5361 = vpop.xlane.xlu0 %5360
    %v5362 = vsel %vm424, %v5350, 0.0
    %5363 = vadd.xlane.f32.xlu0 %v5362
    %v5364 = vpop.xlane.xlu0 %5363
    %v5365 = vsel %vm424, %v5351, 0.0
    %5366 = vadd.xlane.f32.xlu0 %v5365
    %v5367 = vpop.xlane.xlu0 %5366
    %v5368 = vsel %vm424, %v5352, 0.0
    %5369 = vadd.xlane.f32.xlu0 %v5368
    %v5370 = vpop.xlane.xlu0 %5369
    %v5371 = vsel %vm424, %v5353, 0.0
    %5372 = vadd.xlane.f32.xlu0 %v5371
    %v5373 = vpop.xlane.xlu0 %5372
    %v5374 = vsel %vm424, %v5354, 0.0
    %5375 = vadd.xlane.f32.xlu0 %v5374
    %v5376 = vpop.xlane.xlu0 %5375
    %v5377 = vsel %vm424, %v5355, 0.0
    %5378 = vadd.xlane.f32.xlu0 %v5377
    %v5379 = vpop.xlane.xlu0 %5378
    %v5380 = vmul.f32 %v5358, %v449
    %v5381 = vmul.f32 %v5361, %v449
    %v5382 = vmul.f32 %v5364, %v449
    %v5383 = vmul.f32 %v5367, %v449
    %v5384 = vmul.f32 %v5370, %v449
    %v5385 = vmul.f32 %v5373, %v449
    %v5386 = vmul.f32 %v5376, %v449
    %v5387 = vmul.f32 %v5379, %v449
    %v5388 = vsub.f32 %v5348, %v5380
    %v5389 = vsub.f32 %v5349, %v5381
    %v5390 = vsub.f32 %v5350, %v5382
    %v5391 = vsub.f32 %v5351, %v5383
    %v5392 = vsub.f32 %v5352, %v5384
    %v5393 = vsub.f32 %v5353, %v5385
    %v5394 = vsub.f32 %v5354, %v5386
    %v5395 = vsub.f32 %v5355, %v5387
    %v5396 = vmul.f32 %v5388, %v5388
    %v5397 = vmul.f32 %v5389, %v5389
    %v5398 = vmul.f32 %v5390, %v5390
    %v5399 = vmul.f32 %v5391, %v5391
    %v5400 = vmul.f32 %v5392, %v5392
    %v5401 = vmul.f32 %v5393, %v5393
    %v5402 = vmul.f32 %v5394, %v5394
    %v5403 = vmul.f32 %v5395, %v5395
    %v5404 = vsel %vm424, %v5396, 0.0
    %5405 = vadd.xlane.f32.xlu0 %v5404
    %v5406 = vpop.xlane.xlu0 %5405
    %v5407 = vsel %vm424, %v5397, 0.0
    %5408 = vadd.xlane.f32.xlu0 %v5407
    %v5409 = vpop.xlane.xlu0 %5408
    %v5410 = vsel %vm424, %v5398, 0.0
    %5411 = vadd.xlane.f32.xlu0 %v5410
    %v5412 = vpop.xlane.xlu0 %5411
    %v5413 = vsel %vm424, %v5399, 0.0
    %5414 = vadd.xlane.f32.xlu0 %v5413
    %v5415 = vpop.xlane.xlu0 %5414
    %v5416 = vsel %vm424, %v5400, 0.0
    %5417 = vadd.xlane.f32.xlu0 %v5416
    %v5418 = vpop.xlane.xlu0 %5417
    %v5419 = vsel %vm424, %v5401, 0.0
    %5420 = vadd.xlane.f32.xlu0 %v5419
    %v5421 = vpop.xlane.xlu0 %5420
    %v5422 = vsel %vm424, %v5402, 0.0
    %5423 = vadd.xlane.f32.xlu0 %v5422
    %v5424 = vpop.xlane.xlu0 %5423
    %v5425 = vsel %vm424, %v5403, 0.0
    %5426 = vadd.xlane.f32.xlu0 %v5425
    %v5427 = vpop.xlane.xlu0 %5426
    %v5428 = vmul.f32 %v5406, %v449
    %v5429 = vmul.f32 %v5409, %v449
    %v5430 = vmul.f32 %v5412, %v449
    %v5431 = vmul.f32 %v5415, %v449
    %v5432 = vmul.f32 %v5418, %v449
    %v5433 = vmul.f32 %v5421, %v449
    %v5434 = vmul.f32 %v5424, %v449
    %v5435 = vmul.f32 %v5427, %v449
    %v5436 = vadd.f32 %v5428, 1e-05
    %v5437 = vadd.f32 %v5429, 1e-05
    %v5438 = vadd.f32 %v5430, 1e-05
    %v5439 = vadd.f32 %v5431, 1e-05
    %v5440 = vadd.f32 %v5432, 1e-05
    %v5441 = vadd.f32 %v5433, 1e-05
    %v5442 = vadd.f32 %v5434, 1e-05
    %v5443 = vadd.f32 %v5435, 1e-05
    %v5444 = vrsqrt.pop %v5436
    %v5445 = vrsqrt.pop %v5437
    %v5446 = vrsqrt.pop %v5438
    %v5447 = vrsqrt.pop %v5439
    %v5448 = vrsqrt.pop %v5440
    %v5449 = vrsqrt.pop %v5441
    %v5450 = vrsqrt.pop %v5442
    %v5451 = vrsqrt.pop %v5443
    %v5452 = vmul.f32 %v5388, %v5444
    %v5453 = vmul.f32 %v5389, %v5445
    %v5454 = vmul.f32 %v5390, %v5446
    %v5455 = vmul.f32 %v5391, %v5447
    %v5456 = vmul.f32 %v5392, %v5448
    %v5457 = vmul.f32 %v5393, %v5449
    %v5458 = vmul.f32 %v5394, %v5450
    %v5459 = vmul.f32 %v5395, %v5451
    %v5461 = vlaneseq
    %v5462 = vshrl.u32 %v5461, 7
    %v5463 = vsub.s32 0, %v5462
    %v5464 = vrot.slane %v4961, %v5463
    %v5466 = vmul.f32 %v5452, %v5464
    %v5467 = vmul.f32 %v5453, %v5464
    %v5468 = vmul.f32 %v5454, %v5464
    %v5469 = vmul.f32 %v5455, %v5464
    %v5470 = vmul.f32 %v5456, %v5464
    %v5471 = vmul.f32 %v5457, %v5464
    %v5472 = vmul.f32 %v5458, %v5464
    %v5473 = vmul.f32 %v5459, %v5464
    %v5475 = vlaneseq
    %v5476 = vshrl.u32 %v5475, 7
    %v5477 = vsub.s32 0, %v5476
    %v5478 = vrot.slane %v4962, %v5477
    %v5480 = vadd.f32 %v5466, %v5478
    %v5481 = vadd.f32 %v5467, %v5478
    %v5482 = vadd.f32 %v5468, %v5478
    %v5483 = vadd.f32 %v5469, %v5478
    %v5484 = vadd.f32 %v5470, %v5478
    %v5485 = vadd.f32 %v5471, %v5478
    %v5486 = vadd.f32 %v5472, %v5478
    %v5487 = vadd.f32 %v5473, %v5478
    %v5488 = vld [vmem:[%s83] sm:$0xff]
    %v5489 = vld [vmem:[%s83 + $0x8] sm:$0xff]
    %v5490 = vld [vmem:[%s83 + $0x10] sm:$0xff]
    %v5491 = vld [vmem:[%s83 + $0x18] sm:$0xff]
    %v5492 = vld [vmem:[%s85] sm:$0x1]
    %v5493 = vld [vmem:[%s87] sm:$0x1]
    %v5494 = vld [vmem:[%s89] sm:$0x1]
    %v5495 = vld [vmem:[%s91] sm:$0x1]
    %v5496 = vld [vmem:[#allocation3] sm:$0x1]
    %v5498 = vlaneseq
    %v5499 = vshrl.u32 %v5498, 7
    %v5500 = vsub.s32 0, %v5499
    %v5501 = vrot.slane %v5492, %v5500
    %v5504 = vsel %vm424, %v5480, 0
    %v5507 = vsel %vm424, %v5481, 0
    %v5510 = vsel %vm424, %v5482, 0
    %v5513 = vsel %vm424, %v5483, 0
    %v5516 = vsel %vm424, %v5484, 0
    %v5519 = vsel %vm424, %v5485, 0
    %v5522 = vsel %vm424, %v5486, 0
    %v5525 = vsel %vm424, %v5487, 0
    %5527 = vmatprep.subr.mxu0 0.0
    %5528 = vmatpush1.msra.mxu0 %v5488
    %5529 = vmatprep.subr.mxu0 0.0
    %5530 = vmatpush1.msra.mxu0 %v5489
    %5531 = vmatprep.subr.mxu0 0.0
    %5532 = vmatpush1.msra.mxu0 %v5490
    %5533 = vmatprep.subr.mxu0 0.0
    %5534 = vmatpush1.msra.mxu0 %v5491
    %5535 = vmatprep.subr.mxu0 0.0
    %5536 = vmatpush1.msra.mxu0 0.0
    %5537 = vmatprep.subr.mxu0 0.0
    %5538 = vmatpush1.msra.mxu0 0.0
    %5539 = vmatprep.subr.mxu0 0.0
    %5540 = vmatpush1.msra.mxu0 0.0
    %5541 = vmatprep.subr.mxu0 0.0
    %5542 = vmatpush1.msra.mxu0 0.0
    %5543 = vmatprep.subr.mxu0 0.0
    %5544 = vmatpush1.msra.mxu0 0.0
    %5545 = vmatprep.subr.mxu0 0.0
    %5546 = vmatpush1.msra.mxu0 0.0
    %5547 = vmatprep.subr.mxu0 0.0
    %5548 = vmatpush1.msra.mxu0 0.0
    %5549 = vmatprep.subr.mxu0 0.0
    %5550 = vmatpush1.msra.mxu0 0.0
    %5551 = vmatprep.subr.mxu0 0.0
    %5552 = vmatpush1.msra.mxu0 0.0
    %5553 = vmatprep.subr.mxu0 0.0
    %5554 = vmatpush1.msra.mxu0 0.0
    %5555 = vmatprep.subr.mxu0 0.0
    %5556 = vmatpush1.msra.mxu0 0.0
    %5557 = vmatprep.subr.mxu0 0.0
    %5558 = vmatpush1.msra.mxu0 0.0
    %5559 = vmatprep.subr.mxu0 0.0
    %5560 = vmatpush1.msra.mxu0 0.0
    %5561 = vmatprep.subr.mxu0 0.0
    %5562 = vmatpush1.msra.mxu0 0.0
    %5563 = vmatprep.subr.mxu0 0.0
    %5564 = vmatpush1.msra.mxu0 0.0
    %5565 = vmatprep.subr.mxu0 0.0
    %5566 = vmatpush1.msra.mxu0 0.0
    %5567 = vmatprep.subr.mxu0 0.0
    %5568 = vmatpush1.msra.mxu0 0.0
    %5569 = vmatprep.subr.mxu0 0.0
    %5570 = vmatpush1.msra.mxu0 0.0
    %5571 = vmatprep.subr.mxu0 0.0
    %5572 = vmatpush1.msra.mxu0 0.0
    %5573 = vmatprep.subr.mxu0 0.0
    %5574 = vmatpush1.msra.mxu0 0.0
    %5575 = vmatprep.subr.mxu0 0.0
    %5576 = vmatpush1.msra.mxu0 0.0
    %5577 = vmatprep.subr.mxu0 0.0
    %5578 = vmatpush1.msra.mxu0 0.0
    %5579 = vmatprep.subr.mxu0 0.0
    %5580 = vmatpush1.msra.mxu0 0.0
    %5581 = vmatprep.subr.mxu0 0.0
    %5582 = vmatpush1.msra.mxu0 0.0
    %5583 = vmatprep.subr.mxu0 0.0
    %5584 = vmatpush1.msra.mxu0 0.0
    %5585 = vmatprep.subr.mxu0 0.0
    %5586 = vmatpush1.msra.mxu0 0.0
    %5587 = vmatprep.subr.mxu0 0.0
    %5588 = vmatpush1.msra.mxu0 0.0
    %5589 = vmatprep.subr.mxu0 0.0
    %5590 = vmatpush1.msra.mxu0 0.0
    %5591 = vmatprep.mubr.f32.mxu0 0.0
    %5592 = vmatmul.mubr.f32.gmra.mrb[0].mxu0 %v5504
    %v5593 = vpop.f32.mrb[0].mxu0
    %v5594 = vadd.f32 %v5501, %v5593
    %v5595 = vpop.f32.mrb[0].mxu0
    %5596 = vmatprep.mubr.f32.mxu0 0.0
    %5597 = vmatmul.mubr.f32.gmra.mrb[0].mxu0 %v5507
    %v5598 = vpop.f32.mrb[0].mxu0
    %v5599 = vadd.f32 %v5501, %v5598
    %v5600 = vpop.f32.mrb[0].mxu0
    %5601 = vmatprep.mubr.f32.mxu0 0.0
    %5602 = vmatmul.mubr.f32.gmra.mrb[0].mxu0 %v5510
    %v5603 = vpop.f32.mrb[0].mxu0
    %v5604 = vadd.f32 %v5501, %v5603
    %v5605 = vpop.f32.mrb[0].mxu0
    %5606 = vmatprep.mubr.f32.mxu0 0.0
    %5607 = vmatmul.mubr.f32.gmra.mrb[0].mxu0 %v5513
    %v5608 = vpop.f32.mrb[0].mxu0
    %v5609 = vadd.f32 %v5501, %v5608
    %v5610 = vpop.f32.mrb[0].mxu0
    %5611 = vmatprep.mubr.f32.mxu0 0.0
    %5612 = vmatmul.mubr.f32.gmra.mrb[0].mxu0 %v5516
    %v5613 = vpop.f32.mrb[0].mxu0
    %v5614 = vadd.f32 %v5501, %v5613
    %v5615 = vpop.f32.mrb[0].mxu0
    %5616 = vmatprep.mubr.f32.mxu0 0.0
    %5617 = vmatmul.mubr.f32.gmra.mrb[0].mxu0 %v5519
    %v5618 = vpop.f32.mrb[0].mxu0
    %v5619 = vadd.f32 %v5501, %v5618
    %v5620 = vpop.f32.mrb[0].mxu0
    %5621 = vmatprep.mubr.f32.mxu0 0.0
    %5622 = vmatmul.mubr.f32.gmra.mrb[0].mxu0 %v5522
    %v5623 = vpop.f32.mrb[0].mxu0
    %v5624 = vadd.f32 %v5501, %v5623
    %v5625 = vpop.f32.mrb[0].mxu0
    %5626 = vmatprep.mubr.f32.mxu0 0.0
    %5627 = vmatmul.mubr.f32.gmra.mrb[0].mxu0 %v5525
    %v5628 = vpop.f32.mrb[0].mxu0
    %v5629 = vadd.f32 %v5501, %v5628
    %v5630 = vpop.f32.mrb[0].mxu0
    %5631 = vdwg.mxu0
    %v5632 = vmax.f32 %v5594, 0.0
    %v5633 = vmax.f32 %v5599, 0.0
    %v5634 = vmax.f32 %v5604, 0.0
    %v5635 = vmax.f32 %v5609, 0.0
    %v5636 = vmax.f32 %v5614, 0.0
    %v5637 = vmax.f32 %v5619, 0.0
    %v5638 = vmax.f32 %v5624, 0.0
    %v5639 = vmax.f32 %v5629, 0.0
    %v5640 = vsel %vm1519, %v5632, 0.0
    %5641 = vadd.xlane.f32.xlu0 %v5640
    %v5642 = vpop.xlane.xlu0 %5641
    %v5643 = vsel %vm1519, %v5633, 0.0
    %5644 = vadd.xlane.f32.xlu0 %v5643
    %v5645 = vpop.xlane.xlu0 %5644
    %v5646 = vsel %vm1519, %v5634, 0.0
    %5647 = vadd.xlane.f32.xlu0 %v5646
    %v5648 = vpop.xlane.xlu0 %5647
    %v5649 = vsel %vm1519, %v5635, 0.0
    %5650 = vadd.xlane.f32.xlu0 %v5649
    %v5651 = vpop.xlane.xlu0 %5650
    %v5652 = vsel %vm1519, %v5636, 0.0
    %5653 = vadd.xlane.f32.xlu0 %v5652
    %v5654 = vpop.xlane.xlu0 %5653
    %v5655 = vsel %vm1519, %v5637, 0.0
    %5656 = vadd.xlane.f32.xlu0 %v5655
    %v5657 = vpop.xlane.xlu0 %5656
    %v5658 = vsel %vm1519, %v5638, 0.0
    %5659 = vadd.xlane.f32.xlu0 %v5658
    %v5660 = vpop.xlane.xlu0 %5659
    %v5661 = vsel %vm1519, %v5639, 0.0
    %5662 = vadd.xlane.f32.xlu0 %v5661
    %v5663 = vpop.xlane.xlu0 %5662
    %v5664 = vrcp.pop 64.0
    %v5665 = vmul.f32 %v5642, %v5664
    %v5666 = vmul.f32 %v5645, %v5664
    %v5667 = vmul.f32 %v5648, %v5664
    %v5668 = vmul.f32 %v5651, %v5664
    %v5669 = vmul.f32 %v5654, %v5664
    %v5670 = vmul.f32 %v5657, %v5664
    %v5671 = vmul.f32 %v5660, %v5664
    %v5672 = vmul.f32 %v5663, %v5664
    %v5673 = vsub.f32 %v5632, %v5665
    %v5674 = vsub.f32 %v5633, %v5666
    %v5675 = vsub.f32 %v5634, %v5667
    %v5676 = vsub.f32 %v5635, %v5668
    %v5677 = vsub.f32 %v5636, %v5669
    %v5678 = vsub.f32 %v5637, %v5670
    %v5679 = vsub.f32 %v5638, %v5671
    %v5680 = vsub.f32 %v5639, %v5672
    %v5681 = vmul.f32 %v5673, %v5673
    %v5682 = vmul.f32 %v5674, %v5674
    %v5683 = vmul.f32 %v5675, %v5675
    %v5684 = vmul.f32 %v5676, %v5676
    %v5685 = vmul.f32 %v5677, %v5677
    %v5686 = vmul.f32 %v5678, %v5678
    %v5687 = vmul.f32 %v5679, %v5679
    %v5688 = vmul.f32 %v5680, %v5680
    %v5689 = vsel %vm1519, %v5681, 0.0
    %5690 = vadd.xlane.f32.xlu0 %v5689
    %v5691 = vpop.xlane.xlu0 %5690
    %v5692 = vsel %vm1519, %v5682, 0.0
    %5693 = vadd.xlane.f32.xlu0 %v5692
    %v5694 = vpop.xlane.xlu0 %5693
    %v5695 = vsel %vm1519, %v5683, 0.0
    %5696 = vadd.xlane.f32.xlu0 %v5695
    %v5697 = vpop.xlane.xlu0 %5696
    %v5698 = vsel %vm1519, %v5684, 0.0
    %5699 = vadd.xlane.f32.xlu0 %v5698
    %v5700 = vpop.xlane.xlu0 %5699
    %v5701 = vsel %vm1519, %v5685, 0.0
    %5702 = vadd.xlane.f32.xlu0 %v5701
    %v5703 = vpop.xlane.xlu0 %5702
    %v5704 = vsel %vm1519, %v5686, 0.0
    %5705 = vadd.xlane.f32.xlu0 %v5704
    %v5706 = vpop.xlane.xlu0 %5705
    %v5707 = vsel %vm1519, %v5687, 0.0
    %5708 = vadd.xlane.f32.xlu0 %v5707
    %v5709 = vpop.xlane.xlu0 %5708
    %v5710 = vsel %vm1519, %v5688, 0.0
    %5711 = vadd.xlane.f32.xlu0 %v5710
    %v5712 = vpop.xlane.xlu0 %5711
    %v5713 = vmul.f32 %v5691, %v5664
    %v5714 = vmul.f32 %v5694, %v5664
    %v5715 = vmul.f32 %v5697, %v5664
    %v5716 = vmul.f32 %v5700, %v5664
    %v5717 = vmul.f32 %v5703, %v5664
    %v5718 = vmul.f32 %v5706, %v5664
    %v5719 = vmul.f32 %v5709, %v5664
    %v5720 = vmul.f32 %v5712, %v5664
    %v5721 = vadd.f32 %v5713, 1e-05
    %v5722 = vadd.f32 %v5714, 1e-05
    %v5723 = vadd.f32 %v5715, 1e-05
    %v5724 = vadd.f32 %v5716, 1e-05
    %v5725 = vadd.f32 %v5717, 1e-05
    %v5726 = vadd.f32 %v5718, 1e-05
    %v5727 = vadd.f32 %v5719, 1e-05
    %v5728 = vadd.f32 %v5720, 1e-05
    %v5729 = vrsqrt.pop %v5721
    %v5730 = vrsqrt.pop %v5722
    %v5731 = vrsqrt.pop %v5723
    %v5732 = vrsqrt.pop %v5724
    %v5733 = vrsqrt.pop %v5725
    %v5734 = vrsqrt.pop %v5726
    %v5735 = vrsqrt.pop %v5727
    %v5736 = vrsqrt.pop %v5728
    %v5737 = vmul.f32 %v5673, %v5729
    %v5738 = vmul.f32 %v5674, %v5730
    %v5739 = vmul.f32 %v5675, %v5731
    %v5740 = vmul.f32 %v5676, %v5732
    %v5741 = vmul.f32 %v5677, %v5733
    %v5742 = vmul.f32 %v5678, %v5734
    %v5743 = vmul.f32 %v5679, %v5735
    %v5744 = vmul.f32 %v5680, %v5736
    %v5746 = vlaneseq
    %v5747 = vshrl.u32 %v5746, 7
    %v5748 = vsub.s32 0, %v5747
    %v5749 = vrot.slane %v5493, %v5748
    %v5751 = vmul.f32 %v5737, %v5749
    %v5752 = vmul.f32 %v5738, %v5749
    %v5753 = vmul.f32 %v5739, %v5749
    %v5754 = vmul.f32 %v5740, %v5749
    %v5755 = vmul.f32 %v5741, %v5749
    %v5756 = vmul.f32 %v5742, %v5749
    %v5757 = vmul.f32 %v5743, %v5749
    %v5758 = vmul.f32 %v5744, %v5749
    %v5760 = vlaneseq
    %v5761 = vshrl.u32 %v5760, 7
    %v5762 = vsub.s32 0, %v5761
    %v5763 = vrot.slane %v5494, %v5762
    %v5765 = vadd.f32 %v5751, %v5763
    %v5766 = vadd.f32 %v5752, %v5763
    %v5767 = vadd.f32 %v5753, %v5763
    %v5768 = vadd.f32 %v5754, %v5763
    %v5769 = vadd.f32 %v5755, %v5763
    %v5770 = vadd.f32 %v5756, %v5763
    %v5771 = vadd.f32 %v5757, %v5763
    %v5772 = vadd.f32 %v5758, %v5763
    %5781 = vrot.lane.b32.xlu0 %v5632, 64
    %v5782 = vpop.permute.xlu0 %5781
    %5783 = vrot.lane.b32.xlu0 %v5633, 64
    %v5784 = vpop.permute.xlu0 %5783
    %5785 = vrot.lane.b32.xlu0 %v5634, 64
    %v5786 = vpop.permute.xlu0 %5785
    %5787 = vrot.lane.b32.xlu0 %v5635, 64
    %v5788 = vpop.permute.xlu0 %5787
    %5789 = vrot.lane.b32.xlu0 %v5636, 64
    %v5790 = vpop.permute.xlu0 %5789
    %5791 = vrot.lane.b32.xlu0 %v5637, 64
    %v5792 = vpop.permute.xlu0 %5791
    %5793 = vrot.lane.b32.xlu0 %v5638, 64
    %v5794 = vpop.permute.xlu0 %5793
    %5795 = vrot.lane.b32.xlu0 %v5639, 64
    %v5796 = vpop.permute.xlu0 %5795
    %v5805 = vsel %vm1519, %v5782, 0.0
    %5806 = vadd.xlane.f32.xlu0 %v5805
    %v5807 = vpop.xlane.xlu0 %5806
    %v5808 = vsel %vm1519, %v5784, 0.0
    %5809 = vadd.xlane.f32.xlu0 %v5808
    %v5810 = vpop.xlane.xlu0 %5809
    %v5811 = vsel %vm1519, %v5786, 0.0
    %5812 = vadd.xlane.f32.xlu0 %v5811
    %v5813 = vpop.xlane.xlu0 %5812
    %v5814 = vsel %vm1519, %v5788, 0.0
    %5815 = vadd.xlane.f32.xlu0 %v5814
    %v5816 = vpop.xlane.xlu0 %5815
    %v5817 = vsel %vm1519, %v5790, 0.0
    %5818 = vadd.xlane.f32.xlu0 %v5817
    %v5819 = vpop.xlane.xlu0 %5818
    %v5820 = vsel %vm1519, %v5792, 0.0
    %5821 = vadd.xlane.f32.xlu0 %v5820
    %v5822 = vpop.xlane.xlu0 %5821
    %v5823 = vsel %vm1519, %v5794, 0.0
    %5824 = vadd.xlane.f32.xlu0 %v5823
    %v5825 = vpop.xlane.xlu0 %5824
    %v5826 = vsel %vm1519, %v5796, 0.0
    %5827 = vadd.xlane.f32.xlu0 %v5826
    %v5828 = vpop.xlane.xlu0 %5827
    %v5829 = vmul.f32 %v5807, %v5664
    %v5830 = vmul.f32 %v5810, %v5664
    %v5831 = vmul.f32 %v5813, %v5664
    %v5832 = vmul.f32 %v5816, %v5664
    %v5833 = vmul.f32 %v5819, %v5664
    %v5834 = vmul.f32 %v5822, %v5664
    %v5835 = vmul.f32 %v5825, %v5664
    %v5836 = vmul.f32 %v5828, %v5664
    %v5837 = vsub.f32 %v5632, %v5829
    %v5838 = vsub.f32 %v5633, %v5830
    %v5839 = vsub.f32 %v5634, %v5831
    %v5840 = vsub.f32 %v5635, %v5832
    %v5841 = vsub.f32 %v5636, %v5833
    %v5842 = vsub.f32 %v5637, %v5834
    %v5843 = vsub.f32 %v5638, %v5835
    %v5844 = vsub.f32 %v5639, %v5836
    %v5845 = vmul.f32 %v5837, %v5837
    %v5846 = vmul.f32 %v5838, %v5838
    %v5847 = vmul.f32 %v5839, %v5839
    %v5848 = vmul.f32 %v5840, %v5840
    %v5849 = vmul.f32 %v5841, %v5841
    %v5850 = vmul.f32 %v5842, %v5842
    %v5851 = vmul.f32 %v5843, %v5843
    %v5852 = vmul.f32 %v5844, %v5844
    %5861 = vrot.lane.b32.xlu0 %v5845, 64
    %v5862 = vpop.permute.xlu0 %5861
    %5863 = vrot.lane.b32.xlu0 %v5846, 64
    %v5864 = vpop.permute.xlu0 %5863
    %5865 = vrot.lane.b32.xlu0 %v5847, 64
    %v5866 = vpop.permute.xlu0 %5865
    %5867 = vrot.lane.b32.xlu0 %v5848, 64
    %v5868 = vpop.permute.xlu0 %5867
    %5869 = vrot.lane.b32.xlu0 %v5849, 64
    %v5870 = vpop.permute.xlu0 %5869
    %5871 = vrot.lane.b32.xlu0 %v5850, 64
    %v5872 = vpop.permute.xlu0 %5871
    %5873 = vrot.lane.b32.xlu0 %v5851, 64
    %v5874 = vpop.permute.xlu0 %5873
    %5875 = vrot.lane.b32.xlu0 %v5852, 64
    %v5876 = vpop.permute.xlu0 %5875
    %v5885 = vsel %vm1519, %v5862, 0.0
    %5886 = vadd.xlane.f32.xlu0 %v5885
    %v5887 = vpop.xlane.xlu0 %5886
    %v5888 = vsel %vm1519, %v5864, 0.0
    %5889 = vadd.xlane.f32.xlu0 %v5888
    %v5890 = vpop.xlane.xlu0 %5889
    %v5891 = vsel %vm1519, %v5866, 0.0
    %5892 = vadd.xlane.f32.xlu0 %v5891
    %v5893 = vpop.xlane.xlu0 %5892
    %v5894 = vsel %vm1519, %v5868, 0.0
    %5895 = vadd.xlane.f32.xlu0 %v5894
    %v5896 = vpop.xlane.xlu0 %5895
    %v5897 = vsel %vm1519, %v5870, 0.0
    %5898 = vadd.xlane.f32.xlu0 %v5897
    %v5899 = vpop.xlane.xlu0 %5898
    %v5900 = vsel %vm1519, %v5872, 0.0
    %5901 = vadd.xlane.f32.xlu0 %v5900
    %v5902 = vpop.xlane.xlu0 %5901
    %v5903 = vsel %vm1519, %v5874, 0.0
    %5904 = vadd.xlane.f32.xlu0 %v5903
    %v5905 = vpop.xlane.xlu0 %5904
    %v5906 = vsel %vm1519, %v5876, 0.0
    %5907 = vadd.xlane.f32.xlu0 %v5906
    %v5908 = vpop.xlane.xlu0 %5907
    %v5909 = vmul.f32 %v5887, %v5664
    %v5910 = vmul.f32 %v5890, %v5664
    %v5911 = vmul.f32 %v5893, %v5664
    %v5912 = vmul.f32 %v5896, %v5664
    %v5913 = vmul.f32 %v5899, %v5664
    %v5914 = vmul.f32 %v5902, %v5664
    %v5915 = vmul.f32 %v5905, %v5664
    %v5916 = vmul.f32 %v5908, %v5664
    %v5917 = vadd.f32 %v5909, 1e-05
    %v5918 = vadd.f32 %v5910, 1e-05
    %v5919 = vadd.f32 %v5911, 1e-05
    %v5920 = vadd.f32 %v5912, 1e-05
    %v5921 = vadd.f32 %v5913, 1e-05
    %v5922 = vadd.f32 %v5914, 1e-05
    %v5923 = vadd.f32 %v5915, 1e-05
    %v5924 = vadd.f32 %v5916, 1e-05
    %v5925 = vrsqrt.pop %v5917
    %v5926 = vrsqrt.pop %v5918
    %v5927 = vrsqrt.pop %v5919
    %v5928 = vrsqrt.pop %v5920
    %v5929 = vrsqrt.pop %v5921
    %v5930 = vrsqrt.pop %v5922
    %v5931 = vrsqrt.pop %v5923
    %v5932 = vrsqrt.pop %v5924
    %v5933 = vmul.f32 %v5837, %v5925
    %v5934 = vmul.f32 %v5838, %v5926
    %v5935 = vmul.f32 %v5839, %v5927
    %v5936 = vmul.f32 %v5840, %v5928
    %v5937 = vmul.f32 %v5841, %v5929
    %v5938 = vmul.f32 %v5842, %v5930
    %v5939 = vmul.f32 %v5843, %v5931
    %v5940 = vmul.f32 %v5844, %v5932
    %v5942 = vlaneseq
    %v5943 = vshrl.u32 %v5942, 7
    %v5944 = vsub.s32 0, %v5943
    %v5945 = vrot.slane %v5495, %v5944
    %5946 = vrot.lane.b32.xlu0 %v5945, 64
    %v5947 = vpop.permute.xlu0 %5946
    %v5949 = vmul.f32 %v5933, %v5947
    %v5950 = vmul.f32 %v5934, %v5947
    %v5951 = vmul.f32 %v5935, %v5947
    %v5952 = vmul.f32 %v5936, %v5947
    %v5953 = vmul.f32 %v5937, %v5947
    %v5954 = vmul.f32 %v5938, %v5947
    %v5955 = vmul.f32 %v5939, %v5947
    %v5956 = vmul.f32 %v5940, %v5947
    %v5958 = vlaneseq
    %v5959 = vshrl.u32 %v5958, 7
    %v5960 = vsub.s32 0, %v5959
    %v5961 = vrot.slane %v5496, %v5960
    %5962 = vrot.lane.b32.xlu0 %v5961, 64
    %v5963 = vpop.permute.xlu0 %5962
    %v5965 = vadd.f32 %v5949, %v5963
    %v5966 = vadd.f32 %v5950, %v5963
    %v5967 = vadd.f32 %v5951, %v5963
    %v5968 = vadd.f32 %v5952, %v5963
    %v5969 = vadd.f32 %v5953, %v5963
    %v5970 = vadd.f32 %v5954, %v5963
    %v5971 = vadd.f32 %v5955, %v5963
    %v5972 = vadd.f32 %v5956, %v5963
    %v5973 = vld [vmem:[%s95] sm:$0xff]
    %v5974 = vld [vmem:[%s95 + $0x8] sm:$0xff]
    %v5975 = vld [vmem:[%s95 + $0x10] sm:$0xff]
    %v5976 = vld [vmem:[%s95 + $0x18] sm:$0xff]
    %v5977 = vld [vmem:[%s95 + $0x20] sm:$0xff]
    %v5978 = vld [vmem:[%s95 + $0x28] sm:$0xff]
    %v5979 = vld [vmem:[%s95 + $0x30] sm:$0xff]
    %v5980 = vld [vmem:[%s95 + $0x38] sm:$0xff]
    %v5981 = vld [vmem:[#allocation6] sm:$0x1]
    %v5983 = vlaneseq
    %v5984 = vshrl.u32 %v5983, 7
    %v5985 = vsub.s32 0, %v5984
    %v5986 = vrot.slane %v5981, %v5985
    %v5989 = vsel %vm1519, %v5765, 0
    %v5992 = vsel %vm1519, %v5766, 0
    %v5995 = vsel %vm1519, %v5767, 0
    %v5998 = vsel %vm1519, %v5768, 0
    %v6001 = vsel %vm1519, %v5769, 0
    %v6004 = vsel %vm1519, %v5770, 0
    %v6007 = vsel %vm1519, %v5771, 0
    %v6010 = vsel %vm1519, %v5772, 0
    %6012 = vmatprep.subr.mxu0 0.0
    %6013 = vmatpush1.msra.mxu0 %v5973
    %6014 = vmatprep.subr.mxu0 0.0
    %6015 = vmatpush1.msra.mxu0 %v5974
    %6016 = vmatprep.subr.mxu0 0.0
    %6017 = vmatpush1.msra.mxu0 %v5975
    %6018 = vmatprep.subr.mxu0 0.0
    %6019 = vmatpush1.msra.mxu0 %v5976
    %6020 = vmatprep.subr.mxu0 0.0
    %6021 = vmatpush1.msra.mxu0 %v5977
    %6022 = vmatprep.subr.mxu0 0.0
    %6023 = vmatpush1.msra.mxu0 %v5978
    %6024 = vmatprep.subr.mxu0 0.0
    %6025 = vmatpush1.msra.mxu0 %v5979
    %6026 = vmatprep.subr.mxu0 0.0
    %6027 = vmatpush1.msra.mxu0 %v5980
    %6028 = vmatprep.subr.mxu0 0.0
    %6029 = vmatpush1.msra.mxu0 0.0
    %6030 = vmatprep.subr.mxu0 0.0
    %6031 = vmatpush1.msra.mxu0 0.0
    %6032 = vmatprep.subr.mxu0 0.0
    %6033 = vmatpush1.msra.mxu0 0.0
    %6034 = vmatprep.subr.mxu0 0.0
    %6035 = vmatpush1.msra.mxu0 0.0
    %6036 = vmatprep.subr.mxu0 0.0
    %6037 = vmatpush1.msra.mxu0 0.0
    %6038 = vmatprep.subr.mxu0 0.0
    %6039 = vmatpush1.msra.mxu0 0.0
    %6040 = vmatprep.subr.mxu0 0.0
    %6041 = vmatpush1.msra.mxu0 0.0
    %6042 = vmatprep.subr.mxu0 0.0
    %6043 = vmatpush1.msra.mxu0 0.0
    %6044 = vmatprep.subr.mxu0 0.0
    %6045 = vmatpush1.msra.mxu0 0.0
    %6046 = vmatprep.subr.mxu0 0.0
    %6047 = vmatpush1.msra.mxu0 0.0
    %6048 = vmatprep.subr.mxu0 0.0
    %6049 = vmatpush1.msra.mxu0 0.0
    %6050 = vmatprep.subr.mxu0 0.0
    %6051 = vmatpush1.msra.mxu0 0.0
    %6052 = vmatprep.subr.mxu0 0.0
    %6053 = vmatpush1.msra.mxu0 0.0
    %6054 = vmatprep.subr.mxu0 0.0
    %6055 = vmatpush1.msra.mxu0 0.0
    %6056 = vmatprep.subr.mxu0 0.0
    %6057 = vmatpush1.msra.mxu0 0.0
    %6058 = vmatprep.subr.mxu0 0.0
    %6059 = vmatpush1.msra.mxu0 0.0
    %6060 = vmatprep.subr.mxu0 0.0
    %6061 = vmatpush1.msra.mxu0 0.0
    %6062 = vmatprep.subr.mxu0 0.0
    %6063 = vmatpush1.msra.mxu0 0.0
    %6064 = vmatprep.subr.mxu0 0.0
    %6065 = vmatpush1.msra.mxu0 0.0
    %6066 = vmatprep.subr.mxu0 0.0
    %6067 = vmatpush1.msra.mxu0 0.0
    %6068 = vmatprep.subr.mxu0 0.0
    %6069 = vmatpush1.msra.mxu0 0.0
    %6070 = vmatprep.subr.mxu0 0.0
    %6071 = vmatpush1.msra.mxu0 0.0
    %6072 = vmatprep.subr.mxu0 0.0
    %6073 = vmatpush1.msra.mxu0 0.0
    %6074 = vmatprep.subr.mxu0 0.0
    %6075 = vmatpush1.msra.mxu0 0.0
    %6076 = vmatprep.mubr.f32.mxu0 0.0
    %6077 = vmatmul.mubr.f32.gmra.mrb[0].mxu0 %v5989
    %v6078 = vpop.f32.mrb[0].mxu0
    %v6079 = vadd.f32 %v5986, %v6078
    %v6080 = vpop.f32.mrb[0].mxu0
    %6081 = vmatprep.mubr.f32.mxu0 0.0
    %6082 = vmatmul.mubr.f32.gmra.mrb[0].mxu0 %v5992
    %v6083 = vpop.f32.mrb[0].mxu0
    %v6084 = vadd.f32 %v5986, %v6083
    %v6085 = vpop.f32.mrb[0].mxu0
    %6086 = vmatprep.mubr.f32.mxu0 0.0
    %6087 = vmatmul.mubr.f32.gmra.mrb[0].mxu0 %v5995
    %v6088 = vpop.f32.mrb[0].mxu0
    %v6089 = vadd.f32 %v5986, %v6088
    %v6090 = vpop.f32.mrb[0].mxu0
    %6091 = vmatprep.mubr.f32.mxu0 0.0
    %6092 = vmatmul.mubr.f32.gmra.mrb[0].mxu0 %v5998
    %v6093 = vpop.f32.mrb[0].mxu0
    %v6094 = vadd.f32 %v5986, %v6093
    %v6095 = vpop.f32.mrb[0].mxu0
    %6096 = vmatprep.mubr.f32.mxu0 0.0
    %6097 = vmatmul.mubr.f32.gmra.mrb[0].mxu0 %v6001
    %v6098 = vpop.f32.mrb[0].mxu0
    %v6099 = vadd.f32 %v5986, %v6098
    %v6100 = vpop.f32.mrb[0].mxu0
    %6101 = vmatprep.mubr.f32.mxu0 0.0
    %6102 = vmatmul.mubr.f32.gmra.mrb[0].mxu0 %v6004
    %v6103 = vpop.f32.mrb[0].mxu0
    %v6104 = vadd.f32 %v5986, %v6103
    %v6105 = vpop.f32.mrb[0].mxu0
    %6106 = vmatprep.mubr.f32.mxu0 0.0
    %6107 = vmatmul.mubr.f32.gmra.mrb[0].mxu0 %v6007
    %v6108 = vpop.f32.mrb[0].mxu0
    %v6109 = vadd.f32 %v5986, %v6108
    %v6110 = vpop.f32.mrb[0].mxu0
    %6111 = vmatprep.mubr.f32.mxu0 0.0
    %6112 = vmatmul.mubr.f32.gmra.mrb[0].mxu0 %v6010
    %v6113 = vpop.f32.mrb[0].mxu0
    %v6114 = vadd.f32 %v5986, %v6113
    %v6115 = vpop.f32.mrb[0].mxu0
    %6116 = vdwg.mxu0
    %vm6117 = vcmask 64512
    %6118 = vst.msk [vmem:[#allocation8] sm:$0xff] %vm6117, %v6079
    %6119 = vst.msk [vmem:[#allocation8 + $0x8] sm:$0xff] %vm6117, %v6084
    %6120 = vst.msk [vmem:[#allocation8 + $0x10] sm:$0xff] %vm6117, %v6089
    %6121 = vst.msk [vmem:[#allocation8 + $0x18] sm:$0xff] %vm6117, %v6094
    %6122 = vst.msk [vmem:[#allocation8 + $0x20] sm:$0xff] %vm6117, %v6099
    %6123 = vst.msk [vmem:[#allocation8 + $0x28] sm:$0xff] %vm6117, %v6104
    %6124 = vst.msk [vmem:[#allocation8 + $0x30] sm:$0xff] %vm6117, %v6109
    %6125 = vst.msk [vmem:[#allocation8 + $0x38] sm:$0xff] %vm6117, %v6114
    %v6126 = vld [vmem:[%s99] sm:$0xff]
    %v6127 = vld [vmem:[%s99 + $0x8] sm:$0xff]
    %v6128 = vld [vmem:[%s99 + $0x10] sm:$0xff]
    %v6129 = vld [vmem:[%s99 + $0x18] sm:$0xff]
    %v6130 = vld [vmem:[%s99 + $0x20] sm:$0xff]
    %v6131 = vld [vmem:[%s99 + $0x28] sm:$0xff]
    %v6132 = vld [vmem:[%s99 + $0x30] sm:$0xff]
    %v6133 = vld [vmem:[%s99 + $0x38] sm:$0xff]
    %v6134 = vld [vmem:[#allocation2] sm:$0x1]
    %v6136 = vlaneseq
    %v6137 = vshrl.u32 %v6136, 7
    %v6138 = vsub.s32 0, %v6137
    %v6139 = vrot.slane %v6134, %v6138
    %6149 = vrot.lane.b32.xlu0 %v5965, 64
    %v6150 = vpop.permute.xlu0 %6149
    %6151 = vrot.lane.b32.xlu0 %v5966, 64
    %v6152 = vpop.permute.xlu0 %6151
    %6153 = vrot.lane.b32.xlu0 %v5967, 64
    %v6154 = vpop.permute.xlu0 %6153
    %6155 = vrot.lane.b32.xlu0 %v5968, 64
    %v6156 = vpop.permute.xlu0 %6155
    %6157 = vrot.lane.b32.xlu0 %v5969, 64
    %v6158 = vpop.permute.xlu0 %6157
    %6159 = vrot.lane.b32.xlu0 %v5970, 64
    %v6160 = vpop.permute.xlu0 %6159
    %6161 = vrot.lane.b32.xlu0 %v5971, 64
    %v6162 = vpop.permute.xlu0 %6161
    %6163 = vrot.lane.b32.xlu0 %v5972, 64
    %v6164 = vpop.permute.xlu0 %6163
    %v6165 = vsel %vm1519, %v6150, 0
    %v6167 = vsel %vm1519, %v6152, 0
    %v6169 = vsel %vm1519, %v6154, 0
    %v6171 = vsel %vm1519, %v6156, 0
    %v6173 = vsel %vm1519, %v6158, 0
    %v6175 = vsel %vm1519, %v6160, 0
    %v6177 = vsel %vm1519, %v6162, 0
    %v6179 = vsel %vm1519, %v6164, 0
    %6181 = vmatprep.subr.mxu0 0.0
    %6182 = vmatpush1.msra.mxu0 %v6126
    %6183 = vmatprep.subr.mxu0 0.0
    %6184 = vmatpush1.msra.mxu0 %v6127
    %6185 = vmatprep.subr.mxu0 0.0
    %6186 = vmatpush1.msra.mxu0 %v6128
    %6187 = vmatprep.subr.mxu0 0.0
    %6188 = vmatpush1.msra.mxu0 %v6129
    %6189 = vmatprep.subr.mxu0 0.0
    %6190 = vmatpush1.msra.mxu0 %v6130
    %6191 = vmatprep.subr.mxu0 0.0
    %6192 = vmatpush1.msra.mxu0 %v6131
    %6193 = vmatprep.subr.mxu0 0.0
    %6194 = vmatpush1.msra.mxu0 %v6132
    %6195 = vmatprep.subr.mxu0 0.0
    %6196 = vmatpush1.msra.mxu0 %v6133
    %6197 = vmatprep.subr.mxu0 0.0
    %6198 = vmatpush1.msra.mxu0 0.0
    %6199 = vmatprep.subr.mxu0 0.0
    %6200 = vmatpush1.msra.mxu0 0.0
    %6201 = vmatprep.subr.mxu0 0.0
    %6202 = vmatpush1.msra.mxu0 0.0
    %6203 = vmatprep.subr.mxu0 0.0
    %6204 = vmatpush1.msra.mxu0 0.0
    %6205 = vmatprep.subr.mxu0 0.0
    %6206 = vmatpush1.msra.mxu0 0.0
    %6207 = vmatprep.subr.mxu0 0.0
    %6208 = vmatpush1.msra.mxu0 0.0
    %6209 = vmatprep.subr.mxu0 0.0
    %6210 = vmatpush1.msra.mxu0 0.0
    %6211 = vmatprep.subr.mxu0 0.0
    %6212 = vmatpush1.msra.mxu0 0.0
    %6213 = vmatprep.subr.mxu0 0.0
    %6214 = vmatpush1.msra.mxu0 0.0
    %6215 = vmatprep.subr.mxu0 0.0
    %6216 = vmatpush1.msra.mxu0 0.0
    %6217 = vmatprep.subr.mxu0 0.0
    %6218 = vmatpush1.msra.mxu0 0.0
    %6219 = vmatprep.subr.mxu0 0.0
    %6220 = vmatpush1.msra.mxu0 0.0
    %6221 = vmatprep.subr.mxu0 0.0
    %6222 = vmatpush1.msra.mxu0 0.0
    %6223 = vmatprep.subr.mxu0 0.0
    %6224 = vmatpush1.msra.mxu0 0.0
    %6225 = vmatprep.subr.mxu0 0.0
    %6226 = vmatpush1.msra.mxu0 0.0
    %6227 = vmatprep.subr.mxu0 0.0
    %6228 = vmatpush1.msra.mxu0 0.0
    %6229 = vmatprep.subr.mxu0 0.0
    %6230 = vmatpush1.msra.mxu0 0.0
    %6231 = vmatprep.subr.mxu0 0.0
    %6232 = vmatpush1.msra.mxu0 0.0
    %6233 = vmatprep.subr.mxu0 0.0
    %6234 = vmatpush1.msra.mxu0 0.0
    %6235 = vmatprep.subr.mxu0 0.0
    %6236 = vmatpush1.msra.mxu0 0.0
    %6237 = vmatprep.subr.mxu0 0.0
    %6238 = vmatpush1.msra.mxu0 0.0
    %6239 = vmatprep.subr.mxu0 0.0
    %6240 = vmatpush1.msra.mxu0 0.0
    %6241 = vmatprep.subr.mxu0 0.0
    %6242 = vmatpush1.msra.mxu0 0.0
    %6243 = vmatprep.subr.mxu0 0.0
    %6244 = vmatpush1.msra.mxu0 0.0
    %6245 = vmatprep.mubr.f32.mxu0 0.0
    %6246 = vmatmul.mubr.f32.gmra.mrb[0].mxu0 %v6165
    %v6247 = vpop.f32.mrb[0].mxu0
    %v6248 = vadd.f32 %v6139, %v6247
    %v6249 = vpop.f32.mrb[0].mxu0
    %6250 = vmatprep.mubr.f32.mxu0 0.0
    %6251 = vmatmul.mubr.f32.gmra.mrb[0].mxu0 %v6167
    %v6252 = vpop.f32.mrb[0].mxu0
    %v6253 = vadd.f32 %v6139, %v6252
    %v6254 = vpop.f32.mrb[0].mxu0
    %6255 = vmatprep.mubr.f32.mxu0 0.0
    %6256 = vmatmul.mubr.f32.gmra.mrb[0].mxu0 %v6169
    %v6257 = vpop.f32.mrb[0].mxu0
    %v6258 = vadd.f32 %v6139, %v6257
    %v6259 = vpop.f32.mrb[0].mxu0
    %6260 = vmatprep.mubr.f32.mxu0 0.0
    %6261 = vmatmul.mubr.f32.gmra.mrb[0].mxu0 %v6171
    %v6262 = vpop.f32.mrb[0].mxu0
    %v6263 = vadd.f32 %v6139, %v6262
    %v6264 = vpop.f32.mrb[0].mxu0
    %6265 = vmatprep.mubr.f32.mxu0 0.0
    %6266 = vmatmul.mubr.f32.gmra.mrb[0].mxu0 %v6173
    %v6267 = vpop.f32.mrb[0].mxu0
    %v6268 = vadd.f32 %v6139, %v6267
    %v6269 = vpop.f32.mrb[0].mxu0
    %6270 = vmatprep.mubr.f32.mxu0 0.0
    %6271 = vmatmul.mubr.f32.gmra.mrb[0].mxu0 %v6175
    %v6272 = vpop.f32.mrb[0].mxu0
    %v6273 = vadd.f32 %v6139, %v6272
    %v6274 = vpop.f32.mrb[0].mxu0
    %6275 = vmatprep.mubr.f32.mxu0 0.0
    %6276 = vmatmul.mubr.f32.gmra.mrb[0].mxu0 %v6177
    %v6277 = vpop.f32.mrb[0].mxu0
    %v6278 = vadd.f32 %v6139, %v6277
    %v6279 = vpop.f32.mrb[0].mxu0
    %6280 = vmatprep.mubr.f32.mxu0 0.0
    %6281 = vmatmul.mubr.f32.gmra.mrb[0].mxu0 %v6179
    %v6282 = vpop.f32.mrb[0].mxu0
    %v6283 = vadd.f32 %v6139, %v6282
    %v6284 = vpop.f32.mrb[0].mxu0
    %6285 = vdwg.mxu0
    %vm6286 = vcmask 7168
    %6287 = vst.msk [vmem:[%s105] sm:$0xff] %vm6286, %v6248
    %6288 = vst.msk [vmem:[%s105 + $0x8] sm:$0xff] %vm6286, %v6253
    %6289 = vst.msk [vmem:[%s105 + $0x10] sm:$0xff] %vm6286, %v6258
    %6290 = vst.msk [vmem:[%s105 + $0x18] sm:$0xff] %vm6286, %v6263
    %6291 = vst.msk [vmem:[%s105 + $0x20] sm:$0xff] %vm6286, %v6268
    %6292 = vst.msk [vmem:[%s105 + $0x28] sm:$0xff] %vm6286, %v6273
    %6293 = vst.msk [vmem:[%s105 + $0x30] sm:$0xff] %vm6286, %v6278
    %6294 = vst.msk [vmem:[%s105 + $0x38] sm:$0xff] %vm6286, %v6283
    // Predicated region
    $region214: #{forward.1} parent=1 // pred_check
      _
    $region215: #{forward.1} parent=1 // pred_check_branch
      %6296 = sbr.rel (0) target = $region217
    $region216: #{forward.1} parent=1 // pred_region
      %s6298 = ssub.s32 1024, 1024
      %6299 = vsyncadd [#allocation5], %s6298
      %s6300 = sshll.u32 [#allocation8], 4
      %s6301 = int_to_ptr.vmem [resolvable:$true] %s6300
      %6306 = dma.vmem_to_hbm [thread:$0]  %s6301, 1024, %s103, [#allocation5], 128, 128, 8
    $region217: #{forward.1} parent=1 // pred_fallthru
      _
    // Predicated region
    $region218: #{forward.1} parent=1 // pred_check
      _
    $region219: #{forward.1} parent=1 // pred_check_branch
      %6308 = sbr.rel (0) target = $region221
    $region220: #{forward.1} parent=1 // pred_region
      _
    $region221: #{forward.1} parent=1 // pred_fallthru
      _
    // Predicated region
    $region222: #{forward.1} parent=1 // pred_check
      _
    $region223: #{forward.1} parent=1 // pred_check_branch
      %6310 = sbr.rel (0) target = $region225
    $region224: #{forward.1} parent=1 // pred_region
      %6311 = dma.done [#allocation5], 1024
    $region225: #{forward.1} parent=1 // pred_fallthru
      _
    // Predicated region
    $region226: #{forward.1} parent=1 // pred_check
      _
    $region227: #{forward.1} parent=1 // pred_check_branch
      %6313 = sbr.rel (0) target = $region229
    $region228: #{forward.1} parent=1 // pred_region
      _
    $region229: #{forward.1} parent=1 // pred_fallthru
      _
    %6314 = vsyncpa [#allocation4], 1
    %6315 = vsyncpa [#allocation7], 1
    %6316 = vsyncpa [#allocation5], 1

</llo_original>
